<compile_context>
chip_gen: v6e
topology: v6e:2x2x1
jax: 0.10.0
libtpu: 0.0.40
codegen_flags: <defaults>
</compile_context>

<pallas_src>
import functools

import jax
import jax.numpy as jnp
from jax.experimental import pallas as pl
from jax.experimental.pallas import tpu as pltpu


# ----------------------------------------------------------------------------
# Pallas kernel
# ----------------------------------------------------------------------------
def _conv3x3_im2col(src_ref, col_ref, w_bf16, bias_f32, H, W, C):
    """3x3 'SAME' conv from a (H+2, W+2, C) zero-padded f32 VMEM ref.

    Builds an im2col slab (H*W, 9*C) in VMEM scratch, then does a single bf16
    MXU matmul against the (9*C, C) weight.  Returns (H*W, C) float32.
    """
    for kh in range(3):
        for kw in range(3):
            t = kh * 3 + kw
            col_ref[:, t * C:(t + 1) * C] = (
                src_ref[kh:kh + H, kw:kw + W, :].reshape(H * W, C))
    lhs = col_ref[...].astype(jnp.bfloat16)
    acc = jnp.dot(lhs, w_bf16, preferred_element_type=jnp.float32)
    return acc + bias_f32  # bias is (1, C)


def residual_group_kernel(x_ref, w1_ref, b1_ref, w2_ref, b2_ref,
                          caw1_ref, cab1_ref, caw2_ref, cab2_ref,
                          tw_ref, tb_ref,
                          o_ref,
                          state_ref, tmp_ref, col_ref, *, H, W, C, NB):
    j = pl.program_id(1)

    # Initialize the resident (zero-padded) chain state from this image's input.
    @pl.when(j == 0)
    def _init():
        state_ref[...] = jnp.zeros_like(state_ref)
        tmp_ref[...] = jnp.zeros_like(tmp_ref)
        state_ref[1:H + 1, 1:W + 1, :] = x_ref[0].astype(jnp.float32)

    # ---------------- RCAB body (block j) ----------------
    # conv1 + ReLU
    t1 = _conv3x3_im2col(state_ref, col_ref, w1_ref[j], b1_ref[j], H, W, C)
    t1 = jnp.maximum(t1, 0.0)
    tmp_ref[1:H + 1, 1:W + 1, :] = t1.reshape(H, W, C)

    # conv2
    res = _conv3x3_im2col(tmp_ref, col_ref, w2_ref[j], b2_ref[j], H, W, C)

    # Channel attention: GAP -> 1x1 conv (ReLU) -> 1x1 conv (sigmoid) -> scale
    pooled = jnp.mean(res, axis=0, keepdims=True)                      # (1, C)
    z = jnp.dot(pooled.astype(jnp.bfloat16), caw1_ref[j],
                preferred_element_type=jnp.float32) + cab1_ref[j]
    z = jnp.maximum(z, 0.0)                                            # (1, Cr)
    s = jnp.dot(z.astype(jnp.bfloat16), caw2_ref[j],
                preferred_element_type=jnp.float32) + cab2_ref[j]
    s = jax.nn.sigmoid(s)                                              # (1, C)
    res = res * s

    # RCAB residual add with the chain state, then update the state.
    out = res + state_ref[1:H + 1, 1:W + 1, :].reshape(H * W, C)
    state_ref[1:H + 1, 1:W + 1, :] = out.reshape(H, W, C)

    # ------------- fused tail conv + group residual (last block only) -------------
    @pl.when(j == NB - 1)
    def _tail():
        tail = _conv3x3_im2col(state_ref, col_ref, tw_ref[...], tb_ref[...],
                               H, W, C)
        o_ref[0] = (tail.reshape(H, W, C)
                    + x_ref[0].astype(jnp.float32)).astype(o_ref.dtype)


# ----------------------------------------------------------------------------
# Wrapper
# ----------------------------------------------------------------------------
def _vmem_limit_bytes(H, W, C, NB, Cr):
    f32, bf16 = 4, 2
    io = 2 * 2 * H * W * C * f32                               # in/out blocks, 2x buffered
    weights = ((2 * NB + 1) * 9 * C * C) * bf16 \
        + (NB * (2 * C + Cr + 2 * C * Cr) + C) * f32
    scratch = 2 * (H + 2) * (W + 2) * C * f32 + H * W * 9 * C * f32
    need = io + 2 * weights + scratch
    # generous margin for lane/sublane padding; keep inside every generation's VMEM
    return int(min(max(4 * need, 16 * 1024 * 1024), 96 * 1024 * 1024))


def fused_residual_group(x_nchw, params):
    """x_nchw: (B, C, H, W) float32.  Returns (B, C, H, W) float32."""
    B, C, H, W = x_nchw.shape
    NB = params["w1"].shape[0]
    Cr = params["caw1"].shape[-1]

    x = jnp.transpose(x_nchw, (0, 2, 3, 1))  # NCHW -> NHWC

    bf16 = jnp.bfloat16
    w1 = params["w1"].reshape(NB, 9 * C, C).astype(bf16)
    w2 = params["w2"].reshape(NB, 9 * C, C).astype(bf16)
    tw = params["tw"].reshape(9 * C, C).astype(bf16)
    caw1 = params["caw1"].astype(bf16)
    caw2 = params["caw2"].astype(bf16)
    b1, b2 = params["b1"], params["b2"]
    cab1, cab2 = params["cab1"], params["cab2"]
    tb = params["tb"]

    kernel = functools.partial(residual_group_kernel, H=H, W=W, C=C, NB=NB)

    out = pl.pallas_call(
        kernel,
        out_shape=jax.ShapeDtypeStruct((B, H, W, C), x.dtype),
        grid_spec=pltpu.PrefetchScalarGridSpec(
            num_scalar_prefetch=0,
            grid=(B, NB),
            in_specs=[
                pl.BlockSpec((1, H, W, C), lambda b, j: (b, 0, 0, 0)),
                # All weights resident across the whole grid (block index fixed
                # at 0 -> DMA'd once); indexed by j inside the kernel.
                pl.BlockSpec((NB, 9 * C, C), lambda b, j: (0, 0, 0)),
                pl.BlockSpec((NB, 1, C),     lambda b, j: (0, 0, 0)),
                pl.BlockSpec((NB, 9 * C, C), lambda b, j: (0, 0, 0)),
                pl.BlockSpec((NB, 1, C),     lambda b, j: (0, 0, 0)),
                pl.BlockSpec((NB, C, Cr),    lambda b, j: (0, 0, 0)),
                pl.BlockSpec((NB, 1, Cr),    lambda b, j: (0, 0, 0)),
                pl.BlockSpec((NB, Cr, C),    lambda b, j: (0, 0, 0)),
                pl.BlockSpec((NB, 1, C),     lambda b, j: (0, 0, 0)),
                pl.BlockSpec((9 * C, C),     lambda b, j: (0, 0)),
                pl.BlockSpec((1, C),         lambda b, j: (0, 0)),
            ],
            out_specs=pl.BlockSpec((1, H, W, C), lambda b, j: (b, 0, 0, 0)),
            scratch_shapes=[
                pltpu.VMEM((H + 2, W + 2, C), jnp.float32),   # chain state (padded)
                pltpu.VMEM((H + 2, W + 2, C), jnp.float32),   # post-ReLU act (padded)
                pltpu.VMEM((H * W, 9 * C), jnp.float32),      # im2col slab
            ],
        ),
        compiler_params=pltpu.CompilerParams(
            dimension_semantics=("parallel", "arbitrary"),
            vmem_limit_bytes=_vmem_limit_bytes(H, W, C, NB, Cr)),
    )(x, w1, b1, w2, b2, caw1, cab1, caw2, cab2, tw, tb)

    return jnp.transpose(out, (0, 3, 1, 2))  # NHWC -> NCHW


# ----------------------------------------------------------------------------
# Pure-JAX references (same semantics as the PyTorch module)
# ----------------------------------------------------------------------------
def reference_group(x_nchw, params, conv_dtype=None):
    """conv_dtype=None      -> full f32 math (HIGHEST precision).
       conv_dtype=bfloat16  -> conv/matmul operands cast to bf16, f32 accumulation,
                               i.e. the exact numerics the Pallas kernel uses."""
    x = jnp.transpose(x_nchw, (0, 2, 3, 1))
    NB = params["w1"].shape[0]

    def conv(a, w9, b):
        w = w9.reshape(3, 3, w9.shape[-2], w9.shape[-1])  # HWIO
        if conv_dtype is not None:
            a, w = a.astype(conv_dtype), w.astype(conv_dtype)
        y = jax.lax.conv_general_dilated(
            a, w, (1, 1), "SAME",
            dimension_numbers=("NHWC", "HWIO", "NHWC"),
            preferred_element_type=jnp.float32,
            precision=jax.lax.Precision.HIGHEST)
        return y + b.reshape(1, 1, 1, -1)

    def dot(a, w):
        if conv_dtype is not None:
            a, w = a.astype(conv_dtype), w.astype(conv_dtype)
        return jnp.dot(a, w, preferred_element_type=jnp.float32,
                       precision=jax.lax.Precision.HIGHEST)

    res = x
    for i in range(NB):
        t = jnp.maximum(conv(res, params["w1"][i], params["b1"][i]), 0.0)
        t = conv(t, params["w2"][i], params["b2"][i])
        pooled = jnp.mean(t, axis=(1, 2))                                   # (B, C)
        z = jnp.maximum(dot(pooled, params["caw1"][i]) + params["cab1"][i], 0.0)
        s = jax.nn.sigmoid(dot(z, params["caw2"][i]) + params["cab2"][i])   # (B, C)
        res = t * s[:, None, None, :] + res
    res = conv(res, params["tw"], params["tb"])
    return jnp.transpose(res + x, (0, 3, 1, 2))


# ----------------------------------------------------------------------------
if __name__ == "__main__":
    # Small, consistent shapes: batch=2, n_feat=32, spatial=16, reduction=4,
    # n_resblocks=4 (module default is 20; reduced for a fast synthetic run).
    B, C, H, W = 2, 32, 16, 16
    NB, RED = 4, 4
    Cr = C // RED

    key = jax.random.PRNGKey(0)
    ks = jax.random.split(key, 11)
    sc = 0.05
    params = {
        "w1":   jax.random.normal(ks[0], (NB, 9, C, C), jnp.float32) * sc,
        "b1":   jax.random.normal(ks[1], (NB, 1, C), jnp.float32) * sc,
        "w2":   jax.random.normal(ks[2], (NB, 9, C, C), jnp.float32) * sc,
        "b2":   jax.random.normal(ks[3], (NB, 1, C), jnp.float32) * sc,
        "caw1": jax.random.normal(ks[4], (NB, C, Cr), jnp.float32) * sc,
        "cab1": jax.random.normal(ks[5], (NB, 1, Cr), jnp.float32) * sc,
        "caw2": jax.random.normal(ks[6], (NB, Cr, C), jnp.float32) * sc,
        "cab2": jax.random.normal(ks[7], (NB, 1, C), jnp.float32) * sc,
        "tw":   jax.random.normal(ks[8], (9, C, C), jnp.float32) * sc,
        "tb":   jax.random.normal(ks[9], (1, C), jnp.float32) * sc,
    }
    x = jax.random.normal(ks[10], (B, C, H, W), jnp.float32)

    out = jax.block_until_ready(jax.jit(fused_residual_group)(x, params))

    # Tight check against a reference with identical (bf16-operand, f32-accum)
    # conv numerics, plus a looser sanity check against full-f32 math.
    ref_bf16 = jax.block_until_ready(reference_group(x, params, jnp.bfloat16))
    ref_f32 = jax.block_until_ready(reference_group(x, params))

    assert out.shape == x.shape and out.dtype == x.dtype
    err_bf16 = float(jnp.max(jnp.abs(out - ref_bf16)))
    err_f32 = float(jnp.max(jnp.abs(out - ref_f32)))
    assert err_bf16 < 5e-3, f"mismatch vs bf16-matched reference: {err_bf16}"
    assert err_f32 < 3e-2, f"mismatch vs f32 reference: {err_f32}"
    print("KERNEL_OK")
</pallas_src>

<mosaic_0001>
module attributes {stable_mosaic.version = 11 : i64} {
  func.func @residual_group_kernel(%arg0: i32, %arg1: i32, %arg2: memref<1x16x16x32xf32, #tpu.memory_space<vmem>>, %arg3: memref<4x288x32xbf16, #tpu.memory_space<vmem>>, %arg4: memref<4x1x32xf32, #tpu.memory_space<vmem>>, %arg5: memref<4x288x32xbf16, #tpu.memory_space<vmem>>, %arg6: memref<4x1x32xf32, #tpu.memory_space<vmem>>, %arg7: memref<4x32x8xbf16, #tpu.memory_space<vmem>>, %arg8: memref<4x1x8xf32, #tpu.memory_space<vmem>>, %arg9: memref<4x8x32xbf16, #tpu.memory_space<vmem>>, %arg10: memref<4x1x32xf32, #tpu.memory_space<vmem>>, %arg11: memref<288x32xbf16, #tpu.memory_space<vmem>>, %arg12: memref<1x32xf32, #tpu.memory_space<vmem>>, %arg13: memref<1x16x16x32xf32, #tpu.memory_space<vmem>>, %arg14: memref<18x18x32xf32, #tpu.memory_space<vmem>>, %arg15: memref<18x18x32xf32, #tpu.memory_space<vmem>>, %arg16: memref<256x288xf32, #tpu.memory_space<vmem>>) attributes {dimension_semantics = [#tpu.dimension_semantics<parallel>, #tpu.dimension_semantics<arbitrary>], iteration_bounds = array<i64: 2, 4>, scalar_prefetch = 0 : i64, scratch_operands = 3 : i64, tpu.core_type = #tpu.core_type<tc>, window_params = [{transform_indices = @transform_0, window_bounds = array<i64: 1, 16, 16, 32>}, {pipeline_mode = #tpu.pipeline_mode<synchronous>, transform_indices = @transform_1, window_bounds = array<i64: 4, 288, 32>}, {pipeline_mode = #tpu.pipeline_mode<synchronous>, transform_indices = @transform_2, window_bounds = array<i64: 4, 1, 32>}, {pipeline_mode = #tpu.pipeline_mode<synchronous>, transform_indices = @transform_3, window_bounds = array<i64: 4, 288, 32>}, {pipeline_mode = #tpu.pipeline_mode<synchronous>, transform_indices = @transform_4, window_bounds = array<i64: 4, 1, 32>}, {pipeline_mode = #tpu.pipeline_mode<synchronous>, transform_indices = @transform_5, window_bounds = array<i64: 4, 32, 8>}, {pipeline_mode = #tpu.pipeline_mode<synchronous>, transform_indices = @transform_6, window_bounds = array<i64: 4, 1, 8>}, {pipeline_mode = #tpu.pipeline_mode<synchronous>, transform_indices = @transform_7, window_bounds = array<i64: 4, 8, 32>}, {pipeline_mode = #tpu.pipeline_mode<synchronous>, transform_indices = @transform_8, window_bounds = array<i64: 4, 1, 32>}, {pipeline_mode = #tpu.pipeline_mode<synchronous>, transform_indices = @transform_9, window_bounds = array<i64: 288, 32>}, {pipeline_mode = #tpu.pipeline_mode<synchronous>, transform_indices = @transform_10, window_bounds = array<i64: 1, 32>}, {transform_indices = @transform_11, window_bounds = array<i64: 1, 16, 16, 32>}]} {
    %c0_i32 = arith.constant 0 : i32
    %0 = arith.cmpi eq, %arg1, %c0_i32 : i32
    %1 = arith.extui %0 : i1 to i32
    %c0_i32_0 = arith.constant 0 : i32
    %2 = arith.cmpi ne, %1, %c0_i32_0 : i32
    scf.if %2 {
      %cst_118 = arith.constant 0.000000e+00 : f32
      %122 = vector.broadcast %cst_118 : f32 to vector<18x18x32xf32>
      %c0_119 = arith.constant 0 : index
      %c0_120 = arith.constant 0 : index
      %c0_121 = arith.constant 0 : index
      %123 = vector.load %arg14[%c0_119, %c0_120, %c0_121] : memref<18x18x32xf32, #tpu.memory_space<vmem>>, vector<18x18x32xf32>
      tpu.vector_store %arg14[%c0_119, %c0_120, %c0_121], %122 {strides = array<i32>} : memref<18x18x32xf32, #tpu.memory_space<vmem>>, vector<18x18x32xf32>,
      %cst_122 = arith.constant 0.000000e+00 : f32
      %124 = vector.broadcast %cst_122 : f32 to vector<18x18x32xf32>
      %c0_123 = arith.constant 0 : index
      %c0_124 = arith.constant 0 : index
      %c0_125 = arith.constant 0 : index
      %125 = vector.load %arg15[%c0_123, %c0_124, %c0_125] : memref<18x18x32xf32, #tpu.memory_space<vmem>>, vector<18x18x32xf32>
      tpu.vector_store %arg15[%c0_123, %c0_124, %c0_125], %124 {strides = array<i32>} : memref<18x18x32xf32, #tpu.memory_space<vmem>>, vector<18x18x32xf32>,
      %c0_126 = arith.constant 0 : index
      %c0_127 = arith.constant 0 : index
      %c0_128 = arith.constant 0 : index
      %c0_129 = arith.constant 0 : index
      %126 = vector.load %arg2[%c0_126, %c0_127, %c0_128, %c0_129] : memref<1x16x16x32xf32, #tpu.memory_space<vmem>>, vector<1x16x16x32xf32>
      %127 = vector.shape_cast %126 : vector<1x16x16x32xf32> to vector<16x16x32xf32>
      %c1_130 = arith.constant 1 : index
      %c1_131 = arith.constant 1 : index
      %c0_132 = arith.constant 0 : index
      %128 = vector.load %arg14[%c1_130, %c1_131, %c0_132] : memref<18x18x32xf32, #tpu.memory_space<vmem>>, vector<16x16x32xf32>
      tpu.vector_store %arg14[%c1_130, %c1_131, %c0_132], %127 {strides = array<i32>} : memref<18x18x32xf32, #tpu.memory_space<vmem>>, vector<16x16x32xf32>,
    } else {
    }
    %3 = arith.index_cast %arg1 : i32 to index
    %c0 = arith.constant 0 : index
    %c0_1 = arith.constant 0 : index
    %4 = vector.load %arg3[%3, %c0, %c0_1] : memref<4x288x32xbf16, #tpu.memory_space<vmem>>, vector<1x288x32xbf16>
    %5 = vector.shape_cast %4 : vector<1x288x32xbf16> to vector<288x32xbf16>
    %6 = arith.index_cast %arg1 : i32 to index
    %c0_2 = arith.constant 0 : index
    %c0_3 = arith.constant 0 : index
    %7 = vector.load %arg4[%6, %c0_2, %c0_3] : memref<4x1x32xf32, #tpu.memory_space<vmem>>, vector<1x1x32xf32>
    %8 = vector.shape_cast %7 : vector<1x1x32xf32> to vector<1x32xf32>
    %c0_4 = arith.constant 0 : index
    %c0_5 = arith.constant 0 : index
    %c0_6 = arith.constant 0 : index
    %9 = vector.load %arg14[%c0_4, %c0_5, %c0_6] : memref<18x18x32xf32, #tpu.memory_space<vmem>>, vector<16x16x32xf32>
    %10 = vector.shape_cast %9 : vector<16x16x32xf32> to vector<256x32xf32>
    %c0_7 = arith.constant 0 : index
    %c0_8 = arith.constant 0 : index
    %11 = vector.load %arg16[%c0_7, %c0_8] : memref<256x288xf32, #tpu.memory_space<vmem>>, vector<256x32xf32>
    tpu.vector_store %arg16[%c0_7, %c0_8], %10 {strides = array<i32>} : memref<256x288xf32, #tpu.memory_space<vmem>>, vector<256x32xf32>,
    %c0_9 = arith.constant 0 : index
    %c1 = arith.constant 1 : index
    %c0_10 = arith.constant 0 : index
    %12 = vector.load %arg14[%c0_9, %c1, %c0_10] : memref<18x18x32xf32, #tpu.memory_space<vmem>>, vector<16x16x32xf32>
    %13 = vector.shape_cast %12 : vector<16x16x32xf32> to vector<256x32xf32>
    %c0_11 = arith.constant 0 : index
    %c32 = arith.constant 32 : index
    %14 = vector.load %arg16[%c0_11, %c32] : memref<256x288xf32, #tpu.memory_space<vmem>>, vector<256x32xf32>
    tpu.vector_store %arg16[%c0_11, %c32], %13 {strides = array<i32>} : memref<256x288xf32, #tpu.memory_space<vmem>>, vector<256x32xf32>,
    %c0_12 = arith.constant 0 : index
    %c2 = arith.constant 2 : index
    %c0_13 = arith.constant 0 : index
    %15 = vector.load %arg14[%c0_12, %c2, %c0_13] : memref<18x18x32xf32, #tpu.memory_space<vmem>>, vector<16x16x32xf32>
    %16 = vector.shape_cast %15 : vector<16x16x32xf32> to vector<256x32xf32>
    %c0_14 = arith.constant 0 : index
    %c64 = arith.constant 64 : index
    %17 = vector.load %arg16[%c0_14, %c64] : memref<256x288xf32, #tpu.memory_space<vmem>>, vector<256x32xf32>
    tpu.vector_store %arg16[%c0_14, %c64], %16 {strides = array<i32>} : memref<256x288xf32, #tpu.memory_space<vmem>>, vector<256x32xf32>,
    %c1_15 = arith.constant 1 : index
    %c0_16 = arith.constant 0 : index
    %c0_17 = arith.constant 0 : index
    %18 = vector.load %arg14[%c1_15, %c0_16, %c0_17] : memref<18x18x32xf32, #tpu.memory_space<vmem>>, vector<16x16x32xf32>
    %19 = vector.shape_cast %18 : vector<16x16x32xf32> to vector<256x32xf32>
    %c0_18 = arith.constant 0 : index
    %c96 = arith.constant 96 : index
    %20 = vector.load %arg16[%c0_18, %c96] : memref<256x288xf32, #tpu.memory_space<vmem>>, vector<256x32xf32>
    tpu.vector_store %arg16[%c0_18, %c96], %19 {strides = array<i32>} : memref<256x288xf32, #tpu.memory_space<vmem>>, vector<256x32xf32>,
    %c1_19 = arith.constant 1 : index
    %c1_20 = arith.constant 1 : index
    %c0_21 = arith.constant 0 : index
    %21 = vector.load %arg14[%c1_19, %c1_20, %c0_21] : memref<18x18x32xf32, #tpu.memory_space<vmem>>, vector<16x16x32xf32>
    %22 = vector.shape_cast %21 : vector<16x16x32xf32> to vector<256x32xf32>
    %c0_22 = arith.constant 0 : index
    %c128 = arith.constant 128 : index
    %23 = vector.load %arg16[%c0_22, %c128] : memref<256x288xf32, #tpu.memory_space<vmem>>, vector<256x32xf32>
    tpu.vector_store %arg16[%c0_22, %c128], %22 {strides = array<i32>} : memref<256x288xf32, #tpu.memory_space<vmem>>, vector<256x32xf32>,
    %c1_23 = arith.constant 1 : index
    %c2_24 = arith.constant 2 : index
    %c0_25 = arith.constant 0 : index
    %24 = vector.load %arg14[%c1_23, %c2_24, %c0_25] : memref<18x18x32xf32, #tpu.memory_space<vmem>>, vector<16x16x32xf32>
    %25 = vector.shape_cast %24 : vector<16x16x32xf32> to vector<256x32xf32>
    %c0_26 = arith.constant 0 : index
    %c160 = arith.constant 160 : index
    %26 = vector.load %arg16[%c0_26, %c160] : memref<256x288xf32, #tpu.memory_space<vmem>>, vector<256x32xf32>
    tpu.vector_store %arg16[%c0_26, %c160], %25 {strides = array<i32>} : memref<256x288xf32, #tpu.memory_space<vmem>>, vector<256x32xf32>,
    %c2_27 = arith.constant 2 : index
    %c0_28 = arith.constant 0 : index
    %c0_29 = arith.constant 0 : index
    %27 = vector.load %arg14[%c2_27, %c0_28, %c0_29] : memref<18x18x32xf32, #tpu.memory_space<vmem>>, vector<16x16x32xf32>
    %28 = vector.shape_cast %27 : vector<16x16x32xf32> to vector<256x32xf32>
    %c0_30 = arith.constant 0 : index
    %c192 = arith.constant 192 : index
    %29 = vector.load %arg16[%c0_30, %c192] : memref<256x288xf32, #tpu.memory_space<vmem>>, vector<256x32xf32>
    tpu.vector_store %arg16[%c0_30, %c192], %28 {strides = array<i32>} : memref<256x288xf32, #tpu.memory_space<vmem>>, vector<256x32xf32>,
    %c2_31 = arith.constant 2 : index
    %c1_32 = arith.constant 1 : index
    %c0_33 = arith.constant 0 : index
    %30 = vector.load %arg14[%c2_31, %c1_32, %c0_33] : memref<18x18x32xf32, #tpu.memory_space<vmem>>, vector<16x16x32xf32>
    %31 = vector.shape_cast %30 : vector<16x16x32xf32> to vector<256x32xf32>
    %c0_34 = arith.constant 0 : index
    %c224 = arith.constant 224 : index
    %32 = vector.load %arg16[%c0_34, %c224] : memref<256x288xf32, #tpu.memory_space<vmem>>, vector<256x32xf32>
    tpu.vector_store %arg16[%c0_34, %c224], %31 {strides = array<i32>} : memref<256x288xf32, #tpu.memory_space<vmem>>, vector<256x32xf32>,
    %c2_35 = arith.constant 2 : index
    %c2_36 = arith.constant 2 : index
    %c0_37 = arith.constant 0 : index
    %33 = vector.load %arg14[%c2_35, %c2_36, %c0_37] : memref<18x18x32xf32, #tpu.memory_space<vmem>>, vector<16x16x32xf32>
    %34 = vector.shape_cast %33 : vector<16x16x32xf32> to vector<256x32xf32>
    %c0_38 = arith.constant 0 : index
    %c256 = arith.constant 256 : index
    %35 = vector.load %arg16[%c0_38, %c256] : memref<256x288xf32, #tpu.memory_space<vmem>>, vector<256x32xf32>
    tpu.vector_store %arg16[%c0_38, %c256], %34 {strides = array<i32>} : memref<256x288xf32, #tpu.memory_space<vmem>>, vector<256x32xf32>,
    %c0_39 = arith.constant 0 : index
    %c0_40 = arith.constant 0 : index
    %36 = vector.load %arg16[%c0_39, %c0_40] : memref<256x288xf32, #tpu.memory_space<vmem>>, vector<256x288xf32>
    %37 = arith.truncf %36 : vector<256x288xf32> to vector<256x288xbf16>
    %cst = arith.constant dense<0.000000e+00> : vector<256x32xf32>
    %38 = tpu.matmul %37, %5, %cst {dimension_numbers = #tpu.dot_dimension_numbers<[1], [0], [0], [1], [0, 0, 1, 1], [], []>} : vector<256x288xbf16>, vector<288x32xbf16>, vector<256x32xf32> -> vector<256x32xf32>
    %39 = vector.broadcast %8 : vector<1x32xf32> to vector<256x32xf32>
    %40 = arith.addf %38, %39 : vector<256x32xf32>
    %cst_41 = arith.constant 0.000000e+00 : f32
    %41 = vector.broadcast %cst_41 : f32 to vector<256x32xf32>
    %42 = arith.maximumf %40, %41 : vector<256x32xf32>
    %43 = vector.shape_cast %42 : vector<256x32xf32> to vector<16x16x32xf32>
    %c1_42 = arith.constant 1 : index
    %c1_43 = arith.constant 1 : index
    %c0_44 = arith.constant 0 : index
    %44 = vector.load %arg15[%c1_42, %c1_43, %c0_44] : memref<18x18x32xf32, #tpu.memory_space<vmem>>, vector<16x16x32xf32>
    tpu.vector_store %arg15[%c1_42, %c1_43, %c0_44], %43 {strides = array<i32>} : memref<18x18x32xf32, #tpu.memory_space<vmem>>, vector<16x16x32xf32>,
    %45 = arith.index_cast %arg1 : i32 to index
    %c0_45 = arith.constant 0 : index
    %c0_46 = arith.constant 0 : index
    %46 = vector.load %arg5[%45, %c0_45, %c0_46] : memref<4x288x32xbf16, #tpu.memory_space<vmem>>, vector<1x288x32xbf16>
    %47 = vector.shape_cast %46 : vector<1x288x32xbf16> to vector<288x32xbf16>
    %48 = arith.index_cast %arg1 : i32 to index
    %c0_47 = arith.constant 0 : index
    %c0_48 = arith.constant 0 : index
    %49 = vector.load %arg6[%48, %c0_47, %c0_48] : memref<4x1x32xf32, #tpu.memory_space<vmem>>, vector<1x1x32xf32>
    %50 = vector.shape_cast %49 : vector<1x1x32xf32> to vector<1x32xf32>
    %c0_49 = arith.constant 0 : index
    %c0_50 = arith.constant 0 : index
    %c0_51 = arith.constant 0 : index
    %51 = vector.load %arg15[%c0_49, %c0_50, %c0_51] : memref<18x18x32xf32, #tpu.memory_space<vmem>>, vector<16x16x32xf32>
    %52 = vector.shape_cast %51 : vector<16x16x32xf32> to vector<256x32xf32>
    %c0_52 = arith.constant 0 : index
    %c0_53 = arith.constant 0 : index
    %53 = vector.load %arg16[%c0_52, %c0_53] : memref<256x288xf32, #tpu.memory_space<vmem>>, vector<256x32xf32>
    tpu.vector_store %arg16[%c0_52, %c0_53], %52 {strides = array<i32>} : memref<256x288xf32, #tpu.memory_space<vmem>>, vector<256x32xf32>,
    %c0_54 = arith.constant 0 : index
    %c1_55 = arith.constant 1 : index
    %c0_56 = arith.constant 0 : index
    %54 = vector.load %arg15[%c0_54, %c1_55, %c0_56] : memref<18x18x32xf32, #tpu.memory_space<vmem>>, vector<16x16x32xf32>
    %55 = vector.shape_cast %54 : vector<16x16x32xf32> to vector<256x32xf32>
    %c0_57 = arith.constant 0 : index
    %c32_58 = arith.constant 32 : index
    %56 = vector.load %arg16[%c0_57, %c32_58] : memref<256x288xf32, #tpu.memory_space<vmem>>, vector<256x32xf32>
    tpu.vector_store %arg16[%c0_57, %c32_58], %55 {strides = array<i32>} : memref<256x288xf32, #tpu.memory_space<vmem>>, vector<256x32xf32>,
    %c0_59 = arith.constant 0 : index
    %c2_60 = arith.constant 2 : index
    %c0_61 = arith.constant 0 : index
    %57 = vector.load %arg15[%c0_59, %c2_60, %c0_61] : memref<18x18x32xf32, #tpu.memory_space<vmem>>, vector<16x16x32xf32>
    %58 = vector.shape_cast %57 : vector<16x16x32xf32> to vector<256x32xf32>
    %c0_62 = arith.constant 0 : index
    %c64_63 = arith.constant 64 : index
    %59 = vector.load %arg16[%c0_62, %c64_63] : memref<256x288xf32, #tpu.memory_space<vmem>>, vector<256x32xf32>
    tpu.vector_store %arg16[%c0_62, %c64_63], %58 {strides = array<i32>} : memref<256x288xf32, #tpu.memory_space<vmem>>, vector<256x32xf32>,
    %c1_64 = arith.constant 1 : index
    %c0_65 = arith.constant 0 : index
    %c0_66 = arith.constant 0 : index
    %60 = vector.load %arg15[%c1_64, %c0_65, %c0_66] : memref<18x18x32xf32, #tpu.memory_space<vmem>>, vector<16x16x32xf32>
    %61 = vector.shape_cast %60 : vector<16x16x32xf32> to vector<256x32xf32>
    %c0_67 = arith.constant 0 : index
    %c96_68 = arith.constant 96 : index
    %62 = vector.load %arg16[%c0_67, %c96_68] : memref<256x288xf32, #tpu.memory_space<vmem>>, vector<256x32xf32>
    tpu.vector_store %arg16[%c0_67, %c96_68], %61 {strides = array<i32>} : memref<256x288xf32, #tpu.memory_space<vmem>>, vector<256x32xf32>,
    %c1_69 = arith.constant 1 : index
    %c1_70 = arith.constant 1 : index
    %c0_71 = arith.constant 0 : index
    %63 = vector.load %arg15[%c1_69, %c1_70, %c0_71] : memref<18x18x32xf32, #tpu.memory_space<vmem>>, vector<16x16x32xf32>
    %64 = vector.shape_cast %63 : vector<16x16x32xf32> to vector<256x32xf32>
    %c0_72 = arith.constant 0 : index
    %c128_73 = arith.constant 128 : index
    %65 = vector.load %arg16[%c0_72, %c128_73] : memref<256x288xf32, #tpu.memory_space<vmem>>, vector<256x32xf32>
    tpu.vector_store %arg16[%c0_72, %c128_73], %64 {strides = array<i32>} : memref<256x288xf32, #tpu.memory_space<vmem>>, vector<256x32xf32>,
    %c1_74 = arith.constant 1 : index
    %c2_75 = arith.constant 2 : index
    %c0_76 = arith.constant 0 : index
    %66 = vector.load %arg15[%c1_74, %c2_75, %c0_76] : memref<18x18x32xf32, #tpu.memory_space<vmem>>, vector<16x16x32xf32>
    %67 = vector.shape_cast %66 : vector<16x16x32xf32> to vector<256x32xf32>
    %c0_77 = arith.constant 0 : index
    %c160_78 = arith.constant 160 : index
    %68 = vector.load %arg16[%c0_77, %c160_78] : memref<256x288xf32, #tpu.memory_space<vmem>>, vector<256x32xf32>
    tpu.vector_store %arg16[%c0_77, %c160_78], %67 {strides = array<i32>} : memref<256x288xf32, #tpu.memory_space<vmem>>, vector<256x32xf32>,
    %c2_79 = arith.constant 2 : index
    %c0_80 = arith.constant 0 : index
    %c0_81 = arith.constant 0 : index
    %69 = vector.load %arg15[%c2_79, %c0_80, %c0_81] : memref<18x18x32xf32, #tpu.memory_space<vmem>>, vector<16x16x32xf32>
    %70 = vector.shape_cast %69 : vector<16x16x32xf32> to vector<256x32xf32>
    %c0_82 = arith.constant 0 : index
    %c192_83 = arith.constant 192 : index
    %71 = vector.load %arg16[%c0_82, %c192_83] : memref<256x288xf32, #tpu.memory_space<vmem>>, vector<256x32xf32>
    tpu.vector_store %arg16[%c0_82, %c192_83], %70 {strides = array<i32>} : memref<256x288xf32, #tpu.memory_space<vmem>>, vector<256x32xf32>,
    %c2_84 = arith.constant 2 : index
    %c1_85 = arith.constant 1 : index
    %c0_86 = arith.constant 0 : index
    %72 = vector.load %arg15[%c2_84, %c1_85, %c0_86] : memref<18x18x32xf32, #tpu.memory_space<vmem>>, vector<16x16x32xf32>
    %73 = vector.shape_cast %72 : vector<16x16x32xf32> to vector<256x32xf32>
    %c0_87 = arith.constant 0 : index
    %c224_88 = arith.constant 224 : index
    %74 = vector.load %arg16[%c0_87, %c224_88] : memref<256x288xf32, #tpu.memory_space<vmem>>, vector<256x32xf32>
    tpu.vector_store %arg16[%c0_87, %c224_88], %73 {strides = array<i32>} : memref<256x288xf32, #tpu.memory_space<vmem>>, vector<256x32xf32>,
    %c2_89 = arith.constant 2 : index
    %c2_90 = arith.constant 2 : index
    %c0_91 = arith.constant 0 : index
    %75 = vector.load %arg15[%c2_89, %c2_90, %c0_91] : memref<18x18x32xf32, #tpu.memory_space<vmem>>, vector<16x16x32xf32>
    %76 = vector.shape_cast %75 : vector<16x16x32xf32> to vector<256x32xf32>
    %c0_92 = arith.constant 0 : index
    %c256_93 = arith.constant 256 : index
    %77 = vector.load %arg16[%c0_92, %c256_93] : memref<256x288xf32, #tpu.memory_space<vmem>>, vector<256x32xf32>
    tpu.vector_store %arg16[%c0_92, %c256_93], %76 {strides = array<i32>} : memref<256x288xf32, #tpu.memory_space<vmem>>, vector<256x32xf32>,
    %c0_94 = arith.constant 0 : index
    %c0_95 = arith.constant 0 : index
    %78 = vector.load %arg16[%c0_94, %c0_95] : memref<256x288xf32, #tpu.memory_space<vmem>>, vector<256x288xf32>
    %79 = arith.truncf %78 : vector<256x288xf32> to vector<256x288xbf16>
    %cst_96 = arith.constant dense<0.000000e+00> : vector<256x32xf32>
    %80 = tpu.matmul %79, %47, %cst_96 {dimension_numbers = #tpu.dot_dimension_numbers<[1], [0], [0], [1], [0, 0, 1, 1], [], []>} : vector<256x288xbf16>, vector<288x32xbf16>, vector<256x32xf32> -> vector<256x32xf32>
    %81 = vector.broadcast %50 : vector<1x32xf32> to vector<256x32xf32>
    %82 = arith.addf %80, %81 : vector<256x32xf32>
    %cst_97 = arith.constant dense<0.000000e+00> : vector<32xf32>
    %83 = vector.multi_reduction <add>, %82, %cst_97 [0] : vector<256x32xf32> to vector<32xf32>
    %84 = vector.shape_cast %83 : vector<32xf32> to vector<1x32xf32>
    %cst_98 = arith.constant 2.560000e+02 : f32
    %85 = vector.broadcast %cst_98 : f32 to vector<1x32xf32>
    %86 = arith.divf %84, %85 : vector<1x32xf32>
    %87 = arith.truncf %86 : vector<1x32xf32> to vector<1x32xbf16>
    %88 = arith.index_cast %arg1 : i32 to index
    %c0_99 = arith.constant 0 : index
    %c0_100 = arith.constant 0 : index
    %89 = vector.load %arg7[%88, %c0_99, %c0_100] : memref<4x32x8xbf16, #tpu.memory_space<vmem>>, vector<1x32x8xbf16>
    %90 = vector.shape_cast %89 : vector<1x32x8xbf16> to vector<32x8xbf16>
    %cst_101 = arith.constant dense<0.000000e+00> : vector<1x8xf32>
    %91 = tpu.matmul %87, %90, %cst_101 {dimension_numbers = #tpu.dot_dimension_numbers<[1], [0], [0], [1], [0, 0, 1, 1], [], []>} : vector<1x32xbf16>, vector<32x8xbf16>, vector<1x8xf32> -> vector<1x8xf32>
    %92 = arith.index_cast %arg1 : i32 to index
    %c0_102 = arith.constant 0 : index
    %c0_103 = arith.constant 0 : index
    %93 = vector.load %arg8[%92, %c0_102, %c0_103] : memref<4x1x8xf32, #tpu.memory_space<vmem>>, vector<1x1x8xf32>
    %94 = vector.shape_cast %93 : vector<1x1x8xf32> to vector<1x8xf32>
    %95 = arith.addf %91, %94 : vector<1x8xf32>
    %cst_104 = arith.constant 0.000000e+00 : f32
    %96 = vector.broadcast %cst_104 : f32 to vector<1x8xf32>
    %97 = arith.maximumf %95, %96 : vector<1x8xf32>
    %98 = arith.truncf %97 : vector<1x8xf32> to vector<1x8xbf16>
    %99 = arith.index_cast %arg1 : i32 to index
    %c0_105 = arith.constant 0 : index
    %c0_106 = arith.constant 0 : index
    %100 = vector.load %arg9[%99, %c0_105, %c0_106] : memref<4x8x32xbf16, #tpu.memory_space<vmem>>, vector<1x8x32xbf16>
    %101 = vector.shape_cast %100 : vector<1x8x32xbf16> to vector<8x32xbf16>
    %cst_107 = arith.constant dense<0.000000e+00> : vector<1x32xf32>
    %102 = tpu.matmul %98, %101, %cst_107 {dimension_numbers = #tpu.dot_dimension_numbers<[1], [0], [0], [1], [0, 0, 1, 1], [], []>} : vector<1x8xbf16>, vector<8x32xbf16>, vector<1x32xf32> -> vector<1x32xf32>
    %103 = arith.index_cast %arg1 : i32 to index
    %c0_108 = arith.constant 0 : index
    %c0_109 = arith.constant 0 : index
    %104 = vector.load %arg10[%103, %c0_108, %c0_109] : memref<4x1x32xf32, #tpu.memory_space<vmem>>, vector<1x1x32xf32>
    %105 = vector.shape_cast %104 : vector<1x1x32xf32> to vector<1x32xf32>
    %106 = arith.addf %102, %105 : vector<1x32xf32>
    %107 = arith.negf %106 : vector<1x32xf32>
    %108 = math.exp %107 : vector<1x32xf32>
    %cst_110 = arith.constant 1.000000e+00 : f32
    %109 = vector.broadcast %cst_110 : f32 to vector<1x32xf32>
    %110 = arith.addf %109, %108 : vector<1x32xf32>
    %111 = arith.divf %109, %110 : vector<1x32xf32>
    %112 = vector.broadcast %111 : vector<1x32xf32> to vector<256x32xf32>
    %113 = arith.mulf %82, %112 : vector<256x32xf32>
    %c1_111 = arith.constant 1 : index
    %c1_112 = arith.constant 1 : index
    %c0_113 = arith.constant 0 : index
    %114 = vector.load %arg14[%c1_111, %c1_112, %c0_113] : memref<18x18x32xf32, #tpu.memory_space<vmem>>, vector<16x16x32xf32>
    %115 = vector.shape_cast %114 : vector<16x16x32xf32> to vector<256x32xf32>
    %116 = arith.addf %113, %115 : vector<256x32xf32>
    %117 = vector.shape_cast %116 : vector<256x32xf32> to vector<16x16x32xf32>
    %c1_114 = arith.constant 1 : index
    %c1_115 = arith.constant 1 : index
    %c0_116 = arith.constant 0 : index
    %118 = vector.load %arg14[%c1_114, %c1_115, %c0_116] : memref<18x18x32xf32, #tpu.memory_space<vmem>>, vector<16x16x32xf32>
    tpu.vector_store %arg14[%c1_114, %c1_115, %c0_116], %117 {strides = array<i32>} : memref<18x18x32xf32, #tpu.memory_space<vmem>>, vector<16x16x32xf32>,
    %c3_i32 = arith.constant 3 : i32
    %119 = arith.cmpi eq, %arg1, %c3_i32 : i32
    %120 = arith.extui %119 : i1 to i32
    %c0_i32_117 = arith.constant 0 : i32
    %121 = arith.cmpi ne, %120, %c0_i32_117 : i32
    scf.if %121 {
      %c0_118 = arith.constant 0 : index
      %c0_119 = arith.constant 0 : index
      %122 = vector.load %arg11[%c0_118, %c0_119] : memref<288x32xbf16, #tpu.memory_space<vmem>>, vector<288x32xbf16>
      %c0_120 = arith.constant 0 : index
      %c0_121 = arith.constant 0 : index
      %123 = vector.load %arg12[%c0_120, %c0_121] : memref<1x32xf32, #tpu.memory_space<vmem>>, vector<1x32xf32>
      %c0_122 = arith.constant 0 : index
      %c0_123 = arith.constant 0 : index
      %c0_124 = arith.constant 0 : index
      %124 = vector.load %arg14[%c0_122, %c0_123, %c0_124] : memref<18x18x32xf32, #tpu.memory_space<vmem>>, vector<16x16x32xf32>
      %125 = vector.shape_cast %124 : vector<16x16x32xf32> to vector<256x32xf32>
      %c0_125 = arith.constant 0 : index
      %c0_126 = arith.constant 0 : index
      %126 = vector.load %arg16[%c0_125, %c0_126] : memref<256x288xf32, #tpu.memory_space<vmem>>, vector<256x32xf32>
      tpu.vector_store %arg16[%c0_125, %c0_126], %125 {strides = array<i32>} : memref<256x288xf32, #tpu.memory_space<vmem>>, vector<256x32xf32>,
      %c0_127 = arith.constant 0 : index
      %c1_128 = arith.constant 1 : index
      %c0_129 = arith.constant 0 : index
      %127 = vector.load %arg14[%c0_127, %c1_128, %c0_129] : memref<18x18x32xf32, #tpu.memory_space<vmem>>, vector<16x16x32xf32>
      %128 = vector.shape_cast %127 : vector<16x16x32xf32> to vector<256x32xf32>
      %c0_130 = arith.constant 0 : index
      %c32_131 = arith.constant 32 : index
      %129 = vector.load %arg16[%c0_130, %c32_131] : memref<256x288xf32, #tpu.memory_space<vmem>>, vector<256x32xf32>
      tpu.vector_store %arg16[%c0_130, %c32_131], %128 {strides = array<i32>} : memref<256x288xf32, #tpu.memory_space<vmem>>, vector<256x32xf32>,
      %c0_132 = arith.constant 0 : index
      %c2_133 = arith.constant 2 : index
      %c0_134 = arith.constant 0 : index
      %130 = vector.load %arg14[%c0_132, %c2_133, %c0_134] : memref<18x18x32xf32, #tpu.memory_space<vmem>>, vector<16x16x32xf32>
      %131 = vector.shape_cast %130 : vector<16x16x32xf32> to vector<256x32xf32>
      %c0_135 = arith.constant 0 : index
      %c64_136 = arith.constant 64 : index
      %132 = vector.load %arg16[%c0_135, %c64_136] : memref<256x288xf32, #tpu.memory_space<vmem>>, vector<256x32xf32>
      tpu.vector_store %arg16[%c0_135, %c64_136], %131 {strides = array<i32>} : memref<256x288xf32, #tpu.memory_space<vmem>>, vector<256x32xf32>,
      %c1_137 = arith.constant 1 : index
      %c0_138 = arith.constant 0 : index
      %c0_139 = arith.constant 0 : index
      %133 = vector.load %arg14[%c1_137, %c0_138, %c0_139] : memref<18x18x32xf32, #tpu.memory_space<vmem>>, vector<16x16x32xf32>
      %134 = vector.shape_cast %133 : vector<16x16x32xf32> to vector<256x32xf32>
      %c0_140 = arith.constant 0 : index
      %c96_141 = arith.constant 96 : index
      %135 = vector.load %arg16[%c0_140, %c96_141] : memref<256x288xf32, #tpu.memory_space<vmem>>, vector<256x32xf32>
      tpu.vector_store %arg16[%c0_140, %c96_141], %134 {strides = array<i32>} : memref<256x288xf32, #tpu.memory_space<vmem>>, vector<256x32xf32>,
      %c1_142 = arith.constant 1 : index
      %c1_143 = arith.constant 1 : index
      %c0_144 = arith.constant 0 : index
      %136 = vector.load %arg14[%c1_142, %c1_143, %c0_144] : memref<18x18x32xf32, #tpu.memory_space<vmem>>, vector<16x16x32xf32>
      %137 = vector.shape_cast %136 : vector<16x16x32xf32> to vector<256x32xf32>
      %c0_145 = arith.constant 0 : index
      %c128_146 = arith.constant 128 : index
      %138 = vector.load %arg16[%c0_145, %c128_146] : memref<256x288xf32, #tpu.memory_space<vmem>>, vector<256x32xf32>
      tpu.vector_store %arg16[%c0_145, %c128_146], %137 {strides = array<i32>} : memref<256x288xf32, #tpu.memory_space<vmem>>, vector<256x32xf32>,
      %c1_147 = arith.constant 1 : index
      %c2_148 = arith.constant 2 : index
      %c0_149 = arith.constant 0 : index
      %139 = vector.load %arg14[%c1_147, %c2_148, %c0_149] : memref<18x18x32xf32, #tpu.memory_space<vmem>>, vector<16x16x32xf32>
      %140 = vector.shape_cast %139 : vector<16x16x32xf32> to vector<256x32xf32>
      %c0_150 = arith.constant 0 : index
      %c160_151 = arith.constant 160 : index
      %141 = vector.load %arg16[%c0_150, %c160_151] : memref<256x288xf32, #tpu.memory_space<vmem>>, vector<256x32xf32>
      tpu.vector_store %arg16[%c0_150, %c160_151], %140 {strides = array<i32>} : memref<256x288xf32, #tpu.memory_space<vmem>>, vector<256x32xf32>,
      %c2_152 = arith.constant 2 : index
      %c0_153 = arith.constant 0 : index
      %c0_154 = arith.constant 0 : index
      %142 = vector.load %arg14[%c2_152, %c0_153, %c0_154] : memref<18x18x32xf32, #tpu.memory_space<vmem>>, vector<16x16x32xf32>
      %143 = vector.shape_cast %142 : vector<16x16x32xf32> to vector<256x32xf32>
      %c0_155 = arith.constant 0 : index
      %c192_156 = arith.constant 192 : index
      %144 = vector.load %arg16[%c0_155, %c192_156] : memref<256x288xf32, #tpu.memory_space<vmem>>, vector<256x32xf32>
      tpu.vector_store %arg16[%c0_155, %c192_156], %143 {strides = array<i32>} : memref<256x288xf32, #tpu.memory_space<vmem>>, vector<256x32xf32>,
      %c2_157 = arith.constant 2 : index
      %c1_158 = arith.constant 1 : index
      %c0_159 = arith.constant 0 : index
      %145 = vector.load %arg14[%c2_157, %c1_158, %c0_159] : memref<18x18x32xf32, #tpu.memory_space<vmem>>, vector<16x16x32xf32>
      %146 = vector.shape_cast %145 : vector<16x16x32xf32> to vector<256x32xf32>
      %c0_160 = arith.constant 0 : index
      %c224_161 = arith.constant 224 : index
      %147 = vector.load %arg16[%c0_160, %c224_161] : memref<256x288xf32, #tpu.memory_space<vmem>>, vector<256x32xf32>
      tpu.vector_store %arg16[%c0_160, %c224_161], %146 {strides = array<i32>} : memref<256x288xf32, #tpu.memory_space<vmem>>, vector<256x32xf32>,
      %c2_162 = arith.constant 2 : index
      %c2_163 = arith.constant 2 : index
      %c0_164 = arith.constant 0 : index
      %148 = vector.load %arg14[%c2_162, %c2_163, %c0_164] : memref<18x18x32xf32, #tpu.memory_space<vmem>>, vector<16x16x32xf32>
      %149 = vector.shape_cast %148 : vector<16x16x32xf32> to vector<256x32xf32>
      %c0_165 = arith.constant 0 : index
      %c256_166 = arith.constant 256 : index
      %150 = vector.load %arg16[%c0_165, %c256_166] : memref<256x288xf32, #tpu.memory_space<vmem>>, vector<256x32xf32>
      tpu.vector_store %arg16[%c0_165, %c256_166], %149 {strides = array<i32>} : memref<256x288xf32, #tpu.memory_space<vmem>>, vector<256x32xf32>,
      %c0_167 = arith.constant 0 : index
      %c0_168 = arith.constant 0 : index
      %151 = vector.load %arg16[%c0_167, %c0_168] : memref<256x288xf32, #tpu.memory_space<vmem>>, vector<256x288xf32>
      %152 = arith.truncf %151 : vector<256x288xf32> to vector<256x288xbf16>
      %cst_169 = arith.constant dense<0.000000e+00> : vector<256x32xf32>
      %153 = tpu.matmul %152, %122, %cst_169 {dimension_numbers = #tpu.dot_dimension_numbers<[1], [0], [0], [1], [0, 0, 1, 1], [], []>} : vector<256x288xbf16>, vector<288x32xbf16>, vector<256x32xf32> -> vector<256x32xf32>
      %154 = vector.broadcast %123 : vector<1x32xf32> to vector<256x32xf32>
      %155 = arith.addf %153, %154 : vector<256x32xf32>
      %156 = vector.shape_cast %155 : vector<256x32xf32> to vector<16x16x32xf32>
      %c0_170 = arith.constant 0 : index
      %c0_171 = arith.constant 0 : index
      %c0_172 = arith.constant 0 : index
      %c0_173 = arith.constant 0 : index
      %157 = vector.load %arg2[%c0_170, %c0_171, %c0_172, %c0_173] : memref<1x16x16x32xf32, #tpu.memory_space<vmem>>, vector<1x16x16x32xf32>
      %158 = vector.shape_cast %157 : vector<1x16x16x32xf32> to vector<16x16x32xf32>
      %159 = arith.addf %156, %158 : vector<16x16x32xf32>
      %c0_174 = arith.constant 0 : index
      %c0_175 = arith.constant 0 : index
      %c0_176 = arith.constant 0 : index
      %c0_177 = arith.constant 0 : index
      %160 = vector.load %arg13[%c0_174, %c0_175, %c0_176, %c0_177] : memref<1x16x16x32xf32, #tpu.memory_space<vmem>>, vector<1x16x16x32xf32>
      %161 = vector.shape_cast %160 : vector<1x16x16x32xf32> to vector<16x16x32xf32>
      %162 = vector.shape_cast %159 : vector<16x16x32xf32> to vector<1x16x16x32xf32>
      tpu.vector_store %arg13[%c0_174, %c0_175, %c0_176, %c0_177], %162 {strides = array<i32>} : memref<1x16x16x32xf32, #tpu.memory_space<vmem>>, vector<1x16x16x32xf32>,
    } else {
    }
    return
  }
  func.func @transform_0(%arg0: i32, %arg1: i32) -> (i32, i32, i32, i32) {
    %c0_i32 = arith.constant 0 : i32
    %c0_i32_0 = arith.constant 0 : i32
    %c0_i32_1 = arith.constant 0 : i32
    %c0_i32_2 = arith.constant 0 : i32
    return %arg0, %c0_i32, %c0_i32_0, %c0_i32_1 : i32, i32, i32, i32
  }
  func.func @transform_1(%arg0: i32, %arg1: i32) -> (i32, i32, i32) {
    %c0_i32 = arith.constant 0 : i32
    %c0_i32_0 = arith.constant 0 : i32
    %c0_i32_1 = arith.constant 0 : i32
    %c0_i32_2 = arith.constant 0 : i32
    return %c0_i32, %c0_i32_0, %c0_i32_1 : i32, i32, i32
  }
  func.func @transform_2(%arg0: i32, %arg1: i32) -> (i32, i32, i32) {
    %c0_i32 = arith.constant 0 : i32
    %c0_i32_0 = arith.constant 0 : i32
    %c0_i32_1 = arith.constant 0 : i32
    %c0_i32_2 = arith.constant 0 : i32
    return %c0_i32, %c0_i32_0, %c0_i32_1 : i32, i32, i32
  }
  func.func @transform_3(%arg0: i32, %arg1: i32) -> (i32, i32, i32) {
    %c0_i32 = arith.constant 0 : i32
    %c0_i32_0 = arith.constant 0 : i32
    %c0_i32_1 = arith.constant 0 : i32
    %c0_i32_2 = arith.constant 0 : i32
    return %c0_i32, %c0_i32_0, %c0_i32_1 : i32, i32, i32
  }
  func.func @transform_4(%arg0: i32, %arg1: i32) -> (i32, i32, i32) {
    %c0_i32 = arith.constant 0 : i32
    %c0_i32_0 = arith.constant 0 : i32
    %c0_i32_1 = arith.constant 0 : i32
    %c0_i32_2 = arith.constant 0 : i32
    return %c0_i32, %c0_i32_0, %c0_i32_1 : i32, i32, i32
  }
  func.func @transform_5(%arg0: i32, %arg1: i32) -> (i32, i32, i32) {
    %c0_i32 = arith.constant 0 : i32
    %c0_i32_0 = arith.constant 0 : i32
    %c0_i32_1 = arith.constant 0 : i32
    %c0_i32_2 = arith.constant 0 : i32
    return %c0_i32, %c0_i32_0, %c0_i32_1 : i32, i32, i32
  }
  func.func @transform_6(%arg0: i32, %arg1: i32) -> (i32, i32, i32) {
    %c0_i32 = arith.constant 0 : i32
    %c0_i32_0 = arith.constant 0 : i32
    %c0_i32_1 = arith.constant 0 : i32
    %c0_i32_2 = arith.constant 0 : i32
    return %c0_i32, %c0_i32_0, %c0_i32_1 : i32, i32, i32
  }
  func.func @transform_7(%arg0: i32, %arg1: i32) -> (i32, i32, i32) {
    %c0_i32 = arith.constant 0 : i32
    %c0_i32_0 = arith.constant 0 : i32
    %c0_i32_1 = arith.constant 0 : i32
    %c0_i32_2 = arith.constant 0 : i32
    return %c0_i32, %c0_i32_0, %c0_i32_1 : i32, i32, i32
  }
  func.func @transform_8(%arg0: i32, %arg1: i32) -> (i32, i32, i32) {
    %c0_i32 = arith.constant 0 : i32
    %c0_i32_0 = arith.constant 0 : i32
    %c0_i32_1 = arith.constant 0 : i32
    %c0_i32_2 = arith.constant 0 : i32
    return %c0_i32, %c0_i32_0, %c0_i32_1 : i32, i32, i32
  }
  func.func @transform_9(%arg0: i32, %arg1: i32) -> (i32, i32) {
    %c0_i32 = arith.constant 0 : i32
    %c0_i32_0 = arith.constant 0 : i32
    %c0_i32_1 = arith.constant 0 : i32
    return %c0_i32, %c0_i32_0 : i32, i32
  }
  func.func @transform_10(%arg0: i32, %arg1: i32) -> (i32, i32) {
    %c0_i32 = arith.constant 0 : i32
    %c0_i32_0 = arith.constant 0 : i32
    %c0_i32_1 = arith.constant 0 : i32
    return %c0_i32, %c0_i32_0 : i32, i32
  }
  func.func @transform_11(%arg0: i32, %arg1: i32) -> (i32, i32, i32, i32) {
    %c0_i32 = arith.constant 0 : i32
    %c0_i32_0 = arith.constant 0 : i32
    %c0_i32_1 = arith.constant 0 : i32
    %c0_i32_2 = arith.constant 0 : i32
    return %arg0, %c0_i32, %c0_i32_0, %c0_i32_1 : i32, i32, i32, i32
  }
}

</mosaic_0001>

<llo_original>
// kernel: fused_residual_group.1
$region0: #{fused_residual_group.1}
  #allocation0 [shape = 'u32[]', space=smem, size = 0x4, offset = 0x4, fixed_abs, tag = 'smem constant byte address 0x4 - core index']
  #allocation1 [shape = 'u32[144,128]{1,0:T(1,128)}', space=vmem, size = 0x12000, scoped, tag = 'internal scratch']
  #allocation2 [shape = 'f32[18,18,32]{2,1,0:T(8,128)}', space=vmem, size = 0x36000, scoped, tag = 'scratch operand']
  #allocation3 [shape = 'f32[18,18,32]{2,1,0:T(8,128)}', space=vmem, size = 0x36000, scoped, tag = 'scratch operand']
  #allocation4 [shape = 'f32[256,288]{1,0:T(8,128)}', space=vmem, size = 0x60000, scoped, tag = 'scratch operand']
  %s0 = inlined_call_operand.vmem [shape: f32[2,16,16,32], index: 0, kind: input, shape index: {}]
  %s1 = inlined_call_operand.vmem [shape: bf16[4,288,32], index: 1, kind: input, shape index: {}]
  %s2 = inlined_call_operand.vmem [shape: f32[4,1,32], index: 2, kind: input, shape index: {}]
  %s3 = inlined_call_operand.vmem [shape: bf16[4,288,32], index: 3, kind: input, shape index: {}]
  %s4 = inlined_call_operand.vmem [shape: f32[4,1,32], index: 4, kind: input, shape index: {}]
  %s5 = inlined_call_operand.vmem [shape: bf16[4,32,8], index: 5, kind: input, shape index: {}]
  %s6 = inlined_call_operand.vmem [shape: f32[4,1,8], index: 6, kind: input, shape index: {}]
  %s7 = inlined_call_operand.vmem [shape: bf16[4,8,32], index: 7, kind: input, shape index: {}]
  %s8 = inlined_call_operand.vmem [shape: f32[4,1,32], index: 8, kind: input, shape index: {}]
  %s9 = inlined_call_operand.vmem [shape: bf16[288,32], index: 9, kind: input, shape index: {}]
  %s10 = inlined_call_operand.vmem [shape: f32[1,32], index: 10, kind: input, shape index: {}]
  %s11 = inlined_call_operand.hbm [shape: f32[2,16,16,32], index: 11, kind: output, shape index: {}]
  %s12 = sld [smem:[#allocation0]]
  $region85: #{fused_residual_group.1} parent=0
    _
  %s14 = ssub.s32 1, %s12
  %s15 = scalar_select 0, %s14, %s12
  $region1: #{fused_residual_group.1} parent=0
    #allocation5 [shape = 'u8[262144]{0}', space=vmem, size = 0x40000, scoped, tag = 'output window, operand 0']
    #allocation6 [shape = 's32[2]{0}', space=sflag, size = 0x8, scoped, tag = 'scoped memory for fused_residual_group.1']
    %16 = vsyncpa [#allocation6], 0
    %s17 = scalar_lea.sflag [#allocation6], 1
    %18 = vsyncpa %s17, 0
    loop: start=0, step=1, limit=10
    $region2: #{fused_residual_group.1} parent=1 // loop_pre_header
      _
    $region3: #{fused_residual_group.1} parent=1 // loop_header
      %s20 = sphi 0, %s24
      %p21 = scmp.ge.s32.totalorder %s20, 10
      %s27 = sphi 0, %s39
      %s28 = sphi 0, %s35
      %s29 = sphi 0, %s27
      %s30 = sphi 0, %s28
      %s31 = sphi 0, %s29
      %s32 = sphi 0, %s30
      %s42 = sphi 0, %s44
      %s45 = sphi 0, %s42
      %s46 = sphi 0, %s45
      %s62 = sphi 0, %s46
      %s66 = sphi 0, %s66
      %s68 = sphi 0, %s66
      %s69 = sphi 0, %s68
      %s83 = sphi 0, %s69
      %s87 = sphi 0, %s87
      %s89 = sphi 0, %s87
      %s90 = sphi 0, %s89
      %s104 = sphi 0, %s90
      %s108 = sphi 0, %s108
      %s110 = sphi 0, %s108
      %s111 = sphi 0, %s110
      %s125 = sphi 0, %s111
      %s129 = sphi 0, %s129
      %s131 = sphi 0, %s129
      %s132 = sphi 0, %s131
      %s146 = sphi 0, %s132
      %s150 = sphi 0, %s150
      %s152 = sphi 0, %s150
      %s153 = sphi 0, %s152
      %s167 = sphi 0, %s153
      %s171 = sphi 0, %s171
      %s173 = sphi 0, %s171
      %s174 = sphi 0, %s173
      %s188 = sphi 0, %s174
      %s192 = sphi 0, %s192
      %s194 = sphi 0, %s192
      %s195 = sphi 0, %s194
      %s209 = sphi 0, %s195
      %s213 = sphi 0, %s213
      %s215 = sphi 0, %s213
      %s216 = sphi 0, %s215
      %s230 = sphi 0, %s216
      %s234 = sphi 0, %s234
      %s236 = sphi 0, %s234
      %s237 = sphi 0, %s236
      %s251 = sphi 0, %s237
      %s255 = sphi 0, %s255
      %s257 = sphi 0, %s255
      %s258 = sphi 0, %s257
      %s272 = sphi 0, %s258
      %s278 = sphi 0, %s280
      %s281 = sphi 0, %s278
      %s282 = sphi 0, %s281
      %s298 = sphi 0, %s282
    $region4: #{fused_residual_group.1} parent=1 // loop_header_branch
      %23 = sbr.rel (%p21) target = $region8
    $region5: #{fused_residual_group.1} parent=1 // loop_body
      %s25 = ssub.s32 %s20, 1
      %s26 = ssub.s32 %s20, 2
      %s33 = sadd.s32 1, %s28
      %p34 = scmp.ge.s32.totalorder %s33, 4
      %s35 = scalar_select %p34, 0, %s33
      %s36 = sadd.s32 1, %s27
      %s37 = scalar_select %p34, %s36, %s27
      %p38 = scmp.ge.s32.totalorder %s37, 2
      %s39 = scalar_select %p38, 0, %s37
      %s40 = ssub.s32 %s27, %s39
      %p41 = scmp.eq.s32.totalorder %s40, 0
      %s43 = sadd.s32 %s42, 1
      %s44 = scalar_select %p41, %s42, %s43
      %p47 = pneg %p41
      %p48 = scmp.eq.s32.totalorder %s20, 7
      %p49 = por %p47, %p48
      %p50 = scmp.ne.s32.totalorder %s42, %s45
      %p51 = scmp.eq.s32.totalorder %s20, 0
      %p52 = por %p50, %p51
      %p53 = scmp.ne.s32.totalorder %s42, %s45
      %p54 = scmp.eq.s32.totalorder %s25, 7
      %p55 = por %p53, %p54
      %p56 = scmp.ne.s32.totalorder %s45, %s46
      %p57 = scmp.eq.s32.totalorder %s25, 0
      %p58 = por %p56, %p57
      %p59 = scmp.ne.s32.totalorder %s45, %s46
      %p60 = scmp.eq.s32.totalorder %s26, 7
      %p61 = por %p59, %p60
      %p63 = scmp.ne.s32.totalorder %s46, %s62
      %p64 = scmp.eq.s32.totalorder %s26, 0
      %p65 = por %p63, %p64
      %s67 = sadd.s32 %s66, 1
      %p70 = scmp.eq.s32.totalorder %s20, 7
      %p71 = scmp.ne.s32.totalorder %s66, %s68
      %p72 = scmp.eq.s32.totalorder %s20, 0
      %p73 = por %p71, %p72
      %p74 = scmp.ne.s32.totalorder %s66, %s68
      %p75 = scmp.eq.s32.totalorder %s25, 7
      %p76 = por %p74, %p75
      %p77 = scmp.ne.s32.totalorder %s68, %s69
      %p78 = scmp.eq.s32.totalorder %s25, 0
      %p79 = por %p77, %p78
      %p80 = scmp.ne.s32.totalorder %s68, %s69
      %p81 = scmp.eq.s32.totalorder %s26, 7
      %p82 = por %p80, %p81
      %p84 = scmp.ne.s32.totalorder %s69, %s83
      %p85 = scmp.eq.s32.totalorder %s26, 0
      %p86 = por %p84, %p85
      %s88 = sadd.s32 %s87, 1
      %p91 = scmp.eq.s32.totalorder %s20, 7
      %p92 = scmp.ne.s32.totalorder %s87, %s89
      %p93 = scmp.eq.s32.totalorder %s20, 0
      %p94 = por %p92, %p93
      %p95 = scmp.ne.s32.totalorder %s87, %s89
      %p96 = scmp.eq.s32.totalorder %s25, 7
      %p97 = por %p95, %p96
      %p98 = scmp.ne.s32.totalorder %s89, %s90
      %p99 = scmp.eq.s32.totalorder %s25, 0
      %p100 = por %p98, %p99
      %p101 = scmp.ne.s32.totalorder %s89, %s90
      %p102 = scmp.eq.s32.totalorder %s26, 7
      %p103 = por %p101, %p102
      %p105 = scmp.ne.s32.totalorder %s90, %s104
      %p106 = scmp.eq.s32.totalorder %s26, 0
      %p107 = por %p105, %p106
      %s109 = sadd.s32 %s108, 1
      %p112 = scmp.eq.s32.totalorder %s20, 7
      %p113 = scmp.ne.s32.totalorder %s108, %s110
      %p114 = scmp.eq.s32.totalorder %s20, 0
      %p115 = por %p113, %p114
      %p116 = scmp.ne.s32.totalorder %s108, %s110
      %p117 = scmp.eq.s32.totalorder %s25, 7
      %p118 = por %p116, %p117
      %p119 = scmp.ne.s32.totalorder %s110, %s111
      %p120 = scmp.eq.s32.totalorder %s25, 0
      %p121 = por %p119, %p120
      %p122 = scmp.ne.s32.totalorder %s110, %s111
      %p123 = scmp.eq.s32.totalorder %s26, 7
      %p124 = por %p122, %p123
      %p126 = scmp.ne.s32.totalorder %s111, %s125
      %p127 = scmp.eq.s32.totalorder %s26, 0
      %p128 = por %p126, %p127
      %s130 = sadd.s32 %s129, 1
      %p133 = scmp.eq.s32.totalorder %s20, 7
      %p134 = scmp.ne.s32.totalorder %s129, %s131
      %p135 = scmp.eq.s32.totalorder %s20, 0
      %p136 = por %p134, %p135
      %p137 = scmp.ne.s32.totalorder %s129, %s131
      %p138 = scmp.eq.s32.totalorder %s25, 7
      %p139 = por %p137, %p138
      %p140 = scmp.ne.s32.totalorder %s131, %s132
      %p141 = scmp.eq.s32.totalorder %s25, 0
      %p142 = por %p140, %p141
      %p143 = scmp.ne.s32.totalorder %s131, %s132
      %p144 = scmp.eq.s32.totalorder %s26, 7
      %p145 = por %p143, %p144
      %p147 = scmp.ne.s32.totalorder %s132, %s146
      %p148 = scmp.eq.s32.totalorder %s26, 0
      %p149 = por %p147, %p148
      %s151 = sadd.s32 %s150, 1
      %p154 = scmp.eq.s32.totalorder %s20, 7
      %p155 = scmp.ne.s32.totalorder %s150, %s152
      %p156 = scmp.eq.s32.totalorder %s20, 0
      %p157 = por %p155, %p156
      %p158 = scmp.ne.s32.totalorder %s150, %s152
      %p159 = scmp.eq.s32.totalorder %s25, 7
      %p160 = por %p158, %p159
      %p161 = scmp.ne.s32.totalorder %s152, %s153
      %p162 = scmp.eq.s32.totalorder %s25, 0
      %p163 = por %p161, %p162
      %p164 = scmp.ne.s32.totalorder %s152, %s153
      %p165 = scmp.eq.s32.totalorder %s26, 7
      %p166 = por %p164, %p165
      %p168 = scmp.ne.s32.totalorder %s153, %s167
      %p169 = scmp.eq.s32.totalorder %s26, 0
      %p170 = por %p168, %p169
      %s172 = sadd.s32 %s171, 1
      %p175 = scmp.eq.s32.totalorder %s20, 7
      %p176 = scmp.ne.s32.totalorder %s171, %s173
      %p177 = scmp.eq.s32.totalorder %s20, 0
      %p178 = por %p176, %p177
      %p179 = scmp.ne.s32.totalorder %s171, %s173
      %p180 = scmp.eq.s32.totalorder %s25, 7
      %p181 = por %p179, %p180
      %p182 = scmp.ne.s32.totalorder %s173, %s174
      %p183 = scmp.eq.s32.totalorder %s25, 0
      %p184 = por %p182, %p183
      %p185 = scmp.ne.s32.totalorder %s173, %s174
      %p186 = scmp.eq.s32.totalorder %s26, 7
      %p187 = por %p185, %p186
      %p189 = scmp.ne.s32.totalorder %s174, %s188
      %p190 = scmp.eq.s32.totalorder %s26, 0
      %p191 = por %p189, %p190
      %s193 = sadd.s32 %s192, 1
      %p196 = scmp.eq.s32.totalorder %s20, 7
      %p197 = scmp.ne.s32.totalorder %s192, %s194
      %p198 = scmp.eq.s32.totalorder %s20, 0
      %p199 = por %p197, %p198
      %p200 = scmp.ne.s32.totalorder %s192, %s194
      %p201 = scmp.eq.s32.totalorder %s25, 7
      %p202 = por %p200, %p201
      %p203 = scmp.ne.s32.totalorder %s194, %s195
      %p204 = scmp.eq.s32.totalorder %s25, 0
      %p205 = por %p203, %p204
      %p206 = scmp.ne.s32.totalorder %s194, %s195
      %p207 = scmp.eq.s32.totalorder %s26, 7
      %p208 = por %p206, %p207
      %p210 = scmp.ne.s32.totalorder %s195, %s209
      %p211 = scmp.eq.s32.totalorder %s26, 0
      %p212 = por %p210, %p211
      %s214 = sadd.s32 %s213, 1
      %p217 = scmp.eq.s32.totalorder %s20, 7
      %p218 = scmp.ne.s32.totalorder %s213, %s215
      %p219 = scmp.eq.s32.totalorder %s20, 0
      %p220 = por %p218, %p219
      %p221 = scmp.ne.s32.totalorder %s213, %s215
      %p222 = scmp.eq.s32.totalorder %s25, 7
      %p223 = por %p221, %p222
      %p224 = scmp.ne.s32.totalorder %s215, %s216
      %p225 = scmp.eq.s32.totalorder %s25, 0
      %p226 = por %p224, %p225
      %p227 = scmp.ne.s32.totalorder %s215, %s216
      %p228 = scmp.eq.s32.totalorder %s26, 7
      %p229 = por %p227, %p228
      %p231 = scmp.ne.s32.totalorder %s216, %s230
      %p232 = scmp.eq.s32.totalorder %s26, 0
      %p233 = por %p231, %p232
      %s235 = sadd.s32 %s234, 1
      %p238 = scmp.eq.s32.totalorder %s20, 7
      %p239 = scmp.ne.s32.totalorder %s234, %s236
      %p240 = scmp.eq.s32.totalorder %s20, 0
      %p241 = por %p239, %p240
      %p242 = scmp.ne.s32.totalorder %s234, %s236
      %p243 = scmp.eq.s32.totalorder %s25, 7
      %p244 = por %p242, %p243
      %p245 = scmp.ne.s32.totalorder %s236, %s237
      %p246 = scmp.eq.s32.totalorder %s25, 0
      %p247 = por %p245, %p246
      %p248 = scmp.ne.s32.totalorder %s236, %s237
      %p249 = scmp.eq.s32.totalorder %s26, 7
      %p250 = por %p248, %p249
      %p252 = scmp.ne.s32.totalorder %s237, %s251
      %p253 = scmp.eq.s32.totalorder %s26, 0
      %p254 = por %p252, %p253
      %s256 = sadd.s32 %s255, 1
      %p259 = scmp.eq.s32.totalorder %s20, 7
      %p260 = scmp.ne.s32.totalorder %s255, %s257
      %p261 = scmp.eq.s32.totalorder %s20, 0
      %p262 = por %p260, %p261
      %p263 = scmp.ne.s32.totalorder %s255, %s257
      %p264 = scmp.eq.s32.totalorder %s25, 7
      %p265 = por %p263, %p264
      %p266 = scmp.ne.s32.totalorder %s257, %s258
      %p267 = scmp.eq.s32.totalorder %s25, 0
      %p268 = por %p266, %p267
      %p269 = scmp.ne.s32.totalorder %s257, %s258
      %p270 = scmp.eq.s32.totalorder %s26, 7
      %p271 = por %p269, %p270
      %p273 = scmp.ne.s32.totalorder %s258, %s272
      %p274 = scmp.eq.s32.totalorder %s26, 0
      %p275 = por %p273, %p274
      %s276 = ssub.s32 %s27, %s39
      %p277 = scmp.eq.s32.totalorder %s276, 0
      %s279 = sadd.s32 %s278, 1
      %s280 = scalar_select %p277, %s278, %s279
      %p283 = pneg %p277
      %p284 = scmp.eq.s32.totalorder %s20, 7
      %p285 = por %p283, %p284
      %p286 = scmp.ne.s32.totalorder %s278, %s281
      %p287 = scmp.eq.s32.totalorder %s20, 0
      %p288 = por %p286, %p287
      %p289 = scmp.ne.s32.totalorder %s278, %s281
      %p290 = scmp.eq.s32.totalorder %s25, 7
      %p291 = por %p289, %p290
      %p292 = scmp.ne.s32.totalorder %s281, %s282
      %p293 = scmp.eq.s32.totalorder %s25, 0
      %p294 = por %p292, %p293
      %p295 = scmp.ne.s32.totalorder %s281, %s282
      %p296 = scmp.eq.s32.totalorder %s26, 7
      %p297 = por %p295, %p296
      %p299 = scmp.ne.s32.totalorder %s282, %s298
      %p300 = scmp.eq.s32.totalorder %s26, 0
      %p301 = por %p299, %p300
      %p302 = scmp.le.s32.totalorder 1, %s20
      %p303 = scmp.lt.s32.totalorder %s20, 9
      %p304 = pnand %p302, %p303
      %p305 = pneg %p304
      // Predicated region
      $region9: #{fused_residual_group.1} parent=5 // pred_check
        _
      $region10: #{fused_residual_group.1} parent=5 // pred_check_branch
        %307 = sbr.rel (%p304) target = $region12
      $region11: #{fused_residual_group.1} parent=5 // pred_region
        %s308 = ssub.s32 %s20, 1
        // Predicated region
        $region13: #{fused_residual_group.1} parent=11 // pred_check
          %p309 = pneg %p79
        $region14: #{fused_residual_group.1} parent=11 // pred_check_branch
          %311 = sbr.rel (%p309) target = $region16
        $region15: #{fused_residual_group.1} parent=11 // pred_region
          _
        $region16: #{fused_residual_group.1} parent=11 // pred_fallthru
          _
        // Predicated region
        $region17: #{fused_residual_group.1} parent=11 // pred_check
          %p312 = pneg %p100
        $region18: #{fused_residual_group.1} parent=11 // pred_check_branch
          %314 = sbr.rel (%p312) target = $region20
        $region19: #{fused_residual_group.1} parent=11 // pred_region
          _
        $region20: #{fused_residual_group.1} parent=11 // pred_fallthru
          _
        // Predicated region
        $region21: #{fused_residual_group.1} parent=11 // pred_check
          %p315 = pneg %p121
        $region22: #{fused_residual_group.1} parent=11 // pred_check_branch
          %317 = sbr.rel (%p315) target = $region24
        $region23: #{fused_residual_group.1} parent=11 // pred_region
          _
        $region24: #{fused_residual_group.1} parent=11 // pred_fallthru
          _
        // Predicated region
        $region25: #{fused_residual_group.1} parent=11 // pred_check
          %p318 = pneg %p142
        $region26: #{fused_residual_group.1} parent=11 // pred_check_branch
          %320 = sbr.rel (%p318) target = $region28
        $region27: #{fused_residual_group.1} parent=11 // pred_region
          _
        $region28: #{fused_residual_group.1} parent=11 // pred_fallthru
          _
        // Predicated region
        $region29: #{fused_residual_group.1} parent=11 // pred_check
          %p321 = pneg %p163
        $region30: #{fused_residual_group.1} parent=11 // pred_check_branch
          %323 = sbr.rel (%p321) target = $region32
        $region31: #{fused_residual_group.1} parent=11 // pred_region
          _
        $region32: #{fused_residual_group.1} parent=11 // pred_fallthru
          _
        // Predicated region
        $region33: #{fused_residual_group.1} parent=11 // pred_check
          %p324 = pneg %p184
        $region34: #{fused_residual_group.1} parent=11 // pred_check_branch
          %326 = sbr.rel (%p324) target = $region36
        $region35: #{fused_residual_group.1} parent=11 // pred_region
          _
        $region36: #{fused_residual_group.1} parent=11 // pred_fallthru
          _
        // Predicated region
        $region37: #{fused_residual_group.1} parent=11 // pred_check
          %p327 = pneg %p205
        $region38: #{fused_residual_group.1} parent=11 // pred_check_branch
          %329 = sbr.rel (%p327) target = $region40
        $region39: #{fused_residual_group.1} parent=11 // pred_region
          _
        $region40: #{fused_residual_group.1} parent=11 // pred_fallthru
          _
        // Predicated region
        $region41: #{fused_residual_group.1} parent=11 // pred_check
          %p330 = pneg %p226
        $region42: #{fused_residual_group.1} parent=11 // pred_check_branch
          %332 = sbr.rel (%p330) target = $region44
        $region43: #{fused_residual_group.1} parent=11 // pred_region
          _
        $region44: #{fused_residual_group.1} parent=11 // pred_fallthru
          _
        // Predicated region
        $region45: #{fused_residual_group.1} parent=11 // pred_check
          %p333 = pneg %p247
        $region46: #{fused_residual_group.1} parent=11 // pred_check_branch
          %335 = sbr.rel (%p333) target = $region48
        $region47: #{fused_residual_group.1} parent=11 // pred_region
          _
        $region48: #{fused_residual_group.1} parent=11 // pred_fallthru
          _
        // Predicated region
        $region49: #{fused_residual_group.1} parent=11 // pred_check
          %p336 = pneg %p268
        $region50: #{fused_residual_group.1} parent=11 // pred_check_branch
          %338 = sbr.rel (%p336) target = $region52
        $region51: #{fused_residual_group.1} parent=11 // pred_region
          _
        $region52: #{fused_residual_group.1} parent=11 // pred_fallthru
          _
      $region12: #{fused_residual_group.1} parent=5 // pred_fallthru
        _
      %p339 = scmp.lt.s32.totalorder %s20, 8
      // Predicated region
      $region53: #{fused_residual_group.1} parent=5 // pred_check
        %p340 = pneg %p339
      $region54: #{fused_residual_group.1} parent=5 // pred_check_branch
        %342 = sbr.rel (%p340) target = $region56
      $region55: #{fused_residual_group.1} parent=5 // pred_region
        // Predicated region
        $region57: #{fused_residual_group.1} parent=55 // pred_check
          %p343 = pneg %p52
        $region58: #{fused_residual_group.1} parent=55 // pred_check_branch
          %345 = sbr.rel (%p343) target = $region60
        $region59: #{fused_residual_group.1} parent=55 // pred_region
          %p346 = scmp.lt.s32.totalorder %s27, 1
          %s347 = scalar_select %p346, %s27, 1
          %s348 = smul.addr %s347, 32
          %s349 = smul.addr %s348, 8
          %s350 = scalar_lea.vmem %s0, %s349
        $region60: #{fused_residual_group.1} parent=55 // pred_fallthru
          _
      $region56: #{fused_residual_group.1} parent=5 // pred_fallthru
        _
      %p351 = scmp.le.s32.totalorder 1, %s20
      %p352 = scmp.lt.s32.totalorder %s20, 9
      %p353 = pnand %p351, %p352
      %p354 = pneg %p353
      // Predicated region
      $region61: #{fused_residual_group.1} parent=5 // pred_check
        _
      $region62: #{fused_residual_group.1} parent=5 // pred_check_branch
        %356 = sbr.rel (%p353) target = $region64
      $region63: #{fused_residual_group.1} parent=5 // pred_region
        %s357 = ssub.s32 %s20, 1
        %p358 = scmp.lt.s32.totalorder %s29, 1
        %s359 = scalar_select %p358, %s29, 1
        %s360 = smul.addr %s359, 32
        %s361 = smul.addr %s360, 8
        %s362 = scalar_lea.vmem %s0, %s361
        %p363 = pneg %p58
        %p364 = pneg %p55
        %p365 = pneg %p79
        %p366 = pneg %p76
        %p367 = pneg %p100
        %p368 = pneg %p97
        %p369 = pneg %p121
        %p370 = pneg %p118
        %p371 = pneg %p142
        %p372 = pneg %p139
        %p373 = pneg %p163
        %p374 = pneg %p160
        %p375 = pneg %p184
        %p376 = pneg %p181
        %p377 = pneg %p205
        %p378 = pneg %p202
        %p379 = pneg %p226
        %p380 = pneg %p223
        %p381 = pneg %p247
        %p382 = pneg %p244
        %p383 = pneg %p268
        %p384 = pneg %p265
        %p385 = pneg %p294
        %p386 = pneg %p291
        %s387 = sand.u32 %s281, 1
        %s388 = scalar_lea.sflag [#allocation6], %s387
        %s389 = sand.u32 %s281, 1
        %s390 = smul.addr %s389, 256
        %s391 = scalar_lea.vmem [#allocation5], %s390
        %p392 = scmp.lt.s32.totalorder %s29, 1
        %s393 = scalar_select %p392, %s29, 1
        %s394 = smul.addr %s393, 32
        %s395 = smul.addr %s394, 8
        %s396 = scalar_lea.vmem %s0, %s395
        %p398 = scmp.eq.s32.totalorder %s30, 0
        // Predicated region
        $region65: #{fused_residual_group.1} parent=63 // pred_check
          %p399 = pneg %p398
        $region66: #{fused_residual_group.1} parent=63 // pred_check_branch
          %401 = sbr.rel (%p399) target = $region68
        $region67: #{fused_residual_group.1} parent=63 // pred_region
          %vm402 = vcmask 261120
          %403 = vst.msk [vmem:[#allocation2] sm:$0xff] %vm402, 0.0
          %404 = vst.msk [vmem:[#allocation2 + $0x8] sm:$0xff] %vm402, 0.0
          %vm405 = vcmask 254976
          %406 = vst.msk [vmem:[#allocation2 + $0x10] sm:$0x3] %vm405, 0.0
          %407 = vst.msk [vmem:[#allocation2 + $0x18] sm:$0xff] %vm402, 0.0
          %408 = vst.msk [vmem:[#allocation2 + $0x20] sm:$0xff] %vm402, 0.0
          %409 = vst.msk [vmem:[#allocation2 + $0x28] sm:$0x3] %vm405, 0.0
          %410 = vst.msk [vmem:[#allocation2 + $0x30] sm:$0xff] %vm402, 0.0
          %411 = vst.msk [vmem:[#allocation2 + $0x38] sm:$0xff] %vm402, 0.0
          %412 = vst.msk [vmem:[#allocation2 + $0x40] sm:$0x3] %vm405, 0.0
          %413 = vst.msk [vmem:[#allocation2 + $0x48] sm:$0xff] %vm402, 0.0
          %414 = vst.msk [vmem:[#allocation2 + $0x50] sm:$0xff] %vm402, 0.0
          %415 = vst.msk [vmem:[#allocation2 + $0x58] sm:$0x3] %vm405, 0.0
          %416 = vst.msk [vmem:[#allocation2 + $0x60] sm:$0xff] %vm402, 0.0
          %417 = vst.msk [vmem:[#allocation2 + $0x68] sm:$0xff] %vm402, 0.0
          %418 = vst.msk [vmem:[#allocation2 + $0x70] sm:$0x3] %vm405, 0.0
          %419 = vst.msk [vmem:[#allocation2 + $0x78] sm:$0xff] %vm402, 0.0
          %420 = vst.msk [vmem:[#allocation2 + $0x80] sm:$0xff] %vm402, 0.0
          %421 = vst.msk [vmem:[#allocation2 + $0x88] sm:$0x3] %vm405, 0.0
          %422 = vst.msk [vmem:[#allocation2 + $0x90] sm:$0xff] %vm402, 0.0
          %423 = vst.msk [vmem:[#allocation2 + $0x98] sm:$0xff] %vm402, 0.0
          %424 = vst.msk [vmem:[#allocation2 + $0xa0] sm:$0x3] %vm405, 0.0
          %425 = vst.msk [vmem:[#allocation2 + $0xa8] sm:$0xff] %vm402, 0.0
          %426 = vst.msk [vmem:[#allocation2 + $0xb0] sm:$0xff] %vm402, 0.0
          %427 = vst.msk [vmem:[#allocation2 + $0xb8] sm:$0x3] %vm405, 0.0
          %428 = vst.msk [vmem:[#allocation2 + $0xc0] sm:$0xff] %vm402, 0.0
          %429 = vst.msk [vmem:[#allocation2 + $0xc8] sm:$0xff] %vm402, 0.0
          %430 = vst.msk [vmem:[#allocation2 + $0xd0] sm:$0x3] %vm405, 0.0
          %431 = vst.msk [vmem:[#allocation2 + $0xd8] sm:$0xff] %vm402, 0.0
          %432 = vst.msk [vmem:[#allocation2 + $0xe0] sm:$0xff] %vm402, 0.0
          %433 = vst.msk [vmem:[#allocation2 + $0xe8] sm:$0x3] %vm405, 0.0
          %434 = vst.msk [vmem:[#allocation2 + $0xf0] sm:$0xff] %vm402, 0.0
          %435 = vst.msk [vmem:[#allocation2 + $0xf8] sm:$0xff] %vm402, 0.0
          %436 = vst.msk [vmem:[#allocation2 + $0x100] sm:$0x3] %vm405, 0.0
          %437 = vst.msk [vmem:[#allocation2 + $0x108] sm:$0xff] %vm402, 0.0
          %438 = vst.msk [vmem:[#allocation2 + $0x110] sm:$0xff] %vm402, 0.0
          %439 = vst.msk [vmem:[#allocation2 + $0x118] sm:$0x3] %vm405, 0.0
          %440 = vst.msk [vmem:[#allocation2 + $0x120] sm:$0xff] %vm402, 0.0
          %441 = vst.msk [vmem:[#allocation2 + $0x128] sm:$0xff] %vm402, 0.0
          %442 = vst.msk [vmem:[#allocation2 + $0x130] sm:$0x3] %vm405, 0.0
          %443 = vst.msk [vmem:[#allocation2 + $0x138] sm:$0xff] %vm402, 0.0
          %444 = vst.msk [vmem:[#allocation2 + $0x140] sm:$0xff] %vm402, 0.0
          %445 = vst.msk [vmem:[#allocation2 + $0x148] sm:$0x3] %vm405, 0.0
          %446 = vst.msk [vmem:[#allocation2 + $0x150] sm:$0xff] %vm402, 0.0
          %447 = vst.msk [vmem:[#allocation2 + $0x158] sm:$0xff] %vm402, 0.0
          %448 = vst.msk [vmem:[#allocation2 + $0x160] sm:$0x3] %vm405, 0.0
          %449 = vst.msk [vmem:[#allocation2 + $0x168] sm:$0xff] %vm402, 0.0
          %450 = vst.msk [vmem:[#allocation2 + $0x170] sm:$0xff] %vm402, 0.0
          %451 = vst.msk [vmem:[#allocation2 + $0x178] sm:$0x3] %vm405, 0.0
          %452 = vst.msk [vmem:[#allocation2 + $0x180] sm:$0xff] %vm402, 0.0
          %453 = vst.msk [vmem:[#allocation2 + $0x188] sm:$0xff] %vm402, 0.0
          %454 = vst.msk [vmem:[#allocation2 + $0x190] sm:$0x3] %vm405, 0.0
          %455 = vst.msk [vmem:[#allocation2 + $0x198] sm:$0xff] %vm402, 0.0
          %456 = vst.msk [vmem:[#allocation2 + $0x1a0] sm:$0xff] %vm402, 0.0
          %457 = vst.msk [vmem:[#allocation2 + $0x1a8] sm:$0x3] %vm405, 0.0
          %458 = vst.msk [vmem:[#allocation3] sm:$0xff] %vm402, 0.0
          %459 = vst.msk [vmem:[#allocation3 + $0x8] sm:$0xff] %vm402, 0.0
          %460 = vst.msk [vmem:[#allocation3 + $0x10] sm:$0x3] %vm405, 0.0
          %461 = vst.msk [vmem:[#allocation3 + $0x18] sm:$0xff] %vm402, 0.0
          %462 = vst.msk [vmem:[#allocation3 + $0x20] sm:$0xff] %vm402, 0.0
          %463 = vst.msk [vmem:[#allocation3 + $0x28] sm:$0x3] %vm405, 0.0
          %464 = vst.msk [vmem:[#allocation3 + $0x30] sm:$0xff] %vm402, 0.0
          %465 = vst.msk [vmem:[#allocation3 + $0x38] sm:$0xff] %vm402, 0.0
          %466 = vst.msk [vmem:[#allocation3 + $0x40] sm:$0x3] %vm405, 0.0
          %467 = vst.msk [vmem:[#allocation3 + $0x48] sm:$0xff] %vm402, 0.0
          %468 = vst.msk [vmem:[#allocation3 + $0x50] sm:$0xff] %vm402, 0.0
          %469 = vst.msk [vmem:[#allocation3 + $0x58] sm:$0x3] %vm405, 0.0
          %470 = vst.msk [vmem:[#allocation3 + $0x60] sm:$0xff] %vm402, 0.0
          %471 = vst.msk [vmem:[#allocation3 + $0x68] sm:$0xff] %vm402, 0.0
          %472 = vst.msk [vmem:[#allocation3 + $0x70] sm:$0x3] %vm405, 0.0
          %473 = vst.msk [vmem:[#allocation3 + $0x78] sm:$0xff] %vm402, 0.0
          %474 = vst.msk [vmem:[#allocation3 + $0x80] sm:$0xff] %vm402, 0.0
          %475 = vst.msk [vmem:[#allocation3 + $0x88] sm:$0x3] %vm405, 0.0
          %476 = vst.msk [vmem:[#allocation3 + $0x90] sm:$0xff] %vm402, 0.0
          %477 = vst.msk [vmem:[#allocation3 + $0x98] sm:$0xff] %vm402, 0.0
          %478 = vst.msk [vmem:[#allocation3 + $0xa0] sm:$0x3] %vm405, 0.0
          %479 = vst.msk [vmem:[#allocation3 + $0xa8] sm:$0xff] %vm402, 0.0
          %480 = vst.msk [vmem:[#allocation3 + $0xb0] sm:$0xff] %vm402, 0.0
          %481 = vst.msk [vmem:[#allocation3 + $0xb8] sm:$0x3] %vm405, 0.0
          %482 = vst.msk [vmem:[#allocation3 + $0xc0] sm:$0xff] %vm402, 0.0
          %483 = vst.msk [vmem:[#allocation3 + $0xc8] sm:$0xff] %vm402, 0.0
          %484 = vst.msk [vmem:[#allocation3 + $0xd0] sm:$0x3] %vm405, 0.0
          %485 = vst.msk [vmem:[#allocation3 + $0xd8] sm:$0xff] %vm402, 0.0
          %486 = vst.msk [vmem:[#allocation3 + $0xe0] sm:$0xff] %vm402, 0.0
          %487 = vst.msk [vmem:[#allocation3 + $0xe8] sm:$0x3] %vm405, 0.0
          %488 = vst.msk [vmem:[#allocation3 + $0xf0] sm:$0xff] %vm402, 0.0
          %489 = vst.msk [vmem:[#allocation3 + $0xf8] sm:$0xff] %vm402, 0.0
          %490 = vst.msk [vmem:[#allocation3 + $0x100] sm:$0x3] %vm405, 0.0
          %491 = vst.msk [vmem:[#allocation3 + $0x108] sm:$0xff] %vm402, 0.0
          %492 = vst.msk [vmem:[#allocation3 + $0x110] sm:$0xff] %vm402, 0.0
          %493 = vst.msk [vmem:[#allocation3 + $0x118] sm:$0x3] %vm405, 0.0
          %494 = vst.msk [vmem:[#allocation3 + $0x120] sm:$0xff] %vm402, 0.0
          %495 = vst.msk [vmem:[#allocation3 + $0x128] sm:$0xff] %vm402, 0.0
          %496 = vst.msk [vmem:[#allocation3 + $0x130] sm:$0x3] %vm405, 0.0
          %497 = vst.msk [vmem:[#allocation3 + $0x138] sm:$0xff] %vm402, 0.0
          %498 = vst.msk [vmem:[#allocation3 + $0x140] sm:$0xff] %vm402, 0.0
          %499 = vst.msk [vmem:[#allocation3 + $0x148] sm:$0x3] %vm405, 0.0
          %500 = vst.msk [vmem:[#allocation3 + $0x150] sm:$0xff] %vm402, 0.0
          %501 = vst.msk [vmem:[#allocation3 + $0x158] sm:$0xff] %vm402, 0.0
          %502 = vst.msk [vmem:[#allocation3 + $0x160] sm:$0x3] %vm405, 0.0
          %503 = vst.msk [vmem:[#allocation3 + $0x168] sm:$0xff] %vm402, 0.0
          %504 = vst.msk [vmem:[#allocation3 + $0x170] sm:$0xff] %vm402, 0.0
          %505 = vst.msk [vmem:[#allocation3 + $0x178] sm:$0x3] %vm405, 0.0
          %506 = vst.msk [vmem:[#allocation3 + $0x180] sm:$0xff] %vm402, 0.0
          %507 = vst.msk [vmem:[#allocation3 + $0x188] sm:$0xff] %vm402, 0.0
          %508 = vst.msk [vmem:[#allocation3 + $0x190] sm:$0x3] %vm405, 0.0
          %509 = vst.msk [vmem:[#allocation3 + $0x198] sm:$0xff] %vm402, 0.0
          %510 = vst.msk [vmem:[#allocation3 + $0x1a0] sm:$0xff] %vm402, 0.0
          %511 = vst.msk [vmem:[#allocation3 + $0x1a8] sm:$0x3] %vm405, 0.0
          %v512 = vld [vmem:[%s396] sm:$0xff]
          %v513 = vld [vmem:[%s396 + $0x8] sm:$0xff]
          %v514 = vld [vmem:[%s396 + $0x10] sm:$0xff]
          %v515 = vld [vmem:[%s396 + $0x18] sm:$0xff]
          %v516 = vld [vmem:[%s396 + $0x20] sm:$0xff]
          %v517 = vld [vmem:[%s396 + $0x28] sm:$0xff]
          %v518 = vld [vmem:[%s396 + $0x30] sm:$0xff]
          %v519 = vld [vmem:[%s396 + $0x38] sm:$0xff]
          %v520 = vld [vmem:[%s396 + $0x40] sm:$0xff]
          %v521 = vld [vmem:[%s396 + $0x48] sm:$0xff]
          %v522 = vld [vmem:[%s396 + $0x50] sm:$0xff]
          %v523 = vld [vmem:[%s396 + $0x58] sm:$0xff]
          %v524 = vld [vmem:[%s396 + $0x60] sm:$0xff]
          %v525 = vld [vmem:[%s396 + $0x68] sm:$0xff]
          %v526 = vld [vmem:[%s396 + $0x70] sm:$0xff]
          %v527 = vld [vmem:[%s396 + $0x78] sm:$0xff]
          %v528 = vld [vmem:[%s396 + $0x80] sm:$0xff]
          %v529 = vld [vmem:[%s396 + $0x88] sm:$0xff]
          %v530 = vld [vmem:[%s396 + $0x90] sm:$0xff]
          %v531 = vld [vmem:[%s396 + $0x98] sm:$0xff]
          %v532 = vld [vmem:[%s396 + $0xa0] sm:$0xff]
          %v533 = vld [vmem:[%s396 + $0xa8] sm:$0xff]
          %v534 = vld [vmem:[%s396 + $0xb0] sm:$0xff]
          %v535 = vld [vmem:[%s396 + $0xb8] sm:$0xff]
          %v536 = vld [vmem:[%s396 + $0xc0] sm:$0xff]
          %v537 = vld [vmem:[%s396 + $0xc8] sm:$0xff]
          %v538 = vld [vmem:[%s396 + $0xd0] sm:$0xff]
          %v539 = vld [vmem:[%s396 + $0xd8] sm:$0xff]
          %v540 = vld [vmem:[%s396 + $0xe0] sm:$0xff]
          %v541 = vld [vmem:[%s396 + $0xe8] sm:$0xff]
          %v542 = vld [vmem:[%s396 + $0xf0] sm:$0xff]
          %v543 = vld [vmem:[%s396 + $0xf8] sm:$0xff]
          %s544 = scalar_lea.vmem [#allocation2], 24
          %545 = vst.msk [vmem:[%s544 + $0x1] sm:$0xff] %vm402, %v512
          %546 = vst.msk [vmem:[%s544 + $0x9] sm:$0xff] %vm402, %v513
          %547 = vst.msk [vmem:[%s544 + $0x19] sm:$0xff] %vm402, %v514
          %548 = vst.msk [vmem:[%s544 + $0x21] sm:$0xff] %vm402, %v515
          %549 = vst.msk [vmem:[%s544 + $0x31] sm:$0xff] %vm402, %v516
          %550 = vst.msk [vmem:[%s544 + $0x39] sm:$0xff] %vm402, %v517
          %551 = vst.msk [vmem:[%s544 + $0x49] sm:$0xff] %vm402, %v518
          %552 = vst.msk [vmem:[%s544 + $0x51] sm:$0xff] %vm402, %v519
          %553 = vst.msk [vmem:[%s544 + $0x61] sm:$0xff] %vm402, %v520
          %554 = vst.msk [vmem:[%s544 + $0x69] sm:$0xff] %vm402, %v521
          %555 = vst.msk [vmem:[%s544 + $0x79] sm:$0xff] %vm402, %v522
          %556 = vst.msk [vmem:[%s544 + $0x81] sm:$0xff] %vm402, %v523
          %557 = vst.msk [vmem:[%s544 + $0x91] sm:$0xff] %vm402, %v524
          %558 = vst.msk [vmem:[%s544 + $0x99] sm:$0xff] %vm402, %v525
          %559 = vst.msk [vmem:[%s544 + $0xa9] sm:$0xff] %vm402, %v526
          %560 = vst.msk [vmem:[%s544 + $0xb1] sm:$0xff] %vm402, %v527
          %561 = vst.msk [vmem:[%s544 + $0xc1] sm:$0xff] %vm402, %v528
          %562 = vst.msk [vmem:[%s544 + $0xc9] sm:$0xff] %vm402, %v529
          %563 = vst.msk [vmem:[%s544 + $0xd9] sm:$0xff] %vm402, %v530
          %564 = vst.msk [vmem:[%s544 + $0xe1] sm:$0xff] %vm402, %v531
          %565 = vst.msk [vmem:[%s544 + $0xf1] sm:$0xff] %vm402, %v532
          %566 = vst.msk [vmem:[%s544 + $0xf9] sm:$0xff] %vm402, %v533
          %567 = vst.msk [vmem:[%s544 + $0x109] sm:$0xff] %vm402, %v534
          %568 = vst.msk [vmem:[%s544 + $0x111] sm:$0xff] %vm402, %v535
          %569 = vst.msk [vmem:[%s544 + $0x121] sm:$0xff] %vm402, %v536
          %570 = vst.msk [vmem:[%s544 + $0x129] sm:$0xff] %vm402, %v537
          %571 = vst.msk [vmem:[%s544 + $0x139] sm:$0xff] %vm402, %v538
          %572 = vst.msk [vmem:[%s544 + $0x141] sm:$0xff] %vm402, %v539
          %573 = vst.msk [vmem:[%s544 + $0x151] sm:$0xff] %vm402, %v540
          %574 = vst.msk [vmem:[%s544 + $0x159] sm:$0xff] %vm402, %v541
          %575 = vst.msk [vmem:[%s544 + $0x169] sm:$0xff] %vm402, %v542
          %576 = vst.msk [vmem:[%s544 + $0x171] sm:$0xff] %vm402, %v543
        $region68: #{fused_residual_group.1} parent=63 // pred_fallthru
          _
        %s577 = smul.u32 %s30, 36
        %s578 = smul.addr %s577, 4
        %s579 = scalar_lea.vmem %s1, %s578
        %v580 = vld [vmem:[%s579] sm:$0xf]
        %v581 = vld [vmem:[%s579 + $0x4] sm:$0xf]
        %v582 = vld [vmem:[%s579 + $0x8] sm:$0xf]
        %v583 = vld [vmem:[%s579 + $0xc] sm:$0xf]
        %v584 = vld [vmem:[%s579 + $0x10] sm:$0xf]
        %v585 = vld [vmem:[%s579 + $0x14] sm:$0xf]
        %v586 = vld [vmem:[%s579 + $0x18] sm:$0xf]
        %v587 = vld [vmem:[%s579 + $0x1c] sm:$0xf]
        %v588 = vld [vmem:[%s579 + $0x20] sm:$0xf]
        %v589 = vld [vmem:[%s579 + $0x24] sm:$0xf]
        %v590 = vld [vmem:[%s579 + $0x28] sm:$0xf]
        %v591 = vld [vmem:[%s579 + $0x2c] sm:$0xf]
        %v592 = vld [vmem:[%s579 + $0x30] sm:$0xf]
        %v593 = vld [vmem:[%s579 + $0x34] sm:$0xf]
        %v594 = vld [vmem:[%s579 + $0x38] sm:$0xf]
        %v595 = vld [vmem:[%s579 + $0x3c] sm:$0xf]
        %v596 = vld [vmem:[%s579 + $0x40] sm:$0xf]
        %v597 = vld [vmem:[%s579 + $0x44] sm:$0xf]
        %v598 = vld [vmem:[%s579 + $0x48] sm:$0xf]
        %v599 = vld [vmem:[%s579 + $0x4c] sm:$0xf]
        %v600 = vld [vmem:[%s579 + $0x50] sm:$0xf]
        %v601 = vld [vmem:[%s579 + $0x54] sm:$0xf]
        %v602 = vld [vmem:[%s579 + $0x58] sm:$0xf]
        %v603 = vld [vmem:[%s579 + $0x5c] sm:$0xf]
        %v604 = vld [vmem:[%s579 + $0x60] sm:$0xf]
        %v605 = vld [vmem:[%s579 + $0x64] sm:$0xf]
        %v606 = vld [vmem:[%s579 + $0x68] sm:$0xf]
        %v607 = vld [vmem:[%s579 + $0x6c] sm:$0xf]
        %v608 = vld [vmem:[%s579 + $0x70] sm:$0xf]
        %v609 = vld [vmem:[%s579 + $0x74] sm:$0xf]
        %v610 = vld [vmem:[%s579 + $0x78] sm:$0xf]
        %v611 = vld [vmem:[%s579 + $0x7c] sm:$0xf]
        %v612 = vld [vmem:[%s579 + $0x80] sm:$0xf]
        %v613 = vld [vmem:[%s579 + $0x84] sm:$0xf]
        %v614 = vld [vmem:[%s579 + $0x88] sm:$0xf]
        %v615 = vld [vmem:[%s579 + $0x8c] sm:$0xf]
        %s616 = scalar_lea.vmem %s2, %s30
        %v617 = vld [vmem:[%s616] sm:$0x1]
        %v618 = vld [vmem:[#allocation2] sm:$0xff]
        %v619 = vld [vmem:[#allocation2 + $0x8] sm:$0xff]
        %v620 = vld [vmem:[#allocation2 + $0x18] sm:$0xff]
        %v621 = vld [vmem:[#allocation2 + $0x20] sm:$0xff]
        %v622 = vld [vmem:[#allocation2 + $0x30] sm:$0xff]
        %v623 = vld [vmem:[#allocation2 + $0x38] sm:$0xff]
        %v624 = vld [vmem:[#allocation2 + $0x48] sm:$0xff]
        %v625 = vld [vmem:[#allocation2 + $0x50] sm:$0xff]
        %v626 = vld [vmem:[#allocation2 + $0x60] sm:$0xff]
        %v627 = vld [vmem:[#allocation2 + $0x68] sm:$0xff]
        %v628 = vld [vmem:[#allocation2 + $0x78] sm:$0xff]
        %v629 = vld [vmem:[#allocation2 + $0x80] sm:$0xff]
        %v630 = vld [vmem:[#allocation2 + $0x90] sm:$0xff]
        %v631 = vld [vmem:[#allocation2 + $0x98] sm:$0xff]
        %v632 = vld [vmem:[#allocation2 + $0xa8] sm:$0xff]
        %v633 = vld [vmem:[#allocation2 + $0xb0] sm:$0xff]
        %v634 = vld [vmem:[#allocation2 + $0xc0] sm:$0xff]
        %v635 = vld [vmem:[#allocation2 + $0xc8] sm:$0xff]
        %v636 = vld [vmem:[#allocation2 + $0xd8] sm:$0xff]
        %v637 = vld [vmem:[#allocation2 + $0xe0] sm:$0xff]
        %v638 = vld [vmem:[#allocation2 + $0xf0] sm:$0xff]
        %v639 = vld [vmem:[#allocation2 + $0xf8] sm:$0xff]
        %v640 = vld [vmem:[#allocation2 + $0x108] sm:$0xff]
        %v641 = vld [vmem:[#allocation2 + $0x110] sm:$0xff]
        %v642 = vld [vmem:[#allocation2 + $0x120] sm:$0xff]
        %v643 = vld [vmem:[#allocation2 + $0x128] sm:$0xff]
        %v644 = vld [vmem:[#allocation2 + $0x138] sm:$0xff]
        %v645 = vld [vmem:[#allocation2 + $0x140] sm:$0xff]
        %v646 = vld [vmem:[#allocation2 + $0x150] sm:$0xff]
        %v647 = vld [vmem:[#allocation2 + $0x158] sm:$0xff]
        %v648 = vld [vmem:[#allocation2 + $0x168] sm:$0xff]
        %v649 = vld [vmem:[#allocation2 + $0x170] sm:$0xff]
        %vm650 = vcmask 261120
        %651 = vst.msk [vmem:[#allocation4] sm:$0xff] %vm650, %v618
        %652 = vst.msk [vmem:[#allocation4 + $0x18] sm:$0xff] %vm650, %v619
        %653 = vst.msk [vmem:[#allocation4 + $0x30] sm:$0xff] %vm650, %v620
        %654 = vst.msk [vmem:[#allocation4 + $0x48] sm:$0xff] %vm650, %v621
        %655 = vst.msk [vmem:[#allocation4 + $0x60] sm:$0xff] %vm650, %v622
        %656 = vst.msk [vmem:[#allocation4 + $0x78] sm:$0xff] %vm650, %v623
        %657 = vst.msk [vmem:[#allocation4 + $0x90] sm:$0xff] %vm650, %v624
        %658 = vst.msk [vmem:[#allocation4 + $0xa8] sm:$0xff] %vm650, %v625
        %659 = vst.msk [vmem:[#allocation4 + $0xc0] sm:$0xff] %vm650, %v626
        %660 = vst.msk [vmem:[#allocation4 + $0xd8] sm:$0xff] %vm650, %v627
        %661 = vst.msk [vmem:[#allocation4 + $0xf0] sm:$0xff] %vm650, %v628
        %662 = vst.msk [vmem:[#allocation4 + $0x108] sm:$0xff] %vm650, %v629
        %663 = vst.msk [vmem:[#allocation4 + $0x120] sm:$0xff] %vm650, %v630
        %664 = vst.msk [vmem:[#allocation4 + $0x138] sm:$0xff] %vm650, %v631
        %665 = vst.msk [vmem:[#allocation4 + $0x150] sm:$0xff] %vm650, %v632
        %666 = vst.msk [vmem:[#allocation4 + $0x168] sm:$0xff] %vm650, %v633
        %667 = vst.msk [vmem:[#allocation4 + $0x180] sm:$0xff] %vm650, %v634
        %668 = vst.msk [vmem:[#allocation4 + $0x198] sm:$0xff] %vm650, %v635
        %669 = vst.msk [vmem:[#allocation4 + $0x1b0] sm:$0xff] %vm650, %v636
        %670 = vst.msk [vmem:[#allocation4 + $0x1c8] sm:$0xff] %vm650, %v637
        %671 = vst.msk [vmem:[#allocation4 + $0x1e0] sm:$0xff] %vm650, %v638
        %672 = vst.msk [vmem:[#allocation4 + $0x1f8] sm:$0xff] %vm650, %v639
        %673 = vst.msk [vmem:[#allocation4 + $0x210] sm:$0xff] %vm650, %v640
        %674 = vst.msk [vmem:[#allocation4 + $0x228] sm:$0xff] %vm650, %v641
        %675 = vst.msk [vmem:[#allocation4 + $0x240] sm:$0xff] %vm650, %v642
        %676 = vst.msk [vmem:[#allocation4 + $0x258] sm:$0xff] %vm650, %v643
        %677 = vst.msk [vmem:[#allocation4 + $0x270] sm:$0xff] %vm650, %v644
        %678 = vst.msk [vmem:[#allocation4 + $0x288] sm:$0xff] %vm650, %v645
        %679 = vst.msk [vmem:[#allocation4 + $0x2a0] sm:$0xff] %vm650, %v646
        %680 = vst.msk [vmem:[#allocation4 + $0x2b8] sm:$0xff] %vm650, %v647
        %681 = vst.msk [vmem:[#allocation4 + $0x2d0] sm:$0xff] %vm650, %v648
        %682 = vst.msk [vmem:[#allocation4 + $0x2e8] sm:$0xff] %vm650, %v649
        %v683 = vld [vmem:[#allocation2 + $0x1] sm:$0xff]
        %v684 = vld [vmem:[#allocation2 + $0x9] sm:$0xff]
        %v685 = vld [vmem:[#allocation2 + $0x19] sm:$0xff]
        %v686 = vld [vmem:[#allocation2 + $0x21] sm:$0xff]
        %v687 = vld [vmem:[#allocation2 + $0x31] sm:$0xff]
        %v688 = vld [vmem:[#allocation2 + $0x39] sm:$0xff]
        %v689 = vld [vmem:[#allocation2 + $0x49] sm:$0xff]
        %v690 = vld [vmem:[#allocation2 + $0x51] sm:$0xff]
        %v691 = vld [vmem:[#allocation2 + $0x61] sm:$0xff]
        %v692 = vld [vmem:[#allocation2 + $0x69] sm:$0xff]
        %v693 = vld [vmem:[#allocation2 + $0x79] sm:$0xff]
        %v694 = vld [vmem:[#allocation2 + $0x81] sm:$0xff]
        %v695 = vld [vmem:[#allocation2 + $0x91] sm:$0xff]
        %v696 = vld [vmem:[#allocation2 + $0x99] sm:$0xff]
        %v697 = vld [vmem:[#allocation2 + $0xa9] sm:$0xff]
        %v698 = vld [vmem:[#allocation2 + $0xb1] sm:$0xff]
        %v699 = vld [vmem:[#allocation2 + $0xc1] sm:$0xff]
        %v700 = vld [vmem:[#allocation2 + $0xc9] sm:$0xff]
        %v701 = vld [vmem:[#allocation2 + $0xd9] sm:$0xff]
        %v702 = vld [vmem:[#allocation2 + $0xe1] sm:$0xff]
        %v703 = vld [vmem:[#allocation2 + $0xf1] sm:$0xff]
        %v704 = vld [vmem:[#allocation2 + $0xf9] sm:$0xff]
        %v705 = vld [vmem:[#allocation2 + $0x109] sm:$0xff]
        %v706 = vld [vmem:[#allocation2 + $0x111] sm:$0xff]
        %v707 = vld [vmem:[#allocation2 + $0x121] sm:$0xff]
        %v708 = vld [vmem:[#allocation2 + $0x129] sm:$0xff]
        %v709 = vld [vmem:[#allocation2 + $0x139] sm:$0xff]
        %v710 = vld [vmem:[#allocation2 + $0x141] sm:$0xff]
        %v711 = vld [vmem:[#allocation2 + $0x151] sm:$0xff]
        %v712 = vld [vmem:[#allocation2 + $0x159] sm:$0xff]
        %v713 = vld [vmem:[#allocation2 + $0x169] sm:$0xff]
        %v714 = vld [vmem:[#allocation2 + $0x171] sm:$0xff]
        %747 = vrot.lane.b32.xlu0 %v683, 32
        %v748 = vpop.permute.xlu0 %747
        %749 = vrot.lane.b32.xlu0 %v684, 32
        %v750 = vpop.permute.xlu0 %749
        %751 = vrot.lane.b32.xlu0 %v685, 32
        %v752 = vpop.permute.xlu0 %751
        %753 = vrot.lane.b32.xlu0 %v686, 32
        %v754 = vpop.permute.xlu0 %753
        %755 = vrot.lane.b32.xlu0 %v687, 32
        %v756 = vpop.permute.xlu0 %755
        %757 = vrot.lane.b32.xlu0 %v688, 32
        %v758 = vpop.permute.xlu0 %757
        %759 = vrot.lane.b32.xlu0 %v689, 32
        %v760 = vpop.permute.xlu0 %759
        %761 = vrot.lane.b32.xlu0 %v690, 32
        %v762 = vpop.permute.xlu0 %761
        %763 = vrot.lane.b32.xlu0 %v691, 32
        %v764 = vpop.permute.xlu0 %763
        %765 = vrot.lane.b32.xlu0 %v692, 32
        %v766 = vpop.permute.xlu0 %765
        %767 = vrot.lane.b32.xlu0 %v693, 32
        %v768 = vpop.permute.xlu0 %767
        %769 = vrot.lane.b32.xlu0 %v694, 32
        %v770 = vpop.permute.xlu0 %769
        %771 = vrot.lane.b32.xlu0 %v695, 32
        %v772 = vpop.permute.xlu0 %771
        %773 = vrot.lane.b32.xlu0 %v696, 32
        %v774 = vpop.permute.xlu0 %773
        %775 = vrot.lane.b32.xlu0 %v697, 32
        %v776 = vpop.permute.xlu0 %775
        %777 = vrot.lane.b32.xlu0 %v698, 32
        %v778 = vpop.permute.xlu0 %777
        %779 = vrot.lane.b32.xlu0 %v699, 32
        %v780 = vpop.permute.xlu0 %779
        %781 = vrot.lane.b32.xlu0 %v700, 32
        %v782 = vpop.permute.xlu0 %781
        %783 = vrot.lane.b32.xlu0 %v701, 32
        %v784 = vpop.permute.xlu0 %783
        %785 = vrot.lane.b32.xlu0 %v702, 32
        %v786 = vpop.permute.xlu0 %785
        %787 = vrot.lane.b32.xlu0 %v703, 32
        %v788 = vpop.permute.xlu0 %787
        %789 = vrot.lane.b32.xlu0 %v704, 32
        %v790 = vpop.permute.xlu0 %789
        %791 = vrot.lane.b32.xlu0 %v705, 32
        %v792 = vpop.permute.xlu0 %791
        %793 = vrot.lane.b32.xlu0 %v706, 32
        %v794 = vpop.permute.xlu0 %793
        %795 = vrot.lane.b32.xlu0 %v707, 32
        %v796 = vpop.permute.xlu0 %795
        %797 = vrot.lane.b32.xlu0 %v708, 32
        %v798 = vpop.permute.xlu0 %797
        %799 = vrot.lane.b32.xlu0 %v709, 32
        %v800 = vpop.permute.xlu0 %799
        %801 = vrot.lane.b32.xlu0 %v710, 32
        %v802 = vpop.permute.xlu0 %801
        %803 = vrot.lane.b32.xlu0 %v711, 32
        %v804 = vpop.permute.xlu0 %803
        %805 = vrot.lane.b32.xlu0 %v712, 32
        %v806 = vpop.permute.xlu0 %805
        %807 = vrot.lane.b32.xlu0 %v713, 32
        %v808 = vpop.permute.xlu0 %807
        %809 = vrot.lane.b32.xlu0 %v714, 32
        %v810 = vpop.permute.xlu0 %809
        %vm843 = vcmask 523520
        %844 = vst.msk [vmem:[#allocation4] sm:$0xff] %vm843, %v748
        %845 = vst.msk [vmem:[#allocation4 + $0x18] sm:$0xff] %vm843, %v750
        %846 = vst.msk [vmem:[#allocation4 + $0x30] sm:$0xff] %vm843, %v752
        %847 = vst.msk [vmem:[#allocation4 + $0x48] sm:$0xff] %vm843, %v754
        %848 = vst.msk [vmem:[#allocation4 + $0x60] sm:$0xff] %vm843, %v756
        %849 = vst.msk [vmem:[#allocation4 + $0x78] sm:$0xff] %vm843, %v758
        %850 = vst.msk [vmem:[#allocation4 + $0x90] sm:$0xff] %vm843, %v760
        %851 = vst.msk [vmem:[#allocation4 + $0xa8] sm:$0xff] %vm843, %v762
        %852 = vst.msk [vmem:[#allocation4 + $0xc0] sm:$0xff] %vm843, %v764
        %853 = vst.msk [vmem:[#allocation4 + $0xd8] sm:$0xff] %vm843, %v766
        %854 = vst.msk [vmem:[#allocation4 + $0xf0] sm:$0xff] %vm843, %v768
        %855 = vst.msk [vmem:[#allocation4 + $0x108] sm:$0xff] %vm843, %v770
        %856 = vst.msk [vmem:[#allocation4 + $0x120] sm:$0xff] %vm843, %v772
        %857 = vst.msk [vmem:[#allocation4 + $0x138] sm:$0xff] %vm843, %v774
        %858 = vst.msk [vmem:[#allocation4 + $0x150] sm:$0xff] %vm843, %v776
        %859 = vst.msk [vmem:[#allocation4 + $0x168] sm:$0xff] %vm843, %v778
        %860 = vst.msk [vmem:[#allocation4 + $0x180] sm:$0xff] %vm843, %v780
        %861 = vst.msk [vmem:[#allocation4 + $0x198] sm:$0xff] %vm843, %v782
        %862 = vst.msk [vmem:[#allocation4 + $0x1b0] sm:$0xff] %vm843, %v784
        %863 = vst.msk [vmem:[#allocation4 + $0x1c8] sm:$0xff] %vm843, %v786
        %864 = vst.msk [vmem:[#allocation4 + $0x1e0] sm:$0xff] %vm843, %v788
        %865 = vst.msk [vmem:[#allocation4 + $0x1f8] sm:$0xff] %vm843, %v790
        %866 = vst.msk [vmem:[#allocation4 + $0x210] sm:$0xff] %vm843, %v792
        %867 = vst.msk [vmem:[#allocation4 + $0x228] sm:$0xff] %vm843, %v794
        %868 = vst.msk [vmem:[#allocation4 + $0x240] sm:$0xff] %vm843, %v796
        %869 = vst.msk [vmem:[#allocation4 + $0x258] sm:$0xff] %vm843, %v798
        %870 = vst.msk [vmem:[#allocation4 + $0x270] sm:$0xff] %vm843, %v800
        %871 = vst.msk [vmem:[#allocation4 + $0x288] sm:$0xff] %vm843, %v802
        %872 = vst.msk [vmem:[#allocation4 + $0x2a0] sm:$0xff] %vm843, %v804
        %873 = vst.msk [vmem:[#allocation4 + $0x2b8] sm:$0xff] %vm843, %v806
        %874 = vst.msk [vmem:[#allocation4 + $0x2d0] sm:$0xff] %vm843, %v808
        %875 = vst.msk [vmem:[#allocation4 + $0x2e8] sm:$0xff] %vm843, %v810
        %v876 = vld [vmem:[#allocation2 + $0x2] sm:$0xff]
        %v877 = vld [vmem:[#allocation2 + $0xa] sm:$0xff]
        %v878 = vld [vmem:[#allocation2 + $0x1a] sm:$0xff]
        %v879 = vld [vmem:[#allocation2 + $0x22] sm:$0xff]
        %v880 = vld [vmem:[#allocation2 + $0x32] sm:$0xff]
        %v881 = vld [vmem:[#allocation2 + $0x3a] sm:$0xff]
        %v882 = vld [vmem:[#allocation2 + $0x4a] sm:$0xff]
        %v883 = vld [vmem:[#allocation2 + $0x52] sm:$0xff]
        %v884 = vld [vmem:[#allocation2 + $0x62] sm:$0xff]
        %v885 = vld [vmem:[#allocation2 + $0x6a] sm:$0xff]
        %v886 = vld [vmem:[#allocation2 + $0x7a] sm:$0xff]
        %v887 = vld [vmem:[#allocation2 + $0x82] sm:$0xff]
        %v888 = vld [vmem:[#allocation2 + $0x92] sm:$0xff]
        %v889 = vld [vmem:[#allocation2 + $0x9a] sm:$0xff]
        %v890 = vld [vmem:[#allocation2 + $0xaa] sm:$0xff]
        %v891 = vld [vmem:[#allocation2 + $0xb2] sm:$0xff]
        %v892 = vld [vmem:[#allocation2 + $0xc2] sm:$0xff]
        %v893 = vld [vmem:[#allocation2 + $0xca] sm:$0xff]
        %v894 = vld [vmem:[#allocation2 + $0xda] sm:$0xff]
        %v895 = vld [vmem:[#allocation2 + $0xe2] sm:$0xff]
        %v896 = vld [vmem:[#allocation2 + $0xf2] sm:$0xff]
        %v897 = vld [vmem:[#allocation2 + $0xfa] sm:$0xff]
        %v898 = vld [vmem:[#allocation2 + $0x10a] sm:$0xff]
        %v899 = vld [vmem:[#allocation2 + $0x112] sm:$0xff]
        %v900 = vld [vmem:[#allocation2 + $0x122] sm:$0xff]
        %v901 = vld [vmem:[#allocation2 + $0x12a] sm:$0xff]
        %v902 = vld [vmem:[#allocation2 + $0x13a] sm:$0xff]
        %v903 = vld [vmem:[#allocation2 + $0x142] sm:$0xff]
        %v904 = vld [vmem:[#allocation2 + $0x152] sm:$0xff]
        %v905 = vld [vmem:[#allocation2 + $0x15a] sm:$0xff]
        %v906 = vld [vmem:[#allocation2 + $0x16a] sm:$0xff]
        %v907 = vld [vmem:[#allocation2 + $0x172] sm:$0xff]
        %940 = vrot.lane.b32.xlu0 %v876, 64
        %v941 = vpop.permute.xlu0 %940
        %942 = vrot.lane.b32.xlu0 %v877, 64
        %v943 = vpop.permute.xlu0 %942
        %944 = vrot.lane.b32.xlu0 %v878, 64
        %v945 = vpop.permute.xlu0 %944
        %946 = vrot.lane.b32.xlu0 %v879, 64
        %v947 = vpop.permute.xlu0 %946
        %948 = vrot.lane.b32.xlu0 %v880, 64
        %v949 = vpop.permute.xlu0 %948
        %950 = vrot.lane.b32.xlu0 %v881, 64
        %v951 = vpop.permute.xlu0 %950
        %952 = vrot.lane.b32.xlu0 %v882, 64
        %v953 = vpop.permute.xlu0 %952
        %954 = vrot.lane.b32.xlu0 %v883, 64
        %v955 = vpop.permute.xlu0 %954
        %956 = vrot.lane.b32.xlu0 %v884, 64
        %v957 = vpop.permute.xlu0 %956
        %958 = vrot.lane.b32.xlu0 %v885, 64
        %v959 = vpop.permute.xlu0 %958
        %960 = vrot.lane.b32.xlu0 %v886, 64
        %v961 = vpop.permute.xlu0 %960
        %962 = vrot.lane.b32.xlu0 %v887, 64
        %v963 = vpop.permute.xlu0 %962
        %964 = vrot.lane.b32.xlu0 %v888, 64
        %v965 = vpop.permute.xlu0 %964
        %966 = vrot.lane.b32.xlu0 %v889, 64
        %v967 = vpop.permute.xlu0 %966
        %968 = vrot.lane.b32.xlu0 %v890, 64
        %v969 = vpop.permute.xlu0 %968
        %970 = vrot.lane.b32.xlu0 %v891, 64
        %v971 = vpop.permute.xlu0 %970
        %972 = vrot.lane.b32.xlu0 %v892, 64
        %v973 = vpop.permute.xlu0 %972
        %974 = vrot.lane.b32.xlu0 %v893, 64
        %v975 = vpop.permute.xlu0 %974
        %976 = vrot.lane.b32.xlu0 %v894, 64
        %v977 = vpop.permute.xlu0 %976
        %978 = vrot.lane.b32.xlu0 %v895, 64
        %v979 = vpop.permute.xlu0 %978
        %980 = vrot.lane.b32.xlu0 %v896, 64
        %v981 = vpop.permute.xlu0 %980
        %982 = vrot.lane.b32.xlu0 %v897, 64
        %v983 = vpop.permute.xlu0 %982
        %984 = vrot.lane.b32.xlu0 %v898, 64
        %v985 = vpop.permute.xlu0 %984
        %986 = vrot.lane.b32.xlu0 %v899, 64
        %v987 = vpop.permute.xlu0 %986
        %988 = vrot.lane.b32.xlu0 %v900, 64
        %v989 = vpop.permute.xlu0 %988
        %990 = vrot.lane.b32.xlu0 %v901, 64
        %v991 = vpop.permute.xlu0 %990
        %992 = vrot.lane.b32.xlu0 %v902, 64
        %v993 = vpop.permute.xlu0 %992
        %994 = vrot.lane.b32.xlu0 %v903, 64
        %v995 = vpop.permute.xlu0 %994
        %996 = vrot.lane.b32.xlu0 %v904, 64
        %v997 = vpop.permute.xlu0 %996
        %998 = vrot.lane.b32.xlu0 %v905, 64
        %v999 = vpop.permute.xlu0 %998
        %1000 = vrot.lane.b32.xlu0 %v906, 64
        %v1001 = vpop.permute.xlu0 %1000
        %1002 = vrot.lane.b32.xlu0 %v907, 64
        %v1003 = vpop.permute.xlu0 %1002
        %vm1036 = vcmask 785920
        %1037 = vst.msk [vmem:[#allocation4] sm:$0xff] %vm1036, %v941
        %1038 = vst.msk [vmem:[#allocation4 + $0x18] sm:$0xff] %vm1036, %v943
        %1039 = vst.msk [vmem:[#allocation4 + $0x30] sm:$0xff] %vm1036, %v945
        %1040 = vst.msk [vmem:[#allocation4 + $0x48] sm:$0xff] %vm1036, %v947
        %1041 = vst.msk [vmem:[#allocation4 + $0x60] sm:$0xff] %vm1036, %v949
        %1042 = vst.msk [vmem:[#allocation4 + $0x78] sm:$0xff] %vm1036, %v951
        %1043 = vst.msk [vmem:[#allocation4 + $0x90] sm:$0xff] %vm1036, %v953
        %1044 = vst.msk [vmem:[#allocation4 + $0xa8] sm:$0xff] %vm1036, %v955
        %1045 = vst.msk [vmem:[#allocation4 + $0xc0] sm:$0xff] %vm1036, %v957
        %1046 = vst.msk [vmem:[#allocation4 + $0xd8] sm:$0xff] %vm1036, %v959
        %1047 = vst.msk [vmem:[#allocation4 + $0xf0] sm:$0xff] %vm1036, %v961
        %1048 = vst.msk [vmem:[#allocation4 + $0x108] sm:$0xff] %vm1036, %v963
        %1049 = vst.msk [vmem:[#allocation4 + $0x120] sm:$0xff] %vm1036, %v965
        %1050 = vst.msk [vmem:[#allocation4 + $0x138] sm:$0xff] %vm1036, %v967
        %1051 = vst.msk [vmem:[#allocation4 + $0x150] sm:$0xff] %vm1036, %v969
        %1052 = vst.msk [vmem:[#allocation4 + $0x168] sm:$0xff] %vm1036, %v971
        %1053 = vst.msk [vmem:[#allocation4 + $0x180] sm:$0xff] %vm1036, %v973
        %1054 = vst.msk [vmem:[#allocation4 + $0x198] sm:$0xff] %vm1036, %v975
        %1055 = vst.msk [vmem:[#allocation4 + $0x1b0] sm:$0xff] %vm1036, %v977
        %1056 = vst.msk [vmem:[#allocation4 + $0x1c8] sm:$0xff] %vm1036, %v979
        %1057 = vst.msk [vmem:[#allocation4 + $0x1e0] sm:$0xff] %vm1036, %v981
        %1058 = vst.msk [vmem:[#allocation4 + $0x1f8] sm:$0xff] %vm1036, %v983
        %1059 = vst.msk [vmem:[#allocation4 + $0x210] sm:$0xff] %vm1036, %v985
        %1060 = vst.msk [vmem:[#allocation4 + $0x228] sm:$0xff] %vm1036, %v987
        %1061 = vst.msk [vmem:[#allocation4 + $0x240] sm:$0xff] %vm1036, %v989
        %1062 = vst.msk [vmem:[#allocation4 + $0x258] sm:$0xff] %vm1036, %v991
        %1063 = vst.msk [vmem:[#allocation4 + $0x270] sm:$0xff] %vm1036, %v993
        %1064 = vst.msk [vmem:[#allocation4 + $0x288] sm:$0xff] %vm1036, %v995
        %1065 = vst.msk [vmem:[#allocation4 + $0x2a0] sm:$0xff] %vm1036, %v997
        %1066 = vst.msk [vmem:[#allocation4 + $0x2b8] sm:$0xff] %vm1036, %v999
        %1067 = vst.msk [vmem:[#allocation4 + $0x2d0] sm:$0xff] %vm1036, %v1001
        %1068 = vst.msk [vmem:[#allocation4 + $0x2e8] sm:$0xff] %vm1036, %v1003
        %s1069 = scalar_lea.vmem [#allocation2], 24
        %v1070 = vld [vmem:[%s1069] sm:$0xff]
        %v1071 = vld [vmem:[%s1069 + $0x8] sm:$0xff]
        %v1072 = vld [vmem:[%s1069 + $0x18] sm:$0xff]
        %v1073 = vld [vmem:[%s1069 + $0x20] sm:$0xff]
        %v1074 = vld [vmem:[%s1069 + $0x30] sm:$0xff]
        %v1075 = vld [vmem:[%s1069 + $0x38] sm:$0xff]
        %v1076 = vld [vmem:[%s1069 + $0x48] sm:$0xff]
        %v1077 = vld [vmem:[%s1069 + $0x50] sm:$0xff]
        %v1078 = vld [vmem:[%s1069 + $0x60] sm:$0xff]
        %v1079 = vld [vmem:[%s1069 + $0x68] sm:$0xff]
        %v1080 = vld [vmem:[%s1069 + $0x78] sm:$0xff]
        %v1081 = vld [vmem:[%s1069 + $0x80] sm:$0xff]
        %v1082 = vld [vmem:[%s1069 + $0x90] sm:$0xff]
        %v1083 = vld [vmem:[%s1069 + $0x98] sm:$0xff]
        %v1084 = vld [vmem:[%s1069 + $0xa8] sm:$0xff]
        %v1085 = vld [vmem:[%s1069 + $0xb0] sm:$0xff]
        %v1086 = vld [vmem:[%s1069 + $0xc0] sm:$0xff]
        %v1087 = vld [vmem:[%s1069 + $0xc8] sm:$0xff]
        %v1088 = vld [vmem:[%s1069 + $0xd8] sm:$0xff]
        %v1089 = vld [vmem:[%s1069 + $0xe0] sm:$0xff]
        %v1090 = vld [vmem:[%s1069 + $0xf0] sm:$0xff]
        %v1091 = vld [vmem:[%s1069 + $0xf8] sm:$0xff]
        %v1092 = vld [vmem:[%s1069 + $0x108] sm:$0xff]
        %v1093 = vld [vmem:[%s1069 + $0x110] sm:$0xff]
        %v1094 = vld [vmem:[%s1069 + $0x120] sm:$0xff]
        %v1095 = vld [vmem:[%s1069 + $0x128] sm:$0xff]
        %v1096 = vld [vmem:[%s1069 + $0x138] sm:$0xff]
        %v1097 = vld [vmem:[%s1069 + $0x140] sm:$0xff]
        %v1098 = vld [vmem:[%s1069 + $0x150] sm:$0xff]
        %v1099 = vld [vmem:[%s1069 + $0x158] sm:$0xff]
        %v1100 = vld [vmem:[%s1069 + $0x168] sm:$0xff]
        %v1101 = vld [vmem:[%s1069 + $0x170] sm:$0xff]
        %1134 = vrot.lane.b32.xlu0 %v1070, 96
        %v1135 = vpop.permute.xlu0 %1134
        %1136 = vrot.lane.b32.xlu0 %v1071, 96
        %v1137 = vpop.permute.xlu0 %1136
        %1138 = vrot.lane.b32.xlu0 %v1072, 96
        %v1139 = vpop.permute.xlu0 %1138
        %1140 = vrot.lane.b32.xlu0 %v1073, 96
        %v1141 = vpop.permute.xlu0 %1140
        %1142 = vrot.lane.b32.xlu0 %v1074, 96
        %v1143 = vpop.permute.xlu0 %1142
        %1144 = vrot.lane.b32.xlu0 %v1075, 96
        %v1145 = vpop.permute.xlu0 %1144
        %1146 = vrot.lane.b32.xlu0 %v1076, 96
        %v1147 = vpop.permute.xlu0 %1146
        %1148 = vrot.lane.b32.xlu0 %v1077, 96
        %v1149 = vpop.permute.xlu0 %1148
        %1150 = vrot.lane.b32.xlu0 %v1078, 96
        %v1151 = vpop.permute.xlu0 %1150
        %1152 = vrot.lane.b32.xlu0 %v1079, 96
        %v1153 = vpop.permute.xlu0 %1152
        %1154 = vrot.lane.b32.xlu0 %v1080, 96
        %v1155 = vpop.permute.xlu0 %1154
        %1156 = vrot.lane.b32.xlu0 %v1081, 96
        %v1157 = vpop.permute.xlu0 %1156
        %1158 = vrot.lane.b32.xlu0 %v1082, 96
        %v1159 = vpop.permute.xlu0 %1158
        %1160 = vrot.lane.b32.xlu0 %v1083, 96
        %v1161 = vpop.permute.xlu0 %1160
        %1162 = vrot.lane.b32.xlu0 %v1084, 96
        %v1163 = vpop.permute.xlu0 %1162
        %1164 = vrot.lane.b32.xlu0 %v1085, 96
        %v1165 = vpop.permute.xlu0 %1164
        %1166 = vrot.lane.b32.xlu0 %v1086, 96
        %v1167 = vpop.permute.xlu0 %1166
        %1168 = vrot.lane.b32.xlu0 %v1087, 96
        %v1169 = vpop.permute.xlu0 %1168
        %1170 = vrot.lane.b32.xlu0 %v1088, 96
        %v1171 = vpop.permute.xlu0 %1170
        %1172 = vrot.lane.b32.xlu0 %v1089, 96
        %v1173 = vpop.permute.xlu0 %1172
        %1174 = vrot.lane.b32.xlu0 %v1090, 96
        %v1175 = vpop.permute.xlu0 %1174
        %1176 = vrot.lane.b32.xlu0 %v1091, 96
        %v1177 = vpop.permute.xlu0 %1176
        %1178 = vrot.lane.b32.xlu0 %v1092, 96
        %v1179 = vpop.permute.xlu0 %1178
        %1180 = vrot.lane.b32.xlu0 %v1093, 96
        %v1181 = vpop.permute.xlu0 %1180
        %1182 = vrot.lane.b32.xlu0 %v1094, 96
        %v1183 = vpop.permute.xlu0 %1182
        %1184 = vrot.lane.b32.xlu0 %v1095, 96
        %v1185 = vpop.permute.xlu0 %1184
        %1186 = vrot.lane.b32.xlu0 %v1096, 96
        %v1187 = vpop.permute.xlu0 %1186
        %1188 = vrot.lane.b32.xlu0 %v1097, 96
        %v1189 = vpop.permute.xlu0 %1188
        %1190 = vrot.lane.b32.xlu0 %v1098, 96
        %v1191 = vpop.permute.xlu0 %1190
        %1192 = vrot.lane.b32.xlu0 %v1099, 96
        %v1193 = vpop.permute.xlu0 %1192
        %1194 = vrot.lane.b32.xlu0 %v1100, 96
        %v1195 = vpop.permute.xlu0 %1194
        %1196 = vrot.lane.b32.xlu0 %v1101, 96
        %v1197 = vpop.permute.xlu0 %1196
        %vm1230 = vcmask 1048320
        %1231 = vst.msk [vmem:[#allocation4] sm:$0xff] %vm1230, %v1135
        %1232 = vst.msk [vmem:[#allocation4 + $0x18] sm:$0xff] %vm1230, %v1137
        %1233 = vst.msk [vmem:[#allocation4 + $0x30] sm:$0xff] %vm1230, %v1139
        %1234 = vst.msk [vmem:[#allocation4 + $0x48] sm:$0xff] %vm1230, %v1141
        %1235 = vst.msk [vmem:[#allocation4 + $0x60] sm:$0xff] %vm1230, %v1143
        %1236 = vst.msk [vmem:[#allocation4 + $0x78] sm:$0xff] %vm1230, %v1145
        %1237 = vst.msk [vmem:[#allocation4 + $0x90] sm:$0xff] %vm1230, %v1147
        %1238 = vst.msk [vmem:[#allocation4 + $0xa8] sm:$0xff] %vm1230, %v1149
        %1239 = vst.msk [vmem:[#allocation4 + $0xc0] sm:$0xff] %vm1230, %v1151
        %1240 = vst.msk [vmem:[#allocation4 + $0xd8] sm:$0xff] %vm1230, %v1153
        %1241 = vst.msk [vmem:[#allocation4 + $0xf0] sm:$0xff] %vm1230, %v1155
        %1242 = vst.msk [vmem:[#allocation4 + $0x108] sm:$0xff] %vm1230, %v1157
        %1243 = vst.msk [vmem:[#allocation4 + $0x120] sm:$0xff] %vm1230, %v1159
        %1244 = vst.msk [vmem:[#allocation4 + $0x138] sm:$0xff] %vm1230, %v1161
        %1245 = vst.msk [vmem:[#allocation4 + $0x150] sm:$0xff] %vm1230, %v1163
        %1246 = vst.msk [vmem:[#allocation4 + $0x168] sm:$0xff] %vm1230, %v1165
        %1247 = vst.msk [vmem:[#allocation4 + $0x180] sm:$0xff] %vm1230, %v1167
        %1248 = vst.msk [vmem:[#allocation4 + $0x198] sm:$0xff] %vm1230, %v1169
        %1249 = vst.msk [vmem:[#allocation4 + $0x1b0] sm:$0xff] %vm1230, %v1171
        %1250 = vst.msk [vmem:[#allocation4 + $0x1c8] sm:$0xff] %vm1230, %v1173
        %1251 = vst.msk [vmem:[#allocation4 + $0x1e0] sm:$0xff] %vm1230, %v1175
        %1252 = vst.msk [vmem:[#allocation4 + $0x1f8] sm:$0xff] %vm1230, %v1177
        %1253 = vst.msk [vmem:[#allocation4 + $0x210] sm:$0xff] %vm1230, %v1179
        %1254 = vst.msk [vmem:[#allocation4 + $0x228] sm:$0xff] %vm1230, %v1181
        %1255 = vst.msk [vmem:[#allocation4 + $0x240] sm:$0xff] %vm1230, %v1183
        %1256 = vst.msk [vmem:[#allocation4 + $0x258] sm:$0xff] %vm1230, %v1185
        %1257 = vst.msk [vmem:[#allocation4 + $0x270] sm:$0xff] %vm1230, %v1187
        %1258 = vst.msk [vmem:[#allocation4 + $0x288] sm:$0xff] %vm1230, %v1189
        %1259 = vst.msk [vmem:[#allocation4 + $0x2a0] sm:$0xff] %vm1230, %v1191
        %1260 = vst.msk [vmem:[#allocation4 + $0x2b8] sm:$0xff] %vm1230, %v1193
        %1261 = vst.msk [vmem:[#allocation4 + $0x2d0] sm:$0xff] %vm1230, %v1195
        %1262 = vst.msk [vmem:[#allocation4 + $0x2e8] sm:$0xff] %vm1230, %v1197
        %v1263 = vld [vmem:[%s1069 + $0x1] sm:$0xff]
        %v1264 = vld [vmem:[%s1069 + $0x9] sm:$0xff]
        %v1265 = vld [vmem:[%s1069 + $0x19] sm:$0xff]
        %v1266 = vld [vmem:[%s1069 + $0x21] sm:$0xff]
        %v1267 = vld [vmem:[%s1069 + $0x31] sm:$0xff]
        %v1268 = vld [vmem:[%s1069 + $0x39] sm:$0xff]
        %v1269 = vld [vmem:[%s1069 + $0x49] sm:$0xff]
        %v1270 = vld [vmem:[%s1069 + $0x51] sm:$0xff]
        %v1271 = vld [vmem:[%s1069 + $0x61] sm:$0xff]
        %v1272 = vld [vmem:[%s1069 + $0x69] sm:$0xff]
        %v1273 = vld [vmem:[%s1069 + $0x79] sm:$0xff]
        %v1274 = vld [vmem:[%s1069 + $0x81] sm:$0xff]
        %v1275 = vld [vmem:[%s1069 + $0x91] sm:$0xff]
        %v1276 = vld [vmem:[%s1069 + $0x99] sm:$0xff]
        %v1277 = vld [vmem:[%s1069 + $0xa9] sm:$0xff]
        %v1278 = vld [vmem:[%s1069 + $0xb1] sm:$0xff]
        %v1279 = vld [vmem:[%s1069 + $0xc1] sm:$0xff]
        %v1280 = vld [vmem:[%s1069 + $0xc9] sm:$0xff]
        %v1281 = vld [vmem:[%s1069 + $0xd9] sm:$0xff]
        %v1282 = vld [vmem:[%s1069 + $0xe1] sm:$0xff]
        %v1283 = vld [vmem:[%s1069 + $0xf1] sm:$0xff]
        %v1284 = vld [vmem:[%s1069 + $0xf9] sm:$0xff]
        %v1285 = vld [vmem:[%s1069 + $0x109] sm:$0xff]
        %v1286 = vld [vmem:[%s1069 + $0x111] sm:$0xff]
        %v1287 = vld [vmem:[%s1069 + $0x121] sm:$0xff]
        %v1288 = vld [vmem:[%s1069 + $0x129] sm:$0xff]
        %v1289 = vld [vmem:[%s1069 + $0x139] sm:$0xff]
        %v1290 = vld [vmem:[%s1069 + $0x141] sm:$0xff]
        %v1291 = vld [vmem:[%s1069 + $0x151] sm:$0xff]
        %v1292 = vld [vmem:[%s1069 + $0x159] sm:$0xff]
        %v1293 = vld [vmem:[%s1069 + $0x169] sm:$0xff]
        %v1294 = vld [vmem:[%s1069 + $0x171] sm:$0xff]
        %1295 = vst.msk [vmem:[#allocation4 + $0x8] sm:$0xff] %vm650, %v1263
        %1296 = vst.msk [vmem:[#allocation4 + $0x20] sm:$0xff] %vm650, %v1264
        %1297 = vst.msk [vmem:[#allocation4 + $0x38] sm:$0xff] %vm650, %v1265
        %1298 = vst.msk [vmem:[#allocation4 + $0x50] sm:$0xff] %vm650, %v1266
        %1299 = vst.msk [vmem:[#allocation4 + $0x68] sm:$0xff] %vm650, %v1267
        %1300 = vst.msk [vmem:[#allocation4 + $0x80] sm:$0xff] %vm650, %v1268
        %1301 = vst.msk [vmem:[#allocation4 + $0x98] sm:$0xff] %vm650, %v1269
        %1302 = vst.msk [vmem:[#allocation4 + $0xb0] sm:$0xff] %vm650, %v1270
        %1303 = vst.msk [vmem:[#allocation4 + $0xc8] sm:$0xff] %vm650, %v1271
        %1304 = vst.msk [vmem:[#allocation4 + $0xe0] sm:$0xff] %vm650, %v1272
        %1305 = vst.msk [vmem:[#allocation4 + $0xf8] sm:$0xff] %vm650, %v1273
        %1306 = vst.msk [vmem:[#allocation4 + $0x110] sm:$0xff] %vm650, %v1274
        %1307 = vst.msk [vmem:[#allocation4 + $0x128] sm:$0xff] %vm650, %v1275
        %1308 = vst.msk [vmem:[#allocation4 + $0x140] sm:$0xff] %vm650, %v1276
        %1309 = vst.msk [vmem:[#allocation4 + $0x158] sm:$0xff] %vm650, %v1277
        %1310 = vst.msk [vmem:[#allocation4 + $0x170] sm:$0xff] %vm650, %v1278
        %1311 = vst.msk [vmem:[#allocation4 + $0x188] sm:$0xff] %vm650, %v1279
        %1312 = vst.msk [vmem:[#allocation4 + $0x1a0] sm:$0xff] %vm650, %v1280
        %1313 = vst.msk [vmem:[#allocation4 + $0x1b8] sm:$0xff] %vm650, %v1281
        %1314 = vst.msk [vmem:[#allocation4 + $0x1d0] sm:$0xff] %vm650, %v1282
        %1315 = vst.msk [vmem:[#allocation4 + $0x1e8] sm:$0xff] %vm650, %v1283
        %1316 = vst.msk [vmem:[#allocation4 + $0x200] sm:$0xff] %vm650, %v1284
        %1317 = vst.msk [vmem:[#allocation4 + $0x218] sm:$0xff] %vm650, %v1285
        %1318 = vst.msk [vmem:[#allocation4 + $0x230] sm:$0xff] %vm650, %v1286
        %1319 = vst.msk [vmem:[#allocation4 + $0x248] sm:$0xff] %vm650, %v1287
        %1320 = vst.msk [vmem:[#allocation4 + $0x260] sm:$0xff] %vm650, %v1288
        %1321 = vst.msk [vmem:[#allocation4 + $0x278] sm:$0xff] %vm650, %v1289
        %1322 = vst.msk [vmem:[#allocation4 + $0x290] sm:$0xff] %vm650, %v1290
        %1323 = vst.msk [vmem:[#allocation4 + $0x2a8] sm:$0xff] %vm650, %v1291
        %1324 = vst.msk [vmem:[#allocation4 + $0x2c0] sm:$0xff] %vm650, %v1292
        %1325 = vst.msk [vmem:[#allocation4 + $0x2d8] sm:$0xff] %vm650, %v1293
        %1326 = vst.msk [vmem:[#allocation4 + $0x2f0] sm:$0xff] %vm650, %v1294
        %v1327 = vld [vmem:[%s1069 + $0x2] sm:$0xff]
        %v1328 = vld [vmem:[%s1069 + $0xa] sm:$0xff]
        %v1329 = vld [vmem:[%s1069 + $0x1a] sm:$0xff]
        %v1330 = vld [vmem:[%s1069 + $0x22] sm:$0xff]
        %v1331 = vld [vmem:[%s1069 + $0x32] sm:$0xff]
        %v1332 = vld [vmem:[%s1069 + $0x3a] sm:$0xff]
        %v1333 = vld [vmem:[%s1069 + $0x4a] sm:$0xff]
        %v1334 = vld [vmem:[%s1069 + $0x52] sm:$0xff]
        %v1335 = vld [vmem:[%s1069 + $0x62] sm:$0xff]
        %v1336 = vld [vmem:[%s1069 + $0x6a] sm:$0xff]
        %v1337 = vld [vmem:[%s1069 + $0x7a] sm:$0xff]
        %v1338 = vld [vmem:[%s1069 + $0x82] sm:$0xff]
        %v1339 = vld [vmem:[%s1069 + $0x92] sm:$0xff]
        %v1340 = vld [vmem:[%s1069 + $0x9a] sm:$0xff]
        %v1341 = vld [vmem:[%s1069 + $0xaa] sm:$0xff]
        %v1342 = vld [vmem:[%s1069 + $0xb2] sm:$0xff]
        %v1343 = vld [vmem:[%s1069 + $0xc2] sm:$0xff]
        %v1344 = vld [vmem:[%s1069 + $0xca] sm:$0xff]
        %v1345 = vld [vmem:[%s1069 + $0xda] sm:$0xff]
        %v1346 = vld [vmem:[%s1069 + $0xe2] sm:$0xff]
        %v1347 = vld [vmem:[%s1069 + $0xf2] sm:$0xff]
        %v1348 = vld [vmem:[%s1069 + $0xfa] sm:$0xff]
        %v1349 = vld [vmem:[%s1069 + $0x10a] sm:$0xff]
        %v1350 = vld [vmem:[%s1069 + $0x112] sm:$0xff]
        %v1351 = vld [vmem:[%s1069 + $0x122] sm:$0xff]
        %v1352 = vld [vmem:[%s1069 + $0x12a] sm:$0xff]
        %v1353 = vld [vmem:[%s1069 + $0x13a] sm:$0xff]
        %v1354 = vld [vmem:[%s1069 + $0x142] sm:$0xff]
        %v1355 = vld [vmem:[%s1069 + $0x152] sm:$0xff]
        %v1356 = vld [vmem:[%s1069 + $0x15a] sm:$0xff]
        %v1357 = vld [vmem:[%s1069 + $0x16a] sm:$0xff]
        %v1358 = vld [vmem:[%s1069 + $0x172] sm:$0xff]
        %1391 = vrot.lane.b32.xlu0 %v1327, 32
        %v1392 = vpop.permute.xlu0 %1391
        %1393 = vrot.lane.b32.xlu0 %v1328, 32
        %v1394 = vpop.permute.xlu0 %1393
        %1395 = vrot.lane.b32.xlu0 %v1329, 32
        %v1396 = vpop.permute.xlu0 %1395
        %1397 = vrot.lane.b32.xlu0 %v1330, 32
        %v1398 = vpop.permute.xlu0 %1397
        %1399 = vrot.lane.b32.xlu0 %v1331, 32
        %v1400 = vpop.permute.xlu0 %1399
        %1401 = vrot.lane.b32.xlu0 %v1332, 32
        %v1402 = vpop.permute.xlu0 %1401
        %1403 = vrot.lane.b32.xlu0 %v1333, 32
        %v1404 = vpop.permute.xlu0 %1403
        %1405 = vrot.lane.b32.xlu0 %v1334, 32
        %v1406 = vpop.permute.xlu0 %1405
        %1407 = vrot.lane.b32.xlu0 %v1335, 32
        %v1408 = vpop.permute.xlu0 %1407
        %1409 = vrot.lane.b32.xlu0 %v1336, 32
        %v1410 = vpop.permute.xlu0 %1409
        %1411 = vrot.lane.b32.xlu0 %v1337, 32
        %v1412 = vpop.permute.xlu0 %1411
        %1413 = vrot.lane.b32.xlu0 %v1338, 32
        %v1414 = vpop.permute.xlu0 %1413
        %1415 = vrot.lane.b32.xlu0 %v1339, 32
        %v1416 = vpop.permute.xlu0 %1415
        %1417 = vrot.lane.b32.xlu0 %v1340, 32
        %v1418 = vpop.permute.xlu0 %1417
        %1419 = vrot.lane.b32.xlu0 %v1341, 32
        %v1420 = vpop.permute.xlu0 %1419
        %1421 = vrot.lane.b32.xlu0 %v1342, 32
        %v1422 = vpop.permute.xlu0 %1421
        %1423 = vrot.lane.b32.xlu0 %v1343, 32
        %v1424 = vpop.permute.xlu0 %1423
        %1425 = vrot.lane.b32.xlu0 %v1344, 32
        %v1426 = vpop.permute.xlu0 %1425
        %1427 = vrot.lane.b32.xlu0 %v1345, 32
        %v1428 = vpop.permute.xlu0 %1427
        %1429 = vrot.lane.b32.xlu0 %v1346, 32
        %v1430 = vpop.permute.xlu0 %1429
        %1431 = vrot.lane.b32.xlu0 %v1347, 32
        %v1432 = vpop.permute.xlu0 %1431
        %1433 = vrot.lane.b32.xlu0 %v1348, 32
        %v1434 = vpop.permute.xlu0 %1433
        %1435 = vrot.lane.b32.xlu0 %v1349, 32
        %v1436 = vpop.permute.xlu0 %1435
        %1437 = vrot.lane.b32.xlu0 %v1350, 32
        %v1438 = vpop.permute.xlu0 %1437
        %1439 = vrot.lane.b32.xlu0 %v1351, 32
        %v1440 = vpop.permute.xlu0 %1439
        %1441 = vrot.lane.b32.xlu0 %v1352, 32
        %v1442 = vpop.permute.xlu0 %1441
        %1443 = vrot.lane.b32.xlu0 %v1353, 32
        %v1444 = vpop.permute.xlu0 %1443
        %1445 = vrot.lane.b32.xlu0 %v1354, 32
        %v1446 = vpop.permute.xlu0 %1445
        %1447 = vrot.lane.b32.xlu0 %v1355, 32
        %v1448 = vpop.permute.xlu0 %1447
        %1449 = vrot.lane.b32.xlu0 %v1356, 32
        %v1450 = vpop.permute.xlu0 %1449
        %1451 = vrot.lane.b32.xlu0 %v1357, 32
        %v1452 = vpop.permute.xlu0 %1451
        %1453 = vrot.lane.b32.xlu0 %v1358, 32
        %v1454 = vpop.permute.xlu0 %1453
        %1487 = vst.msk [vmem:[#allocation4 + $0x8] sm:$0xff] %vm843, %v1392
        %1488 = vst.msk [vmem:[#allocation4 + $0x20] sm:$0xff] %vm843, %v1394
        %1489 = vst.msk [vmem:[#allocation4 + $0x38] sm:$0xff] %vm843, %v1396
        %1490 = vst.msk [vmem:[#allocation4 + $0x50] sm:$0xff] %vm843, %v1398
        %1491 = vst.msk [vmem:[#allocation4 + $0x68] sm:$0xff] %vm843, %v1400
        %1492 = vst.msk [vmem:[#allocation4 + $0x80] sm:$0xff] %vm843, %v1402
        %1493 = vst.msk [vmem:[#allocation4 + $0x98] sm:$0xff] %vm843, %v1404
        %1494 = vst.msk [vmem:[#allocation4 + $0xb0] sm:$0xff] %vm843, %v1406
        %1495 = vst.msk [vmem:[#allocation4 + $0xc8] sm:$0xff] %vm843, %v1408
        %1496 = vst.msk [vmem:[#allocation4 + $0xe0] sm:$0xff] %vm843, %v1410
        %1497 = vst.msk [vmem:[#allocation4 + $0xf8] sm:$0xff] %vm843, %v1412
        %1498 = vst.msk [vmem:[#allocation4 + $0x110] sm:$0xff] %vm843, %v1414
        %1499 = vst.msk [vmem:[#allocation4 + $0x128] sm:$0xff] %vm843, %v1416
        %1500 = vst.msk [vmem:[#allocation4 + $0x140] sm:$0xff] %vm843, %v1418
        %1501 = vst.msk [vmem:[#allocation4 + $0x158] sm:$0xff] %vm843, %v1420
        %1502 = vst.msk [vmem:[#allocation4 + $0x170] sm:$0xff] %vm843, %v1422
        %1503 = vst.msk [vmem:[#allocation4 + $0x188] sm:$0xff] %vm843, %v1424
        %1504 = vst.msk [vmem:[#allocation4 + $0x1a0] sm:$0xff] %vm843, %v1426
        %1505 = vst.msk [vmem:[#allocation4 + $0x1b8] sm:$0xff] %vm843, %v1428
        %1506 = vst.msk [vmem:[#allocation4 + $0x1d0] sm:$0xff] %vm843, %v1430
        %1507 = vst.msk [vmem:[#allocation4 + $0x1e8] sm:$0xff] %vm843, %v1432
        %1508 = vst.msk [vmem:[#allocation4 + $0x200] sm:$0xff] %vm843, %v1434
        %1509 = vst.msk [vmem:[#allocation4 + $0x218] sm:$0xff] %vm843, %v1436
        %1510 = vst.msk [vmem:[#allocation4 + $0x230] sm:$0xff] %vm843, %v1438
        %1511 = vst.msk [vmem:[#allocation4 + $0x248] sm:$0xff] %vm843, %v1440
        %1512 = vst.msk [vmem:[#allocation4 + $0x260] sm:$0xff] %vm843, %v1442
        %1513 = vst.msk [vmem:[#allocation4 + $0x278] sm:$0xff] %vm843, %v1444
        %1514 = vst.msk [vmem:[#allocation4 + $0x290] sm:$0xff] %vm843, %v1446
        %1515 = vst.msk [vmem:[#allocation4 + $0x2a8] sm:$0xff] %vm843, %v1448
        %1516 = vst.msk [vmem:[#allocation4 + $0x2c0] sm:$0xff] %vm843, %v1450
        %1517 = vst.msk [vmem:[#allocation4 + $0x2d8] sm:$0xff] %vm843, %v1452
        %1518 = vst.msk [vmem:[#allocation4 + $0x2f0] sm:$0xff] %vm843, %v1454
        %s1519 = scalar_lea.vmem [#allocation2], 48
        %v1520 = vld [vmem:[%s1519] sm:$0xff]
        %v1521 = vld [vmem:[%s1519 + $0x8] sm:$0xff]
        %v1522 = vld [vmem:[%s1519 + $0x18] sm:$0xff]
        %v1523 = vld [vmem:[%s1519 + $0x20] sm:$0xff]
        %v1524 = vld [vmem:[%s1519 + $0x30] sm:$0xff]
        %v1525 = vld [vmem:[%s1519 + $0x38] sm:$0xff]
        %v1526 = vld [vmem:[%s1519 + $0x48] sm:$0xff]
        %v1527 = vld [vmem:[%s1519 + $0x50] sm:$0xff]
        %v1528 = vld [vmem:[%s1519 + $0x60] sm:$0xff]
        %v1529 = vld [vmem:[%s1519 + $0x68] sm:$0xff]
        %v1530 = vld [vmem:[%s1519 + $0x78] sm:$0xff]
        %v1531 = vld [vmem:[%s1519 + $0x80] sm:$0xff]
        %v1532 = vld [vmem:[%s1519 + $0x90] sm:$0xff]
        %v1533 = vld [vmem:[%s1519 + $0x98] sm:$0xff]
        %v1534 = vld [vmem:[%s1519 + $0xa8] sm:$0xff]
        %v1535 = vld [vmem:[%s1519 + $0xb0] sm:$0xff]
        %v1536 = vld [vmem:[%s1519 + $0xc0] sm:$0xff]
        %v1537 = vld [vmem:[%s1519 + $0xc8] sm:$0xff]
        %v1538 = vld [vmem:[%s1519 + $0xd8] sm:$0xff]
        %v1539 = vld [vmem:[%s1519 + $0xe0] sm:$0xff]
        %v1540 = vld [vmem:[%s1519 + $0xf0] sm:$0xff]
        %v1541 = vld [vmem:[%s1519 + $0xf8] sm:$0xff]
        %v1542 = vld [vmem:[%s1519 + $0x108] sm:$0xff]
        %v1543 = vld [vmem:[%s1519 + $0x110] sm:$0xff]
        %v1544 = vld [vmem:[%s1519 + $0x120] sm:$0xff]
        %v1545 = vld [vmem:[%s1519 + $0x128] sm:$0xff]
        %v1546 = vld [vmem:[%s1519 + $0x138] sm:$0xff]
        %v1547 = vld [vmem:[%s1519 + $0x140] sm:$0xff]
        %v1548 = vld [vmem:[%s1519 + $0x150] sm:$0xff]
        %v1549 = vld [vmem:[%s1519 + $0x158] sm:$0xff]
        %v1550 = vld [vmem:[%s1519 + $0x168] sm:$0xff]
        %v1551 = vld [vmem:[%s1519 + $0x170] sm:$0xff]
        %1584 = vrot.lane.b32.xlu0 %v1520, 64
        %v1585 = vpop.permute.xlu0 %1584
        %1586 = vrot.lane.b32.xlu0 %v1521, 64
        %v1587 = vpop.permute.xlu0 %1586
        %1588 = vrot.lane.b32.xlu0 %v1522, 64
        %v1589 = vpop.permute.xlu0 %1588
        %1590 = vrot.lane.b32.xlu0 %v1523, 64
        %v1591 = vpop.permute.xlu0 %1590
        %1592 = vrot.lane.b32.xlu0 %v1524, 64
        %v1593 = vpop.permute.xlu0 %1592
        %1594 = vrot.lane.b32.xlu0 %v1525, 64
        %v1595 = vpop.permute.xlu0 %1594
        %1596 = vrot.lane.b32.xlu0 %v1526, 64
        %v1597 = vpop.permute.xlu0 %1596
        %1598 = vrot.lane.b32.xlu0 %v1527, 64
        %v1599 = vpop.permute.xlu0 %1598
        %1600 = vrot.lane.b32.xlu0 %v1528, 64
        %v1601 = vpop.permute.xlu0 %1600
        %1602 = vrot.lane.b32.xlu0 %v1529, 64
        %v1603 = vpop.permute.xlu0 %1602
        %1604 = vrot.lane.b32.xlu0 %v1530, 64
        %v1605 = vpop.permute.xlu0 %1604
        %1606 = vrot.lane.b32.xlu0 %v1531, 64
        %v1607 = vpop.permute.xlu0 %1606
        %1608 = vrot.lane.b32.xlu0 %v1532, 64
        %v1609 = vpop.permute.xlu0 %1608
        %1610 = vrot.lane.b32.xlu0 %v1533, 64
        %v1611 = vpop.permute.xlu0 %1610
        %1612 = vrot.lane.b32.xlu0 %v1534, 64
        %v1613 = vpop.permute.xlu0 %1612
        %1614 = vrot.lane.b32.xlu0 %v1535, 64
        %v1615 = vpop.permute.xlu0 %1614
        %1616 = vrot.lane.b32.xlu0 %v1536, 64
        %v1617 = vpop.permute.xlu0 %1616
        %1618 = vrot.lane.b32.xlu0 %v1537, 64
        %v1619 = vpop.permute.xlu0 %1618
        %1620 = vrot.lane.b32.xlu0 %v1538, 64
        %v1621 = vpop.permute.xlu0 %1620
        %1622 = vrot.lane.b32.xlu0 %v1539, 64
        %v1623 = vpop.permute.xlu0 %1622
        %1624 = vrot.lane.b32.xlu0 %v1540, 64
        %v1625 = vpop.permute.xlu0 %1624
        %1626 = vrot.lane.b32.xlu0 %v1541, 64
        %v1627 = vpop.permute.xlu0 %1626
        %1628 = vrot.lane.b32.xlu0 %v1542, 64
        %v1629 = vpop.permute.xlu0 %1628
        %1630 = vrot.lane.b32.xlu0 %v1543, 64
        %v1631 = vpop.permute.xlu0 %1630
        %1632 = vrot.lane.b32.xlu0 %v1544, 64
        %v1633 = vpop.permute.xlu0 %1632
        %1634 = vrot.lane.b32.xlu0 %v1545, 64
        %v1635 = vpop.permute.xlu0 %1634
        %1636 = vrot.lane.b32.xlu0 %v1546, 64
        %v1637 = vpop.permute.xlu0 %1636
        %1638 = vrot.lane.b32.xlu0 %v1547, 64
        %v1639 = vpop.permute.xlu0 %1638
        %1640 = vrot.lane.b32.xlu0 %v1548, 64
        %v1641 = vpop.permute.xlu0 %1640
        %1642 = vrot.lane.b32.xlu0 %v1549, 64
        %v1643 = vpop.permute.xlu0 %1642
        %1644 = vrot.lane.b32.xlu0 %v1550, 64
        %v1645 = vpop.permute.xlu0 %1644
        %1646 = vrot.lane.b32.xlu0 %v1551, 64
        %v1647 = vpop.permute.xlu0 %1646
        %1680 = vst.msk [vmem:[#allocation4 + $0x8] sm:$0xff] %vm1036, %v1585
        %1681 = vst.msk [vmem:[#allocation4 + $0x20] sm:$0xff] %vm1036, %v1587
        %1682 = vst.msk [vmem:[#allocation4 + $0x38] sm:$0xff] %vm1036, %v1589
        %1683 = vst.msk [vmem:[#allocation4 + $0x50] sm:$0xff] %vm1036, %v1591
        %1684 = vst.msk [vmem:[#allocation4 + $0x68] sm:$0xff] %vm1036, %v1593
        %1685 = vst.msk [vmem:[#allocation4 + $0x80] sm:$0xff] %vm1036, %v1595
        %1686 = vst.msk [vmem:[#allocation4 + $0x98] sm:$0xff] %vm1036, %v1597
        %1687 = vst.msk [vmem:[#allocation4 + $0xb0] sm:$0xff] %vm1036, %v1599
        %1688 = vst.msk [vmem:[#allocation4 + $0xc8] sm:$0xff] %vm1036, %v1601
        %1689 = vst.msk [vmem:[#allocation4 + $0xe0] sm:$0xff] %vm1036, %v1603
        %1690 = vst.msk [vmem:[#allocation4 + $0xf8] sm:$0xff] %vm1036, %v1605
        %1691 = vst.msk [vmem:[#allocation4 + $0x110] sm:$0xff] %vm1036, %v1607
        %1692 = vst.msk [vmem:[#allocation4 + $0x128] sm:$0xff] %vm1036, %v1609
        %1693 = vst.msk [vmem:[#allocation4 + $0x140] sm:$0xff] %vm1036, %v1611
        %1694 = vst.msk [vmem:[#allocation4 + $0x158] sm:$0xff] %vm1036, %v1613
        %1695 = vst.msk [vmem:[#allocation4 + $0x170] sm:$0xff] %vm1036, %v1615
        %1696 = vst.msk [vmem:[#allocation4 + $0x188] sm:$0xff] %vm1036, %v1617
        %1697 = vst.msk [vmem:[#allocation4 + $0x1a0] sm:$0xff] %vm1036, %v1619
        %1698 = vst.msk [vmem:[#allocation4 + $0x1b8] sm:$0xff] %vm1036, %v1621
        %1699 = vst.msk [vmem:[#allocation4 + $0x1d0] sm:$0xff] %vm1036, %v1623
        %1700 = vst.msk [vmem:[#allocation4 + $0x1e8] sm:$0xff] %vm1036, %v1625
        %1701 = vst.msk [vmem:[#allocation4 + $0x200] sm:$0xff] %vm1036, %v1627
        %1702 = vst.msk [vmem:[#allocation4 + $0x218] sm:$0xff] %vm1036, %v1629
        %1703 = vst.msk [vmem:[#allocation4 + $0x230] sm:$0xff] %vm1036, %v1631
        %1704 = vst.msk [vmem:[#allocation4 + $0x248] sm:$0xff] %vm1036, %v1633
        %1705 = vst.msk [vmem:[#allocation4 + $0x260] sm:$0xff] %vm1036, %v1635
        %1706 = vst.msk [vmem:[#allocation4 + $0x278] sm:$0xff] %vm1036, %v1637
        %1707 = vst.msk [vmem:[#allocation4 + $0x290] sm:$0xff] %vm1036, %v1639
        %1708 = vst.msk [vmem:[#allocation4 + $0x2a8] sm:$0xff] %vm1036, %v1641
        %1709 = vst.msk [vmem:[#allocation4 + $0x2c0] sm:$0xff] %vm1036, %v1643
        %1710 = vst.msk [vmem:[#allocation4 + $0x2d8] sm:$0xff] %vm1036, %v1645
        %1711 = vst.msk [vmem:[#allocation4 + $0x2f0] sm:$0xff] %vm1036, %v1647
        %v1712 = vld [vmem:[%s1519 + $0x1] sm:$0xff]
        %v1713 = vld [vmem:[%s1519 + $0x9] sm:$0xff]
        %v1714 = vld [vmem:[%s1519 + $0x19] sm:$0xff]
        %v1715 = vld [vmem:[%s1519 + $0x21] sm:$0xff]
        %v1716 = vld [vmem:[%s1519 + $0x31] sm:$0xff]
        %v1717 = vld [vmem:[%s1519 + $0x39] sm:$0xff]
        %v1718 = vld [vmem:[%s1519 + $0x49] sm:$0xff]
        %v1719 = vld [vmem:[%s1519 + $0x51] sm:$0xff]
        %v1720 = vld [vmem:[%s1519 + $0x61] sm:$0xff]
        %v1721 = vld [vmem:[%s1519 + $0x69] sm:$0xff]
        %v1722 = vld [vmem:[%s1519 + $0x79] sm:$0xff]
        %v1723 = vld [vmem:[%s1519 + $0x81] sm:$0xff]
        %v1724 = vld [vmem:[%s1519 + $0x91] sm:$0xff]
        %v1725 = vld [vmem:[%s1519 + $0x99] sm:$0xff]
        %v1726 = vld [vmem:[%s1519 + $0xa9] sm:$0xff]
        %v1727 = vld [vmem:[%s1519 + $0xb1] sm:$0xff]
        %v1728 = vld [vmem:[%s1519 + $0xc1] sm:$0xff]
        %v1729 = vld [vmem:[%s1519 + $0xc9] sm:$0xff]
        %v1730 = vld [vmem:[%s1519 + $0xd9] sm:$0xff]
        %v1731 = vld [vmem:[%s1519 + $0xe1] sm:$0xff]
        %v1732 = vld [vmem:[%s1519 + $0xf1] sm:$0xff]
        %v1733 = vld [vmem:[%s1519 + $0xf9] sm:$0xff]
        %v1734 = vld [vmem:[%s1519 + $0x109] sm:$0xff]
        %v1735 = vld [vmem:[%s1519 + $0x111] sm:$0xff]
        %v1736 = vld [vmem:[%s1519 + $0x121] sm:$0xff]
        %v1737 = vld [vmem:[%s1519 + $0x129] sm:$0xff]
        %v1738 = vld [vmem:[%s1519 + $0x139] sm:$0xff]
        %v1739 = vld [vmem:[%s1519 + $0x141] sm:$0xff]
        %v1740 = vld [vmem:[%s1519 + $0x151] sm:$0xff]
        %v1741 = vld [vmem:[%s1519 + $0x159] sm:$0xff]
        %v1742 = vld [vmem:[%s1519 + $0x169] sm:$0xff]
        %v1743 = vld [vmem:[%s1519 + $0x171] sm:$0xff]
        %1776 = vrot.lane.b32.xlu0 %v1712, 96
        %v1777 = vpop.permute.xlu0 %1776
        %1778 = vrot.lane.b32.xlu0 %v1713, 96
        %v1779 = vpop.permute.xlu0 %1778
        %1780 = vrot.lane.b32.xlu0 %v1714, 96
        %v1781 = vpop.permute.xlu0 %1780
        %1782 = vrot.lane.b32.xlu0 %v1715, 96
        %v1783 = vpop.permute.xlu0 %1782
        %1784 = vrot.lane.b32.xlu0 %v1716, 96
        %v1785 = vpop.permute.xlu0 %1784
        %1786 = vrot.lane.b32.xlu0 %v1717, 96
        %v1787 = vpop.permute.xlu0 %1786
        %1788 = vrot.lane.b32.xlu0 %v1718, 96
        %v1789 = vpop.permute.xlu0 %1788
        %1790 = vrot.lane.b32.xlu0 %v1719, 96
        %v1791 = vpop.permute.xlu0 %1790
        %1792 = vrot.lane.b32.xlu0 %v1720, 96
        %v1793 = vpop.permute.xlu0 %1792
        %1794 = vrot.lane.b32.xlu0 %v1721, 96
        %v1795 = vpop.permute.xlu0 %1794
        %1796 = vrot.lane.b32.xlu0 %v1722, 96
        %v1797 = vpop.permute.xlu0 %1796
        %1798 = vrot.lane.b32.xlu0 %v1723, 96
        %v1799 = vpop.permute.xlu0 %1798
        %1800 = vrot.lane.b32.xlu0 %v1724, 96
        %v1801 = vpop.permute.xlu0 %1800
        %1802 = vrot.lane.b32.xlu0 %v1725, 96
        %v1803 = vpop.permute.xlu0 %1802
        %1804 = vrot.lane.b32.xlu0 %v1726, 96
        %v1805 = vpop.permute.xlu0 %1804
        %1806 = vrot.lane.b32.xlu0 %v1727, 96
        %v1807 = vpop.permute.xlu0 %1806
        %1808 = vrot.lane.b32.xlu0 %v1728, 96
        %v1809 = vpop.permute.xlu0 %1808
        %1810 = vrot.lane.b32.xlu0 %v1729, 96
        %v1811 = vpop.permute.xlu0 %1810
        %1812 = vrot.lane.b32.xlu0 %v1730, 96
        %v1813 = vpop.permute.xlu0 %1812
        %1814 = vrot.lane.b32.xlu0 %v1731, 96
        %v1815 = vpop.permute.xlu0 %1814
        %1816 = vrot.lane.b32.xlu0 %v1732, 96
        %v1817 = vpop.permute.xlu0 %1816
        %1818 = vrot.lane.b32.xlu0 %v1733, 96
        %v1819 = vpop.permute.xlu0 %1818
        %1820 = vrot.lane.b32.xlu0 %v1734, 96
        %v1821 = vpop.permute.xlu0 %1820
        %1822 = vrot.lane.b32.xlu0 %v1735, 96
        %v1823 = vpop.permute.xlu0 %1822
        %1824 = vrot.lane.b32.xlu0 %v1736, 96
        %v1825 = vpop.permute.xlu0 %1824
        %1826 = vrot.lane.b32.xlu0 %v1737, 96
        %v1827 = vpop.permute.xlu0 %1826
        %1828 = vrot.lane.b32.xlu0 %v1738, 96
        %v1829 = vpop.permute.xlu0 %1828
        %1830 = vrot.lane.b32.xlu0 %v1739, 96
        %v1831 = vpop.permute.xlu0 %1830
        %1832 = vrot.lane.b32.xlu0 %v1740, 96
        %v1833 = vpop.permute.xlu0 %1832
        %1834 = vrot.lane.b32.xlu0 %v1741, 96
        %v1835 = vpop.permute.xlu0 %1834
        %1836 = vrot.lane.b32.xlu0 %v1742, 96
        %v1837 = vpop.permute.xlu0 %1836
        %1838 = vrot.lane.b32.xlu0 %v1743, 96
        %v1839 = vpop.permute.xlu0 %1838
        %1872 = vst.msk [vmem:[#allocation4 + $0x8] sm:$0xff] %vm1230, %v1777
        %1873 = vst.msk [vmem:[#allocation4 + $0x20] sm:$0xff] %vm1230, %v1779
        %1874 = vst.msk [vmem:[#allocation4 + $0x38] sm:$0xff] %vm1230, %v1781
        %1875 = vst.msk [vmem:[#allocation4 + $0x50] sm:$0xff] %vm1230, %v1783
        %1876 = vst.msk [vmem:[#allocation4 + $0x68] sm:$0xff] %vm1230, %v1785
        %1877 = vst.msk [vmem:[#allocation4 + $0x80] sm:$0xff] %vm1230, %v1787
        %1878 = vst.msk [vmem:[#allocation4 + $0x98] sm:$0xff] %vm1230, %v1789
        %1879 = vst.msk [vmem:[#allocation4 + $0xb0] sm:$0xff] %vm1230, %v1791
        %1880 = vst.msk [vmem:[#allocation4 + $0xc8] sm:$0xff] %vm1230, %v1793
        %1881 = vst.msk [vmem:[#allocation4 + $0xe0] sm:$0xff] %vm1230, %v1795
        %1882 = vst.msk [vmem:[#allocation4 + $0xf8] sm:$0xff] %vm1230, %v1797
        %1883 = vst.msk [vmem:[#allocation4 + $0x110] sm:$0xff] %vm1230, %v1799
        %1884 = vst.msk [vmem:[#allocation4 + $0x128] sm:$0xff] %vm1230, %v1801
        %1885 = vst.msk [vmem:[#allocation4 + $0x140] sm:$0xff] %vm1230, %v1803
        %1886 = vst.msk [vmem:[#allocation4 + $0x158] sm:$0xff] %vm1230, %v1805
        %1887 = vst.msk [vmem:[#allocation4 + $0x170] sm:$0xff] %vm1230, %v1807
        %1888 = vst.msk [vmem:[#allocation4 + $0x188] sm:$0xff] %vm1230, %v1809
        %1889 = vst.msk [vmem:[#allocation4 + $0x1a0] sm:$0xff] %vm1230, %v1811
        %1890 = vst.msk [vmem:[#allocation4 + $0x1b8] sm:$0xff] %vm1230, %v1813
        %1891 = vst.msk [vmem:[#allocation4 + $0x1d0] sm:$0xff] %vm1230, %v1815
        %1892 = vst.msk [vmem:[#allocation4 + $0x1e8] sm:$0xff] %vm1230, %v1817
        %1893 = vst.msk [vmem:[#allocation4 + $0x200] sm:$0xff] %vm1230, %v1819
        %1894 = vst.msk [vmem:[#allocation4 + $0x218] sm:$0xff] %vm1230, %v1821
        %1895 = vst.msk [vmem:[#allocation4 + $0x230] sm:$0xff] %vm1230, %v1823
        %1896 = vst.msk [vmem:[#allocation4 + $0x248] sm:$0xff] %vm1230, %v1825
        %1897 = vst.msk [vmem:[#allocation4 + $0x260] sm:$0xff] %vm1230, %v1827
        %1898 = vst.msk [vmem:[#allocation4 + $0x278] sm:$0xff] %vm1230, %v1829
        %1899 = vst.msk [vmem:[#allocation4 + $0x290] sm:$0xff] %vm1230, %v1831
        %1900 = vst.msk [vmem:[#allocation4 + $0x2a8] sm:$0xff] %vm1230, %v1833
        %1901 = vst.msk [vmem:[#allocation4 + $0x2c0] sm:$0xff] %vm1230, %v1835
        %1902 = vst.msk [vmem:[#allocation4 + $0x2d8] sm:$0xff] %vm1230, %v1837
        %1903 = vst.msk [vmem:[#allocation4 + $0x2f0] sm:$0xff] %vm1230, %v1839
        %v1904 = vld [vmem:[%s1519 + $0x2] sm:$0xff]
        %v1905 = vld [vmem:[%s1519 + $0xa] sm:$0xff]
        %v1906 = vld [vmem:[%s1519 + $0x1a] sm:$0xff]
        %v1907 = vld [vmem:[%s1519 + $0x22] sm:$0xff]
        %v1908 = vld [vmem:[%s1519 + $0x32] sm:$0xff]
        %v1909 = vld [vmem:[%s1519 + $0x3a] sm:$0xff]
        %v1910 = vld [vmem:[%s1519 + $0x4a] sm:$0xff]
        %v1911 = vld [vmem:[%s1519 + $0x52] sm:$0xff]
        %v1912 = vld [vmem:[%s1519 + $0x62] sm:$0xff]
        %v1913 = vld [vmem:[%s1519 + $0x6a] sm:$0xff]
        %v1914 = vld [vmem:[%s1519 + $0x7a] sm:$0xff]
        %v1915 = vld [vmem:[%s1519 + $0x82] sm:$0xff]
        %v1916 = vld [vmem:[%s1519 + $0x92] sm:$0xff]
        %v1917 = vld [vmem:[%s1519 + $0x9a] sm:$0xff]
        %v1918 = vld [vmem:[%s1519 + $0xaa] sm:$0xff]
        %v1919 = vld [vmem:[%s1519 + $0xb2] sm:$0xff]
        %v1920 = vld [vmem:[%s1519 + $0xc2] sm:$0xff]
        %v1921 = vld [vmem:[%s1519 + $0xca] sm:$0xff]
        %v1922 = vld [vmem:[%s1519 + $0xda] sm:$0xff]
        %v1923 = vld [vmem:[%s1519 + $0xe2] sm:$0xff]
        %v1924 = vld [vmem:[%s1519 + $0xf2] sm:$0xff]
        %v1925 = vld [vmem:[%s1519 + $0xfa] sm:$0xff]
        %v1926 = vld [vmem:[%s1519 + $0x10a] sm:$0xff]
        %v1927 = vld [vmem:[%s1519 + $0x112] sm:$0xff]
        %v1928 = vld [vmem:[%s1519 + $0x122] sm:$0xff]
        %v1929 = vld [vmem:[%s1519 + $0x12a] sm:$0xff]
        %v1930 = vld [vmem:[%s1519 + $0x13a] sm:$0xff]
        %v1931 = vld [vmem:[%s1519 + $0x142] sm:$0xff]
        %v1932 = vld [vmem:[%s1519 + $0x152] sm:$0xff]
        %v1933 = vld [vmem:[%s1519 + $0x15a] sm:$0xff]
        %v1934 = vld [vmem:[%s1519 + $0x16a] sm:$0xff]
        %v1935 = vld [vmem:[%s1519 + $0x172] sm:$0xff]
        %1936 = vst.msk [vmem:[#allocation4 + $0x10] sm:$0xff] %vm650, %v1904
        %1937 = vst.msk [vmem:[#allocation4 + $0x28] sm:$0xff] %vm650, %v1905
        %1938 = vst.msk [vmem:[#allocation4 + $0x40] sm:$0xff] %vm650, %v1906
        %1939 = vst.msk [vmem:[#allocation4 + $0x58] sm:$0xff] %vm650, %v1907
        %1940 = vst.msk [vmem:[#allocation4 + $0x70] sm:$0xff] %vm650, %v1908
        %1941 = vst.msk [vmem:[#allocation4 + $0x88] sm:$0xff] %vm650, %v1909
        %1942 = vst.msk [vmem:[#allocation4 + $0xa0] sm:$0xff] %vm650, %v1910
        %1943 = vst.msk [vmem:[#allocation4 + $0xb8] sm:$0xff] %vm650, %v1911
        %1944 = vst.msk [vmem:[#allocation4 + $0xd0] sm:$0xff] %vm650, %v1912
        %1945 = vst.msk [vmem:[#allocation4 + $0xe8] sm:$0xff] %vm650, %v1913
        %1946 = vst.msk [vmem:[#allocation4 + $0x100] sm:$0xff] %vm650, %v1914
        %1947 = vst.msk [vmem:[#allocation4 + $0x118] sm:$0xff] %vm650, %v1915
        %1948 = vst.msk [vmem:[#allocation4 + $0x130] sm:$0xff] %vm650, %v1916
        %1949 = vst.msk [vmem:[#allocation4 + $0x148] sm:$0xff] %vm650, %v1917
        %1950 = vst.msk [vmem:[#allocation4 + $0x160] sm:$0xff] %vm650, %v1918
        %1951 = vst.msk [vmem:[#allocation4 + $0x178] sm:$0xff] %vm650, %v1919
        %1952 = vst.msk [vmem:[#allocation4 + $0x190] sm:$0xff] %vm650, %v1920
        %1953 = vst.msk [vmem:[#allocation4 + $0x1a8] sm:$0xff] %vm650, %v1921
        %1954 = vst.msk [vmem:[#allocation4 + $0x1c0] sm:$0xff] %vm650, %v1922
        %1955 = vst.msk [vmem:[#allocation4 + $0x1d8] sm:$0xff] %vm650, %v1923
        %1956 = vst.msk [vmem:[#allocation4 + $0x1f0] sm:$0xff] %vm650, %v1924
        %1957 = vst.msk [vmem:[#allocation4 + $0x208] sm:$0xff] %vm650, %v1925
        %1958 = vst.msk [vmem:[#allocation4 + $0x220] sm:$0xff] %vm650, %v1926
        %1959 = vst.msk [vmem:[#allocation4 + $0x238] sm:$0xff] %vm650, %v1927
        %1960 = vst.msk [vmem:[#allocation4 + $0x250] sm:$0xff] %vm650, %v1928
        %1961 = vst.msk [vmem:[#allocation4 + $0x268] sm:$0xff] %vm650, %v1929
        %1962 = vst.msk [vmem:[#allocation4 + $0x280] sm:$0xff] %vm650, %v1930
        %1963 = vst.msk [vmem:[#allocation4 + $0x298] sm:$0xff] %vm650, %v1931
        %1964 = vst.msk [vmem:[#allocation4 + $0x2b0] sm:$0xff] %vm650, %v1932
        %1965 = vst.msk [vmem:[#allocation4 + $0x2c8] sm:$0xff] %vm650, %v1933
        %1966 = vst.msk [vmem:[#allocation4 + $0x2e0] sm:$0xff] %vm650, %v1934
        %1967 = vst.msk [vmem:[#allocation4 + $0x2f8] sm:$0xff] %vm650, %v1935
        %v1968 = vld [vmem:[#allocation4] sm:$0xff]
        %v1969 = vld [vmem:[#allocation4 + $0x8] sm:$0xff]
        %v1970 = vld [vmem:[#allocation4 + $0x10] sm:$0xff]
        %v1971 = vld [vmem:[#allocation4 + $0x18] sm:$0xff]
        %v1972 = vld [vmem:[#allocation4 + $0x20] sm:$0xff]
        %v1973 = vld [vmem:[#allocation4 + $0x28] sm:$0xff]
        %v1974 = vld [vmem:[#allocation4 + $0x30] sm:$0xff]
        %v1975 = vld [vmem:[#allocation4 + $0x38] sm:$0xff]
        %v1976 = vld [vmem:[#allocation4 + $0x40] sm:$0xff]
        %v1977 = vld [vmem:[#allocation4 + $0x48] sm:$0xff]
        %v1978 = vld [vmem:[#allocation4 + $0x50] sm:$0xff]
        %v1979 = vld [vmem:[#allocation4 + $0x58] sm:$0xff]
        %v1980 = vld [vmem:[#allocation4 + $0x60] sm:$0xff]
        %v1981 = vld [vmem:[#allocation4 + $0x68] sm:$0xff]
        %v1982 = vld [vmem:[#allocation4 + $0x70] sm:$0xff]
        %v1983 = vld [vmem:[#allocation4 + $0x78] sm:$0xff]
        %v1984 = vld [vmem:[#allocation4 + $0x80] sm:$0xff]
        %v1985 = vld [vmem:[#allocation4 + $0x88] sm:$0xff]
        %v1986 = vld [vmem:[#allocation4 + $0x90] sm:$0xff]
        %v1987 = vld [vmem:[#allocation4 + $0x98] sm:$0xff]
        %v1988 = vld [vmem:[#allocation4 + $0xa0] sm:$0xff]
        %v1989 = vld [vmem:[#allocation4 + $0xa8] sm:$0xff]
        %v1990 = vld [vmem:[#allocation4 + $0xb0] sm:$0xff]
        %v1991 = vld [vmem:[#allocation4 + $0xb8] sm:$0xff]
        %v1992 = vld [vmem:[#allocation4 + $0xc0] sm:$0xff]
        %v1993 = vld [vmem:[#allocation4 + $0xc8] sm:$0xff]
        %v1994 = vld [vmem:[#allocation4 + $0xd0] sm:$0xff]
        %v1995 = vld [vmem:[#allocation4 + $0xd8] sm:$0xff]
        %v1996 = vld [vmem:[#allocation4 + $0xe0] sm:$0xff]
        %v1997 = vld [vmem:[#allocation4 + $0xe8] sm:$0xff]
        %v1998 = vld [vmem:[#allocation4 + $0xf0] sm:$0xff]
        %v1999 = vld [vmem:[#allocation4 + $0xf8] sm:$0xff]
        %v2000 = vld [vmem:[#allocation4 + $0x100] sm:$0xff]
        %v2001 = vld [vmem:[#allocation4 + $0x108] sm:$0xff]
        %v2002 = vld [vmem:[#allocation4 + $0x110] sm:$0xff]
        %v2003 = vld [vmem:[#allocation4 + $0x118] sm:$0xff]
        %v2004 = vld [vmem:[#allocation4 + $0x120] sm:$0xff]
        %v2005 = vld [vmem:[#allocation4 + $0x128] sm:$0xff]
        %v2006 = vld [vmem:[#allocation4 + $0x130] sm:$0xff]
        %v2007 = vld [vmem:[#allocation4 + $0x138] sm:$0xff]
        %v2008 = vld [vmem:[#allocation4 + $0x140] sm:$0xff]
        %v2009 = vld [vmem:[#allocation4 + $0x148] sm:$0xff]
        %v2010 = vld [vmem:[#allocation4 + $0x150] sm:$0xff]
        %v2011 = vld [vmem:[#allocation4 + $0x158] sm:$0xff]
        %v2012 = vld [vmem:[#allocation4 + $0x160] sm:$0xff]
        %v2013 = vld [vmem:[#allocation4 + $0x168] sm:$0xff]
        %v2014 = vld [vmem:[#allocation4 + $0x170] sm:$0xff]
        %v2015 = vld [vmem:[#allocation4 + $0x178] sm:$0xff]
        %v2016 = vld [vmem:[#allocation4 + $0x180] sm:$0xff]
        %v2017 = vld [vmem:[#allocation4 + $0x188] sm:$0xff]
        %v2018 = vld [vmem:[#allocation4 + $0x190] sm:$0xff]
        %v2019 = vld [vmem:[#allocation4 + $0x198] sm:$0xff]
        %v2020 = vld [vmem:[#allocation4 + $0x1a0] sm:$0xff]
        %v2021 = vld [vmem:[#allocation4 + $0x1a8] sm:$0xff]
        %v2022 = vld [vmem:[#allocation4 + $0x1b0] sm:$0xff]
        %v2023 = vld [vmem:[#allocation4 + $0x1b8] sm:$0xff]
        %v2024 = vld [vmem:[#allocation4 + $0x1c0] sm:$0xff]
        %v2025 = vld [vmem:[#allocation4 + $0x1c8] sm:$0xff]
        %v2026 = vld [vmem:[#allocation4 + $0x1d0] sm:$0xff]
        %v2027 = vld [vmem:[#allocation4 + $0x1d8] sm:$0xff]
        %v2028 = vld [vmem:[#allocation4 + $0x1e0] sm:$0xff]
        %v2029 = vld [vmem:[#allocation4 + $0x1e8] sm:$0xff]
        %v2030 = vld [vmem:[#allocation4 + $0x1f0] sm:$0xff]
        %v2031 = vld [vmem:[#allocation4 + $0x1f8] sm:$0xff]
        %v2032 = vld [vmem:[#allocation4 + $0x200] sm:$0xff]
        %v2033 = vld [vmem:[#allocation4 + $0x208] sm:$0xff]
        %v2034 = vld [vmem:[#allocation4 + $0x210] sm:$0xff]
        %v2035 = vld [vmem:[#allocation4 + $0x218] sm:$0xff]
        %v2036 = vld [vmem:[#allocation4 + $0x220] sm:$0xff]
        %v2037 = vld [vmem:[#allocation4 + $0x228] sm:$0xff]
        %v2038 = vld [vmem:[#allocation4 + $0x230] sm:$0xff]
        %v2039 = vld [vmem:[#allocation4 + $0x238] sm:$0xff]
        %v2040 = vld [vmem:[#allocation4 + $0x240] sm:$0xff]
        %v2041 = vld [vmem:[#allocation4 + $0x248] sm:$0xff]
        %v2042 = vld [vmem:[#allocation4 + $0x250] sm:$0xff]
        %v2043 = vld [vmem:[#allocation4 + $0x258] sm:$0xff]
        %v2044 = vld [vmem:[#allocation4 + $0x260] sm:$0xff]
        %v2045 = vld [vmem:[#allocation4 + $0x268] sm:$0xff]
        %v2046 = vld [vmem:[#allocation4 + $0x270] sm:$0xff]
        %v2047 = vld [vmem:[#allocation4 + $0x278] sm:$0xff]
        %v2048 = vld [vmem:[#allocation4 + $0x280] sm:$0xff]
        %v2049 = vld [vmem:[#allocation4 + $0x288] sm:$0xff]
        %v2050 = vld [vmem:[#allocation4 + $0x290] sm:$0xff]
        %v2051 = vld [vmem:[#allocation4 + $0x298] sm:$0xff]
        %v2052 = vld [vmem:[#allocation4 + $0x2a0] sm:$0xff]
        %v2053 = vld [vmem:[#allocation4 + $0x2a8] sm:$0xff]
        %v2054 = vld [vmem:[#allocation4 + $0x2b0] sm:$0xff]
        %v2055 = vld [vmem:[#allocation4 + $0x2b8] sm:$0xff]
        %v2056 = vld [vmem:[#allocation4 + $0x2c0] sm:$0xff]
        %v2057 = vld [vmem:[#allocation4 + $0x2c8] sm:$0xff]
        %v2058 = vld [vmem:[#allocation4 + $0x2d0] sm:$0xff]
        %v2059 = vld [vmem:[#allocation4 + $0x2d8] sm:$0xff]
        %v2060 = vld [vmem:[#allocation4 + $0x2e0] sm:$0xff]
        %v2061 = vld [vmem:[#allocation4 + $0x2e8] sm:$0xff]
        %v2062 = vld [vmem:[#allocation4 + $0x2f0] sm:$0xff]
        %v2063 = vld [vmem:[#allocation4 + $0x2f8] sm:$0xff]
        %v2064 = vpack.c.bf16 %v1971, %v1968
        %v2065 = vpack.c.bf16 %v1972, %v1969
        %v2066 = vpack.c.bf16 %v1973, %v1970
        %v2067 = vpack.c.bf16 %v1977, %v1974
        %v2068 = vpack.c.bf16 %v1978, %v1975
        %v2069 = vpack.c.bf16 %v1979, %v1976
        %v2070 = vpack.c.bf16 %v1983, %v1980
        %v2071 = vpack.c.bf16 %v1984, %v1981
        %v2072 = vpack.c.bf16 %v1985, %v1982
        %v2073 = vpack.c.bf16 %v1989, %v1986
        %v2074 = vpack.c.bf16 %v1990, %v1987
        %v2075 = vpack.c.bf16 %v1991, %v1988
        %v2076 = vpack.c.bf16 %v1995, %v1992
        %v2077 = vpack.c.bf16 %v1996, %v1993
        %v2078 = vpack.c.bf16 %v1997, %v1994
        %v2079 = vpack.c.bf16 %v2001, %v1998
        %v2080 = vpack.c.bf16 %v2002, %v1999
        %v2081 = vpack.c.bf16 %v2003, %v2000
        %v2082 = vpack.c.bf16 %v2007, %v2004
        %v2083 = vpack.c.bf16 %v2008, %v2005
        %v2084 = vpack.c.bf16 %v2009, %v2006
        %v2085 = vpack.c.bf16 %v2013, %v2010
        %v2086 = vpack.c.bf16 %v2014, %v2011
        %v2087 = vpack.c.bf16 %v2015, %v2012
        %v2088 = vpack.c.bf16 %v2019, %v2016
        %v2089 = vpack.c.bf16 %v2020, %v2017
        %v2090 = vpack.c.bf16 %v2021, %v2018
        %v2091 = vpack.c.bf16 %v2025, %v2022
        %v2092 = vpack.c.bf16 %v2026, %v2023
        %v2093 = vpack.c.bf16 %v2027, %v2024
        %v2094 = vpack.c.bf16 %v2031, %v2028
        %v2095 = vpack.c.bf16 %v2032, %v2029
        %v2096 = vpack.c.bf16 %v2033, %v2030
        %v2097 = vpack.c.bf16 %v2037, %v2034
        %v2098 = vpack.c.bf16 %v2038, %v2035
        %v2099 = vpack.c.bf16 %v2039, %v2036
        %v2100 = vpack.c.bf16 %v2043, %v2040
        %v2101 = vpack.c.bf16 %v2044, %v2041
        %v2102 = vpack.c.bf16 %v2045, %v2042
        %v2103 = vpack.c.bf16 %v2049, %v2046
        %v2104 = vpack.c.bf16 %v2050, %v2047
        %v2105 = vpack.c.bf16 %v2051, %v2048
        %v2106 = vpack.c.bf16 %v2055, %v2052
        %v2107 = vpack.c.bf16 %v2056, %v2053
        %v2108 = vpack.c.bf16 %v2057, %v2054
        %v2109 = vpack.c.bf16 %v2061, %v2058
        %v2110 = vpack.c.bf16 %v2062, %v2059
        %v2111 = vpack.c.bf16 %v2063, %v2060
        %v2113 = vlaneseq
        %v2114 = vshrl.u32 %v2113, 7
        %v2115 = vsub.s32 0, %v2114
        %v2116 = vrot.slane %v617, %v2115
        %v2154 = vunpack.c.l.b16 %v580
        %v2155 = vunpack.c.l.b16 %v581
        %v2156 = vunpack.c.l.b16 %v582
        %v2157 = vunpack.c.l.b16 %v583
        %v2158 = vunpack.c.l.b16 %v584
        %v2159 = vunpack.c.l.b16 %v585
        %v2160 = vunpack.c.l.b16 %v586
        %v2161 = vunpack.c.l.b16 %v587
        %v2162 = vunpack.c.l.b16 %v588
        %v2163 = vunpack.c.l.b16 %v589
        %v2164 = vunpack.c.l.b16 %v590
        %v2165 = vunpack.c.l.b16 %v591
        %v2166 = vunpack.c.l.b16 %v592
        %v2167 = vunpack.c.l.b16 %v593
        %v2168 = vunpack.c.l.b16 %v594
        %v2169 = vunpack.c.l.b16 %v595
        %v2170 = vunpack.c.l.b16 %v596
        %v2171 = vunpack.c.l.b16 %v597
        %v2172 = vunpack.c.l.b16 %v598
        %v2173 = vunpack.c.l.b16 %v599
        %v2174 = vunpack.c.l.b16 %v600
        %v2175 = vunpack.c.l.b16 %v601
        %v2176 = vunpack.c.l.b16 %v602
        %v2177 = vunpack.c.l.b16 %v603
        %v2178 = vunpack.c.l.b16 %v604
        %v2179 = vunpack.c.l.b16 %v605
        %v2180 = vunpack.c.l.b16 %v606
        %v2181 = vunpack.c.l.b16 %v607
        %v2182 = vunpack.c.l.b16 %v608
        %v2183 = vunpack.c.l.b16 %v609
        %v2184 = vunpack.c.l.b16 %v610
        %v2185 = vunpack.c.l.b16 %v611
        %v2186 = vunpack.c.l.b16 %v612
        %v2187 = vunpack.c.l.b16 %v613
        %v2188 = vunpack.c.l.b16 %v614
        %v2189 = vunpack.c.l.b16 %v615
        %v2190 = vpack.c.b16 %v2155, %v2154
        %v2191 = vpack.c.b16 %v2157, %v2156
        %v2192 = vpack.c.b16 %v2159, %v2158
        %v2193 = vpack.c.b16 %v2161, %v2160
        %v2194 = vpack.c.b16 %v2163, %v2162
        %v2195 = vpack.c.b16 %v2165, %v2164
        %v2196 = vpack.c.b16 %v2167, %v2166
        %v2197 = vpack.c.b16 %v2169, %v2168
        %v2198 = vpack.c.b16 %v2171, %v2170
        %v2199 = vpack.c.b16 %v2173, %v2172
        %v2200 = vpack.c.b16 %v2175, %v2174
        %v2201 = vpack.c.b16 %v2177, %v2176
        %v2202 = vpack.c.b16 %v2179, %v2178
        %v2203 = vpack.c.b16 %v2181, %v2180
        %v2204 = vpack.c.b16 %v2183, %v2182
        %v2205 = vpack.c.b16 %v2185, %v2184
        %v2206 = vpack.c.b16 %v2187, %v2186
        %v2207 = vpack.c.b16 %v2189, %v2188
        %v2227 = vsel %vm650, %v2066, 0
        %v2230 = vsel %vm650, %v2069, 0
        %v2233 = vsel %vm650, %v2072, 0
        %v2236 = vsel %vm650, %v2075, 0
        %v2239 = vsel %vm650, %v2078, 0
        %v2242 = vsel %vm650, %v2081, 0
        %v2245 = vsel %vm650, %v2084, 0
        %v2248 = vsel %vm650, %v2087, 0
        %v2251 = vsel %vm650, %v2090, 0
        %v2254 = vsel %vm650, %v2093, 0
        %v2257 = vsel %vm650, %v2096, 0
        %v2260 = vsel %vm650, %v2099, 0
        %v2263 = vsel %vm650, %v2102, 0
        %v2266 = vsel %vm650, %v2105, 0
        %v2269 = vsel %vm650, %v2108, 0
        %v2272 = vsel %vm650, %v2111, 0
        %2274 = vmatprep.subr.bf16.mxu0 0
        %2275 = vmatpush1.bf16.msra.mxu0 %v2197
        %2276 = vmatprep.subr.bf16.mxu0 0
        %2277 = vmatpush1.bf16.msra.mxu0 %v2196
        %2278 = vmatprep.subr.bf16.mxu0 0
        %2279 = vmatpush1.bf16.msra.mxu0 %v2195
        %2280 = vmatprep.subr.bf16.mxu0 0
        %2281 = vmatpush1.bf16.msra.mxu0 %v2194
        %2282 = vmatprep.subr.bf16.mxu0 0
        %2283 = vmatpush1.bf16.msra.mxu0 %v2193
        %2284 = vmatprep.subr.bf16.mxu0 0
        %2285 = vmatpush1.bf16.msra.mxu0 %v2192
        %2286 = vmatprep.subr.bf16.mxu0 0
        %2287 = vmatpush1.bf16.msra.mxu0 %v2191
        %2288 = vmatprep.subr.bf16.mxu0 0
        %2289 = vmatpush1.bf16.msra.mxu0 %v2190
        %2290 = vmatprep.subr.bf16.mxu0 0
        %2291 = vmatpush2.bf16.msra.mxu0 %v2205
        %2292 = vmatprep.subr.bf16.mxu0 0
        %2293 = vmatpush2.bf16.msra.mxu0 %v2204
        %2294 = vmatprep.subr.bf16.mxu0 0
        %2295 = vmatpush2.bf16.msra.mxu0 %v2203
        %2296 = vmatprep.subr.bf16.mxu0 0
        %2297 = vmatpush2.bf16.msra.mxu0 %v2202
        %2298 = vmatprep.subr.bf16.mxu0 0
        %2299 = vmatpush2.bf16.msra.mxu0 %v2201
        %2300 = vmatprep.subr.bf16.mxu0 0
        %2301 = vmatpush2.bf16.msra.mxu0 %v2200
        %2302 = vmatprep.subr.bf16.mxu0 0
        %2303 = vmatpush2.bf16.msra.mxu0 %v2199
        %2304 = vmatprep.subr.bf16.mxu0 0
        %2305 = vmatpush2.bf16.msra.mxu0 %v2198
        %2306 = vmatprep.mubr.bf16.mxu0 %v2065
        %2307 = vmatmul.mubr.bf16.gmra.mxu0 %v2064
        %v2308 = vpop.f32.mrf.mxu0
        %v2309 = vadd.f32 %v2116, %v2308
        %v2310 = vpop.f32.mrf.mxu0
        %v2311 = vpop.f32.mrf.mxu0
        %v2312 = vadd.f32 %v2116, %v2311
        %v2313 = vpop.f32.mrf.mxu0
        %2314 = vmatprep.mubr.bf16.mxu0 %v2068
        %2315 = vmatmul.mubr.bf16.gmra.mxu0 %v2067
        %v2316 = vpop.f32.mrf.mxu0
        %v2317 = vadd.f32 %v2116, %v2316
        %v2318 = vpop.f32.mrf.mxu0
        %v2319 = vpop.f32.mrf.mxu0
        %v2320 = vadd.f32 %v2116, %v2319
        %v2321 = vpop.f32.mrf.mxu0
        %2322 = vmatprep.mubr.bf16.mxu0 %v2071
        %2323 = vmatmul.mubr.bf16.gmra.mxu0 %v2070
        %v2324 = vpop.f32.mrf.mxu0
        %v2325 = vadd.f32 %v2116, %v2324
        %v2326 = vpop.f32.mrf.mxu0
        %v2327 = vpop.f32.mrf.mxu0
        %v2328 = vadd.f32 %v2116, %v2327
        %v2329 = vpop.f32.mrf.mxu0
        %2330 = vmatprep.mubr.bf16.mxu0 %v2074
        %2331 = vmatmul.mubr.bf16.gmra.mxu0 %v2073
        %v2332 = vpop.f32.mrf.mxu0
        %v2333 = vadd.f32 %v2116, %v2332
        %v2334 = vpop.f32.mrf.mxu0
        %v2335 = vpop.f32.mrf.mxu0
        %v2336 = vadd.f32 %v2116, %v2335
        %v2337 = vpop.f32.mrf.mxu0
        %2338 = vmatprep.mubr.bf16.mxu0 %v2077
        %2339 = vmatmul.mubr.bf16.gmra.mxu0 %v2076
        %v2340 = vpop.f32.mrf.mxu0
        %v2341 = vadd.f32 %v2116, %v2340
        %v2342 = vpop.f32.mrf.mxu0
        %v2343 = vpop.f32.mrf.mxu0
        %v2344 = vadd.f32 %v2116, %v2343
        %v2345 = vpop.f32.mrf.mxu0
        %2346 = vmatprep.mubr.bf16.mxu0 %v2080
        %2347 = vmatmul.mubr.bf16.gmra.mxu0 %v2079
        %v2348 = vpop.f32.mrf.mxu0
        %v2349 = vadd.f32 %v2116, %v2348
        %v2350 = vpop.f32.mrf.mxu0
        %v2351 = vpop.f32.mrf.mxu0
        %v2352 = vadd.f32 %v2116, %v2351
        %v2353 = vpop.f32.mrf.mxu0
        %2354 = vmatprep.mubr.bf16.mxu0 %v2083
        %2355 = vmatmul.mubr.bf16.gmra.mxu0 %v2082
        %v2356 = vpop.f32.mrf.mxu0
        %v2357 = vadd.f32 %v2116, %v2356
        %v2358 = vpop.f32.mrf.mxu0
        %v2359 = vpop.f32.mrf.mxu0
        %v2360 = vadd.f32 %v2116, %v2359
        %v2361 = vpop.f32.mrf.mxu0
        %2362 = vmatprep.mubr.bf16.mxu0 %v2086
        %2363 = vmatmul.mubr.bf16.gmra.mxu0 %v2085
        %v2364 = vpop.f32.mrf.mxu0
        %v2365 = vadd.f32 %v2116, %v2364
        %v2366 = vpop.f32.mrf.mxu0
        %v2367 = vpop.f32.mrf.mxu0
        %v2368 = vadd.f32 %v2116, %v2367
        %v2369 = vpop.f32.mrf.mxu0
        %2370 = vmatprep.mubr.bf16.mxu0 %v2089
        %2371 = vmatmul.mubr.bf16.gmra.mxu0 %v2088
        %v2372 = vpop.f32.mrf.mxu0
        %v2373 = vadd.f32 %v2116, %v2372
        %v2374 = vpop.f32.mrf.mxu0
        %v2375 = vpop.f32.mrf.mxu0
        %v2376 = vadd.f32 %v2116, %v2375
        %v2377 = vpop.f32.mrf.mxu0
        %2378 = vmatprep.mubr.bf16.mxu0 %v2092
        %2379 = vmatmul.mubr.bf16.gmra.mxu0 %v2091
        %v2380 = vpop.f32.mrf.mxu0
        %v2381 = vadd.f32 %v2116, %v2380
        %v2382 = vpop.f32.mrf.mxu0
        %v2383 = vpop.f32.mrf.mxu0
        %v2384 = vadd.f32 %v2116, %v2383
        %v2385 = vpop.f32.mrf.mxu0
        %2386 = vmatprep.mubr.bf16.mxu0 %v2095
        %2387 = vmatmul.mubr.bf16.gmra.mxu0 %v2094
        %v2388 = vpop.f32.mrf.mxu0
        %v2389 = vadd.f32 %v2116, %v2388
        %v2390 = vpop.f32.mrf.mxu0
        %v2391 = vpop.f32.mrf.mxu0
        %v2392 = vadd.f32 %v2116, %v2391
        %v2393 = vpop.f32.mrf.mxu0
        %2394 = vmatprep.mubr.bf16.mxu0 %v2098
        %2395 = vmatmul.mubr.bf16.gmra.mxu0 %v2097
        %v2396 = vpop.f32.mrf.mxu0
        %v2397 = vadd.f32 %v2116, %v2396
        %v2398 = vpop.f32.mrf.mxu0
        %v2399 = vpop.f32.mrf.mxu0
        %v2400 = vadd.f32 %v2116, %v2399
        %v2401 = vpop.f32.mrf.mxu0
        %2402 = vmatprep.mubr.bf16.mxu0 %v2101
        %2403 = vmatmul.mubr.bf16.gmra.mxu0 %v2100
        %v2404 = vpop.f32.mrf.mxu0
        %v2405 = vadd.f32 %v2116, %v2404
        %v2406 = vpop.f32.mrf.mxu0
        %v2407 = vpop.f32.mrf.mxu0
        %v2408 = vadd.f32 %v2116, %v2407
        %v2409 = vpop.f32.mrf.mxu0
        %2410 = vmatprep.mubr.bf16.mxu0 %v2104
        %2411 = vmatmul.mubr.bf16.gmra.mxu0 %v2103
        %v2412 = vpop.f32.mrf.mxu0
        %v2413 = vadd.f32 %v2116, %v2412
        %v2414 = vpop.f32.mrf.mxu0
        %v2415 = vpop.f32.mrf.mxu0
        %v2416 = vadd.f32 %v2116, %v2415
        %v2417 = vpop.f32.mrf.mxu0
        %2418 = vmatprep.mubr.bf16.mxu0 %v2107
        %2419 = vmatmul.mubr.bf16.gmra.mxu0 %v2106
        %v2420 = vpop.f32.mrf.mxu0
        %v2421 = vadd.f32 %v2116, %v2420
        %v2422 = vpop.f32.mrf.mxu0
        %v2423 = vpop.f32.mrf.mxu0
        %v2424 = vadd.f32 %v2116, %v2423
        %v2425 = vpop.f32.mrf.mxu0
        %2426 = vmatprep.mubr.bf16.mxu0 %v2110
        %2427 = vmatmul.mubr.bf16.gmra.mxu0 %v2109
        %v2428 = vpop.f32.mrf.mxu0
        %v2429 = vadd.f32 %v2116, %v2428
        %v2430 = vpop.f32.mrf.mxu0
        %v2431 = vpop.f32.mrf.mxu0
        %v2432 = vadd.f32 %v2116, %v2431
        %v2433 = vpop.f32.mrf.mxu0
        %2434 = vdwg.mxu0
        %2435 = vmatprep.subr.bf16.mxu0 0
        %2436 = vmatpush1.bf16.msra.mxu0 0
        %2437 = vmatprep.subr.bf16.mxu0 0
        %2438 = vmatpush1.bf16.msra.mxu0 0
        %2439 = vmatprep.subr.bf16.mxu0 0
        %2440 = vmatpush1.bf16.msra.mxu0 0
        %2441 = vmatprep.subr.bf16.mxu0 0
        %2442 = vmatpush1.bf16.msra.mxu0 0
        %2443 = vmatprep.subr.bf16.mxu0 0
        %2444 = vmatpush1.bf16.msra.mxu0 0
        %2445 = vmatprep.subr.bf16.mxu0 0
        %2446 = vmatpush1.bf16.msra.mxu0 0
        %2447 = vmatprep.subr.bf16.mxu0 0
        %2448 = vmatpush1.bf16.msra.mxu0 %v2207
        %2449 = vmatprep.subr.bf16.mxu0 0
        %2450 = vmatpush1.bf16.msra.mxu0 %v2206
        %2451 = vmatprep.subr.bf16.mxu0 0
        %2452 = vmatpush2.bf16.msra.mxu0 0
        %2453 = vmatprep.subr.bf16.mxu0 0
        %2454 = vmatpush2.bf16.msra.mxu0 0
        %2455 = vmatprep.subr.bf16.mxu0 0
        %2456 = vmatpush2.bf16.msra.mxu0 0
        %2457 = vmatprep.subr.bf16.mxu0 0
        %2458 = vmatpush2.bf16.msra.mxu0 0
        %2459 = vmatprep.subr.bf16.mxu0 0
        %2460 = vmatpush2.bf16.msra.mxu0 0
        %2461 = vmatprep.subr.bf16.mxu0 0
        %2462 = vmatpush2.bf16.msra.mxu0 0
        %2463 = vmatprep.subr.bf16.mxu0 0
        %2464 = vmatpush2.bf16.msra.mxu0 0
        %2465 = vmatprep.subr.bf16.mxu0 0
        %2466 = vmatpush2.bf16.msra.mxu0 0
        %2467 = vmatprep.mubr.bf16.mxu0 0
        %2468 = vmatmul.mubr.bf16.gmra.mxu0 %v2227
        %v2469 = vpop.f32.mrf.mxu0
        %v2470 = vadd.f32 %v2309, %v2469
        %v2471 = vpop.f32.mrf.mxu0
        %v2472 = vpop.f32.mrf.mxu0
        %v2473 = vadd.f32 %v2312, %v2472
        %v2474 = vpop.f32.mrf.mxu0
        %2475 = vmatprep.mubr.bf16.mxu0 0
        %2476 = vmatmul.mubr.bf16.gmra.mxu0 %v2230
        %v2477 = vpop.f32.mrf.mxu0
        %v2478 = vadd.f32 %v2317, %v2477
        %v2479 = vpop.f32.mrf.mxu0
        %v2480 = vpop.f32.mrf.mxu0
        %v2481 = vadd.f32 %v2320, %v2480
        %v2482 = vpop.f32.mrf.mxu0
        %2483 = vmatprep.mubr.bf16.mxu0 0
        %2484 = vmatmul.mubr.bf16.gmra.mxu0 %v2233
        %v2485 = vpop.f32.mrf.mxu0
        %v2486 = vadd.f32 %v2325, %v2485
        %v2487 = vpop.f32.mrf.mxu0
        %v2488 = vpop.f32.mrf.mxu0
        %v2489 = vadd.f32 %v2328, %v2488
        %v2490 = vpop.f32.mrf.mxu0
        %2491 = vmatprep.mubr.bf16.mxu0 0
        %2492 = vmatmul.mubr.bf16.gmra.mxu0 %v2236
        %v2493 = vpop.f32.mrf.mxu0
        %v2494 = vadd.f32 %v2333, %v2493
        %v2495 = vpop.f32.mrf.mxu0
        %v2496 = vpop.f32.mrf.mxu0
        %v2497 = vadd.f32 %v2336, %v2496
        %v2498 = vpop.f32.mrf.mxu0
        %2499 = vmatprep.mubr.bf16.mxu0 0
        %2500 = vmatmul.mubr.bf16.gmra.mxu0 %v2239
        %v2501 = vpop.f32.mrf.mxu0
        %v2502 = vadd.f32 %v2341, %v2501
        %v2503 = vpop.f32.mrf.mxu0
        %v2504 = vpop.f32.mrf.mxu0
        %v2505 = vadd.f32 %v2344, %v2504
        %v2506 = vpop.f32.mrf.mxu0
        %2507 = vmatprep.mubr.bf16.mxu0 0
        %2508 = vmatmul.mubr.bf16.gmra.mxu0 %v2242
        %v2509 = vpop.f32.mrf.mxu0
        %v2510 = vadd.f32 %v2349, %v2509
        %v2511 = vpop.f32.mrf.mxu0
        %v2512 = vpop.f32.mrf.mxu0
        %v2513 = vadd.f32 %v2352, %v2512
        %v2514 = vpop.f32.mrf.mxu0
        %2515 = vmatprep.mubr.bf16.mxu0 0
        %2516 = vmatmul.mubr.bf16.gmra.mxu0 %v2245
        %v2517 = vpop.f32.mrf.mxu0
        %v2518 = vadd.f32 %v2357, %v2517
        %v2519 = vpop.f32.mrf.mxu0
        %v2520 = vpop.f32.mrf.mxu0
        %v2521 = vadd.f32 %v2360, %v2520
        %v2522 = vpop.f32.mrf.mxu0
        %2523 = vmatprep.mubr.bf16.mxu0 0
        %2524 = vmatmul.mubr.bf16.gmra.mxu0 %v2248
        %v2525 = vpop.f32.mrf.mxu0
        %v2526 = vadd.f32 %v2365, %v2525
        %v2527 = vpop.f32.mrf.mxu0
        %v2528 = vpop.f32.mrf.mxu0
        %v2529 = vadd.f32 %v2368, %v2528
        %v2530 = vpop.f32.mrf.mxu0
        %2531 = vmatprep.mubr.bf16.mxu0 0
        %2532 = vmatmul.mubr.bf16.gmra.mxu0 %v2251
        %v2533 = vpop.f32.mrf.mxu0
        %v2534 = vadd.f32 %v2373, %v2533
        %v2535 = vpop.f32.mrf.mxu0
        %v2536 = vpop.f32.mrf.mxu0
        %v2537 = vadd.f32 %v2376, %v2536
        %v2538 = vpop.f32.mrf.mxu0
        %2539 = vmatprep.mubr.bf16.mxu0 0
        %2540 = vmatmul.mubr.bf16.gmra.mxu0 %v2254
        %v2541 = vpop.f32.mrf.mxu0
        %v2542 = vadd.f32 %v2381, %v2541
        %v2543 = vpop.f32.mrf.mxu0
        %v2544 = vpop.f32.mrf.mxu0
        %v2545 = vadd.f32 %v2384, %v2544
        %v2546 = vpop.f32.mrf.mxu0
        %2547 = vmatprep.mubr.bf16.mxu0 0
        %2548 = vmatmul.mubr.bf16.gmra.mxu0 %v2257
        %v2549 = vpop.f32.mrf.mxu0
        %v2550 = vadd.f32 %v2389, %v2549
        %v2551 = vpop.f32.mrf.mxu0
        %v2552 = vpop.f32.mrf.mxu0
        %v2553 = vadd.f32 %v2392, %v2552
        %v2554 = vpop.f32.mrf.mxu0
        %2555 = vmatprep.mubr.bf16.mxu0 0
        %2556 = vmatmul.mubr.bf16.gmra.mxu0 %v2260
        %v2557 = vpop.f32.mrf.mxu0
        %v2558 = vadd.f32 %v2397, %v2557
        %v2559 = vpop.f32.mrf.mxu0
        %v2560 = vpop.f32.mrf.mxu0
        %v2561 = vadd.f32 %v2400, %v2560
        %v2562 = vpop.f32.mrf.mxu0
        %2563 = vmatprep.mubr.bf16.mxu0 0
        %2564 = vmatmul.mubr.bf16.gmra.mxu0 %v2263
        %v2565 = vpop.f32.mrf.mxu0
        %v2566 = vadd.f32 %v2405, %v2565
        %v2567 = vpop.f32.mrf.mxu0
        %v2568 = vpop.f32.mrf.mxu0
        %v2569 = vadd.f32 %v2408, %v2568
        %v2570 = vpop.f32.mrf.mxu0
        %2571 = vmatprep.mubr.bf16.mxu0 0
        %2572 = vmatmul.mubr.bf16.gmra.mxu0 %v2266
        %v2573 = vpop.f32.mrf.mxu0
        %v2574 = vadd.f32 %v2413, %v2573
        %v2575 = vpop.f32.mrf.mxu0
        %v2576 = vpop.f32.mrf.mxu0
        %v2577 = vadd.f32 %v2416, %v2576
        %v2578 = vpop.f32.mrf.mxu0
        %2579 = vmatprep.mubr.bf16.mxu0 0
        %2580 = vmatmul.mubr.bf16.gmra.mxu0 %v2269
        %v2581 = vpop.f32.mrf.mxu0
        %v2582 = vadd.f32 %v2421, %v2581
        %v2583 = vpop.f32.mrf.mxu0
        %v2584 = vpop.f32.mrf.mxu0
        %v2585 = vadd.f32 %v2424, %v2584
        %v2586 = vpop.f32.mrf.mxu0
        %2587 = vmatprep.mubr.bf16.mxu0 0
        %2588 = vmatmul.mubr.bf16.gmra.mxu0 %v2272
        %v2589 = vpop.f32.mrf.mxu0
        %v2590 = vadd.f32 %v2429, %v2589
        %v2591 = vpop.f32.mrf.mxu0
        %v2592 = vpop.f32.mrf.mxu0
        %v2593 = vadd.f32 %v2432, %v2592
        %v2594 = vpop.f32.mrf.mxu0
        %2595 = vdwg.mxu0
        %v2596 = vmax.f32 %v2470, 0.0
        %v2597 = vmax.f32 %v2473, 0.0
        %v2598 = vmax.f32 %v2478, 0.0
        %v2599 = vmax.f32 %v2481, 0.0
        %v2600 = vmax.f32 %v2486, 0.0
        %v2601 = vmax.f32 %v2489, 0.0
        %v2602 = vmax.f32 %v2494, 0.0
        %v2603 = vmax.f32 %v2497, 0.0
        %v2604 = vmax.f32 %v2502, 0.0
        %v2605 = vmax.f32 %v2505, 0.0
        %v2606 = vmax.f32 %v2510, 0.0
        %v2607 = vmax.f32 %v2513, 0.0
        %v2608 = vmax.f32 %v2518, 0.0
        %v2609 = vmax.f32 %v2521, 0.0
        %v2610 = vmax.f32 %v2526, 0.0
        %v2611 = vmax.f32 %v2529, 0.0
        %v2612 = vmax.f32 %v2534, 0.0
        %v2613 = vmax.f32 %v2537, 0.0
        %v2614 = vmax.f32 %v2542, 0.0
        %v2615 = vmax.f32 %v2545, 0.0
        %v2616 = vmax.f32 %v2550, 0.0
        %v2617 = vmax.f32 %v2553, 0.0
        %v2618 = vmax.f32 %v2558, 0.0
        %v2619 = vmax.f32 %v2561, 0.0
        %v2620 = vmax.f32 %v2566, 0.0
        %v2621 = vmax.f32 %v2569, 0.0
        %v2622 = vmax.f32 %v2574, 0.0
        %v2623 = vmax.f32 %v2577, 0.0
        %v2624 = vmax.f32 %v2582, 0.0
        %v2625 = vmax.f32 %v2585, 0.0
        %v2626 = vmax.f32 %v2590, 0.0
        %v2627 = vmax.f32 %v2593, 0.0
        %s2628 = scalar_lea.vmem [#allocation3], 24
        %2629 = vst.msk [vmem:[%s2628 + $0x1] sm:$0xff] %vm650, %v2596
        %2630 = vst.msk [vmem:[%s2628 + $0x9] sm:$0xff] %vm650, %v2597
        %2631 = vst.msk [vmem:[%s2628 + $0x19] sm:$0xff] %vm650, %v2598
        %2632 = vst.msk [vmem:[%s2628 + $0x21] sm:$0xff] %vm650, %v2599
        %2633 = vst.msk [vmem:[%s2628 + $0x31] sm:$0xff] %vm650, %v2600
        %2634 = vst.msk [vmem:[%s2628 + $0x39] sm:$0xff] %vm650, %v2601
        %2635 = vst.msk [vmem:[%s2628 + $0x49] sm:$0xff] %vm650, %v2602
        %2636 = vst.msk [vmem:[%s2628 + $0x51] sm:$0xff] %vm650, %v2603
        %2637 = vst.msk [vmem:[%s2628 + $0x61] sm:$0xff] %vm650, %v2604
        %2638 = vst.msk [vmem:[%s2628 + $0x69] sm:$0xff] %vm650, %v2605
        %2639 = vst.msk [vmem:[%s2628 + $0x79] sm:$0xff] %vm650, %v2606
        %2640 = vst.msk [vmem:[%s2628 + $0x81] sm:$0xff] %vm650, %v2607
        %2641 = vst.msk [vmem:[%s2628 + $0x91] sm:$0xff] %vm650, %v2608
        %2642 = vst.msk [vmem:[%s2628 + $0x99] sm:$0xff] %vm650, %v2609
        %2643 = vst.msk [vmem:[%s2628 + $0xa9] sm:$0xff] %vm650, %v2610
        %2644 = vst.msk [vmem:[%s2628 + $0xb1] sm:$0xff] %vm650, %v2611
        %2645 = vst.msk [vmem:[%s2628 + $0xc1] sm:$0xff] %vm650, %v2612
        %2646 = vst.msk [vmem:[%s2628 + $0xc9] sm:$0xff] %vm650, %v2613
        %2647 = vst.msk [vmem:[%s2628 + $0xd9] sm:$0xff] %vm650, %v2614
        %2648 = vst.msk [vmem:[%s2628 + $0xe1] sm:$0xff] %vm650, %v2615
        %2649 = vst.msk [vmem:[%s2628 + $0xf1] sm:$0xff] %vm650, %v2616
        %2650 = vst.msk [vmem:[%s2628 + $0xf9] sm:$0xff] %vm650, %v2617
        %2651 = vst.msk [vmem:[%s2628 + $0x109] sm:$0xff] %vm650, %v2618
        %2652 = vst.msk [vmem:[%s2628 + $0x111] sm:$0xff] %vm650, %v2619
        %2653 = vst.msk [vmem:[%s2628 + $0x121] sm:$0xff] %vm650, %v2620
        %2654 = vst.msk [vmem:[%s2628 + $0x129] sm:$0xff] %vm650, %v2621
        %2655 = vst.msk [vmem:[%s2628 + $0x139] sm:$0xff] %vm650, %v2622
        %2656 = vst.msk [vmem:[%s2628 + $0x141] sm:$0xff] %vm650, %v2623
        %2657 = vst.msk [vmem:[%s2628 + $0x151] sm:$0xff] %vm650, %v2624
        %2658 = vst.msk [vmem:[%s2628 + $0x159] sm:$0xff] %vm650, %v2625
        %2659 = vst.msk [vmem:[%s2628 + $0x169] sm:$0xff] %vm650, %v2626
        %2660 = vst.msk [vmem:[%s2628 + $0x171] sm:$0xff] %vm650, %v2627
        %s2661 = smul.addr %s577, 4
        %s2662 = scalar_lea.vmem %s3, %s2661
        %v2663 = vld [vmem:[%s2662] sm:$0xf]
        %v2664 = vld [vmem:[%s2662 + $0x4] sm:$0xf]
        %v2665 = vld [vmem:[%s2662 + $0x8] sm:$0xf]
        %v2666 = vld [vmem:[%s2662 + $0xc] sm:$0xf]
        %v2667 = vld [vmem:[%s2662 + $0x10] sm:$0xf]
        %v2668 = vld [vmem:[%s2662 + $0x14] sm:$0xf]
        %v2669 = vld [vmem:[%s2662 + $0x18] sm:$0xf]
        %v2670 = vld [vmem:[%s2662 + $0x1c] sm:$0xf]
        %v2671 = vld [vmem:[%s2662 + $0x20] sm:$0xf]
        %v2672 = vld [vmem:[%s2662 + $0x24] sm:$0xf]
        %v2673 = vld [vmem:[%s2662 + $0x28] sm:$0xf]
        %v2674 = vld [vmem:[%s2662 + $0x2c] sm:$0xf]
        %v2675 = vld [vmem:[%s2662 + $0x30] sm:$0xf]
        %v2676 = vld [vmem:[%s2662 + $0x34] sm:$0xf]
        %v2677 = vld [vmem:[%s2662 + $0x38] sm:$0xf]
        %v2678 = vld [vmem:[%s2662 + $0x3c] sm:$0xf]
        %v2679 = vld [vmem:[%s2662 + $0x40] sm:$0xf]
        %v2680 = vld [vmem:[%s2662 + $0x44] sm:$0xf]
        %v2681 = vld [vmem:[%s2662 + $0x48] sm:$0xf]
        %v2682 = vld [vmem:[%s2662 + $0x4c] sm:$0xf]
        %v2683 = vld [vmem:[%s2662 + $0x50] sm:$0xf]
        %v2684 = vld [vmem:[%s2662 + $0x54] sm:$0xf]
        %v2685 = vld [vmem:[%s2662 + $0x58] sm:$0xf]
        %v2686 = vld [vmem:[%s2662 + $0x5c] sm:$0xf]
        %v2687 = vld [vmem:[%s2662 + $0x60] sm:$0xf]
        %v2688 = vld [vmem:[%s2662 + $0x64] sm:$0xf]
        %v2689 = vld [vmem:[%s2662 + $0x68] sm:$0xf]
        %v2690 = vld [vmem:[%s2662 + $0x6c] sm:$0xf]
        %v2691 = vld [vmem:[%s2662 + $0x70] sm:$0xf]
        %v2692 = vld [vmem:[%s2662 + $0x74] sm:$0xf]
        %v2693 = vld [vmem:[%s2662 + $0x78] sm:$0xf]
        %v2694 = vld [vmem:[%s2662 + $0x7c] sm:$0xf]
        %v2695 = vld [vmem:[%s2662 + $0x80] sm:$0xf]
        %v2696 = vld [vmem:[%s2662 + $0x84] sm:$0xf]
        %v2697 = vld [vmem:[%s2662 + $0x88] sm:$0xf]
        %v2698 = vld [vmem:[%s2662 + $0x8c] sm:$0xf]
        %s2699 = scalar_lea.vmem %s4, %s30
        %v2700 = vld [vmem:[%s2699] sm:$0x1]
        %v2701 = vld [vmem:[#allocation3] sm:$0xff]
        %v2702 = vld [vmem:[#allocation3 + $0x8] sm:$0xff]
        %v2703 = vld [vmem:[#allocation3 + $0x18] sm:$0xff]
        %v2704 = vld [vmem:[#allocation3 + $0x20] sm:$0xff]
        %v2705 = vld [vmem:[#allocation3 + $0x30] sm:$0xff]
        %v2706 = vld [vmem:[#allocation3 + $0x38] sm:$0xff]
        %v2707 = vld [vmem:[#allocation3 + $0x48] sm:$0xff]
        %v2708 = vld [vmem:[#allocation3 + $0x50] sm:$0xff]
        %v2709 = vld [vmem:[#allocation3 + $0x60] sm:$0xff]
        %v2710 = vld [vmem:[#allocation3 + $0x68] sm:$0xff]
        %v2711 = vld [vmem:[#allocation3 + $0x78] sm:$0xff]
        %v2712 = vld [vmem:[#allocation3 + $0x80] sm:$0xff]
        %v2713 = vld [vmem:[#allocation3 + $0x90] sm:$0xff]
        %v2714 = vld [vmem:[#allocation3 + $0x98] sm:$0xff]
        %v2715 = vld [vmem:[#allocation3 + $0xa8] sm:$0xff]
        %v2716 = vld [vmem:[#allocation3 + $0xb0] sm:$0xff]
        %v2717 = vld [vmem:[#allocation3 + $0xc0] sm:$0xff]
        %v2718 = vld [vmem:[#allocation3 + $0xc8] sm:$0xff]
        %v2719 = vld [vmem:[#allocation3 + $0xd8] sm:$0xff]
        %v2720 = vld [vmem:[#allocation3 + $0xe0] sm:$0xff]
        %v2721 = vld [vmem:[#allocation3 + $0xf0] sm:$0xff]
        %v2722 = vld [vmem:[#allocation3 + $0xf8] sm:$0xff]
        %v2723 = vld [vmem:[#allocation3 + $0x108] sm:$0xff]
        %v2724 = vld [vmem:[#allocation3 + $0x110] sm:$0xff]
        %v2725 = vld [vmem:[#allocation3 + $0x120] sm:$0xff]
        %v2726 = vld [vmem:[#allocation3 + $0x128] sm:$0xff]
        %v2727 = vld [vmem:[#allocation3 + $0x138] sm:$0xff]
        %v2728 = vld [vmem:[#allocation3 + $0x140] sm:$0xff]
        %v2729 = vld [vmem:[#allocation3 + $0x150] sm:$0xff]
        %v2730 = vld [vmem:[#allocation3 + $0x158] sm:$0xff]
        %v2731 = vld [vmem:[#allocation3 + $0x168] sm:$0xff]
        %v2732 = vld [vmem:[#allocation3 + $0x170] sm:$0xff]
        %2733 = vst.msk [vmem:[#allocation4] sm:$0xff] %vm650, %v2701
        %2734 = vst.msk [vmem:[#allocation4 + $0x18] sm:$0xff] %vm650, %v2702
        %2735 = vst.msk [vmem:[#allocation4 + $0x30] sm:$0xff] %vm650, %v2703
        %2736 = vst.msk [vmem:[#allocation4 + $0x48] sm:$0xff] %vm650, %v2704
        %2737 = vst.msk [vmem:[#allocation4 + $0x60] sm:$0xff] %vm650, %v2705
        %2738 = vst.msk [vmem:[#allocation4 + $0x78] sm:$0xff] %vm650, %v2706
        %2739 = vst.msk [vmem:[#allocation4 + $0x90] sm:$0xff] %vm650, %v2707
        %2740 = vst.msk [vmem:[#allocation4 + $0xa8] sm:$0xff] %vm650, %v2708
        %2741 = vst.msk [vmem:[#allocation4 + $0xc0] sm:$0xff] %vm650, %v2709
        %2742 = vst.msk [vmem:[#allocation4 + $0xd8] sm:$0xff] %vm650, %v2710
        %2743 = vst.msk [vmem:[#allocation4 + $0xf0] sm:$0xff] %vm650, %v2711
        %2744 = vst.msk [vmem:[#allocation4 + $0x108] sm:$0xff] %vm650, %v2712
        %2745 = vst.msk [vmem:[#allocation4 + $0x120] sm:$0xff] %vm650, %v2713
        %2746 = vst.msk [vmem:[#allocation4 + $0x138] sm:$0xff] %vm650, %v2714
        %2747 = vst.msk [vmem:[#allocation4 + $0x150] sm:$0xff] %vm650, %v2715
        %2748 = vst.msk [vmem:[#allocation4 + $0x168] sm:$0xff] %vm650, %v2716
        %2749 = vst.msk [vmem:[#allocation4 + $0x180] sm:$0xff] %vm650, %v2717
        %2750 = vst.msk [vmem:[#allocation4 + $0x198] sm:$0xff] %vm650, %v2718
        %2751 = vst.msk [vmem:[#allocation4 + $0x1b0] sm:$0xff] %vm650, %v2719
        %2752 = vst.msk [vmem:[#allocation4 + $0x1c8] sm:$0xff] %vm650, %v2720
        %2753 = vst.msk [vmem:[#allocation4 + $0x1e0] sm:$0xff] %vm650, %v2721
        %2754 = vst.msk [vmem:[#allocation4 + $0x1f8] sm:$0xff] %vm650, %v2722
        %2755 = vst.msk [vmem:[#allocation4 + $0x210] sm:$0xff] %vm650, %v2723
        %2756 = vst.msk [vmem:[#allocation4 + $0x228] sm:$0xff] %vm650, %v2724
        %2757 = vst.msk [vmem:[#allocation4 + $0x240] sm:$0xff] %vm650, %v2725
        %2758 = vst.msk [vmem:[#allocation4 + $0x258] sm:$0xff] %vm650, %v2726
        %2759 = vst.msk [vmem:[#allocation4 + $0x270] sm:$0xff] %vm650, %v2727
        %2760 = vst.msk [vmem:[#allocation4 + $0x288] sm:$0xff] %vm650, %v2728
        %2761 = vst.msk [vmem:[#allocation4 + $0x2a0] sm:$0xff] %vm650, %v2729
        %2762 = vst.msk [vmem:[#allocation4 + $0x2b8] sm:$0xff] %vm650, %v2730
        %2763 = vst.msk [vmem:[#allocation4 + $0x2d0] sm:$0xff] %vm650, %v2731
        %2764 = vst.msk [vmem:[#allocation4 + $0x2e8] sm:$0xff] %vm650, %v2732
        %v2765 = vld [vmem:[#allocation3 + $0x1] sm:$0xff]
        %v2766 = vld [vmem:[#allocation3 + $0x9] sm:$0xff]
        %v2767 = vld [vmem:[#allocation3 + $0x19] sm:$0xff]
        %v2768 = vld [vmem:[#allocation3 + $0x21] sm:$0xff]
        %v2769 = vld [vmem:[#allocation3 + $0x31] sm:$0xff]
        %v2770 = vld [vmem:[#allocation3 + $0x39] sm:$0xff]
        %v2771 = vld [vmem:[#allocation3 + $0x49] sm:$0xff]
        %v2772 = vld [vmem:[#allocation3 + $0x51] sm:$0xff]
        %v2773 = vld [vmem:[#allocation3 + $0x61] sm:$0xff]
        %v2774 = vld [vmem:[#allocation3 + $0x69] sm:$0xff]
        %v2775 = vld [vmem:[#allocation3 + $0x79] sm:$0xff]
        %v2776 = vld [vmem:[#allocation3 + $0x81] sm:$0xff]
        %v2777 = vld [vmem:[#allocation3 + $0x91] sm:$0xff]
        %v2778 = vld [vmem:[#allocation3 + $0x99] sm:$0xff]
        %v2779 = vld [vmem:[#allocation3 + $0xa9] sm:$0xff]
        %v2780 = vld [vmem:[#allocation3 + $0xb1] sm:$0xff]
        %v2781 = vld [vmem:[#allocation3 + $0xc1] sm:$0xff]
        %v2782 = vld [vmem:[#allocation3 + $0xc9] sm:$0xff]
        %v2783 = vld [vmem:[#allocation3 + $0xd9] sm:$0xff]
        %v2784 = vld [vmem:[#allocation3 + $0xe1] sm:$0xff]
        %v2785 = vld [vmem:[#allocation3 + $0xf1] sm:$0xff]
        %v2786 = vld [vmem:[#allocation3 + $0xf9] sm:$0xff]
        %v2787 = vld [vmem:[#allocation3 + $0x109] sm:$0xff]
        %v2788 = vld [vmem:[#allocation3 + $0x111] sm:$0xff]
        %v2789 = vld [vmem:[#allocation3 + $0x121] sm:$0xff]
        %v2790 = vld [vmem:[#allocation3 + $0x129] sm:$0xff]
        %v2791 = vld [vmem:[#allocation3 + $0x139] sm:$0xff]
        %v2792 = vld [vmem:[#allocation3 + $0x141] sm:$0xff]
        %v2793 = vld [vmem:[#allocation3 + $0x151] sm:$0xff]
        %v2794 = vld [vmem:[#allocation3 + $0x159] sm:$0xff]
        %v2795 = vld [vmem:[#allocation3 + $0x169] sm:$0xff]
        %v2796 = vld [vmem:[#allocation3 + $0x171] sm:$0xff]
        %2829 = vrot.lane.b32.xlu0 %v2765, 32
        %v2830 = vpop.permute.xlu0 %2829
        %2831 = vrot.lane.b32.xlu0 %v2766, 32
        %v2832 = vpop.permute.xlu0 %2831
        %2833 = vrot.lane.b32.xlu0 %v2767, 32
        %v2834 = vpop.permute.xlu0 %2833
        %2835 = vrot.lane.b32.xlu0 %v2768, 32
        %v2836 = vpop.permute.xlu0 %2835
        %2837 = vrot.lane.b32.xlu0 %v2769, 32
        %v2838 = vpop.permute.xlu0 %2837
        %2839 = vrot.lane.b32.xlu0 %v2770, 32
        %v2840 = vpop.permute.xlu0 %2839
        %2841 = vrot.lane.b32.xlu0 %v2771, 32
        %v2842 = vpop.permute.xlu0 %2841
        %2843 = vrot.lane.b32.xlu0 %v2772, 32
        %v2844 = vpop.permute.xlu0 %2843
        %2845 = vrot.lane.b32.xlu0 %v2773, 32
        %v2846 = vpop.permute.xlu0 %2845
        %2847 = vrot.lane.b32.xlu0 %v2774, 32
        %v2848 = vpop.permute.xlu0 %2847
        %2849 = vrot.lane.b32.xlu0 %v2775, 32
        %v2850 = vpop.permute.xlu0 %2849
        %2851 = vrot.lane.b32.xlu0 %v2776, 32
        %v2852 = vpop.permute.xlu0 %2851
        %2853 = vrot.lane.b32.xlu0 %v2777, 32
        %v2854 = vpop.permute.xlu0 %2853
        %2855 = vrot.lane.b32.xlu0 %v2778, 32
        %v2856 = vpop.permute.xlu0 %2855
        %2857 = vrot.lane.b32.xlu0 %v2779, 32
        %v2858 = vpop.permute.xlu0 %2857
        %2859 = vrot.lane.b32.xlu0 %v2780, 32
        %v2860 = vpop.permute.xlu0 %2859
        %2861 = vrot.lane.b32.xlu0 %v2781, 32
        %v2862 = vpop.permute.xlu0 %2861
        %2863 = vrot.lane.b32.xlu0 %v2782, 32
        %v2864 = vpop.permute.xlu0 %2863
        %2865 = vrot.lane.b32.xlu0 %v2783, 32
        %v2866 = vpop.permute.xlu0 %2865
        %2867 = vrot.lane.b32.xlu0 %v2784, 32
        %v2868 = vpop.permute.xlu0 %2867
        %2869 = vrot.lane.b32.xlu0 %v2785, 32
        %v2870 = vpop.permute.xlu0 %2869
        %2871 = vrot.lane.b32.xlu0 %v2786, 32
        %v2872 = vpop.permute.xlu0 %2871
        %2873 = vrot.lane.b32.xlu0 %v2787, 32
        %v2874 = vpop.permute.xlu0 %2873
        %2875 = vrot.lane.b32.xlu0 %v2788, 32
        %v2876 = vpop.permute.xlu0 %2875
        %2877 = vrot.lane.b32.xlu0 %v2789, 32
        %v2878 = vpop.permute.xlu0 %2877
        %2879 = vrot.lane.b32.xlu0 %v2790, 32
        %v2880 = vpop.permute.xlu0 %2879
        %2881 = vrot.lane.b32.xlu0 %v2791, 32
        %v2882 = vpop.permute.xlu0 %2881
        %2883 = vrot.lane.b32.xlu0 %v2792, 32
        %v2884 = vpop.permute.xlu0 %2883
        %2885 = vrot.lane.b32.xlu0 %v2793, 32
        %v2886 = vpop.permute.xlu0 %2885
        %2887 = vrot.lane.b32.xlu0 %v2794, 32
        %v2888 = vpop.permute.xlu0 %2887
        %2889 = vrot.lane.b32.xlu0 %v2795, 32
        %v2890 = vpop.permute.xlu0 %2889
        %2891 = vrot.lane.b32.xlu0 %v2796, 32
        %v2892 = vpop.permute.xlu0 %2891
        %2925 = vst.msk [vmem:[#allocation4] sm:$0xff] %vm843, %v2830
        %2926 = vst.msk [vmem:[#allocation4 + $0x18] sm:$0xff] %vm843, %v2832
        %2927 = vst.msk [vmem:[#allocation4 + $0x30] sm:$0xff] %vm843, %v2834
        %2928 = vst.msk [vmem:[#allocation4 + $0x48] sm:$0xff] %vm843, %v2836
        %2929 = vst.msk [vmem:[#allocation4 + $0x60] sm:$0xff] %vm843, %v2838
        %2930 = vst.msk [vmem:[#allocation4 + $0x78] sm:$0xff] %vm843, %v2840
        %2931 = vst.msk [vmem:[#allocation4 + $0x90] sm:$0xff] %vm843, %v2842
        %2932 = vst.msk [vmem:[#allocation4 + $0xa8] sm:$0xff] %vm843, %v2844
        %2933 = vst.msk [vmem:[#allocation4 + $0xc0] sm:$0xff] %vm843, %v2846
        %2934 = vst.msk [vmem:[#allocation4 + $0xd8] sm:$0xff] %vm843, %v2848
        %2935 = vst.msk [vmem:[#allocation4 + $0xf0] sm:$0xff] %vm843, %v2850
        %2936 = vst.msk [vmem:[#allocation4 + $0x108] sm:$0xff] %vm843, %v2852
        %2937 = vst.msk [vmem:[#allocation4 + $0x120] sm:$0xff] %vm843, %v2854
        %2938 = vst.msk [vmem:[#allocation4 + $0x138] sm:$0xff] %vm843, %v2856
        %2939 = vst.msk [vmem:[#allocation4 + $0x150] sm:$0xff] %vm843, %v2858
        %2940 = vst.msk [vmem:[#allocation4 + $0x168] sm:$0xff] %vm843, %v2860
        %2941 = vst.msk [vmem:[#allocation4 + $0x180] sm:$0xff] %vm843, %v2862
        %2942 = vst.msk [vmem:[#allocation4 + $0x198] sm:$0xff] %vm843, %v2864
        %2943 = vst.msk [vmem:[#allocation4 + $0x1b0] sm:$0xff] %vm843, %v2866
        %2944 = vst.msk [vmem:[#allocation4 + $0x1c8] sm:$0xff] %vm843, %v2868
        %2945 = vst.msk [vmem:[#allocation4 + $0x1e0] sm:$0xff] %vm843, %v2870
        %2946 = vst.msk [vmem:[#allocation4 + $0x1f8] sm:$0xff] %vm843, %v2872
        %2947 = vst.msk [vmem:[#allocation4 + $0x210] sm:$0xff] %vm843, %v2874
        %2948 = vst.msk [vmem:[#allocation4 + $0x228] sm:$0xff] %vm843, %v2876
        %2949 = vst.msk [vmem:[#allocation4 + $0x240] sm:$0xff] %vm843, %v2878
        %2950 = vst.msk [vmem:[#allocation4 + $0x258] sm:$0xff] %vm843, %v2880
        %2951 = vst.msk [vmem:[#allocation4 + $0x270] sm:$0xff] %vm843, %v2882
        %2952 = vst.msk [vmem:[#allocation4 + $0x288] sm:$0xff] %vm843, %v2884
        %2953 = vst.msk [vmem:[#allocation4 + $0x2a0] sm:$0xff] %vm843, %v2886
        %2954 = vst.msk [vmem:[#allocation4 + $0x2b8] sm:$0xff] %vm843, %v2888
        %2955 = vst.msk [vmem:[#allocation4 + $0x2d0] sm:$0xff] %vm843, %v2890
        %2956 = vst.msk [vmem:[#allocation4 + $0x2e8] sm:$0xff] %vm843, %v2892
        %v2957 = vld [vmem:[#allocation3 + $0x2] sm:$0xff]
        %v2958 = vld [vmem:[#allocation3 + $0xa] sm:$0xff]
        %v2959 = vld [vmem:[#allocation3 + $0x1a] sm:$0xff]
        %v2960 = vld [vmem:[#allocation3 + $0x22] sm:$0xff]
        %v2961 = vld [vmem:[#allocation3 + $0x32] sm:$0xff]
        %v2962 = vld [vmem:[#allocation3 + $0x3a] sm:$0xff]
        %v2963 = vld [vmem:[#allocation3 + $0x4a] sm:$0xff]
        %v2964 = vld [vmem:[#allocation3 + $0x52] sm:$0xff]
        %v2965 = vld [vmem:[#allocation3 + $0x62] sm:$0xff]
        %v2966 = vld [vmem:[#allocation3 + $0x6a] sm:$0xff]
        %v2967 = vld [vmem:[#allocation3 + $0x7a] sm:$0xff]
        %v2968 = vld [vmem:[#allocation3 + $0x82] sm:$0xff]
        %v2969 = vld [vmem:[#allocation3 + $0x92] sm:$0xff]
        %v2970 = vld [vmem:[#allocation3 + $0x9a] sm:$0xff]
        %v2971 = vld [vmem:[#allocation3 + $0xaa] sm:$0xff]
        %v2972 = vld [vmem:[#allocation3 + $0xb2] sm:$0xff]
        %v2973 = vld [vmem:[#allocation3 + $0xc2] sm:$0xff]
        %v2974 = vld [vmem:[#allocation3 + $0xca] sm:$0xff]
        %v2975 = vld [vmem:[#allocation3 + $0xda] sm:$0xff]
        %v2976 = vld [vmem:[#allocation3 + $0xe2] sm:$0xff]
        %v2977 = vld [vmem:[#allocation3 + $0xf2] sm:$0xff]
        %v2978 = vld [vmem:[#allocation3 + $0xfa] sm:$0xff]
        %v2979 = vld [vmem:[#allocation3 + $0x10a] sm:$0xff]
        %v2980 = vld [vmem:[#allocation3 + $0x112] sm:$0xff]
        %v2981 = vld [vmem:[#allocation3 + $0x122] sm:$0xff]
        %v2982 = vld [vmem:[#allocation3 + $0x12a] sm:$0xff]
        %v2983 = vld [vmem:[#allocation3 + $0x13a] sm:$0xff]
        %v2984 = vld [vmem:[#allocation3 + $0x142] sm:$0xff]
        %v2985 = vld [vmem:[#allocation3 + $0x152] sm:$0xff]
        %v2986 = vld [vmem:[#allocation3 + $0x15a] sm:$0xff]
        %v2987 = vld [vmem:[#allocation3 + $0x16a] sm:$0xff]
        %v2988 = vld [vmem:[#allocation3 + $0x172] sm:$0xff]
        %3021 = vrot.lane.b32.xlu0 %v2957, 64
        %v3022 = vpop.permute.xlu0 %3021
        %3023 = vrot.lane.b32.xlu0 %v2958, 64
        %v3024 = vpop.permute.xlu0 %3023
        %3025 = vrot.lane.b32.xlu0 %v2959, 64
        %v3026 = vpop.permute.xlu0 %3025
        %3027 = vrot.lane.b32.xlu0 %v2960, 64
        %v3028 = vpop.permute.xlu0 %3027
        %3029 = vrot.lane.b32.xlu0 %v2961, 64
        %v3030 = vpop.permute.xlu0 %3029
        %3031 = vrot.lane.b32.xlu0 %v2962, 64
        %v3032 = vpop.permute.xlu0 %3031
        %3033 = vrot.lane.b32.xlu0 %v2963, 64
        %v3034 = vpop.permute.xlu0 %3033
        %3035 = vrot.lane.b32.xlu0 %v2964, 64
        %v3036 = vpop.permute.xlu0 %3035
        %3037 = vrot.lane.b32.xlu0 %v2965, 64
        %v3038 = vpop.permute.xlu0 %3037
        %3039 = vrot.lane.b32.xlu0 %v2966, 64
        %v3040 = vpop.permute.xlu0 %3039
        %3041 = vrot.lane.b32.xlu0 %v2967, 64
        %v3042 = vpop.permute.xlu0 %3041
        %3043 = vrot.lane.b32.xlu0 %v2968, 64
        %v3044 = vpop.permute.xlu0 %3043
        %3045 = vrot.lane.b32.xlu0 %v2969, 64
        %v3046 = vpop.permute.xlu0 %3045
        %3047 = vrot.lane.b32.xlu0 %v2970, 64
        %v3048 = vpop.permute.xlu0 %3047
        %3049 = vrot.lane.b32.xlu0 %v2971, 64
        %v3050 = vpop.permute.xlu0 %3049
        %3051 = vrot.lane.b32.xlu0 %v2972, 64
        %v3052 = vpop.permute.xlu0 %3051
        %3053 = vrot.lane.b32.xlu0 %v2973, 64
        %v3054 = vpop.permute.xlu0 %3053
        %3055 = vrot.lane.b32.xlu0 %v2974, 64
        %v3056 = vpop.permute.xlu0 %3055
        %3057 = vrot.lane.b32.xlu0 %v2975, 64
        %v3058 = vpop.permute.xlu0 %3057
        %3059 = vrot.lane.b32.xlu0 %v2976, 64
        %v3060 = vpop.permute.xlu0 %3059
        %3061 = vrot.lane.b32.xlu0 %v2977, 64
        %v3062 = vpop.permute.xlu0 %3061
        %3063 = vrot.lane.b32.xlu0 %v2978, 64
        %v3064 = vpop.permute.xlu0 %3063
        %3065 = vrot.lane.b32.xlu0 %v2979, 64
        %v3066 = vpop.permute.xlu0 %3065
        %3067 = vrot.lane.b32.xlu0 %v2980, 64
        %v3068 = vpop.permute.xlu0 %3067
        %3069 = vrot.lane.b32.xlu0 %v2981, 64
        %v3070 = vpop.permute.xlu0 %3069
        %3071 = vrot.lane.b32.xlu0 %v2982, 64
        %v3072 = vpop.permute.xlu0 %3071
        %3073 = vrot.lane.b32.xlu0 %v2983, 64
        %v3074 = vpop.permute.xlu0 %3073
        %3075 = vrot.lane.b32.xlu0 %v2984, 64
        %v3076 = vpop.permute.xlu0 %3075
        %3077 = vrot.lane.b32.xlu0 %v2985, 64
        %v3078 = vpop.permute.xlu0 %3077
        %3079 = vrot.lane.b32.xlu0 %v2986, 64
        %v3080 = vpop.permute.xlu0 %3079
        %3081 = vrot.lane.b32.xlu0 %v2987, 64
        %v3082 = vpop.permute.xlu0 %3081
        %3083 = vrot.lane.b32.xlu0 %v2988, 64
        %v3084 = vpop.permute.xlu0 %3083
        %3117 = vst.msk [vmem:[#allocation4] sm:$0xff] %vm1036, %v3022
        %3118 = vst.msk [vmem:[#allocation4 + $0x18] sm:$0xff] %vm1036, %v3024
        %3119 = vst.msk [vmem:[#allocation4 + $0x30] sm:$0xff] %vm1036, %v3026
        %3120 = vst.msk [vmem:[#allocation4 + $0x48] sm:$0xff] %vm1036, %v3028
        %3121 = vst.msk [vmem:[#allocation4 + $0x60] sm:$0xff] %vm1036, %v3030
        %3122 = vst.msk [vmem:[#allocation4 + $0x78] sm:$0xff] %vm1036, %v3032
        %3123 = vst.msk [vmem:[#allocation4 + $0x90] sm:$0xff] %vm1036, %v3034
        %3124 = vst.msk [vmem:[#allocation4 + $0xa8] sm:$0xff] %vm1036, %v3036
        %3125 = vst.msk [vmem:[#allocation4 + $0xc0] sm:$0xff] %vm1036, %v3038
        %3126 = vst.msk [vmem:[#allocation4 + $0xd8] sm:$0xff] %vm1036, %v3040
        %3127 = vst.msk [vmem:[#allocation4 + $0xf0] sm:$0xff] %vm1036, %v3042
        %3128 = vst.msk [vmem:[#allocation4 + $0x108] sm:$0xff] %vm1036, %v3044
        %3129 = vst.msk [vmem:[#allocation4 + $0x120] sm:$0xff] %vm1036, %v3046
        %3130 = vst.msk [vmem:[#allocation4 + $0x138] sm:$0xff] %vm1036, %v3048
        %3131 = vst.msk [vmem:[#allocation4 + $0x150] sm:$0xff] %vm1036, %v3050
        %3132 = vst.msk [vmem:[#allocation4 + $0x168] sm:$0xff] %vm1036, %v3052
        %3133 = vst.msk [vmem:[#allocation4 + $0x180] sm:$0xff] %vm1036, %v3054
        %3134 = vst.msk [vmem:[#allocation4 + $0x198] sm:$0xff] %vm1036, %v3056
        %3135 = vst.msk [vmem:[#allocation4 + $0x1b0] sm:$0xff] %vm1036, %v3058
        %3136 = vst.msk [vmem:[#allocation4 + $0x1c8] sm:$0xff] %vm1036, %v3060
        %3137 = vst.msk [vmem:[#allocation4 + $0x1e0] sm:$0xff] %vm1036, %v3062
        %3138 = vst.msk [vmem:[#allocation4 + $0x1f8] sm:$0xff] %vm1036, %v3064
        %3139 = vst.msk [vmem:[#allocation4 + $0x210] sm:$0xff] %vm1036, %v3066
        %3140 = vst.msk [vmem:[#allocation4 + $0x228] sm:$0xff] %vm1036, %v3068
        %3141 = vst.msk [vmem:[#allocation4 + $0x240] sm:$0xff] %vm1036, %v3070
        %3142 = vst.msk [vmem:[#allocation4 + $0x258] sm:$0xff] %vm1036, %v3072
        %3143 = vst.msk [vmem:[#allocation4 + $0x270] sm:$0xff] %vm1036, %v3074
        %3144 = vst.msk [vmem:[#allocation4 + $0x288] sm:$0xff] %vm1036, %v3076
        %3145 = vst.msk [vmem:[#allocation4 + $0x2a0] sm:$0xff] %vm1036, %v3078
        %3146 = vst.msk [vmem:[#allocation4 + $0x2b8] sm:$0xff] %vm1036, %v3080
        %3147 = vst.msk [vmem:[#allocation4 + $0x2d0] sm:$0xff] %vm1036, %v3082
        %3148 = vst.msk [vmem:[#allocation4 + $0x2e8] sm:$0xff] %vm1036, %v3084
        %v3149 = vld [vmem:[%s2628] sm:$0xff]
        %v3150 = vld [vmem:[%s2628 + $0x8] sm:$0xff]
        %v3151 = vld [vmem:[%s2628 + $0x18] sm:$0xff]
        %v3152 = vld [vmem:[%s2628 + $0x20] sm:$0xff]
        %v3153 = vld [vmem:[%s2628 + $0x30] sm:$0xff]
        %v3154 = vld [vmem:[%s2628 + $0x38] sm:$0xff]
        %v3155 = vld [vmem:[%s2628 + $0x48] sm:$0xff]
        %v3156 = vld [vmem:[%s2628 + $0x50] sm:$0xff]
        %v3157 = vld [vmem:[%s2628 + $0x60] sm:$0xff]
        %v3158 = vld [vmem:[%s2628 + $0x68] sm:$0xff]
        %v3159 = vld [vmem:[%s2628 + $0x78] sm:$0xff]
        %v3160 = vld [vmem:[%s2628 + $0x80] sm:$0xff]
        %v3161 = vld [vmem:[%s2628 + $0x90] sm:$0xff]
        %v3162 = vld [vmem:[%s2628 + $0x98] sm:$0xff]
        %v3163 = vld [vmem:[%s2628 + $0xa8] sm:$0xff]
        %v3164 = vld [vmem:[%s2628 + $0xb0] sm:$0xff]
        %v3165 = vld [vmem:[%s2628 + $0xc0] sm:$0xff]
        %v3166 = vld [vmem:[%s2628 + $0xc8] sm:$0xff]
        %v3167 = vld [vmem:[%s2628 + $0xd8] sm:$0xff]
        %v3168 = vld [vmem:[%s2628 + $0xe0] sm:$0xff]
        %v3169 = vld [vmem:[%s2628 + $0xf0] sm:$0xff]
        %v3170 = vld [vmem:[%s2628 + $0xf8] sm:$0xff]
        %v3171 = vld [vmem:[%s2628 + $0x108] sm:$0xff]
        %v3172 = vld [vmem:[%s2628 + $0x110] sm:$0xff]
        %v3173 = vld [vmem:[%s2628 + $0x120] sm:$0xff]
        %v3174 = vld [vmem:[%s2628 + $0x128] sm:$0xff]
        %v3175 = vld [vmem:[%s2628 + $0x138] sm:$0xff]
        %v3176 = vld [vmem:[%s2628 + $0x140] sm:$0xff]
        %v3177 = vld [vmem:[%s2628 + $0x150] sm:$0xff]
        %v3178 = vld [vmem:[%s2628 + $0x158] sm:$0xff]
        %v3179 = vld [vmem:[%s2628 + $0x168] sm:$0xff]
        %v3180 = vld [vmem:[%s2628 + $0x170] sm:$0xff]
        %3213 = vrot.lane.b32.xlu0 %v3149, 96
        %v3214 = vpop.permute.xlu0 %3213
        %3215 = vrot.lane.b32.xlu0 %v3150, 96
        %v3216 = vpop.permute.xlu0 %3215
        %3217 = vrot.lane.b32.xlu0 %v3151, 96
        %v3218 = vpop.permute.xlu0 %3217
        %3219 = vrot.lane.b32.xlu0 %v3152, 96
        %v3220 = vpop.permute.xlu0 %3219
        %3221 = vrot.lane.b32.xlu0 %v3153, 96
        %v3222 = vpop.permute.xlu0 %3221
        %3223 = vrot.lane.b32.xlu0 %v3154, 96
        %v3224 = vpop.permute.xlu0 %3223
        %3225 = vrot.lane.b32.xlu0 %v3155, 96
        %v3226 = vpop.permute.xlu0 %3225
        %3227 = vrot.lane.b32.xlu0 %v3156, 96
        %v3228 = vpop.permute.xlu0 %3227
        %3229 = vrot.lane.b32.xlu0 %v3157, 96
        %v3230 = vpop.permute.xlu0 %3229
        %3231 = vrot.lane.b32.xlu0 %v3158, 96
        %v3232 = vpop.permute.xlu0 %3231
        %3233 = vrot.lane.b32.xlu0 %v3159, 96
        %v3234 = vpop.permute.xlu0 %3233
        %3235 = vrot.lane.b32.xlu0 %v3160, 96
        %v3236 = vpop.permute.xlu0 %3235
        %3237 = vrot.lane.b32.xlu0 %v3161, 96
        %v3238 = vpop.permute.xlu0 %3237
        %3239 = vrot.lane.b32.xlu0 %v3162, 96
        %v3240 = vpop.permute.xlu0 %3239
        %3241 = vrot.lane.b32.xlu0 %v3163, 96
        %v3242 = vpop.permute.xlu0 %3241
        %3243 = vrot.lane.b32.xlu0 %v3164, 96
        %v3244 = vpop.permute.xlu0 %3243
        %3245 = vrot.lane.b32.xlu0 %v3165, 96
        %v3246 = vpop.permute.xlu0 %3245
        %3247 = vrot.lane.b32.xlu0 %v3166, 96
        %v3248 = vpop.permute.xlu0 %3247
        %3249 = vrot.lane.b32.xlu0 %v3167, 96
        %v3250 = vpop.permute.xlu0 %3249
        %3251 = vrot.lane.b32.xlu0 %v3168, 96
        %v3252 = vpop.permute.xlu0 %3251
        %3253 = vrot.lane.b32.xlu0 %v3169, 96
        %v3254 = vpop.permute.xlu0 %3253
        %3255 = vrot.lane.b32.xlu0 %v3170, 96
        %v3256 = vpop.permute.xlu0 %3255
        %3257 = vrot.lane.b32.xlu0 %v3171, 96
        %v3258 = vpop.permute.xlu0 %3257
        %3259 = vrot.lane.b32.xlu0 %v3172, 96
        %v3260 = vpop.permute.xlu0 %3259
        %3261 = vrot.lane.b32.xlu0 %v3173, 96
        %v3262 = vpop.permute.xlu0 %3261
        %3263 = vrot.lane.b32.xlu0 %v3174, 96
        %v3264 = vpop.permute.xlu0 %3263
        %3265 = vrot.lane.b32.xlu0 %v3175, 96
        %v3266 = vpop.permute.xlu0 %3265
        %3267 = vrot.lane.b32.xlu0 %v3176, 96
        %v3268 = vpop.permute.xlu0 %3267
        %3269 = vrot.lane.b32.xlu0 %v3177, 96
        %v3270 = vpop.permute.xlu0 %3269
        %3271 = vrot.lane.b32.xlu0 %v3178, 96
        %v3272 = vpop.permute.xlu0 %3271
        %3273 = vrot.lane.b32.xlu0 %v3179, 96
        %v3274 = vpop.permute.xlu0 %3273
        %3275 = vrot.lane.b32.xlu0 %v3180, 96
        %v3276 = vpop.permute.xlu0 %3275
        %3309 = vst.msk [vmem:[#allocation4] sm:$0xff] %vm1230, %v3214
        %3310 = vst.msk [vmem:[#allocation4 + $0x18] sm:$0xff] %vm1230, %v3216
        %3311 = vst.msk [vmem:[#allocation4 + $0x30] sm:$0xff] %vm1230, %v3218
        %3312 = vst.msk [vmem:[#allocation4 + $0x48] sm:$0xff] %vm1230, %v3220
        %3313 = vst.msk [vmem:[#allocation4 + $0x60] sm:$0xff] %vm1230, %v3222
        %3314 = vst.msk [vmem:[#allocation4 + $0x78] sm:$0xff] %vm1230, %v3224
        %3315 = vst.msk [vmem:[#allocation4 + $0x90] sm:$0xff] %vm1230, %v3226
        %3316 = vst.msk [vmem:[#allocation4 + $0xa8] sm:$0xff] %vm1230, %v3228
        %3317 = vst.msk [vmem:[#allocation4 + $0xc0] sm:$0xff] %vm1230, %v3230
        %3318 = vst.msk [vmem:[#allocation4 + $0xd8] sm:$0xff] %vm1230, %v3232
        %3319 = vst.msk [vmem:[#allocation4 + $0xf0] sm:$0xff] %vm1230, %v3234
        %3320 = vst.msk [vmem:[#allocation4 + $0x108] sm:$0xff] %vm1230, %v3236
        %3321 = vst.msk [vmem:[#allocation4 + $0x120] sm:$0xff] %vm1230, %v3238
        %3322 = vst.msk [vmem:[#allocation4 + $0x138] sm:$0xff] %vm1230, %v3240
        %3323 = vst.msk [vmem:[#allocation4 + $0x150] sm:$0xff] %vm1230, %v3242
        %3324 = vst.msk [vmem:[#allocation4 + $0x168] sm:$0xff] %vm1230, %v3244
        %3325 = vst.msk [vmem:[#allocation4 + $0x180] sm:$0xff] %vm1230, %v3246
        %3326 = vst.msk [vmem:[#allocation4 + $0x198] sm:$0xff] %vm1230, %v3248
        %3327 = vst.msk [vmem:[#allocation4 + $0x1b0] sm:$0xff] %vm1230, %v3250
        %3328 = vst.msk [vmem:[#allocation4 + $0x1c8] sm:$0xff] %vm1230, %v3252
        %3329 = vst.msk [vmem:[#allocation4 + $0x1e0] sm:$0xff] %vm1230, %v3254
        %3330 = vst.msk [vmem:[#allocation4 + $0x1f8] sm:$0xff] %vm1230, %v3256
        %3331 = vst.msk [vmem:[#allocation4 + $0x210] sm:$0xff] %vm1230, %v3258
        %3332 = vst.msk [vmem:[#allocation4 + $0x228] sm:$0xff] %vm1230, %v3260
        %3333 = vst.msk [vmem:[#allocation4 + $0x240] sm:$0xff] %vm1230, %v3262
        %3334 = vst.msk [vmem:[#allocation4 + $0x258] sm:$0xff] %vm1230, %v3264
        %3335 = vst.msk [vmem:[#allocation4 + $0x270] sm:$0xff] %vm1230, %v3266
        %3336 = vst.msk [vmem:[#allocation4 + $0x288] sm:$0xff] %vm1230, %v3268
        %3337 = vst.msk [vmem:[#allocation4 + $0x2a0] sm:$0xff] %vm1230, %v3270
        %3338 = vst.msk [vmem:[#allocation4 + $0x2b8] sm:$0xff] %vm1230, %v3272
        %3339 = vst.msk [vmem:[#allocation4 + $0x2d0] sm:$0xff] %vm1230, %v3274
        %3340 = vst.msk [vmem:[#allocation4 + $0x2e8] sm:$0xff] %vm1230, %v3276
        %v3341 = vld [vmem:[%s2628 + $0x1] sm:$0xff]
        %v3342 = vld [vmem:[%s2628 + $0x9] sm:$0xff]
        %v3343 = vld [vmem:[%s2628 + $0x19] sm:$0xff]
        %v3344 = vld [vmem:[%s2628 + $0x21] sm:$0xff]
        %v3345 = vld [vmem:[%s2628 + $0x31] sm:$0xff]
        %v3346 = vld [vmem:[%s2628 + $0x39] sm:$0xff]
        %v3347 = vld [vmem:[%s2628 + $0x49] sm:$0xff]
        %v3348 = vld [vmem:[%s2628 + $0x51] sm:$0xff]
        %v3349 = vld [vmem:[%s2628 + $0x61] sm:$0xff]
        %v3350 = vld [vmem:[%s2628 + $0x69] sm:$0xff]
        %v3351 = vld [vmem:[%s2628 + $0x79] sm:$0xff]
        %v3352 = vld [vmem:[%s2628 + $0x81] sm:$0xff]
        %v3353 = vld [vmem:[%s2628 + $0x91] sm:$0xff]
        %v3354 = vld [vmem:[%s2628 + $0x99] sm:$0xff]
        %v3355 = vld [vmem:[%s2628 + $0xa9] sm:$0xff]
        %v3356 = vld [vmem:[%s2628 + $0xb1] sm:$0xff]
        %v3357 = vld [vmem:[%s2628 + $0xc1] sm:$0xff]
        %v3358 = vld [vmem:[%s2628 + $0xc9] sm:$0xff]
        %v3359 = vld [vmem:[%s2628 + $0xd9] sm:$0xff]
        %v3360 = vld [vmem:[%s2628 + $0xe1] sm:$0xff]
        %v3361 = vld [vmem:[%s2628 + $0xf1] sm:$0xff]
        %v3362 = vld [vmem:[%s2628 + $0xf9] sm:$0xff]
        %v3363 = vld [vmem:[%s2628 + $0x109] sm:$0xff]
        %v3364 = vld [vmem:[%s2628 + $0x111] sm:$0xff]
        %v3365 = vld [vmem:[%s2628 + $0x121] sm:$0xff]
        %v3366 = vld [vmem:[%s2628 + $0x129] sm:$0xff]
        %v3367 = vld [vmem:[%s2628 + $0x139] sm:$0xff]
        %v3368 = vld [vmem:[%s2628 + $0x141] sm:$0xff]
        %v3369 = vld [vmem:[%s2628 + $0x151] sm:$0xff]
        %v3370 = vld [vmem:[%s2628 + $0x159] sm:$0xff]
        %v3371 = vld [vmem:[%s2628 + $0x169] sm:$0xff]
        %v3372 = vld [vmem:[%s2628 + $0x171] sm:$0xff]
        %3373 = vst.msk [vmem:[#allocation4 + $0x8] sm:$0xff] %vm650, %v3341
        %3374 = vst.msk [vmem:[#allocation4 + $0x20] sm:$0xff] %vm650, %v3342
        %3375 = vst.msk [vmem:[#allocation4 + $0x38] sm:$0xff] %vm650, %v3343
        %3376 = vst.msk [vmem:[#allocation4 + $0x50] sm:$0xff] %vm650, %v3344
        %3377 = vst.msk [vmem:[#allocation4 + $0x68] sm:$0xff] %vm650, %v3345
        %3378 = vst.msk [vmem:[#allocation4 + $0x80] sm:$0xff] %vm650, %v3346
        %3379 = vst.msk [vmem:[#allocation4 + $0x98] sm:$0xff] %vm650, %v3347
        %3380 = vst.msk [vmem:[#allocation4 + $0xb0] sm:$0xff] %vm650, %v3348
        %3381 = vst.msk [vmem:[#allocation4 + $0xc8] sm:$0xff] %vm650, %v3349
        %3382 = vst.msk [vmem:[#allocation4 + $0xe0] sm:$0xff] %vm650, %v3350
        %3383 = vst.msk [vmem:[#allocation4 + $0xf8] sm:$0xff] %vm650, %v3351
        %3384 = vst.msk [vmem:[#allocation4 + $0x110] sm:$0xff] %vm650, %v3352
        %3385 = vst.msk [vmem:[#allocation4 + $0x128] sm:$0xff] %vm650, %v3353
        %3386 = vst.msk [vmem:[#allocation4 + $0x140] sm:$0xff] %vm650, %v3354
        %3387 = vst.msk [vmem:[#allocation4 + $0x158] sm:$0xff] %vm650, %v3355
        %3388 = vst.msk [vmem:[#allocation4 + $0x170] sm:$0xff] %vm650, %v3356
        %3389 = vst.msk [vmem:[#allocation4 + $0x188] sm:$0xff] %vm650, %v3357
        %3390 = vst.msk [vmem:[#allocation4 + $0x1a0] sm:$0xff] %vm650, %v3358
        %3391 = vst.msk [vmem:[#allocation4 + $0x1b8] sm:$0xff] %vm650, %v3359
        %3392 = vst.msk [vmem:[#allocation4 + $0x1d0] sm:$0xff] %vm650, %v3360
        %3393 = vst.msk [vmem:[#allocation4 + $0x1e8] sm:$0xff] %vm650, %v3361
        %3394 = vst.msk [vmem:[#allocation4 + $0x200] sm:$0xff] %vm650, %v3362
        %3395 = vst.msk [vmem:[#allocation4 + $0x218] sm:$0xff] %vm650, %v3363
        %3396 = vst.msk [vmem:[#allocation4 + $0x230] sm:$0xff] %vm650, %v3364
        %3397 = vst.msk [vmem:[#allocation4 + $0x248] sm:$0xff] %vm650, %v3365
        %3398 = vst.msk [vmem:[#allocation4 + $0x260] sm:$0xff] %vm650, %v3366
        %3399 = vst.msk [vmem:[#allocation4 + $0x278] sm:$0xff] %vm650, %v3367
        %3400 = vst.msk [vmem:[#allocation4 + $0x290] sm:$0xff] %vm650, %v3368
        %3401 = vst.msk [vmem:[#allocation4 + $0x2a8] sm:$0xff] %vm650, %v3369
        %3402 = vst.msk [vmem:[#allocation4 + $0x2c0] sm:$0xff] %vm650, %v3370
        %3403 = vst.msk [vmem:[#allocation4 + $0x2d8] sm:$0xff] %vm650, %v3371
        %3404 = vst.msk [vmem:[#allocation4 + $0x2f0] sm:$0xff] %vm650, %v3372
        %v3405 = vld [vmem:[%s2628 + $0x2] sm:$0xff]
        %v3406 = vld [vmem:[%s2628 + $0xa] sm:$0xff]
        %v3407 = vld [vmem:[%s2628 + $0x1a] sm:$0xff]
        %v3408 = vld [vmem:[%s2628 + $0x22] sm:$0xff]
        %v3409 = vld [vmem:[%s2628 + $0x32] sm:$0xff]
        %v3410 = vld [vmem:[%s2628 + $0x3a] sm:$0xff]
        %v3411 = vld [vmem:[%s2628 + $0x4a] sm:$0xff]
        %v3412 = vld [vmem:[%s2628 + $0x52] sm:$0xff]
        %v3413 = vld [vmem:[%s2628 + $0x62] sm:$0xff]
        %v3414 = vld [vmem:[%s2628 + $0x6a] sm:$0xff]
        %v3415 = vld [vmem:[%s2628 + $0x7a] sm:$0xff]
        %v3416 = vld [vmem:[%s2628 + $0x82] sm:$0xff]
        %v3417 = vld [vmem:[%s2628 + $0x92] sm:$0xff]
        %v3418 = vld [vmem:[%s2628 + $0x9a] sm:$0xff]
        %v3419 = vld [vmem:[%s2628 + $0xaa] sm:$0xff]
        %v3420 = vld [vmem:[%s2628 + $0xb2] sm:$0xff]
        %v3421 = vld [vmem:[%s2628 + $0xc2] sm:$0xff]
        %v3422 = vld [vmem:[%s2628 + $0xca] sm:$0xff]
        %v3423 = vld [vmem:[%s2628 + $0xda] sm:$0xff]
        %v3424 = vld [vmem:[%s2628 + $0xe2] sm:$0xff]
        %v3425 = vld [vmem:[%s2628 + $0xf2] sm:$0xff]
        %v3426 = vld [vmem:[%s2628 + $0xfa] sm:$0xff]
        %v3427 = vld [vmem:[%s2628 + $0x10a] sm:$0xff]
        %v3428 = vld [vmem:[%s2628 + $0x112] sm:$0xff]
        %v3429 = vld [vmem:[%s2628 + $0x122] sm:$0xff]
        %v3430 = vld [vmem:[%s2628 + $0x12a] sm:$0xff]
        %v3431 = vld [vmem:[%s2628 + $0x13a] sm:$0xff]
        %v3432 = vld [vmem:[%s2628 + $0x142] sm:$0xff]
        %v3433 = vld [vmem:[%s2628 + $0x152] sm:$0xff]
        %v3434 = vld [vmem:[%s2628 + $0x15a] sm:$0xff]
        %v3435 = vld [vmem:[%s2628 + $0x16a] sm:$0xff]
        %v3436 = vld [vmem:[%s2628 + $0x172] sm:$0xff]
        %3469 = vrot.lane.b32.xlu0 %v3405, 32
        %v3470 = vpop.permute.xlu0 %3469
        %3471 = vrot.lane.b32.xlu0 %v3406, 32
        %v3472 = vpop.permute.xlu0 %3471
        %3473 = vrot.lane.b32.xlu0 %v3407, 32
        %v3474 = vpop.permute.xlu0 %3473
        %3475 = vrot.lane.b32.xlu0 %v3408, 32
        %v3476 = vpop.permute.xlu0 %3475
        %3477 = vrot.lane.b32.xlu0 %v3409, 32
        %v3478 = vpop.permute.xlu0 %3477
        %3479 = vrot.lane.b32.xlu0 %v3410, 32
        %v3480 = vpop.permute.xlu0 %3479
        %3481 = vrot.lane.b32.xlu0 %v3411, 32
        %v3482 = vpop.permute.xlu0 %3481
        %3483 = vrot.lane.b32.xlu0 %v3412, 32
        %v3484 = vpop.permute.xlu0 %3483
        %3485 = vrot.lane.b32.xlu0 %v3413, 32
        %v3486 = vpop.permute.xlu0 %3485
        %3487 = vrot.lane.b32.xlu0 %v3414, 32
        %v3488 = vpop.permute.xlu0 %3487
        %3489 = vrot.lane.b32.xlu0 %v3415, 32
        %v3490 = vpop.permute.xlu0 %3489
        %3491 = vrot.lane.b32.xlu0 %v3416, 32
        %v3492 = vpop.permute.xlu0 %3491
        %3493 = vrot.lane.b32.xlu0 %v3417, 32
        %v3494 = vpop.permute.xlu0 %3493
        %3495 = vrot.lane.b32.xlu0 %v3418, 32
        %v3496 = vpop.permute.xlu0 %3495
        %3497 = vrot.lane.b32.xlu0 %v3419, 32
        %v3498 = vpop.permute.xlu0 %3497
        %3499 = vrot.lane.b32.xlu0 %v3420, 32
        %v3500 = vpop.permute.xlu0 %3499
        %3501 = vrot.lane.b32.xlu0 %v3421, 32
        %v3502 = vpop.permute.xlu0 %3501
        %3503 = vrot.lane.b32.xlu0 %v3422, 32
        %v3504 = vpop.permute.xlu0 %3503
        %3505 = vrot.lane.b32.xlu0 %v3423, 32
        %v3506 = vpop.permute.xlu0 %3505
        %3507 = vrot.lane.b32.xlu0 %v3424, 32
        %v3508 = vpop.permute.xlu0 %3507
        %3509 = vrot.lane.b32.xlu0 %v3425, 32
        %v3510 = vpop.permute.xlu0 %3509
        %3511 = vrot.lane.b32.xlu0 %v3426, 32
        %v3512 = vpop.permute.xlu0 %3511
        %3513 = vrot.lane.b32.xlu0 %v3427, 32
        %v3514 = vpop.permute.xlu0 %3513
        %3515 = vrot.lane.b32.xlu0 %v3428, 32
        %v3516 = vpop.permute.xlu0 %3515
        %3517 = vrot.lane.b32.xlu0 %v3429, 32
        %v3518 = vpop.permute.xlu0 %3517
        %3519 = vrot.lane.b32.xlu0 %v3430, 32
        %v3520 = vpop.permute.xlu0 %3519
        %3521 = vrot.lane.b32.xlu0 %v3431, 32
        %v3522 = vpop.permute.xlu0 %3521
        %3523 = vrot.lane.b32.xlu0 %v3432, 32
        %v3524 = vpop.permute.xlu0 %3523
        %3525 = vrot.lane.b32.xlu0 %v3433, 32
        %v3526 = vpop.permute.xlu0 %3525
        %3527 = vrot.lane.b32.xlu0 %v3434, 32
        %v3528 = vpop.permute.xlu0 %3527
        %3529 = vrot.lane.b32.xlu0 %v3435, 32
        %v3530 = vpop.permute.xlu0 %3529
        %3531 = vrot.lane.b32.xlu0 %v3436, 32
        %v3532 = vpop.permute.xlu0 %3531
        %3565 = vst.msk [vmem:[#allocation4 + $0x8] sm:$0xff] %vm843, %v3470
        %3566 = vst.msk [vmem:[#allocation4 + $0x20] sm:$0xff] %vm843, %v3472
        %3567 = vst.msk [vmem:[#allocation4 + $0x38] sm:$0xff] %vm843, %v3474
        %3568 = vst.msk [vmem:[#allocation4 + $0x50] sm:$0xff] %vm843, %v3476
        %3569 = vst.msk [vmem:[#allocation4 + $0x68] sm:$0xff] %vm843, %v3478
        %3570 = vst.msk [vmem:[#allocation4 + $0x80] sm:$0xff] %vm843, %v3480
        %3571 = vst.msk [vmem:[#allocation4 + $0x98] sm:$0xff] %vm843, %v3482
        %3572 = vst.msk [vmem:[#allocation4 + $0xb0] sm:$0xff] %vm843, %v3484
        %3573 = vst.msk [vmem:[#allocation4 + $0xc8] sm:$0xff] %vm843, %v3486
        %3574 = vst.msk [vmem:[#allocation4 + $0xe0] sm:$0xff] %vm843, %v3488
        %3575 = vst.msk [vmem:[#allocation4 + $0xf8] sm:$0xff] %vm843, %v3490
        %3576 = vst.msk [vmem:[#allocation4 + $0x110] sm:$0xff] %vm843, %v3492
        %3577 = vst.msk [vmem:[#allocation4 + $0x128] sm:$0xff] %vm843, %v3494
        %3578 = vst.msk [vmem:[#allocation4 + $0x140] sm:$0xff] %vm843, %v3496
        %3579 = vst.msk [vmem:[#allocation4 + $0x158] sm:$0xff] %vm843, %v3498
        %3580 = vst.msk [vmem:[#allocation4 + $0x170] sm:$0xff] %vm843, %v3500
        %3581 = vst.msk [vmem:[#allocation4 + $0x188] sm:$0xff] %vm843, %v3502
        %3582 = vst.msk [vmem:[#allocation4 + $0x1a0] sm:$0xff] %vm843, %v3504
        %3583 = vst.msk [vmem:[#allocation4 + $0x1b8] sm:$0xff] %vm843, %v3506
        %3584 = vst.msk [vmem:[#allocation4 + $0x1d0] sm:$0xff] %vm843, %v3508
        %3585 = vst.msk [vmem:[#allocation4 + $0x1e8] sm:$0xff] %vm843, %v3510
        %3586 = vst.msk [vmem:[#allocation4 + $0x200] sm:$0xff] %vm843, %v3512
        %3587 = vst.msk [vmem:[#allocation4 + $0x218] sm:$0xff] %vm843, %v3514
        %3588 = vst.msk [vmem:[#allocation4 + $0x230] sm:$0xff] %vm843, %v3516
        %3589 = vst.msk [vmem:[#allocation4 + $0x248] sm:$0xff] %vm843, %v3518
        %3590 = vst.msk [vmem:[#allocation4 + $0x260] sm:$0xff] %vm843, %v3520
        %3591 = vst.msk [vmem:[#allocation4 + $0x278] sm:$0xff] %vm843, %v3522
        %3592 = vst.msk [vmem:[#allocation4 + $0x290] sm:$0xff] %vm843, %v3524
        %3593 = vst.msk [vmem:[#allocation4 + $0x2a8] sm:$0xff] %vm843, %v3526
        %3594 = vst.msk [vmem:[#allocation4 + $0x2c0] sm:$0xff] %vm843, %v3528
        %3595 = vst.msk [vmem:[#allocation4 + $0x2d8] sm:$0xff] %vm843, %v3530
        %3596 = vst.msk [vmem:[#allocation4 + $0x2f0] sm:$0xff] %vm843, %v3532
        %s3597 = scalar_lea.vmem [#allocation3], 48
        %v3598 = vld [vmem:[%s3597] sm:$0xff]
        %v3599 = vld [vmem:[%s3597 + $0x8] sm:$0xff]
        %v3600 = vld [vmem:[%s3597 + $0x18] sm:$0xff]
        %v3601 = vld [vmem:[%s3597 + $0x20] sm:$0xff]
        %v3602 = vld [vmem:[%s3597 + $0x30] sm:$0xff]
        %v3603 = vld [vmem:[%s3597 + $0x38] sm:$0xff]
        %v3604 = vld [vmem:[%s3597 + $0x48] sm:$0xff]
        %v3605 = vld [vmem:[%s3597 + $0x50] sm:$0xff]
        %v3606 = vld [vmem:[%s3597 + $0x60] sm:$0xff]
        %v3607 = vld [vmem:[%s3597 + $0x68] sm:$0xff]
        %v3608 = vld [vmem:[%s3597 + $0x78] sm:$0xff]
        %v3609 = vld [vmem:[%s3597 + $0x80] sm:$0xff]
        %v3610 = vld [vmem:[%s3597 + $0x90] sm:$0xff]
        %v3611 = vld [vmem:[%s3597 + $0x98] sm:$0xff]
        %v3612 = vld [vmem:[%s3597 + $0xa8] sm:$0xff]
        %v3613 = vld [vmem:[%s3597 + $0xb0] sm:$0xff]
        %v3614 = vld [vmem:[%s3597 + $0xc0] sm:$0xff]
        %v3615 = vld [vmem:[%s3597 + $0xc8] sm:$0xff]
        %v3616 = vld [vmem:[%s3597 + $0xd8] sm:$0xff]
        %v3617 = vld [vmem:[%s3597 + $0xe0] sm:$0xff]
        %v3618 = vld [vmem:[%s3597 + $0xf0] sm:$0xff]
        %v3619 = vld [vmem:[%s3597 + $0xf8] sm:$0xff]
        %v3620 = vld [vmem:[%s3597 + $0x108] sm:$0xff]
        %v3621 = vld [vmem:[%s3597 + $0x110] sm:$0xff]
        %v3622 = vld [vmem:[%s3597 + $0x120] sm:$0xff]
        %v3623 = vld [vmem:[%s3597 + $0x128] sm:$0xff]
        %v3624 = vld [vmem:[%s3597 + $0x138] sm:$0xff]
        %v3625 = vld [vmem:[%s3597 + $0x140] sm:$0xff]
        %v3626 = vld [vmem:[%s3597 + $0x150] sm:$0xff]
        %v3627 = vld [vmem:[%s3597 + $0x158] sm:$0xff]
        %v3628 = vld [vmem:[%s3597 + $0x168] sm:$0xff]
        %v3629 = vld [vmem:[%s3597 + $0x170] sm:$0xff]
        %3662 = vrot.lane.b32.xlu0 %v3598, 64
        %v3663 = vpop.permute.xlu0 %3662
        %3664 = vrot.lane.b32.xlu0 %v3599, 64
        %v3665 = vpop.permute.xlu0 %3664
        %3666 = vrot.lane.b32.xlu0 %v3600, 64
        %v3667 = vpop.permute.xlu0 %3666
        %3668 = vrot.lane.b32.xlu0 %v3601, 64
        %v3669 = vpop.permute.xlu0 %3668
        %3670 = vrot.lane.b32.xlu0 %v3602, 64
        %v3671 = vpop.permute.xlu0 %3670
        %3672 = vrot.lane.b32.xlu0 %v3603, 64
        %v3673 = vpop.permute.xlu0 %3672
        %3674 = vrot.lane.b32.xlu0 %v3604, 64
        %v3675 = vpop.permute.xlu0 %3674
        %3676 = vrot.lane.b32.xlu0 %v3605, 64
        %v3677 = vpop.permute.xlu0 %3676
        %3678 = vrot.lane.b32.xlu0 %v3606, 64
        %v3679 = vpop.permute.xlu0 %3678
        %3680 = vrot.lane.b32.xlu0 %v3607, 64
        %v3681 = vpop.permute.xlu0 %3680
        %3682 = vrot.lane.b32.xlu0 %v3608, 64
        %v3683 = vpop.permute.xlu0 %3682
        %3684 = vrot.lane.b32.xlu0 %v3609, 64
        %v3685 = vpop.permute.xlu0 %3684
        %3686 = vrot.lane.b32.xlu0 %v3610, 64
        %v3687 = vpop.permute.xlu0 %3686
        %3688 = vrot.lane.b32.xlu0 %v3611, 64
        %v3689 = vpop.permute.xlu0 %3688
        %3690 = vrot.lane.b32.xlu0 %v3612, 64
        %v3691 = vpop.permute.xlu0 %3690
        %3692 = vrot.lane.b32.xlu0 %v3613, 64
        %v3693 = vpop.permute.xlu0 %3692
        %3694 = vrot.lane.b32.xlu0 %v3614, 64
        %v3695 = vpop.permute.xlu0 %3694
        %3696 = vrot.lane.b32.xlu0 %v3615, 64
        %v3697 = vpop.permute.xlu0 %3696
        %3698 = vrot.lane.b32.xlu0 %v3616, 64
        %v3699 = vpop.permute.xlu0 %3698
        %3700 = vrot.lane.b32.xlu0 %v3617, 64
        %v3701 = vpop.permute.xlu0 %3700
        %3702 = vrot.lane.b32.xlu0 %v3618, 64
        %v3703 = vpop.permute.xlu0 %3702
        %3704 = vrot.lane.b32.xlu0 %v3619, 64
        %v3705 = vpop.permute.xlu0 %3704
        %3706 = vrot.lane.b32.xlu0 %v3620, 64
        %v3707 = vpop.permute.xlu0 %3706
        %3708 = vrot.lane.b32.xlu0 %v3621, 64
        %v3709 = vpop.permute.xlu0 %3708
        %3710 = vrot.lane.b32.xlu0 %v3622, 64
        %v3711 = vpop.permute.xlu0 %3710
        %3712 = vrot.lane.b32.xlu0 %v3623, 64
        %v3713 = vpop.permute.xlu0 %3712
        %3714 = vrot.lane.b32.xlu0 %v3624, 64
        %v3715 = vpop.permute.xlu0 %3714
        %3716 = vrot.lane.b32.xlu0 %v3625, 64
        %v3717 = vpop.permute.xlu0 %3716
        %3718 = vrot.lane.b32.xlu0 %v3626, 64
        %v3719 = vpop.permute.xlu0 %3718
        %3720 = vrot.lane.b32.xlu0 %v3627, 64
        %v3721 = vpop.permute.xlu0 %3720
        %3722 = vrot.lane.b32.xlu0 %v3628, 64
        %v3723 = vpop.permute.xlu0 %3722
        %3724 = vrot.lane.b32.xlu0 %v3629, 64
        %v3725 = vpop.permute.xlu0 %3724
        %3758 = vst.msk [vmem:[#allocation4 + $0x8] sm:$0xff] %vm1036, %v3663
        %3759 = vst.msk [vmem:[#allocation4 + $0x20] sm:$0xff] %vm1036, %v3665
        %3760 = vst.msk [vmem:[#allocation4 + $0x38] sm:$0xff] %vm1036, %v3667
        %3761 = vst.msk [vmem:[#allocation4 + $0x50] sm:$0xff] %vm1036, %v3669
        %3762 = vst.msk [vmem:[#allocation4 + $0x68] sm:$0xff] %vm1036, %v3671
        %3763 = vst.msk [vmem:[#allocation4 + $0x80] sm:$0xff] %vm1036, %v3673
        %3764 = vst.msk [vmem:[#allocation4 + $0x98] sm:$0xff] %vm1036, %v3675
        %3765 = vst.msk [vmem:[#allocation4 + $0xb0] sm:$0xff] %vm1036, %v3677
        %3766 = vst.msk [vmem:[#allocation4 + $0xc8] sm:$0xff] %vm1036, %v3679
        %3767 = vst.msk [vmem:[#allocation4 + $0xe0] sm:$0xff] %vm1036, %v3681
        %3768 = vst.msk [vmem:[#allocation4 + $0xf8] sm:$0xff] %vm1036, %v3683
        %3769 = vst.msk [vmem:[#allocation4 + $0x110] sm:$0xff] %vm1036, %v3685
        %3770 = vst.msk [vmem:[#allocation4 + $0x128] sm:$0xff] %vm1036, %v3687
        %3771 = vst.msk [vmem:[#allocation4 + $0x140] sm:$0xff] %vm1036, %v3689
        %3772 = vst.msk [vmem:[#allocation4 + $0x158] sm:$0xff] %vm1036, %v3691
        %3773 = vst.msk [vmem:[#allocation4 + $0x170] sm:$0xff] %vm1036, %v3693
        %3774 = vst.msk [vmem:[#allocation4 + $0x188] sm:$0xff] %vm1036, %v3695
        %3775 = vst.msk [vmem:[#allocation4 + $0x1a0] sm:$0xff] %vm1036, %v3697
        %3776 = vst.msk [vmem:[#allocation4 + $0x1b8] sm:$0xff] %vm1036, %v3699
        %3777 = vst.msk [vmem:[#allocation4 + $0x1d0] sm:$0xff] %vm1036, %v3701
        %3778 = vst.msk [vmem:[#allocation4 + $0x1e8] sm:$0xff] %vm1036, %v3703
        %3779 = vst.msk [vmem:[#allocation4 + $0x200] sm:$0xff] %vm1036, %v3705
        %3780 = vst.msk [vmem:[#allocation4 + $0x218] sm:$0xff] %vm1036, %v3707
        %3781 = vst.msk [vmem:[#allocation4 + $0x230] sm:$0xff] %vm1036, %v3709
        %3782 = vst.msk [vmem:[#allocation4 + $0x248] sm:$0xff] %vm1036, %v3711
        %3783 = vst.msk [vmem:[#allocation4 + $0x260] sm:$0xff] %vm1036, %v3713
        %3784 = vst.msk [vmem:[#allocation4 + $0x278] sm:$0xff] %vm1036, %v3715
        %3785 = vst.msk [vmem:[#allocation4 + $0x290] sm:$0xff] %vm1036, %v3717
        %3786 = vst.msk [vmem:[#allocation4 + $0x2a8] sm:$0xff] %vm1036, %v3719
        %3787 = vst.msk [vmem:[#allocation4 + $0x2c0] sm:$0xff] %vm1036, %v3721
        %3788 = vst.msk [vmem:[#allocation4 + $0x2d8] sm:$0xff] %vm1036, %v3723
        %3789 = vst.msk [vmem:[#allocation4 + $0x2f0] sm:$0xff] %vm1036, %v3725
        %v3790 = vld [vmem:[%s3597 + $0x1] sm:$0xff]
        %v3791 = vld [vmem:[%s3597 + $0x9] sm:$0xff]
        %v3792 = vld [vmem:[%s3597 + $0x19] sm:$0xff]
        %v3793 = vld [vmem:[%s3597 + $0x21] sm:$0xff]
        %v3794 = vld [vmem:[%s3597 + $0x31] sm:$0xff]
        %v3795 = vld [vmem:[%s3597 + $0x39] sm:$0xff]
        %v3796 = vld [vmem:[%s3597 + $0x49] sm:$0xff]
        %v3797 = vld [vmem:[%s3597 + $0x51] sm:$0xff]
        %v3798 = vld [vmem:[%s3597 + $0x61] sm:$0xff]
        %v3799 = vld [vmem:[%s3597 + $0x69] sm:$0xff]
        %v3800 = vld [vmem:[%s3597 + $0x79] sm:$0xff]
        %v3801 = vld [vmem:[%s3597 + $0x81] sm:$0xff]
        %v3802 = vld [vmem:[%s3597 + $0x91] sm:$0xff]
        %v3803 = vld [vmem:[%s3597 + $0x99] sm:$0xff]
        %v3804 = vld [vmem:[%s3597 + $0xa9] sm:$0xff]
        %v3805 = vld [vmem:[%s3597 + $0xb1] sm:$0xff]
        %v3806 = vld [vmem:[%s3597 + $0xc1] sm:$0xff]
        %v3807 = vld [vmem:[%s3597 + $0xc9] sm:$0xff]
        %v3808 = vld [vmem:[%s3597 + $0xd9] sm:$0xff]
        %v3809 = vld [vmem:[%s3597 + $0xe1] sm:$0xff]
        %v3810 = vld [vmem:[%s3597 + $0xf1] sm:$0xff]
        %v3811 = vld [vmem:[%s3597 + $0xf9] sm:$0xff]
        %v3812 = vld [vmem:[%s3597 + $0x109] sm:$0xff]
        %v3813 = vld [vmem:[%s3597 + $0x111] sm:$0xff]
        %v3814 = vld [vmem:[%s3597 + $0x121] sm:$0xff]
        %v3815 = vld [vmem:[%s3597 + $0x129] sm:$0xff]
        %v3816 = vld [vmem:[%s3597 + $0x139] sm:$0xff]
        %v3817 = vld [vmem:[%s3597 + $0x141] sm:$0xff]
        %v3818 = vld [vmem:[%s3597 + $0x151] sm:$0xff]
        %v3819 = vld [vmem:[%s3597 + $0x159] sm:$0xff]
        %v3820 = vld [vmem:[%s3597 + $0x169] sm:$0xff]
        %v3821 = vld [vmem:[%s3597 + $0x171] sm:$0xff]
        %3854 = vrot.lane.b32.xlu0 %v3790, 96
        %v3855 = vpop.permute.xlu0 %3854
        %3856 = vrot.lane.b32.xlu0 %v3791, 96
        %v3857 = vpop.permute.xlu0 %3856
        %3858 = vrot.lane.b32.xlu0 %v3792, 96
        %v3859 = vpop.permute.xlu0 %3858
        %3860 = vrot.lane.b32.xlu0 %v3793, 96
        %v3861 = vpop.permute.xlu0 %3860
        %3862 = vrot.lane.b32.xlu0 %v3794, 96
        %v3863 = vpop.permute.xlu0 %3862
        %3864 = vrot.lane.b32.xlu0 %v3795, 96
        %v3865 = vpop.permute.xlu0 %3864
        %3866 = vrot.lane.b32.xlu0 %v3796, 96
        %v3867 = vpop.permute.xlu0 %3866
        %3868 = vrot.lane.b32.xlu0 %v3797, 96
        %v3869 = vpop.permute.xlu0 %3868
        %3870 = vrot.lane.b32.xlu0 %v3798, 96
        %v3871 = vpop.permute.xlu0 %3870
        %3872 = vrot.lane.b32.xlu0 %v3799, 96
        %v3873 = vpop.permute.xlu0 %3872
        %3874 = vrot.lane.b32.xlu0 %v3800, 96
        %v3875 = vpop.permute.xlu0 %3874
        %3876 = vrot.lane.b32.xlu0 %v3801, 96
        %v3877 = vpop.permute.xlu0 %3876
        %3878 = vrot.lane.b32.xlu0 %v3802, 96
        %v3879 = vpop.permute.xlu0 %3878
        %3880 = vrot.lane.b32.xlu0 %v3803, 96
        %v3881 = vpop.permute.xlu0 %3880
        %3882 = vrot.lane.b32.xlu0 %v3804, 96
        %v3883 = vpop.permute.xlu0 %3882
        %3884 = vrot.lane.b32.xlu0 %v3805, 96
        %v3885 = vpop.permute.xlu0 %3884
        %3886 = vrot.lane.b32.xlu0 %v3806, 96
        %v3887 = vpop.permute.xlu0 %3886
        %3888 = vrot.lane.b32.xlu0 %v3807, 96
        %v3889 = vpop.permute.xlu0 %3888
        %3890 = vrot.lane.b32.xlu0 %v3808, 96
        %v3891 = vpop.permute.xlu0 %3890
        %3892 = vrot.lane.b32.xlu0 %v3809, 96
        %v3893 = vpop.permute.xlu0 %3892
        %3894 = vrot.lane.b32.xlu0 %v3810, 96
        %v3895 = vpop.permute.xlu0 %3894
        %3896 = vrot.lane.b32.xlu0 %v3811, 96
        %v3897 = vpop.permute.xlu0 %3896
        %3898 = vrot.lane.b32.xlu0 %v3812, 96
        %v3899 = vpop.permute.xlu0 %3898
        %3900 = vrot.lane.b32.xlu0 %v3813, 96
        %v3901 = vpop.permute.xlu0 %3900
        %3902 = vrot.lane.b32.xlu0 %v3814, 96
        %v3903 = vpop.permute.xlu0 %3902
        %3904 = vrot.lane.b32.xlu0 %v3815, 96
        %v3905 = vpop.permute.xlu0 %3904
        %3906 = vrot.lane.b32.xlu0 %v3816, 96
        %v3907 = vpop.permute.xlu0 %3906
        %3908 = vrot.lane.b32.xlu0 %v3817, 96
        %v3909 = vpop.permute.xlu0 %3908
        %3910 = vrot.lane.b32.xlu0 %v3818, 96
        %v3911 = vpop.permute.xlu0 %3910
        %3912 = vrot.lane.b32.xlu0 %v3819, 96
        %v3913 = vpop.permute.xlu0 %3912
        %3914 = vrot.lane.b32.xlu0 %v3820, 96
        %v3915 = vpop.permute.xlu0 %3914
        %3916 = vrot.lane.b32.xlu0 %v3821, 96
        %v3917 = vpop.permute.xlu0 %3916
        %3950 = vst.msk [vmem:[#allocation4 + $0x8] sm:$0xff] %vm1230, %v3855
        %3951 = vst.msk [vmem:[#allocation4 + $0x20] sm:$0xff] %vm1230, %v3857
        %3952 = vst.msk [vmem:[#allocation4 + $0x38] sm:$0xff] %vm1230, %v3859
        %3953 = vst.msk [vmem:[#allocation4 + $0x50] sm:$0xff] %vm1230, %v3861
        %3954 = vst.msk [vmem:[#allocation4 + $0x68] sm:$0xff] %vm1230, %v3863
        %3955 = vst.msk [vmem:[#allocation4 + $0x80] sm:$0xff] %vm1230, %v3865
        %3956 = vst.msk [vmem:[#allocation4 + $0x98] sm:$0xff] %vm1230, %v3867
        %3957 = vst.msk [vmem:[#allocation4 + $0xb0] sm:$0xff] %vm1230, %v3869
        %3958 = vst.msk [vmem:[#allocation4 + $0xc8] sm:$0xff] %vm1230, %v3871
        %3959 = vst.msk [vmem:[#allocation4 + $0xe0] sm:$0xff] %vm1230, %v3873
        %3960 = vst.msk [vmem:[#allocation4 + $0xf8] sm:$0xff] %vm1230, %v3875
        %3961 = vst.msk [vmem:[#allocation4 + $0x110] sm:$0xff] %vm1230, %v3877
        %3962 = vst.msk [vmem:[#allocation4 + $0x128] sm:$0xff] %vm1230, %v3879
        %3963 = vst.msk [vmem:[#allocation4 + $0x140] sm:$0xff] %vm1230, %v3881
        %3964 = vst.msk [vmem:[#allocation4 + $0x158] sm:$0xff] %vm1230, %v3883
        %3965 = vst.msk [vmem:[#allocation4 + $0x170] sm:$0xff] %vm1230, %v3885
        %3966 = vst.msk [vmem:[#allocation4 + $0x188] sm:$0xff] %vm1230, %v3887
        %3967 = vst.msk [vmem:[#allocation4 + $0x1a0] sm:$0xff] %vm1230, %v3889
        %3968 = vst.msk [vmem:[#allocation4 + $0x1b8] sm:$0xff] %vm1230, %v3891
        %3969 = vst.msk [vmem:[#allocation4 + $0x1d0] sm:$0xff] %vm1230, %v3893
        %3970 = vst.msk [vmem:[#allocation4 + $0x1e8] sm:$0xff] %vm1230, %v3895
        %3971 = vst.msk [vmem:[#allocation4 + $0x200] sm:$0xff] %vm1230, %v3897
        %3972 = vst.msk [vmem:[#allocation4 + $0x218] sm:$0xff] %vm1230, %v3899
        %3973 = vst.msk [vmem:[#allocation4 + $0x230] sm:$0xff] %vm1230, %v3901
        %3974 = vst.msk [vmem:[#allocation4 + $0x248] sm:$0xff] %vm1230, %v3903
        %3975 = vst.msk [vmem:[#allocation4 + $0x260] sm:$0xff] %vm1230, %v3905
        %3976 = vst.msk [vmem:[#allocation4 + $0x278] sm:$0xff] %vm1230, %v3907
        %3977 = vst.msk [vmem:[#allocation4 + $0x290] sm:$0xff] %vm1230, %v3909
        %3978 = vst.msk [vmem:[#allocation4 + $0x2a8] sm:$0xff] %vm1230, %v3911
        %3979 = vst.msk [vmem:[#allocation4 + $0x2c0] sm:$0xff] %vm1230, %v3913
        %3980 = vst.msk [vmem:[#allocation4 + $0x2d8] sm:$0xff] %vm1230, %v3915
        %3981 = vst.msk [vmem:[#allocation4 + $0x2f0] sm:$0xff] %vm1230, %v3917
        %v3982 = vld [vmem:[%s3597 + $0x2] sm:$0xff]
        %v3983 = vld [vmem:[%s3597 + $0xa] sm:$0xff]
        %v3984 = vld [vmem:[%s3597 + $0x1a] sm:$0xff]
        %v3985 = vld [vmem:[%s3597 + $0x22] sm:$0xff]
        %v3986 = vld [vmem:[%s3597 + $0x32] sm:$0xff]
        %v3987 = vld [vmem:[%s3597 + $0x3a] sm:$0xff]
        %v3988 = vld [vmem:[%s3597 + $0x4a] sm:$0xff]
        %v3989 = vld [vmem:[%s3597 + $0x52] sm:$0xff]
        %v3990 = vld [vmem:[%s3597 + $0x62] sm:$0xff]
        %v3991 = vld [vmem:[%s3597 + $0x6a] sm:$0xff]
        %v3992 = vld [vmem:[%s3597 + $0x7a] sm:$0xff]
        %v3993 = vld [vmem:[%s3597 + $0x82] sm:$0xff]
        %v3994 = vld [vmem:[%s3597 + $0x92] sm:$0xff]
        %v3995 = vld [vmem:[%s3597 + $0x9a] sm:$0xff]
        %v3996 = vld [vmem:[%s3597 + $0xaa] sm:$0xff]
        %v3997 = vld [vmem:[%s3597 + $0xb2] sm:$0xff]
        %v3998 = vld [vmem:[%s3597 + $0xc2] sm:$0xff]
        %v3999 = vld [vmem:[%s3597 + $0xca] sm:$0xff]
        %v4000 = vld [vmem:[%s3597 + $0xda] sm:$0xff]
        %v4001 = vld [vmem:[%s3597 + $0xe2] sm:$0xff]
        %v4002 = vld [vmem:[%s3597 + $0xf2] sm:$0xff]
        %v4003 = vld [vmem:[%s3597 + $0xfa] sm:$0xff]
        %v4004 = vld [vmem:[%s3597 + $0x10a] sm:$0xff]
        %v4005 = vld [vmem:[%s3597 + $0x112] sm:$0xff]
        %v4006 = vld [vmem:[%s3597 + $0x122] sm:$0xff]
        %v4007 = vld [vmem:[%s3597 + $0x12a] sm:$0xff]
        %v4008 = vld [vmem:[%s3597 + $0x13a] sm:$0xff]
        %v4009 = vld [vmem:[%s3597 + $0x142] sm:$0xff]
        %v4010 = vld [vmem:[%s3597 + $0x152] sm:$0xff]
        %v4011 = vld [vmem:[%s3597 + $0x15a] sm:$0xff]
        %v4012 = vld [vmem:[%s3597 + $0x16a] sm:$0xff]
        %v4013 = vld [vmem:[%s3597 + $0x172] sm:$0xff]
        %4014 = vst.msk [vmem:[#allocation4 + $0x10] sm:$0xff] %vm650, %v3982
        %4015 = vst.msk [vmem:[#allocation4 + $0x28] sm:$0xff] %vm650, %v3983
        %4016 = vst.msk [vmem:[#allocation4 + $0x40] sm:$0xff] %vm650, %v3984
        %4017 = vst.msk [vmem:[#allocation4 + $0x58] sm:$0xff] %vm650, %v3985
        %4018 = vst.msk [vmem:[#allocation4 + $0x70] sm:$0xff] %vm650, %v3986
        %4019 = vst.msk [vmem:[#allocation4 + $0x88] sm:$0xff] %vm650, %v3987
        %4020 = vst.msk [vmem:[#allocation4 + $0xa0] sm:$0xff] %vm650, %v3988
        %4021 = vst.msk [vmem:[#allocation4 + $0xb8] sm:$0xff] %vm650, %v3989
        %4022 = vst.msk [vmem:[#allocation4 + $0xd0] sm:$0xff] %vm650, %v3990
        %4023 = vst.msk [vmem:[#allocation4 + $0xe8] sm:$0xff] %vm650, %v3991
        %4024 = vst.msk [vmem:[#allocation4 + $0x100] sm:$0xff] %vm650, %v3992
        %4025 = vst.msk [vmem:[#allocation4 + $0x118] sm:$0xff] %vm650, %v3993
        %4026 = vst.msk [vmem:[#allocation4 + $0x130] sm:$0xff] %vm650, %v3994
        %4027 = vst.msk [vmem:[#allocation4 + $0x148] sm:$0xff] %vm650, %v3995
        %4028 = vst.msk [vmem:[#allocation4 + $0x160] sm:$0xff] %vm650, %v3996
        %4029 = vst.msk [vmem:[#allocation4 + $0x178] sm:$0xff] %vm650, %v3997
        %4030 = vst.msk [vmem:[#allocation4 + $0x190] sm:$0xff] %vm650, %v3998
        %4031 = vst.msk [vmem:[#allocation4 + $0x1a8] sm:$0xff] %vm650, %v3999
        %4032 = vst.msk [vmem:[#allocation4 + $0x1c0] sm:$0xff] %vm650, %v4000
        %4033 = vst.msk [vmem:[#allocation4 + $0x1d8] sm:$0xff] %vm650, %v4001
        %4034 = vst.msk [vmem:[#allocation4 + $0x1f0] sm:$0xff] %vm650, %v4002
        %4035 = vst.msk [vmem:[#allocation4 + $0x208] sm:$0xff] %vm650, %v4003
        %4036 = vst.msk [vmem:[#allocation4 + $0x220] sm:$0xff] %vm650, %v4004
        %4037 = vst.msk [vmem:[#allocation4 + $0x238] sm:$0xff] %vm650, %v4005
        %4038 = vst.msk [vmem:[#allocation4 + $0x250] sm:$0xff] %vm650, %v4006
        %4039 = vst.msk [vmem:[#allocation4 + $0x268] sm:$0xff] %vm650, %v4007
        %4040 = vst.msk [vmem:[#allocation4 + $0x280] sm:$0xff] %vm650, %v4008
        %4041 = vst.msk [vmem:[#allocation4 + $0x298] sm:$0xff] %vm650, %v4009
        %4042 = vst.msk [vmem:[#allocation4 + $0x2b0] sm:$0xff] %vm650, %v4010
        %4043 = vst.msk [vmem:[#allocation4 + $0x2c8] sm:$0xff] %vm650, %v4011
        %4044 = vst.msk [vmem:[#allocation4 + $0x2e0] sm:$0xff] %vm650, %v4012
        %4045 = vst.msk [vmem:[#allocation4 + $0x2f8] sm:$0xff] %vm650, %v4013
        %v4046 = vld [vmem:[#allocation4] sm:$0xff]
        %v4047 = vld [vmem:[#allocation4 + $0x8] sm:$0xff]
        %v4048 = vld [vmem:[#allocation4 + $0x10] sm:$0xff]
        %v4049 = vld [vmem:[#allocation4 + $0x18] sm:$0xff]
        %v4050 = vld [vmem:[#allocation4 + $0x20] sm:$0xff]
        %v4051 = vld [vmem:[#allocation4 + $0x28] sm:$0xff]
        %v4052 = vld [vmem:[#allocation4 + $0x30] sm:$0xff]
        %v4053 = vld [vmem:[#allocation4 + $0x38] sm:$0xff]
        %v4054 = vld [vmem:[#allocation4 + $0x40] sm:$0xff]
        %v4055 = vld [vmem:[#allocation4 + $0x48] sm:$0xff]
        %v4056 = vld [vmem:[#allocation4 + $0x50] sm:$0xff]
        %v4057 = vld [vmem:[#allocation4 + $0x58] sm:$0xff]
        %v4058 = vld [vmem:[#allocation4 + $0x60] sm:$0xff]
        %v4059 = vld [vmem:[#allocation4 + $0x68] sm:$0xff]
        %v4060 = vld [vmem:[#allocation4 + $0x70] sm:$0xff]
        %v4061 = vld [vmem:[#allocation4 + $0x78] sm:$0xff]
        %v4062 = vld [vmem:[#allocation4 + $0x80] sm:$0xff]
        %v4063 = vld [vmem:[#allocation4 + $0x88] sm:$0xff]
        %v4064 = vld [vmem:[#allocation4 + $0x90] sm:$0xff]
        %v4065 = vld [vmem:[#allocation4 + $0x98] sm:$0xff]
        %v4066 = vld [vmem:[#allocation4 + $0xa0] sm:$0xff]
        %v4067 = vld [vmem:[#allocation4 + $0xa8] sm:$0xff]
        %v4068 = vld [vmem:[#allocation4 + $0xb0] sm:$0xff]
        %v4069 = vld [vmem:[#allocation4 + $0xb8] sm:$0xff]
        %v4070 = vld [vmem:[#allocation4 + $0xc0] sm:$0xff]
        %v4071 = vld [vmem:[#allocation4 + $0xc8] sm:$0xff]
        %v4072 = vld [vmem:[#allocation4 + $0xd0] sm:$0xff]
        %v4073 = vld [vmem:[#allocation4 + $0xd8] sm:$0xff]
        %v4074 = vld [vmem:[#allocation4 + $0xe0] sm:$0xff]
        %v4075 = vld [vmem:[#allocation4 + $0xe8] sm:$0xff]
        %v4076 = vld [vmem:[#allocation4 + $0xf0] sm:$0xff]
        %v4077 = vld [vmem:[#allocation4 + $0xf8] sm:$0xff]
        %v4078 = vld [vmem:[#allocation4 + $0x100] sm:$0xff]
        %v4079 = vld [vmem:[#allocation4 + $0x108] sm:$0xff]
        %v4080 = vld [vmem:[#allocation4 + $0x110] sm:$0xff]
        %v4081 = vld [vmem:[#allocation4 + $0x118] sm:$0xff]
        %v4082 = vld [vmem:[#allocation4 + $0x120] sm:$0xff]
        %v4083 = vld [vmem:[#allocation4 + $0x128] sm:$0xff]
        %v4084 = vld [vmem:[#allocation4 + $0x130] sm:$0xff]
        %v4085 = vld [vmem:[#allocation4 + $0x138] sm:$0xff]
        %v4086 = vld [vmem:[#allocation4 + $0x140] sm:$0xff]
        %v4087 = vld [vmem:[#allocation4 + $0x148] sm:$0xff]
        %v4088 = vld [vmem:[#allocation4 + $0x150] sm:$0xff]
        %v4089 = vld [vmem:[#allocation4 + $0x158] sm:$0xff]
        %v4090 = vld [vmem:[#allocation4 + $0x160] sm:$0xff]
        %v4091 = vld [vmem:[#allocation4 + $0x168] sm:$0xff]
        %v4092 = vld [vmem:[#allocation4 + $0x170] sm:$0xff]
        %v4093 = vld [vmem:[#allocation4 + $0x178] sm:$0xff]
        %v4094 = vld [vmem:[#allocation4 + $0x180] sm:$0xff]
        %v4095 = vld [vmem:[#allocation4 + $0x188] sm:$0xff]
        %v4096 = vld [vmem:[#allocation4 + $0x190] sm:$0xff]
        %v4097 = vld [vmem:[#allocation4 + $0x198] sm:$0xff]
        %v4098 = vld [vmem:[#allocation4 + $0x1a0] sm:$0xff]
        %v4099 = vld [vmem:[#allocation4 + $0x1a8] sm:$0xff]
        %v4100 = vld [vmem:[#allocation4 + $0x1b0] sm:$0xff]
        %v4101 = vld [vmem:[#allocation4 + $0x1b8] sm:$0xff]
        %v4102 = vld [vmem:[#allocation4 + $0x1c0] sm:$0xff]
        %v4103 = vld [vmem:[#allocation4 + $0x1c8] sm:$0xff]
        %v4104 = vld [vmem:[#allocation4 + $0x1d0] sm:$0xff]
        %v4105 = vld [vmem:[#allocation4 + $0x1d8] sm:$0xff]
        %v4106 = vld [vmem:[#allocation4 + $0x1e0] sm:$0xff]
        %v4107 = vld [vmem:[#allocation4 + $0x1e8] sm:$0xff]
        %v4108 = vld [vmem:[#allocation4 + $0x1f0] sm:$0xff]
        %v4109 = vld [vmem:[#allocation4 + $0x1f8] sm:$0xff]
        %v4110 = vld [vmem:[#allocation4 + $0x200] sm:$0xff]
        %v4111 = vld [vmem:[#allocation4 + $0x208] sm:$0xff]
        %v4112 = vld [vmem:[#allocation4 + $0x210] sm:$0xff]
        %v4113 = vld [vmem:[#allocation4 + $0x218] sm:$0xff]
        %v4114 = vld [vmem:[#allocation4 + $0x220] sm:$0xff]
        %v4115 = vld [vmem:[#allocation4 + $0x228] sm:$0xff]
        %v4116 = vld [vmem:[#allocation4 + $0x230] sm:$0xff]
        %v4117 = vld [vmem:[#allocation4 + $0x238] sm:$0xff]
        %v4118 = vld [vmem:[#allocation4 + $0x240] sm:$0xff]
        %v4119 = vld [vmem:[#allocation4 + $0x248] sm:$0xff]
        %v4120 = vld [vmem:[#allocation4 + $0x250] sm:$0xff]
        %v4121 = vld [vmem:[#allocation4 + $0x258] sm:$0xff]
        %v4122 = vld [vmem:[#allocation4 + $0x260] sm:$0xff]
        %v4123 = vld [vmem:[#allocation4 + $0x268] sm:$0xff]
        %v4124 = vld [vmem:[#allocation4 + $0x270] sm:$0xff]
        %v4125 = vld [vmem:[#allocation4 + $0x278] sm:$0xff]
        %v4126 = vld [vmem:[#allocation4 + $0x280] sm:$0xff]
        %v4127 = vld [vmem:[#allocation4 + $0x288] sm:$0xff]
        %v4128 = vld [vmem:[#allocation4 + $0x290] sm:$0xff]
        %v4129 = vld [vmem:[#allocation4 + $0x298] sm:$0xff]
        %v4130 = vld [vmem:[#allocation4 + $0x2a0] sm:$0xff]
        %v4131 = vld [vmem:[#allocation4 + $0x2a8] sm:$0xff]
        %v4132 = vld [vmem:[#allocation4 + $0x2b0] sm:$0xff]
        %v4133 = vld [vmem:[#allocation4 + $0x2b8] sm:$0xff]
        %v4134 = vld [vmem:[#allocation4 + $0x2c0] sm:$0xff]
        %v4135 = vld [vmem:[#allocation4 + $0x2c8] sm:$0xff]
        %v4136 = vld [vmem:[#allocation4 + $0x2d0] sm:$0xff]
        %v4137 = vld [vmem:[#allocation4 + $0x2d8] sm:$0xff]
        %v4138 = vld [vmem:[#allocation4 + $0x2e0] sm:$0xff]
        %v4139 = vld [vmem:[#allocation4 + $0x2e8] sm:$0xff]
        %v4140 = vld [vmem:[#allocation4 + $0x2f0] sm:$0xff]
        %v4141 = vld [vmem:[#allocation4 + $0x2f8] sm:$0xff]
        %v4142 = vpack.c.bf16 %v4049, %v4046
        %v4143 = vpack.c.bf16 %v4050, %v4047
        %v4144 = vpack.c.bf16 %v4051, %v4048
        %v4145 = vpack.c.bf16 %v4055, %v4052
        %v4146 = vpack.c.bf16 %v4056, %v4053
        %v4147 = vpack.c.bf16 %v4057, %v4054
        %v4148 = vpack.c.bf16 %v4061, %v4058
        %v4149 = vpack.c.bf16 %v4062, %v4059
        %v4150 = vpack.c.bf16 %v4063, %v4060
        %v4151 = vpack.c.bf16 %v4067, %v4064
        %v4152 = vpack.c.bf16 %v4068, %v4065
        %v4153 = vpack.c.bf16 %v4069, %v4066
        %v4154 = vpack.c.bf16 %v4073, %v4070
        %v4155 = vpack.c.bf16 %v4074, %v4071
        %v4156 = vpack.c.bf16 %v4075, %v4072
        %v4157 = vpack.c.bf16 %v4079, %v4076
        %v4158 = vpack.c.bf16 %v4080, %v4077
        %v4159 = vpack.c.bf16 %v4081, %v4078
        %v4160 = vpack.c.bf16 %v4085, %v4082
        %v4161 = vpack.c.bf16 %v4086, %v4083
        %v4162 = vpack.c.bf16 %v4087, %v4084
        %v4163 = vpack.c.bf16 %v4091, %v4088
        %v4164 = vpack.c.bf16 %v4092, %v4089
        %v4165 = vpack.c.bf16 %v4093, %v4090
        %v4166 = vpack.c.bf16 %v4097, %v4094
        %v4167 = vpack.c.bf16 %v4098, %v4095
        %v4168 = vpack.c.bf16 %v4099, %v4096
        %v4169 = vpack.c.bf16 %v4103, %v4100
        %v4170 = vpack.c.bf16 %v4104, %v4101
        %v4171 = vpack.c.bf16 %v4105, %v4102
        %v4172 = vpack.c.bf16 %v4109, %v4106
        %v4173 = vpack.c.bf16 %v4110, %v4107
        %v4174 = vpack.c.bf16 %v4111, %v4108
        %v4175 = vpack.c.bf16 %v4115, %v4112
        %v4176 = vpack.c.bf16 %v4116, %v4113
        %v4177 = vpack.c.bf16 %v4117, %v4114
        %v4178 = vpack.c.bf16 %v4121, %v4118
        %v4179 = vpack.c.bf16 %v4122, %v4119
        %v4180 = vpack.c.bf16 %v4123, %v4120
        %v4181 = vpack.c.bf16 %v4127, %v4124
        %v4182 = vpack.c.bf16 %v4128, %v4125
        %v4183 = vpack.c.bf16 %v4129, %v4126
        %v4184 = vpack.c.bf16 %v4133, %v4130
        %v4185 = vpack.c.bf16 %v4134, %v4131
        %v4186 = vpack.c.bf16 %v4135, %v4132
        %v4187 = vpack.c.bf16 %v4139, %v4136
        %v4188 = vpack.c.bf16 %v4140, %v4137
        %v4189 = vpack.c.bf16 %v4141, %v4138
        %v4191 = vlaneseq
        %v4192 = vshrl.u32 %v4191, 7
        %v4193 = vsub.s32 0, %v4192
        %v4194 = vrot.slane %v2700, %v4193
        %v4232 = vunpack.c.l.b16 %v2663
        %v4233 = vunpack.c.l.b16 %v2664
        %v4234 = vunpack.c.l.b16 %v2665
        %v4235 = vunpack.c.l.b16 %v2666
        %v4236 = vunpack.c.l.b16 %v2667
        %v4237 = vunpack.c.l.b16 %v2668
        %v4238 = vunpack.c.l.b16 %v2669
        %v4239 = vunpack.c.l.b16 %v2670
        %v4240 = vunpack.c.l.b16 %v2671
        %v4241 = vunpack.c.l.b16 %v2672
        %v4242 = vunpack.c.l.b16 %v2673
        %v4243 = vunpack.c.l.b16 %v2674
        %v4244 = vunpack.c.l.b16 %v2675
        %v4245 = vunpack.c.l.b16 %v2676
        %v4246 = vunpack.c.l.b16 %v2677
        %v4247 = vunpack.c.l.b16 %v2678
        %v4248 = vunpack.c.l.b16 %v2679
        %v4249 = vunpack.c.l.b16 %v2680
        %v4250 = vunpack.c.l.b16 %v2681
        %v4251 = vunpack.c.l.b16 %v2682
        %v4252 = vunpack.c.l.b16 %v2683
        %v4253 = vunpack.c.l.b16 %v2684
        %v4254 = vunpack.c.l.b16 %v2685
        %v4255 = vunpack.c.l.b16 %v2686
        %v4256 = vunpack.c.l.b16 %v2687
        %v4257 = vunpack.c.l.b16 %v2688
        %v4258 = vunpack.c.l.b16 %v2689
        %v4259 = vunpack.c.l.b16 %v2690
        %v4260 = vunpack.c.l.b16 %v2691
        %v4261 = vunpack.c.l.b16 %v2692
        %v4262 = vunpack.c.l.b16 %v2693
        %v4263 = vunpack.c.l.b16 %v2694
        %v4264 = vunpack.c.l.b16 %v2695
        %v4265 = vunpack.c.l.b16 %v2696
        %v4266 = vunpack.c.l.b16 %v2697
        %v4267 = vunpack.c.l.b16 %v2698
        %v4268 = vpack.c.b16 %v4233, %v4232
        %v4269 = vpack.c.b16 %v4235, %v4234
        %v4270 = vpack.c.b16 %v4237, %v4236
        %v4271 = vpack.c.b16 %v4239, %v4238
        %v4272 = vpack.c.b16 %v4241, %v4240
        %v4273 = vpack.c.b16 %v4243, %v4242
        %v4274 = vpack.c.b16 %v4245, %v4244
        %v4275 = vpack.c.b16 %v4247, %v4246
        %v4276 = vpack.c.b16 %v4249, %v4248
        %v4277 = vpack.c.b16 %v4251, %v4250
        %v4278 = vpack.c.b16 %v4253, %v4252
        %v4279 = vpack.c.b16 %v4255, %v4254
        %v4280 = vpack.c.b16 %v4257, %v4256
        %v4281 = vpack.c.b16 %v4259, %v4258
        %v4282 = vpack.c.b16 %v4261, %v4260
        %v4283 = vpack.c.b16 %v4263, %v4262
        %v4284 = vpack.c.b16 %v4265, %v4264
        %v4285 = vpack.c.b16 %v4267, %v4266
        %v4305 = vsel %vm650, %v4144, 0
        %v4308 = vsel %vm650, %v4147, 0
        %v4311 = vsel %vm650, %v4150, 0
        %v4314 = vsel %vm650, %v4153, 0
        %v4317 = vsel %vm650, %v4156, 0
        %v4320 = vsel %vm650, %v4159, 0
        %v4323 = vsel %vm650, %v4162, 0
        %v4326 = vsel %vm650, %v4165, 0
        %v4329 = vsel %vm650, %v4168, 0
        %v4332 = vsel %vm650, %v4171, 0
        %v4335 = vsel %vm650, %v4174, 0
        %v4338 = vsel %vm650, %v4177, 0
        %v4341 = vsel %vm650, %v4180, 0
        %v4344 = vsel %vm650, %v4183, 0
        %v4347 = vsel %vm650, %v4186, 0
        %v4350 = vsel %vm650, %v4189, 0
        %4352 = vmatprep.subr.bf16.mxu0 0
        %4353 = vmatpush1.bf16.msra.mxu0 %v4275
        %4354 = vmatprep.subr.bf16.mxu0 0
        %4355 = vmatpush1.bf16.msra.mxu0 %v4274
        %4356 = vmatprep.subr.bf16.mxu0 0
        %4357 = vmatpush1.bf16.msra.mxu0 %v4273
        %4358 = vmatprep.subr.bf16.mxu0 0
        %4359 = vmatpush1.bf16.msra.mxu0 %v4272
        %4360 = vmatprep.subr.bf16.mxu0 0
        %4361 = vmatpush1.bf16.msra.mxu0 %v4271
        %4362 = vmatprep.subr.bf16.mxu0 0
        %4363 = vmatpush1.bf16.msra.mxu0 %v4270
        %4364 = vmatprep.subr.bf16.mxu0 0
        %4365 = vmatpush1.bf16.msra.mxu0 %v4269
        %4366 = vmatprep.subr.bf16.mxu0 0
        %4367 = vmatpush1.bf16.msra.mxu0 %v4268
        %4368 = vmatprep.subr.bf16.mxu0 0
        %4369 = vmatpush2.bf16.msra.mxu0 %v4283
        %4370 = vmatprep.subr.bf16.mxu0 0
        %4371 = vmatpush2.bf16.msra.mxu0 %v4282
        %4372 = vmatprep.subr.bf16.mxu0 0
        %4373 = vmatpush2.bf16.msra.mxu0 %v4281
        %4374 = vmatprep.subr.bf16.mxu0 0
        %4375 = vmatpush2.bf16.msra.mxu0 %v4280
        %4376 = vmatprep.subr.bf16.mxu0 0
        %4377 = vmatpush2.bf16.msra.mxu0 %v4279
        %4378 = vmatprep.subr.bf16.mxu0 0
        %4379 = vmatpush2.bf16.msra.mxu0 %v4278
        %4380 = vmatprep.subr.bf16.mxu0 0
        %4381 = vmatpush2.bf16.msra.mxu0 %v4277
        %4382 = vmatprep.subr.bf16.mxu0 0
        %4383 = vmatpush2.bf16.msra.mxu0 %v4276
        %4384 = vmatprep.mubr.bf16.mxu0 %v4143
        %4385 = vmatmul.mubr.bf16.gmra.mxu0 %v4142
        %v4386 = vpop.f32.mrf.mxu0
        %v4387 = vadd.f32 %v4194, %v4386
        %v4388 = vpop.f32.mrf.mxu0
        %v4389 = vpop.f32.mrf.mxu0
        %v4390 = vadd.f32 %v4194, %v4389
        %v4391 = vpop.f32.mrf.mxu0
        %4392 = vmatprep.mubr.bf16.mxu0 %v4146
        %4393 = vmatmul.mubr.bf16.gmra.mxu0 %v4145
        %v4394 = vpop.f32.mrf.mxu0
        %v4395 = vadd.f32 %v4194, %v4394
        %v4396 = vpop.f32.mrf.mxu0
        %v4397 = vpop.f32.mrf.mxu0
        %v4398 = vadd.f32 %v4194, %v4397
        %v4399 = vpop.f32.mrf.mxu0
        %4400 = vmatprep.mubr.bf16.mxu0 %v4149
        %4401 = vmatmul.mubr.bf16.gmra.mxu0 %v4148
        %v4402 = vpop.f32.mrf.mxu0
        %v4403 = vadd.f32 %v4194, %v4402
        %v4404 = vpop.f32.mrf.mxu0
        %v4405 = vpop.f32.mrf.mxu0
        %v4406 = vadd.f32 %v4194, %v4405
        %v4407 = vpop.f32.mrf.mxu0
        %4408 = vmatprep.mubr.bf16.mxu0 %v4152
        %4409 = vmatmul.mubr.bf16.gmra.mxu0 %v4151
        %v4410 = vpop.f32.mrf.mxu0
        %v4411 = vadd.f32 %v4194, %v4410
        %v4412 = vpop.f32.mrf.mxu0
        %v4413 = vpop.f32.mrf.mxu0
        %v4414 = vadd.f32 %v4194, %v4413
        %v4415 = vpop.f32.mrf.mxu0
        %4416 = vmatprep.mubr.bf16.mxu0 %v4155
        %4417 = vmatmul.mubr.bf16.gmra.mxu0 %v4154
        %v4418 = vpop.f32.mrf.mxu0
        %v4419 = vadd.f32 %v4194, %v4418
        %v4420 = vpop.f32.mrf.mxu0
        %v4421 = vpop.f32.mrf.mxu0
        %v4422 = vadd.f32 %v4194, %v4421
        %v4423 = vpop.f32.mrf.mxu0
        %4424 = vmatprep.mubr.bf16.mxu0 %v4158
        %4425 = vmatmul.mubr.bf16.gmra.mxu0 %v4157
        %v4426 = vpop.f32.mrf.mxu0
        %v4427 = vadd.f32 %v4194, %v4426
        %v4428 = vpop.f32.mrf.mxu0
        %v4429 = vpop.f32.mrf.mxu0
        %v4430 = vadd.f32 %v4194, %v4429
        %v4431 = vpop.f32.mrf.mxu0
        %4432 = vmatprep.mubr.bf16.mxu0 %v4161
        %4433 = vmatmul.mubr.bf16.gmra.mxu0 %v4160
        %v4434 = vpop.f32.mrf.mxu0
        %v4435 = vadd.f32 %v4194, %v4434
        %v4436 = vpop.f32.mrf.mxu0
        %v4437 = vpop.f32.mrf.mxu0
        %v4438 = vadd.f32 %v4194, %v4437
        %v4439 = vpop.f32.mrf.mxu0
        %4440 = vmatprep.mubr.bf16.mxu0 %v4164
        %4441 = vmatmul.mubr.bf16.gmra.mxu0 %v4163
        %v4442 = vpop.f32.mrf.mxu0
        %v4443 = vadd.f32 %v4194, %v4442
        %v4444 = vpop.f32.mrf.mxu0
        %v4445 = vpop.f32.mrf.mxu0
        %v4446 = vadd.f32 %v4194, %v4445
        %v4447 = vpop.f32.mrf.mxu0
        %4448 = vmatprep.mubr.bf16.mxu0 %v4167
        %4449 = vmatmul.mubr.bf16.gmra.mxu0 %v4166
        %v4450 = vpop.f32.mrf.mxu0
        %v4451 = vadd.f32 %v4194, %v4450
        %v4452 = vpop.f32.mrf.mxu0
        %v4453 = vpop.f32.mrf.mxu0
        %v4454 = vadd.f32 %v4194, %v4453
        %v4455 = vpop.f32.mrf.mxu0
        %4456 = vmatprep.mubr.bf16.mxu0 %v4170
        %4457 = vmatmul.mubr.bf16.gmra.mxu0 %v4169
        %v4458 = vpop.f32.mrf.mxu0
        %v4459 = vadd.f32 %v4194, %v4458
        %v4460 = vpop.f32.mrf.mxu0
        %v4461 = vpop.f32.mrf.mxu0
        %v4462 = vadd.f32 %v4194, %v4461
        %v4463 = vpop.f32.mrf.mxu0
        %4464 = vmatprep.mubr.bf16.mxu0 %v4173
        %4465 = vmatmul.mubr.bf16.gmra.mxu0 %v4172
        %v4466 = vpop.f32.mrf.mxu0
        %v4467 = vadd.f32 %v4194, %v4466
        %v4468 = vpop.f32.mrf.mxu0
        %v4469 = vpop.f32.mrf.mxu0
        %v4470 = vadd.f32 %v4194, %v4469
        %v4471 = vpop.f32.mrf.mxu0
        %4472 = vmatprep.mubr.bf16.mxu0 %v4176
        %4473 = vmatmul.mubr.bf16.gmra.mxu0 %v4175
        %v4474 = vpop.f32.mrf.mxu0
        %v4475 = vadd.f32 %v4194, %v4474
        %v4476 = vpop.f32.mrf.mxu0
        %v4477 = vpop.f32.mrf.mxu0
        %v4478 = vadd.f32 %v4194, %v4477
        %v4479 = vpop.f32.mrf.mxu0
        %4480 = vmatprep.mubr.bf16.mxu0 %v4179
        %4481 = vmatmul.mubr.bf16.gmra.mxu0 %v4178
        %v4482 = vpop.f32.mrf.mxu0
        %v4483 = vadd.f32 %v4194, %v4482
        %v4484 = vpop.f32.mrf.mxu0
        %v4485 = vpop.f32.mrf.mxu0
        %v4486 = vadd.f32 %v4194, %v4485
        %v4487 = vpop.f32.mrf.mxu0
        %4488 = vmatprep.mubr.bf16.mxu0 %v4182
        %4489 = vmatmul.mubr.bf16.gmra.mxu0 %v4181
        %v4490 = vpop.f32.mrf.mxu0
        %v4491 = vadd.f32 %v4194, %v4490
        %v4492 = vpop.f32.mrf.mxu0
        %v4493 = vpop.f32.mrf.mxu0
        %v4494 = vadd.f32 %v4194, %v4493
        %v4495 = vpop.f32.mrf.mxu0
        %4496 = vmatprep.mubr.bf16.mxu0 %v4185
        %4497 = vmatmul.mubr.bf16.gmra.mxu0 %v4184
        %v4498 = vpop.f32.mrf.mxu0
        %v4499 = vadd.f32 %v4194, %v4498
        %v4500 = vpop.f32.mrf.mxu0
        %v4501 = vpop.f32.mrf.mxu0
        %v4502 = vadd.f32 %v4194, %v4501
        %v4503 = vpop.f32.mrf.mxu0
        %4504 = vmatprep.mubr.bf16.mxu0 %v4188
        %4505 = vmatmul.mubr.bf16.gmra.mxu0 %v4187
        %v4506 = vpop.f32.mrf.mxu0
        %v4507 = vadd.f32 %v4194, %v4506
        %v4508 = vpop.f32.mrf.mxu0
        %v4509 = vpop.f32.mrf.mxu0
        %v4510 = vadd.f32 %v4194, %v4509
        %v4511 = vpop.f32.mrf.mxu0
        %4512 = vdwg.mxu0
        %4513 = vmatprep.subr.bf16.mxu0 0
        %4514 = vmatpush1.bf16.msra.mxu0 0
        %4515 = vmatprep.subr.bf16.mxu0 0
        %4516 = vmatpush1.bf16.msra.mxu0 0
        %4517 = vmatprep.subr.bf16.mxu0 0
        %4518 = vmatpush1.bf16.msra.mxu0 0
        %4519 = vmatprep.subr.bf16.mxu0 0
        %4520 = vmatpush1.bf16.msra.mxu0 0
        %4521 = vmatprep.subr.bf16.mxu0 0
        %4522 = vmatpush1.bf16.msra.mxu0 0
        %4523 = vmatprep.subr.bf16.mxu0 0
        %4524 = vmatpush1.bf16.msra.mxu0 0
        %4525 = vmatprep.subr.bf16.mxu0 0
        %4526 = vmatpush1.bf16.msra.mxu0 %v4285
        %4527 = vmatprep.subr.bf16.mxu0 0
        %4528 = vmatpush1.bf16.msra.mxu0 %v4284
        %4529 = vmatprep.subr.bf16.mxu0 0
        %4530 = vmatpush2.bf16.msra.mxu0 0
        %4531 = vmatprep.subr.bf16.mxu0 0
        %4532 = vmatpush2.bf16.msra.mxu0 0
        %4533 = vmatprep.subr.bf16.mxu0 0
        %4534 = vmatpush2.bf16.msra.mxu0 0
        %4535 = vmatprep.subr.bf16.mxu0 0
        %4536 = vmatpush2.bf16.msra.mxu0 0
        %4537 = vmatprep.subr.bf16.mxu0 0
        %4538 = vmatpush2.bf16.msra.mxu0 0
        %4539 = vmatprep.subr.bf16.mxu0 0
        %4540 = vmatpush2.bf16.msra.mxu0 0
        %4541 = vmatprep.subr.bf16.mxu0 0
        %4542 = vmatpush2.bf16.msra.mxu0 0
        %4543 = vmatprep.subr.bf16.mxu0 0
        %4544 = vmatpush2.bf16.msra.mxu0 0
        %4545 = vmatprep.mubr.bf16.mxu0 0
        %4546 = vmatmul.mubr.bf16.gmra.mxu0 %v4305
        %v4547 = vpop.f32.mrf.mxu0
        %v4548 = vadd.f32 %v4387, %v4547
        %v4549 = vpop.f32.mrf.mxu0
        %v4550 = vpop.f32.mrf.mxu0
        %v4551 = vadd.f32 %v4390, %v4550
        %v4552 = vpop.f32.mrf.mxu0
        %4553 = vmatprep.mubr.bf16.mxu0 0
        %4554 = vmatmul.mubr.bf16.gmra.mxu0 %v4308
        %v4555 = vpop.f32.mrf.mxu0
        %v4556 = vadd.f32 %v4395, %v4555
        %v4557 = vpop.f32.mrf.mxu0
        %v4558 = vpop.f32.mrf.mxu0
        %v4559 = vadd.f32 %v4398, %v4558
        %v4560 = vpop.f32.mrf.mxu0
        %4561 = vmatprep.mubr.bf16.mxu0 0
        %4562 = vmatmul.mubr.bf16.gmra.mxu0 %v4311
        %v4563 = vpop.f32.mrf.mxu0
        %v4564 = vadd.f32 %v4403, %v4563
        %v4565 = vpop.f32.mrf.mxu0
        %v4566 = vpop.f32.mrf.mxu0
        %v4567 = vadd.f32 %v4406, %v4566
        %v4568 = vpop.f32.mrf.mxu0
        %4569 = vmatprep.mubr.bf16.mxu0 0
        %4570 = vmatmul.mubr.bf16.gmra.mxu0 %v4314
        %v4571 = vpop.f32.mrf.mxu0
        %v4572 = vadd.f32 %v4411, %v4571
        %v4573 = vpop.f32.mrf.mxu0
        %v4574 = vpop.f32.mrf.mxu0
        %v4575 = vadd.f32 %v4414, %v4574
        %v4576 = vpop.f32.mrf.mxu0
        %4577 = vmatprep.mubr.bf16.mxu0 0
        %4578 = vmatmul.mubr.bf16.gmra.mxu0 %v4317
        %v4579 = vpop.f32.mrf.mxu0
        %v4580 = vadd.f32 %v4419, %v4579
        %v4581 = vpop.f32.mrf.mxu0
        %v4582 = vpop.f32.mrf.mxu0
        %v4583 = vadd.f32 %v4422, %v4582
        %v4584 = vpop.f32.mrf.mxu0
        %4585 = vmatprep.mubr.bf16.mxu0 0
        %4586 = vmatmul.mubr.bf16.gmra.mxu0 %v4320
        %v4587 = vpop.f32.mrf.mxu0
        %v4588 = vadd.f32 %v4427, %v4587
        %v4589 = vpop.f32.mrf.mxu0
        %v4590 = vpop.f32.mrf.mxu0
        %v4591 = vadd.f32 %v4430, %v4590
        %v4592 = vpop.f32.mrf.mxu0
        %4593 = vmatprep.mubr.bf16.mxu0 0
        %4594 = vmatmul.mubr.bf16.gmra.mxu0 %v4323
        %v4595 = vpop.f32.mrf.mxu0
        %v4596 = vadd.f32 %v4435, %v4595
        %v4597 = vpop.f32.mrf.mxu0
        %v4598 = vpop.f32.mrf.mxu0
        %v4599 = vadd.f32 %v4438, %v4598
        %v4600 = vpop.f32.mrf.mxu0
        %4601 = vmatprep.mubr.bf16.mxu0 0
        %4602 = vmatmul.mubr.bf16.gmra.mxu0 %v4326
        %v4603 = vpop.f32.mrf.mxu0
        %v4604 = vadd.f32 %v4443, %v4603
        %v4605 = vpop.f32.mrf.mxu0
        %v4606 = vpop.f32.mrf.mxu0
        %v4607 = vadd.f32 %v4446, %v4606
        %v4608 = vpop.f32.mrf.mxu0
        %4609 = vmatprep.mubr.bf16.mxu0 0
        %4610 = vmatmul.mubr.bf16.gmra.mxu0 %v4329
        %v4611 = vpop.f32.mrf.mxu0
        %v4612 = vadd.f32 %v4451, %v4611
        %v4613 = vpop.f32.mrf.mxu0
        %v4614 = vpop.f32.mrf.mxu0
        %v4615 = vadd.f32 %v4454, %v4614
        %v4616 = vpop.f32.mrf.mxu0
        %4617 = vmatprep.mubr.bf16.mxu0 0
        %4618 = vmatmul.mubr.bf16.gmra.mxu0 %v4332
        %v4619 = vpop.f32.mrf.mxu0
        %v4620 = vadd.f32 %v4459, %v4619
        %v4621 = vpop.f32.mrf.mxu0
        %v4622 = vpop.f32.mrf.mxu0
        %v4623 = vadd.f32 %v4462, %v4622
        %v4624 = vpop.f32.mrf.mxu0
        %4625 = vmatprep.mubr.bf16.mxu0 0
        %4626 = vmatmul.mubr.bf16.gmra.mxu0 %v4335
        %v4627 = vpop.f32.mrf.mxu0
        %v4628 = vadd.f32 %v4467, %v4627
        %v4629 = vpop.f32.mrf.mxu0
        %v4630 = vpop.f32.mrf.mxu0
        %v4631 = vadd.f32 %v4470, %v4630
        %v4632 = vpop.f32.mrf.mxu0
        %4633 = vmatprep.mubr.bf16.mxu0 0
        %4634 = vmatmul.mubr.bf16.gmra.mxu0 %v4338
        %v4635 = vpop.f32.mrf.mxu0
        %v4636 = vadd.f32 %v4475, %v4635
        %v4637 = vpop.f32.mrf.mxu0
        %v4638 = vpop.f32.mrf.mxu0
        %v4639 = vadd.f32 %v4478, %v4638
        %v4640 = vpop.f32.mrf.mxu0
        %4641 = vmatprep.mubr.bf16.mxu0 0
        %4642 = vmatmul.mubr.bf16.gmra.mxu0 %v4341
        %v4643 = vpop.f32.mrf.mxu0
        %v4644 = vadd.f32 %v4483, %v4643
        %v4645 = vpop.f32.mrf.mxu0
        %v4646 = vpop.f32.mrf.mxu0
        %v4647 = vadd.f32 %v4486, %v4646
        %v4648 = vpop.f32.mrf.mxu0
        %4649 = vmatprep.mubr.bf16.mxu0 0
        %4650 = vmatmul.mubr.bf16.gmra.mxu0 %v4344
        %v4651 = vpop.f32.mrf.mxu0
        %v4652 = vadd.f32 %v4491, %v4651
        %v4653 = vpop.f32.mrf.mxu0
        %v4654 = vpop.f32.mrf.mxu0
        %v4655 = vadd.f32 %v4494, %v4654
        %v4656 = vpop.f32.mrf.mxu0
        %4657 = vmatprep.mubr.bf16.mxu0 0
        %4658 = vmatmul.mubr.bf16.gmra.mxu0 %v4347
        %v4659 = vpop.f32.mrf.mxu0
        %v4660 = vadd.f32 %v4499, %v4659
        %v4661 = vpop.f32.mrf.mxu0
        %v4662 = vpop.f32.mrf.mxu0
        %v4663 = vadd.f32 %v4502, %v4662
        %v4664 = vpop.f32.mrf.mxu0
        %4665 = vmatprep.mubr.bf16.mxu0 0
        %4666 = vmatmul.mubr.bf16.gmra.mxu0 %v4350
        %v4667 = vpop.f32.mrf.mxu0
        %v4668 = vadd.f32 %v4507, %v4667
        %v4669 = vpop.f32.mrf.mxu0
        %v4670 = vpop.f32.mrf.mxu0
        %v4671 = vadd.f32 %v4510, %v4670
        %v4672 = vpop.f32.mrf.mxu0
        %4673 = vdwg.mxu0
        %v4674 = vsel %vm650, %v4548, 0.0
        %v4675 = vsel %vm650, %v4551, 0.0
        %v4676 = vadd.f32 %v4674, %v4675
        %v4677 = vsel %vm650, %v4556, 0.0
        %v4678 = vadd.f32 %v4676, %v4677
        %v4679 = vsel %vm650, %v4559, 0.0
        %v4680 = vadd.f32 %v4678, %v4679
        %v4681 = vsel %vm650, %v4564, 0.0
        %v4682 = vadd.f32 %v4680, %v4681
        %v4683 = vsel %vm650, %v4567, 0.0
        %v4684 = vadd.f32 %v4682, %v4683
        %v4685 = vsel %vm650, %v4572, 0.0
        %v4686 = vadd.f32 %v4684, %v4685
        %v4687 = vsel %vm650, %v4575, 0.0
        %v4688 = vadd.f32 %v4686, %v4687
        %v4689 = vsel %vm650, %v4580, 0.0
        %v4690 = vadd.f32 %v4688, %v4689
        %v4691 = vsel %vm650, %v4583, 0.0
        %v4692 = vadd.f32 %v4690, %v4691
        %v4693 = vsel %vm650, %v4588, 0.0
        %v4694 = vadd.f32 %v4692, %v4693
        %v4695 = vsel %vm650, %v4591, 0.0
        %v4696 = vadd.f32 %v4694, %v4695
        %v4697 = vsel %vm650, %v4596, 0.0
        %v4698 = vadd.f32 %v4696, %v4697
        %v4699 = vsel %vm650, %v4599, 0.0
        %v4700 = vadd.f32 %v4698, %v4699
        %v4701 = vsel %vm650, %v4604, 0.0
        %v4702 = vadd.f32 %v4700, %v4701
        %v4703 = vsel %vm650, %v4607, 0.0
        %v4704 = vadd.f32 %v4702, %v4703
        %v4705 = vsel %vm650, %v4612, 0.0
        %v4706 = vadd.f32 %v4704, %v4705
        %v4707 = vsel %vm650, %v4615, 0.0
        %v4708 = vadd.f32 %v4706, %v4707
        %v4709 = vsel %vm650, %v4620, 0.0
        %v4710 = vadd.f32 %v4708, %v4709
        %v4711 = vsel %vm650, %v4623, 0.0
        %v4712 = vadd.f32 %v4710, %v4711
        %v4713 = vsel %vm650, %v4628, 0.0
        %v4714 = vadd.f32 %v4712, %v4713
        %v4715 = vsel %vm650, %v4631, 0.0
        %v4716 = vadd.f32 %v4714, %v4715
        %v4717 = vsel %vm650, %v4636, 0.0
        %v4718 = vadd.f32 %v4716, %v4717
        %v4719 = vsel %vm650, %v4639, 0.0
        %v4720 = vadd.f32 %v4718, %v4719
        %v4721 = vsel %vm650, %v4644, 0.0
        %v4722 = vadd.f32 %v4720, %v4721
        %v4723 = vsel %vm650, %v4647, 0.0
        %v4724 = vadd.f32 %v4722, %v4723
        %v4725 = vsel %vm650, %v4652, 0.0
        %v4726 = vadd.f32 %v4724, %v4725
        %v4727 = vsel %vm650, %v4655, 0.0
        %v4728 = vadd.f32 %v4726, %v4727
        %v4729 = vsel %vm650, %v4660, 0.0
        %v4730 = vadd.f32 %v4728, %v4729
        %v4731 = vsel %vm650, %v4663, 0.0
        %v4732 = vadd.f32 %v4730, %v4731
        %v4733 = vsel %vm650, %v4668, 0.0
        %v4734 = vadd.f32 %v4732, %v4733
        %v4735 = vsel %vm650, %v4671, 0.0
        %v4736 = vadd.f32 %v4734, %v4735
        %v4737 = vrot.slane %v4736, 4
        %v4738 = vadd.f32 %v4736, %v4737
        %v4739 = vrot.slane %v4738, 2
        %v4740 = vadd.f32 %v4738, %v4739
        %v4741 = vrot.slane %v4740, 1
        %v4742 = vadd.f32 %v4740, %v4741
        %v4743 = vrcp.pop 256.0
        %v4744 = vmul.f32 %v4742, %v4743
        %v4745 = vpack.c.bf16 %v4744, %v4744
        %s4746 = smul.u32 %s30, 4
        %s4747 = smul.addr %s4746, 4
        %s4748 = scalar_lea.vmem %s5, %s4747
        %v4749 = vld [vmem:[%s4748] sm:$0xf]
        %v4750 = vld [vmem:[%s4748 + $0x4] sm:$0xf]
        %v4751 = vld [vmem:[%s4748 + $0x8] sm:$0xf]
        %v4752 = vld [vmem:[%s4748 + $0xc] sm:$0xf]
        %s4753 = scalar_lea.vmem %s6, %s30
        %v4754 = vld [vmem:[%s4753] sm:$0x1]
        %v4759 = vunpack.c.l.b16 %v4749
        %v4760 = vunpack.c.l.b16 %v4750
        %v4761 = vunpack.c.l.b16 %v4751
        %v4762 = vunpack.c.l.b16 %v4752
        %v4763 = vpack.c.b16 %v4760, %v4759
        %v4764 = vpack.c.b16 %v4762, %v4761
        %v4768 = vsel %vm650, %v4745, 0
        %4770 = vmatprep.subr.bf16.mxu0 0
        %4771 = vmatpush1.bf16.msra.mxu0 0
        %4772 = vmatprep.subr.bf16.mxu0 0
        %4773 = vmatpush1.bf16.msra.mxu0 0
        %4774 = vmatprep.subr.bf16.mxu0 0
        %4775 = vmatpush1.bf16.msra.mxu0 0
        %4776 = vmatprep.subr.bf16.mxu0 0
        %4777 = vmatpush1.bf16.msra.mxu0 0
        %4778 = vmatprep.subr.bf16.mxu0 0
        %4779 = vmatpush1.bf16.msra.mxu0 0
        %4780 = vmatprep.subr.bf16.mxu0 0
        %4781 = vmatpush1.bf16.msra.mxu0 0
        %4782 = vmatprep.subr.bf16.mxu0 0
        %4783 = vmatpush1.bf16.msra.mxu0 %v4764
        %4784 = vmatprep.subr.bf16.mxu0 0
        %4785 = vmatpush1.bf16.msra.mxu0 %v4763
        %4786 = vmatprep.subr.bf16.mxu0 0
        %4787 = vmatpush2.bf16.msra.mxu0 0
        %4788 = vmatprep.subr.bf16.mxu0 0
        %4789 = vmatpush2.bf16.msra.mxu0 0
        %4790 = vmatprep.subr.bf16.mxu0 0
        %4791 = vmatpush2.bf16.msra.mxu0 0
        %4792 = vmatprep.subr.bf16.mxu0 0
        %4793 = vmatpush2.bf16.msra.mxu0 0
        %4794 = vmatprep.subr.bf16.mxu0 0
        %4795 = vmatpush2.bf16.msra.mxu0 0
        %4796 = vmatprep.subr.bf16.mxu0 0
        %4797 = vmatpush2.bf16.msra.mxu0 0
        %4798 = vmatprep.subr.bf16.mxu0 0
        %4799 = vmatpush2.bf16.msra.mxu0 0
        %4800 = vmatprep.subr.bf16.mxu0 0
        %4801 = vmatpush2.bf16.msra.mxu0 0
        %4802 = vmatprep.mubr.bf16.mxu0 0
        %4803 = vmatmul.mubr.bf16.gmra.mxu0 %v4768
        %v4804 = vpop.f32.mrf.mxu0
        %v4805 = vadd.f32 %v4754, %v4804
        %v4806 = vpop.f32.mrf.mxu0
        %v4807 = vpop.f32.mrf.mxu0
        %v4808 = vpop.f32.mrf.mxu0
        %4809 = vdwg.mxu0
        %v4810 = vmax.f32 %v4805, 0.0
        %v4811 = vpack.c.bf16 %v4810, %v4810
        %s4812 = smul.addr %s30, 4
        %s4813 = scalar_lea.vmem %s7, %s4812
        %v4814 = vld [vmem:[%s4813] sm:$0xf]
        %s4815 = scalar_lea.vmem %s8, %s30
        %v4816 = vld [vmem:[%s4815] sm:$0x1]
        %vm4817 = vcmask 64512
        %v4819 = vsel %vm4817, %v4811, 0
        %vm4821 = vcmask 1043456
        %v4823 = vsel %vm4821, %v4814, 0
        %4825 = vmatprep.subr.bf16.mxu0 0
        %4826 = vmatpush1.bf16.msra.mxu0 0
        %4827 = vmatprep.subr.bf16.mxu0 0
        %4828 = vmatpush1.bf16.msra.mxu0 0
        %4829 = vmatprep.subr.bf16.mxu0 0
        %4830 = vmatpush1.bf16.msra.mxu0 0
        %4831 = vmatprep.subr.bf16.mxu0 0
        %4832 = vmatpush1.bf16.msra.mxu0 0
        %4833 = vmatprep.subr.bf16.mxu0 0
        %4834 = vmatpush1.bf16.msra.mxu0 0
        %4835 = vmatprep.subr.bf16.mxu0 0
        %4836 = vmatpush1.bf16.msra.mxu0 0
        %4837 = vmatprep.subr.bf16.mxu0 0
        %4838 = vmatpush1.bf16.msra.mxu0 0
        %4839 = vmatprep.subr.bf16.mxu0 0
        %4840 = vmatpush1.bf16.msra.mxu0 %v4823
        %4841 = vmatprep.subr.bf16.mxu0 0
        %4842 = vmatpush2.bf16.msra.mxu0 0
        %4843 = vmatprep.subr.bf16.mxu0 0
        %4844 = vmatpush2.bf16.msra.mxu0 0
        %4845 = vmatprep.subr.bf16.mxu0 0
        %4846 = vmatpush2.bf16.msra.mxu0 0
        %4847 = vmatprep.subr.bf16.mxu0 0
        %4848 = vmatpush2.bf16.msra.mxu0 0
        %4849 = vmatprep.subr.bf16.mxu0 0
        %4850 = vmatpush2.bf16.msra.mxu0 0
        %4851 = vmatprep.subr.bf16.mxu0 0
        %4852 = vmatpush2.bf16.msra.mxu0 0
        %4853 = vmatprep.subr.bf16.mxu0 0
        %4854 = vmatpush2.bf16.msra.mxu0 0
        %4855 = vmatprep.subr.bf16.mxu0 0
        %4856 = vmatpush2.bf16.msra.mxu0 0
        %4857 = vmatprep.mubr.bf16.mxu0 0
        %4858 = vmatmul.mubr.bf16.gmra.mxu0 %v4819
        %v4859 = vpop.f32.mrf.mxu0
        %v4860 = vadd.f32 %v4816, %v4859
        %v4861 = vpop.f32.mrf.mxu0
        %v4862 = vpop.f32.mrf.mxu0
        %v4863 = vpop.f32.mrf.mxu0
        %4864 = vdwg.mxu0
        %v4865 = vxor.u32 %v4860, 2147483648
        %v4866 = vmul.f32 %v4865, 1.442695
        %v4867 = vpow.pop %v4866
        %v4868 = vadd.f32 %v4867, 1.0
        %v4869 = vrcp.pop %v4868
        %v4870 = vmul.f32 1.0, %v4869
        %v4871 = vlaneseq
        %v4872 = vshrl.u32 %v4871, 7
        %v4873 = vsub.s32 0, %v4872
        %v4874 = vrot.slane %v4870, %v4873
        %v4875 = vmul.f32 %v4548, %v4874
        %v4876 = vmul.f32 %v4551, %v4874
        %v4877 = vmul.f32 %v4556, %v4874
        %v4878 = vmul.f32 %v4559, %v4874
        %v4879 = vmul.f32 %v4564, %v4874
        %v4880 = vmul.f32 %v4567, %v4874
        %v4881 = vmul.f32 %v4572, %v4874
        %v4882 = vmul.f32 %v4575, %v4874
        %v4883 = vmul.f32 %v4580, %v4874
        %v4884 = vmul.f32 %v4583, %v4874
        %v4885 = vmul.f32 %v4588, %v4874
        %v4886 = vmul.f32 %v4591, %v4874
        %v4887 = vmul.f32 %v4596, %v4874
        %v4888 = vmul.f32 %v4599, %v4874
        %v4889 = vmul.f32 %v4604, %v4874
        %v4890 = vmul.f32 %v4607, %v4874
        %v4891 = vmul.f32 %v4612, %v4874
        %v4892 = vmul.f32 %v4615, %v4874
        %v4893 = vmul.f32 %v4620, %v4874
        %v4894 = vmul.f32 %v4623, %v4874
        %v4895 = vmul.f32 %v4628, %v4874
        %v4896 = vmul.f32 %v4631, %v4874
        %v4897 = vmul.f32 %v4636, %v4874
        %v4898 = vmul.f32 %v4639, %v4874
        %v4899 = vmul.f32 %v4644, %v4874
        %v4900 = vmul.f32 %v4647, %v4874
        %v4901 = vmul.f32 %v4652, %v4874
        %v4902 = vmul.f32 %v4655, %v4874
        %v4903 = vmul.f32 %v4660, %v4874
        %v4904 = vmul.f32 %v4663, %v4874
        %v4905 = vmul.f32 %v4668, %v4874
        %v4906 = vmul.f32 %v4671, %v4874
        %v4907 = vld [vmem:[%s1069 + $0x1] sm:$0xff]
        %v4908 = vld [vmem:[%s1069 + $0x9] sm:$0xff]
        %v4909 = vld [vmem:[%s1069 + $0x19] sm:$0xff]
        %v4910 = vld [vmem:[%s1069 + $0x21] sm:$0xff]
        %v4911 = vld [vmem:[%s1069 + $0x31] sm:$0xff]
        %v4912 = vld [vmem:[%s1069 + $0x39] sm:$0xff]
        %v4913 = vld [vmem:[%s1069 + $0x49] sm:$0xff]
        %v4914 = vld [vmem:[%s1069 + $0x51] sm:$0xff]
        %v4915 = vld [vmem:[%s1069 + $0x61] sm:$0xff]
        %v4916 = vld [vmem:[%s1069 + $0x69] sm:$0xff]
        %v4917 = vld [vmem:[%s1069 + $0x79] sm:$0xff]
        %v4918 = vld [vmem:[%s1069 + $0x81] sm:$0xff]
        %v4919 = vld [vmem:[%s1069 + $0x91] sm:$0xff]
        %v4920 = vld [vmem:[%s1069 + $0x99] sm:$0xff]
        %v4921 = vld [vmem:[%s1069 + $0xa9] sm:$0xff]
        %v4922 = vld [vmem:[%s1069 + $0xb1] sm:$0xff]
        %v4923 = vld [vmem:[%s1069 + $0xc1] sm:$0xff]
        %v4924 = vld [vmem:[%s1069 + $0xc9] sm:$0xff]
        %v4925 = vld [vmem:[%s1069 + $0xd9] sm:$0xff]
        %v4926 = vld [vmem:[%s1069 + $0xe1] sm:$0xff]
        %v4927 = vld [vmem:[%s1069 + $0xf1] sm:$0xff]
        %v4928 = vld [vmem:[%s1069 + $0xf9] sm:$0xff]
        %v4929 = vld [vmem:[%s1069 + $0x109] sm:$0xff]
        %v4930 = vld [vmem:[%s1069 + $0x111] sm:$0xff]
        %v4931 = vld [vmem:[%s1069 + $0x121] sm:$0xff]
        %v4932 = vld [vmem:[%s1069 + $0x129] sm:$0xff]
        %v4933 = vld [vmem:[%s1069 + $0x139] sm:$0xff]
        %v4934 = vld [vmem:[%s1069 + $0x141] sm:$0xff]
        %v4935 = vld [vmem:[%s1069 + $0x151] sm:$0xff]
        %v4936 = vld [vmem:[%s1069 + $0x159] sm:$0xff]
        %v4937 = vld [vmem:[%s1069 + $0x169] sm:$0xff]
        %v4938 = vld [vmem:[%s1069 + $0x171] sm:$0xff]
        %v4939 = vadd.f32 %v4875, %v4907
        %v4940 = vadd.f32 %v4876, %v4908
        %v4941 = vadd.f32 %v4877, %v4909
        %v4942 = vadd.f32 %v4878, %v4910
        %v4943 = vadd.f32 %v4879, %v4911
        %v4944 = vadd.f32 %v4880, %v4912
        %v4945 = vadd.f32 %v4881, %v4913
        %v4946 = vadd.f32 %v4882, %v4914
        %v4947 = vadd.f32 %v4883, %v4915
        %v4948 = vadd.f32 %v4884, %v4916
        %v4949 = vadd.f32 %v4885, %v4917
        %v4950 = vadd.f32 %v4886, %v4918
        %v4951 = vadd.f32 %v4887, %v4919
        %v4952 = vadd.f32 %v4888, %v4920
        %v4953 = vadd.f32 %v4889, %v4921
        %v4954 = vadd.f32 %v4890, %v4922
        %v4955 = vadd.f32 %v4891, %v4923
        %v4956 = vadd.f32 %v4892, %v4924
        %v4957 = vadd.f32 %v4893, %v4925
        %v4958 = vadd.f32 %v4894, %v4926
        %v4959 = vadd.f32 %v4895, %v4927
        %v4960 = vadd.f32 %v4896, %v4928
        %v4961 = vadd.f32 %v4897, %v4929
        %v4962 = vadd.f32 %v4898, %v4930
        %v4963 = vadd.f32 %v4899, %v4931
        %v4964 = vadd.f32 %v4900, %v4932
        %v4965 = vadd.f32 %v4901, %v4933
        %v4966 = vadd.f32 %v4902, %v4934
        %v4967 = vadd.f32 %v4903, %v4935
        %v4968 = vadd.f32 %v4904, %v4936
        %v4969 = vadd.f32 %v4905, %v4937
        %v4970 = vadd.f32 %v4906, %v4938
        %4971 = vst.msk [vmem:[%s1069 + $0x1] sm:$0xff] %vm650, %v4939
        %4972 = vst.msk [vmem:[%s1069 + $0x9] sm:$0xff] %vm650, %v4940
        %4973 = vst.msk [vmem:[%s1069 + $0x19] sm:$0xff] %vm650, %v4941
        %4974 = vst.msk [vmem:[%s1069 + $0x21] sm:$0xff] %vm650, %v4942
        %4975 = vst.msk [vmem:[%s1069 + $0x31] sm:$0xff] %vm650, %v4943
        %4976 = vst.msk [vmem:[%s1069 + $0x39] sm:$0xff] %vm650, %v4944
        %4977 = vst.msk [vmem:[%s1069 + $0x49] sm:$0xff] %vm650, %v4945
        %4978 = vst.msk [vmem:[%s1069 + $0x51] sm:$0xff] %vm650, %v4946
        %4979 = vst.msk [vmem:[%s1069 + $0x61] sm:$0xff] %vm650, %v4947
        %4980 = vst.msk [vmem:[%s1069 + $0x69] sm:$0xff] %vm650, %v4948
        %4981 = vst.msk [vmem:[%s1069 + $0x79] sm:$0xff] %vm650, %v4949
        %4982 = vst.msk [vmem:[%s1069 + $0x81] sm:$0xff] %vm650, %v4950
        %4983 = vst.msk [vmem:[%s1069 + $0x91] sm:$0xff] %vm650, %v4951
        %4984 = vst.msk [vmem:[%s1069 + $0x99] sm:$0xff] %vm650, %v4952
        %4985 = vst.msk [vmem:[%s1069 + $0xa9] sm:$0xff] %vm650, %v4953
        %4986 = vst.msk [vmem:[%s1069 + $0xb1] sm:$0xff] %vm650, %v4954
        %4987 = vst.msk [vmem:[%s1069 + $0xc1] sm:$0xff] %vm650, %v4955
        %4988 = vst.msk [vmem:[%s1069 + $0xc9] sm:$0xff] %vm650, %v4956
        %4989 = vst.msk [vmem:[%s1069 + $0xd9] sm:$0xff] %vm650, %v4957
        %4990 = vst.msk [vmem:[%s1069 + $0xe1] sm:$0xff] %vm650, %v4958
        %4991 = vst.msk [vmem:[%s1069 + $0xf1] sm:$0xff] %vm650, %v4959
        %4992 = vst.msk [vmem:[%s1069 + $0xf9] sm:$0xff] %vm650, %v4960
        %4993 = vst.msk [vmem:[%s1069 + $0x109] sm:$0xff] %vm650, %v4961
        %4994 = vst.msk [vmem:[%s1069 + $0x111] sm:$0xff] %vm650, %v4962
        %4995 = vst.msk [vmem:[%s1069 + $0x121] sm:$0xff] %vm650, %v4963
        %4996 = vst.msk [vmem:[%s1069 + $0x129] sm:$0xff] %vm650, %v4964
        %4997 = vst.msk [vmem:[%s1069 + $0x139] sm:$0xff] %vm650, %v4965
        %4998 = vst.msk [vmem:[%s1069 + $0x141] sm:$0xff] %vm650, %v4966
        %4999 = vst.msk [vmem:[%s1069 + $0x151] sm:$0xff] %vm650, %v4967
        %5000 = vst.msk [vmem:[%s1069 + $0x159] sm:$0xff] %vm650, %v4968
        %5001 = vst.msk [vmem:[%s1069 + $0x169] sm:$0xff] %vm650, %v4969
        %5002 = vst.msk [vmem:[%s1069 + $0x171] sm:$0xff] %vm650, %v4970
        %p5003 = scmp.eq.s32.totalorder %s30, 3
        // Predicated region
        $region69: #{fused_residual_group.1} parent=63 // pred_check
          %p5004 = pneg %p5003
        $region70: #{fused_residual_group.1} parent=63 // pred_check_branch
          %5006 = sbr.rel (%p5004) target = $region72
        $region71: #{fused_residual_group.1} parent=63 // pred_region
          %v5007 = vld [vmem:[%s9] sm:$0xf]
          %v5008 = vld [vmem:[%s9 + $0x4] sm:$0xf]
          %v5009 = vld [vmem:[%s9 + $0x8] sm:$0xf]
          %v5010 = vld [vmem:[%s9 + $0xc] sm:$0xf]
          %v5011 = vld [vmem:[%s9 + $0x10] sm:$0xf]
          %v5012 = vld [vmem:[%s9 + $0x14] sm:$0xf]
          %v5013 = vld [vmem:[%s9 + $0x18] sm:$0xf]
          %v5014 = vld [vmem:[%s9 + $0x1c] sm:$0xf]
          %v5015 = vld [vmem:[%s9 + $0x20] sm:$0xf]
          %v5016 = vld [vmem:[%s9 + $0x24] sm:$0xf]
          %v5017 = vld [vmem:[%s9 + $0x28] sm:$0xf]
          %v5018 = vld [vmem:[%s9 + $0x2c] sm:$0xf]
          %v5019 = vld [vmem:[%s9 + $0x30] sm:$0xf]
          %v5020 = vld [vmem:[%s9 + $0x34] sm:$0xf]
          %v5021 = vld [vmem:[%s9 + $0x38] sm:$0xf]
          %v5022 = vld [vmem:[%s9 + $0x3c] sm:$0xf]
          %v5023 = vld [vmem:[%s9 + $0x40] sm:$0xf]
          %v5024 = vld [vmem:[%s9 + $0x44] sm:$0xf]
          %v5025 = vld [vmem:[%s9 + $0x48] sm:$0xf]
          %v5026 = vld [vmem:[%s9 + $0x4c] sm:$0xf]
          %v5027 = vld [vmem:[%s9 + $0x50] sm:$0xf]
          %v5028 = vld [vmem:[%s9 + $0x54] sm:$0xf]
          %v5029 = vld [vmem:[%s9 + $0x58] sm:$0xf]
          %v5030 = vld [vmem:[%s9 + $0x5c] sm:$0xf]
          %v5031 = vld [vmem:[%s9 + $0x60] sm:$0xf]
          %v5032 = vld [vmem:[%s9 + $0x64] sm:$0xf]
          %v5033 = vld [vmem:[%s9 + $0x68] sm:$0xf]
          %v5034 = vld [vmem:[%s9 + $0x6c] sm:$0xf]
          %v5035 = vld [vmem:[%s9 + $0x70] sm:$0xf]
          %v5036 = vld [vmem:[%s9 + $0x74] sm:$0xf]
          %v5037 = vld [vmem:[%s9 + $0x78] sm:$0xf]
          %v5038 = vld [vmem:[%s9 + $0x7c] sm:$0xf]
          %v5039 = vld [vmem:[%s9 + $0x80] sm:$0xf]
          %v5040 = vld [vmem:[%s9 + $0x84] sm:$0xf]
          %v5041 = vld [vmem:[%s9 + $0x88] sm:$0xf]
          %v5042 = vld [vmem:[%s9 + $0x8c] sm:$0xf]
          %v5043 = vld [vmem:[%s10] sm:$0x1]
          %v5044 = vld [vmem:[#allocation2] sm:$0xff]
          %v5045 = vld [vmem:[#allocation2 + $0x8] sm:$0xff]
          %v5046 = vld [vmem:[#allocation2 + $0x18] sm:$0xff]
          %v5047 = vld [vmem:[#allocation2 + $0x20] sm:$0xff]
          %v5048 = vld [vmem:[#allocation2 + $0x30] sm:$0xff]
          %v5049 = vld [vmem:[#allocation2 + $0x38] sm:$0xff]
          %v5050 = vld [vmem:[#allocation2 + $0x48] sm:$0xff]
          %v5051 = vld [vmem:[#allocation2 + $0x50] sm:$0xff]
          %v5052 = vld [vmem:[#allocation2 + $0x60] sm:$0xff]
          %v5053 = vld [vmem:[#allocation2 + $0x68] sm:$0xff]
          %v5054 = vld [vmem:[#allocation2 + $0x78] sm:$0xff]
          %v5055 = vld [vmem:[#allocation2 + $0x80] sm:$0xff]
          %v5056 = vld [vmem:[#allocation2 + $0x90] sm:$0xff]
          %v5057 = vld [vmem:[#allocation2 + $0x98] sm:$0xff]
          %v5058 = vld [vmem:[#allocation2 + $0xa8] sm:$0xff]
          %v5059 = vld [vmem:[#allocation2 + $0xb0] sm:$0xff]
          %v5060 = vld [vmem:[#allocation2 + $0xc0] sm:$0xff]
          %v5061 = vld [vmem:[#allocation2 + $0xc8] sm:$0xff]
          %v5062 = vld [vmem:[#allocation2 + $0xd8] sm:$0xff]
          %v5063 = vld [vmem:[#allocation2 + $0xe0] sm:$0xff]
          %v5064 = vld [vmem:[#allocation2 + $0xf0] sm:$0xff]
          %v5065 = vld [vmem:[#allocation2 + $0xf8] sm:$0xff]
          %v5066 = vld [vmem:[#allocation2 + $0x108] sm:$0xff]
          %v5067 = vld [vmem:[#allocation2 + $0x110] sm:$0xff]
          %v5068 = vld [vmem:[#allocation2 + $0x120] sm:$0xff]
          %v5069 = vld [vmem:[#allocation2 + $0x128] sm:$0xff]
          %v5070 = vld [vmem:[#allocation2 + $0x138] sm:$0xff]
          %v5071 = vld [vmem:[#allocation2 + $0x140] sm:$0xff]
          %v5072 = vld [vmem:[#allocation2 + $0x150] sm:$0xff]
          %v5073 = vld [vmem:[#allocation2 + $0x158] sm:$0xff]
          %v5074 = vld [vmem:[#allocation2 + $0x168] sm:$0xff]
          %v5075 = vld [vmem:[#allocation2 + $0x170] sm:$0xff]
          %5076 = vst.msk [vmem:[#allocation4] sm:$0xff] %vm650, %v5044
          %5077 = vst.msk [vmem:[#allocation4 + $0x18] sm:$0xff] %vm650, %v5045
          %5078 = vst.msk [vmem:[#allocation4 + $0x30] sm:$0xff] %vm650, %v5046
          %5079 = vst.msk [vmem:[#allocation4 + $0x48] sm:$0xff] %vm650, %v5047
          %5080 = vst.msk [vmem:[#allocation4 + $0x60] sm:$0xff] %vm650, %v5048
          %5081 = vst.msk [vmem:[#allocation4 + $0x78] sm:$0xff] %vm650, %v5049
          %5082 = vst.msk [vmem:[#allocation4 + $0x90] sm:$0xff] %vm650, %v5050
          %5083 = vst.msk [vmem:[#allocation4 + $0xa8] sm:$0xff] %vm650, %v5051
          %5084 = vst.msk [vmem:[#allocation4 + $0xc0] sm:$0xff] %vm650, %v5052
          %5085 = vst.msk [vmem:[#allocation4 + $0xd8] sm:$0xff] %vm650, %v5053
          %5086 = vst.msk [vmem:[#allocation4 + $0xf0] sm:$0xff] %vm650, %v5054
          %5087 = vst.msk [vmem:[#allocation4 + $0x108] sm:$0xff] %vm650, %v5055
          %5088 = vst.msk [vmem:[#allocation4 + $0x120] sm:$0xff] %vm650, %v5056
          %5089 = vst.msk [vmem:[#allocation4 + $0x138] sm:$0xff] %vm650, %v5057
          %5090 = vst.msk [vmem:[#allocation4 + $0x150] sm:$0xff] %vm650, %v5058
          %5091 = vst.msk [vmem:[#allocation4 + $0x168] sm:$0xff] %vm650, %v5059
          %5092 = vst.msk [vmem:[#allocation4 + $0x180] sm:$0xff] %vm650, %v5060
          %5093 = vst.msk [vmem:[#allocation4 + $0x198] sm:$0xff] %vm650, %v5061
          %5094 = vst.msk [vmem:[#allocation4 + $0x1b0] sm:$0xff] %vm650, %v5062
          %5095 = vst.msk [vmem:[#allocation4 + $0x1c8] sm:$0xff] %vm650, %v5063
          %5096 = vst.msk [vmem:[#allocation4 + $0x1e0] sm:$0xff] %vm650, %v5064
          %5097 = vst.msk [vmem:[#allocation4 + $0x1f8] sm:$0xff] %vm650, %v5065
          %5098 = vst.msk [vmem:[#allocation4 + $0x210] sm:$0xff] %vm650, %v5066
          %5099 = vst.msk [vmem:[#allocation4 + $0x228] sm:$0xff] %vm650, %v5067
          %5100 = vst.msk [vmem:[#allocation4 + $0x240] sm:$0xff] %vm650, %v5068
          %5101 = vst.msk [vmem:[#allocation4 + $0x258] sm:$0xff] %vm650, %v5069
          %5102 = vst.msk [vmem:[#allocation4 + $0x270] sm:$0xff] %vm650, %v5070
          %5103 = vst.msk [vmem:[#allocation4 + $0x288] sm:$0xff] %vm650, %v5071
          %5104 = vst.msk [vmem:[#allocation4 + $0x2a0] sm:$0xff] %vm650, %v5072
          %5105 = vst.msk [vmem:[#allocation4 + $0x2b8] sm:$0xff] %vm650, %v5073
          %5106 = vst.msk [vmem:[#allocation4 + $0x2d0] sm:$0xff] %vm650, %v5074
          %5107 = vst.msk [vmem:[#allocation4 + $0x2e8] sm:$0xff] %vm650, %v5075
          %v5108 = vld [vmem:[#allocation2 + $0x1] sm:$0xff]
          %v5109 = vld [vmem:[#allocation2 + $0x9] sm:$0xff]
          %v5110 = vld [vmem:[#allocation2 + $0x19] sm:$0xff]
          %v5111 = vld [vmem:[#allocation2 + $0x21] sm:$0xff]
          %v5112 = vld [vmem:[#allocation2 + $0x31] sm:$0xff]
          %v5113 = vld [vmem:[#allocation2 + $0x39] sm:$0xff]
          %v5114 = vld [vmem:[#allocation2 + $0x49] sm:$0xff]
          %v5115 = vld [vmem:[#allocation2 + $0x51] sm:$0xff]
          %v5116 = vld [vmem:[#allocation2 + $0x61] sm:$0xff]
          %v5117 = vld [vmem:[#allocation2 + $0x69] sm:$0xff]
          %v5118 = vld [vmem:[#allocation2 + $0x79] sm:$0xff]
          %v5119 = vld [vmem:[#allocation2 + $0x81] sm:$0xff]
          %v5120 = vld [vmem:[#allocation2 + $0x91] sm:$0xff]
          %v5121 = vld [vmem:[#allocation2 + $0x99] sm:$0xff]
          %v5122 = vld [vmem:[#allocation2 + $0xa9] sm:$0xff]
          %v5123 = vld [vmem:[#allocation2 + $0xb1] sm:$0xff]
          %v5124 = vld [vmem:[#allocation2 + $0xc1] sm:$0xff]
          %v5125 = vld [vmem:[#allocation2 + $0xc9] sm:$0xff]
          %v5126 = vld [vmem:[#allocation2 + $0xd9] sm:$0xff]
          %v5127 = vld [vmem:[#allocation2 + $0xe1] sm:$0xff]
          %v5128 = vld [vmem:[#allocation2 + $0xf1] sm:$0xff]
          %v5129 = vld [vmem:[#allocation2 + $0xf9] sm:$0xff]
          %v5130 = vld [vmem:[#allocation2 + $0x109] sm:$0xff]
          %v5131 = vld [vmem:[#allocation2 + $0x111] sm:$0xff]
          %v5132 = vld [vmem:[#allocation2 + $0x121] sm:$0xff]
          %v5133 = vld [vmem:[#allocation2 + $0x129] sm:$0xff]
          %v5134 = vld [vmem:[#allocation2 + $0x139] sm:$0xff]
          %v5135 = vld [vmem:[#allocation2 + $0x141] sm:$0xff]
          %v5136 = vld [vmem:[#allocation2 + $0x151] sm:$0xff]
          %v5137 = vld [vmem:[#allocation2 + $0x159] sm:$0xff]
          %v5138 = vld [vmem:[#allocation2 + $0x169] sm:$0xff]
          %v5139 = vld [vmem:[#allocation2 + $0x171] sm:$0xff]
          %5172 = vrot.lane.b32.xlu0 %v5108, 32
          %v5173 = vpop.permute.xlu0 %5172
          %5174 = vrot.lane.b32.xlu0 %v5109, 32
          %v5175 = vpop.permute.xlu0 %5174
          %5176 = vrot.lane.b32.xlu0 %v5110, 32
          %v5177 = vpop.permute.xlu0 %5176
          %5178 = vrot.lane.b32.xlu0 %v5111, 32
          %v5179 = vpop.permute.xlu0 %5178
          %5180 = vrot.lane.b32.xlu0 %v5112, 32
          %v5181 = vpop.permute.xlu0 %5180
          %5182 = vrot.lane.b32.xlu0 %v5113, 32
          %v5183 = vpop.permute.xlu0 %5182
          %5184 = vrot.lane.b32.xlu0 %v5114, 32
          %v5185 = vpop.permute.xlu0 %5184
          %5186 = vrot.lane.b32.xlu0 %v5115, 32
          %v5187 = vpop.permute.xlu0 %5186
          %5188 = vrot.lane.b32.xlu0 %v5116, 32
          %v5189 = vpop.permute.xlu0 %5188
          %5190 = vrot.lane.b32.xlu0 %v5117, 32
          %v5191 = vpop.permute.xlu0 %5190
          %5192 = vrot.lane.b32.xlu0 %v5118, 32
          %v5193 = vpop.permute.xlu0 %5192
          %5194 = vrot.lane.b32.xlu0 %v5119, 32
          %v5195 = vpop.permute.xlu0 %5194
          %5196 = vrot.lane.b32.xlu0 %v5120, 32
          %v5197 = vpop.permute.xlu0 %5196
          %5198 = vrot.lane.b32.xlu0 %v5121, 32
          %v5199 = vpop.permute.xlu0 %5198
          %5200 = vrot.lane.b32.xlu0 %v5122, 32
          %v5201 = vpop.permute.xlu0 %5200
          %5202 = vrot.lane.b32.xlu0 %v5123, 32
          %v5203 = vpop.permute.xlu0 %5202
          %5204 = vrot.lane.b32.xlu0 %v5124, 32
          %v5205 = vpop.permute.xlu0 %5204
          %5206 = vrot.lane.b32.xlu0 %v5125, 32
          %v5207 = vpop.permute.xlu0 %5206
          %5208 = vrot.lane.b32.xlu0 %v5126, 32
          %v5209 = vpop.permute.xlu0 %5208
          %5210 = vrot.lane.b32.xlu0 %v5127, 32
          %v5211 = vpop.permute.xlu0 %5210
          %5212 = vrot.lane.b32.xlu0 %v5128, 32
          %v5213 = vpop.permute.xlu0 %5212
          %5214 = vrot.lane.b32.xlu0 %v5129, 32
          %v5215 = vpop.permute.xlu0 %5214
          %5216 = vrot.lane.b32.xlu0 %v5130, 32
          %v5217 = vpop.permute.xlu0 %5216
          %5218 = vrot.lane.b32.xlu0 %v5131, 32
          %v5219 = vpop.permute.xlu0 %5218
          %5220 = vrot.lane.b32.xlu0 %v5132, 32
          %v5221 = vpop.permute.xlu0 %5220
          %5222 = vrot.lane.b32.xlu0 %v5133, 32
          %v5223 = vpop.permute.xlu0 %5222
          %5224 = vrot.lane.b32.xlu0 %v5134, 32
          %v5225 = vpop.permute.xlu0 %5224
          %5226 = vrot.lane.b32.xlu0 %v5135, 32
          %v5227 = vpop.permute.xlu0 %5226
          %5228 = vrot.lane.b32.xlu0 %v5136, 32
          %v5229 = vpop.permute.xlu0 %5228
          %5230 = vrot.lane.b32.xlu0 %v5137, 32
          %v5231 = vpop.permute.xlu0 %5230
          %5232 = vrot.lane.b32.xlu0 %v5138, 32
          %v5233 = vpop.permute.xlu0 %5232
          %5234 = vrot.lane.b32.xlu0 %v5139, 32
          %v5235 = vpop.permute.xlu0 %5234
          %5268 = vst.msk [vmem:[#allocation4] sm:$0xff] %vm843, %v5173
          %5269 = vst.msk [vmem:[#allocation4 + $0x18] sm:$0xff] %vm843, %v5175
          %5270 = vst.msk [vmem:[#allocation4 + $0x30] sm:$0xff] %vm843, %v5177
          %5271 = vst.msk [vmem:[#allocation4 + $0x48] sm:$0xff] %vm843, %v5179
          %5272 = vst.msk [vmem:[#allocation4 + $0x60] sm:$0xff] %vm843, %v5181
          %5273 = vst.msk [vmem:[#allocation4 + $0x78] sm:$0xff] %vm843, %v5183
          %5274 = vst.msk [vmem:[#allocation4 + $0x90] sm:$0xff] %vm843, %v5185
          %5275 = vst.msk [vmem:[#allocation4 + $0xa8] sm:$0xff] %vm843, %v5187
          %5276 = vst.msk [vmem:[#allocation4 + $0xc0] sm:$0xff] %vm843, %v5189
          %5277 = vst.msk [vmem:[#allocation4 + $0xd8] sm:$0xff] %vm843, %v5191
          %5278 = vst.msk [vmem:[#allocation4 + $0xf0] sm:$0xff] %vm843, %v5193
          %5279 = vst.msk [vmem:[#allocation4 + $0x108] sm:$0xff] %vm843, %v5195
          %5280 = vst.msk [vmem:[#allocation4 + $0x120] sm:$0xff] %vm843, %v5197
          %5281 = vst.msk [vmem:[#allocation4 + $0x138] sm:$0xff] %vm843, %v5199
          %5282 = vst.msk [vmem:[#allocation4 + $0x150] sm:$0xff] %vm843, %v5201
          %5283 = vst.msk [vmem:[#allocation4 + $0x168] sm:$0xff] %vm843, %v5203
          %5284 = vst.msk [vmem:[#allocation4 + $0x180] sm:$0xff] %vm843, %v5205
          %5285 = vst.msk [vmem:[#allocation4 + $0x198] sm:$0xff] %vm843, %v5207
          %5286 = vst.msk [vmem:[#allocation4 + $0x1b0] sm:$0xff] %vm843, %v5209
          %5287 = vst.msk [vmem:[#allocation4 + $0x1c8] sm:$0xff] %vm843, %v5211
          %5288 = vst.msk [vmem:[#allocation4 + $0x1e0] sm:$0xff] %vm843, %v5213
          %5289 = vst.msk [vmem:[#allocation4 + $0x1f8] sm:$0xff] %vm843, %v5215
          %5290 = vst.msk [vmem:[#allocation4 + $0x210] sm:$0xff] %vm843, %v5217
          %5291 = vst.msk [vmem:[#allocation4 + $0x228] sm:$0xff] %vm843, %v5219
          %5292 = vst.msk [vmem:[#allocation4 + $0x240] sm:$0xff] %vm843, %v5221
          %5293 = vst.msk [vmem:[#allocation4 + $0x258] sm:$0xff] %vm843, %v5223
          %5294 = vst.msk [vmem:[#allocation4 + $0x270] sm:$0xff] %vm843, %v5225
          %5295 = vst.msk [vmem:[#allocation4 + $0x288] sm:$0xff] %vm843, %v5227
          %5296 = vst.msk [vmem:[#allocation4 + $0x2a0] sm:$0xff] %vm843, %v5229
          %5297 = vst.msk [vmem:[#allocation4 + $0x2b8] sm:$0xff] %vm843, %v5231
          %5298 = vst.msk [vmem:[#allocation4 + $0x2d0] sm:$0xff] %vm843, %v5233
          %5299 = vst.msk [vmem:[#allocation4 + $0x2e8] sm:$0xff] %vm843, %v5235
          %v5300 = vld [vmem:[#allocation2 + $0x2] sm:$0xff]
          %v5301 = vld [vmem:[#allocation2 + $0xa] sm:$0xff]
          %v5302 = vld [vmem:[#allocation2 + $0x1a] sm:$0xff]
          %v5303 = vld [vmem:[#allocation2 + $0x22] sm:$0xff]
          %v5304 = vld [vmem:[#allocation2 + $0x32] sm:$0xff]
          %v5305 = vld [vmem:[#allocation2 + $0x3a] sm:$0xff]
          %v5306 = vld [vmem:[#allocation2 + $0x4a] sm:$0xff]
          %v5307 = vld [vmem:[#allocation2 + $0x52] sm:$0xff]
          %v5308 = vld [vmem:[#allocation2 + $0x62] sm:$0xff]
          %v5309 = vld [vmem:[#allocation2 + $0x6a] sm:$0xff]
          %v5310 = vld [vmem:[#allocation2 + $0x7a] sm:$0xff]
          %v5311 = vld [vmem:[#allocation2 + $0x82] sm:$0xff]
          %v5312 = vld [vmem:[#allocation2 + $0x92] sm:$0xff]
          %v5313 = vld [vmem:[#allocation2 + $0x9a] sm:$0xff]
          %v5314 = vld [vmem:[#allocation2 + $0xaa] sm:$0xff]
          %v5315 = vld [vmem:[#allocation2 + $0xb2] sm:$0xff]
          %v5316 = vld [vmem:[#allocation2 + $0xc2] sm:$0xff]
          %v5317 = vld [vmem:[#allocation2 + $0xca] sm:$0xff]
          %v5318 = vld [vmem:[#allocation2 + $0xda] sm:$0xff]
          %v5319 = vld [vmem:[#allocation2 + $0xe2] sm:$0xff]
          %v5320 = vld [vmem:[#allocation2 + $0xf2] sm:$0xff]
          %v5321 = vld [vmem:[#allocation2 + $0xfa] sm:$0xff]
          %v5322 = vld [vmem:[#allocation2 + $0x10a] sm:$0xff]
          %v5323 = vld [vmem:[#allocation2 + $0x112] sm:$0xff]
          %v5324 = vld [vmem:[#allocation2 + $0x122] sm:$0xff]
          %v5325 = vld [vmem:[#allocation2 + $0x12a] sm:$0xff]
          %v5326 = vld [vmem:[#allocation2 + $0x13a] sm:$0xff]
          %v5327 = vld [vmem:[#allocation2 + $0x142] sm:$0xff]
          %v5328 = vld [vmem:[#allocation2 + $0x152] sm:$0xff]
          %v5329 = vld [vmem:[#allocation2 + $0x15a] sm:$0xff]
          %v5330 = vld [vmem:[#allocation2 + $0x16a] sm:$0xff]
          %v5331 = vld [vmem:[#allocation2 + $0x172] sm:$0xff]
          %5364 = vrot.lane.b32.xlu0 %v5300, 64
          %v5365 = vpop.permute.xlu0 %5364
          %5366 = vrot.lane.b32.xlu0 %v5301, 64
          %v5367 = vpop.permute.xlu0 %5366
          %5368 = vrot.lane.b32.xlu0 %v5302, 64
          %v5369 = vpop.permute.xlu0 %5368
          %5370 = vrot.lane.b32.xlu0 %v5303, 64
          %v5371 = vpop.permute.xlu0 %5370
          %5372 = vrot.lane.b32.xlu0 %v5304, 64
          %v5373 = vpop.permute.xlu0 %5372
          %5374 = vrot.lane.b32.xlu0 %v5305, 64
          %v5375 = vpop.permute.xlu0 %5374
          %5376 = vrot.lane.b32.xlu0 %v5306, 64
          %v5377 = vpop.permute.xlu0 %5376
          %5378 = vrot.lane.b32.xlu0 %v5307, 64
          %v5379 = vpop.permute.xlu0 %5378
          %5380 = vrot.lane.b32.xlu0 %v5308, 64
          %v5381 = vpop.permute.xlu0 %5380
          %5382 = vrot.lane.b32.xlu0 %v5309, 64
          %v5383 = vpop.permute.xlu0 %5382
          %5384 = vrot.lane.b32.xlu0 %v5310, 64
          %v5385 = vpop.permute.xlu0 %5384
          %5386 = vrot.lane.b32.xlu0 %v5311, 64
          %v5387 = vpop.permute.xlu0 %5386
          %5388 = vrot.lane.b32.xlu0 %v5312, 64
          %v5389 = vpop.permute.xlu0 %5388
          %5390 = vrot.lane.b32.xlu0 %v5313, 64
          %v5391 = vpop.permute.xlu0 %5390
          %5392 = vrot.lane.b32.xlu0 %v5314, 64
          %v5393 = vpop.permute.xlu0 %5392
          %5394 = vrot.lane.b32.xlu0 %v5315, 64
          %v5395 = vpop.permute.xlu0 %5394
          %5396 = vrot.lane.b32.xlu0 %v5316, 64
          %v5397 = vpop.permute.xlu0 %5396
          %5398 = vrot.lane.b32.xlu0 %v5317, 64
          %v5399 = vpop.permute.xlu0 %5398
          %5400 = vrot.lane.b32.xlu0 %v5318, 64
          %v5401 = vpop.permute.xlu0 %5400
          %5402 = vrot.lane.b32.xlu0 %v5319, 64
          %v5403 = vpop.permute.xlu0 %5402
          %5404 = vrot.lane.b32.xlu0 %v5320, 64
          %v5405 = vpop.permute.xlu0 %5404
          %5406 = vrot.lane.b32.xlu0 %v5321, 64
          %v5407 = vpop.permute.xlu0 %5406
          %5408 = vrot.lane.b32.xlu0 %v5322, 64
          %v5409 = vpop.permute.xlu0 %5408
          %5410 = vrot.lane.b32.xlu0 %v5323, 64
          %v5411 = vpop.permute.xlu0 %5410
          %5412 = vrot.lane.b32.xlu0 %v5324, 64
          %v5413 = vpop.permute.xlu0 %5412
          %5414 = vrot.lane.b32.xlu0 %v5325, 64
          %v5415 = vpop.permute.xlu0 %5414
          %5416 = vrot.lane.b32.xlu0 %v5326, 64
          %v5417 = vpop.permute.xlu0 %5416
          %5418 = vrot.lane.b32.xlu0 %v5327, 64
          %v5419 = vpop.permute.xlu0 %5418
          %5420 = vrot.lane.b32.xlu0 %v5328, 64
          %v5421 = vpop.permute.xlu0 %5420
          %5422 = vrot.lane.b32.xlu0 %v5329, 64
          %v5423 = vpop.permute.xlu0 %5422
          %5424 = vrot.lane.b32.xlu0 %v5330, 64
          %v5425 = vpop.permute.xlu0 %5424
          %5426 = vrot.lane.b32.xlu0 %v5331, 64
          %v5427 = vpop.permute.xlu0 %5426
          %5460 = vst.msk [vmem:[#allocation4] sm:$0xff] %vm1036, %v5365
          %5461 = vst.msk [vmem:[#allocation4 + $0x18] sm:$0xff] %vm1036, %v5367
          %5462 = vst.msk [vmem:[#allocation4 + $0x30] sm:$0xff] %vm1036, %v5369
          %5463 = vst.msk [vmem:[#allocation4 + $0x48] sm:$0xff] %vm1036, %v5371
          %5464 = vst.msk [vmem:[#allocation4 + $0x60] sm:$0xff] %vm1036, %v5373
          %5465 = vst.msk [vmem:[#allocation4 + $0x78] sm:$0xff] %vm1036, %v5375
          %5466 = vst.msk [vmem:[#allocation4 + $0x90] sm:$0xff] %vm1036, %v5377
          %5467 = vst.msk [vmem:[#allocation4 + $0xa8] sm:$0xff] %vm1036, %v5379
          %5468 = vst.msk [vmem:[#allocation4 + $0xc0] sm:$0xff] %vm1036, %v5381
          %5469 = vst.msk [vmem:[#allocation4 + $0xd8] sm:$0xff] %vm1036, %v5383
          %5470 = vst.msk [vmem:[#allocation4 + $0xf0] sm:$0xff] %vm1036, %v5385
          %5471 = vst.msk [vmem:[#allocation4 + $0x108] sm:$0xff] %vm1036, %v5387
          %5472 = vst.msk [vmem:[#allocation4 + $0x120] sm:$0xff] %vm1036, %v5389
          %5473 = vst.msk [vmem:[#allocation4 + $0x138] sm:$0xff] %vm1036, %v5391
          %5474 = vst.msk [vmem:[#allocation4 + $0x150] sm:$0xff] %vm1036, %v5393
          %5475 = vst.msk [vmem:[#allocation4 + $0x168] sm:$0xff] %vm1036, %v5395
          %5476 = vst.msk [vmem:[#allocation4 + $0x180] sm:$0xff] %vm1036, %v5397
          %5477 = vst.msk [vmem:[#allocation4 + $0x198] sm:$0xff] %vm1036, %v5399
          %5478 = vst.msk [vmem:[#allocation4 + $0x1b0] sm:$0xff] %vm1036, %v5401
          %5479 = vst.msk [vmem:[#allocation4 + $0x1c8] sm:$0xff] %vm1036, %v5403
          %5480 = vst.msk [vmem:[#allocation4 + $0x1e0] sm:$0xff] %vm1036, %v5405
          %5481 = vst.msk [vmem:[#allocation4 + $0x1f8] sm:$0xff] %vm1036, %v5407
          %5482 = vst.msk [vmem:[#allocation4 + $0x210] sm:$0xff] %vm1036, %v5409
          %5483 = vst.msk [vmem:[#allocation4 + $0x228] sm:$0xff] %vm1036, %v5411
          %5484 = vst.msk [vmem:[#allocation4 + $0x240] sm:$0xff] %vm1036, %v5413
          %5485 = vst.msk [vmem:[#allocation4 + $0x258] sm:$0xff] %vm1036, %v5415
          %5486 = vst.msk [vmem:[#allocation4 + $0x270] sm:$0xff] %vm1036, %v5417
          %5487 = vst.msk [vmem:[#allocation4 + $0x288] sm:$0xff] %vm1036, %v5419
          %5488 = vst.msk [vmem:[#allocation4 + $0x2a0] sm:$0xff] %vm1036, %v5421
          %5489 = vst.msk [vmem:[#allocation4 + $0x2b8] sm:$0xff] %vm1036, %v5423
          %5490 = vst.msk [vmem:[#allocation4 + $0x2d0] sm:$0xff] %vm1036, %v5425
          %5491 = vst.msk [vmem:[#allocation4 + $0x2e8] sm:$0xff] %vm1036, %v5427
          %v5492 = vld [vmem:[%s1069] sm:$0xff]
          %v5493 = vld [vmem:[%s1069 + $0x8] sm:$0xff]
          %v5494 = vld [vmem:[%s1069 + $0x18] sm:$0xff]
          %v5495 = vld [vmem:[%s1069 + $0x20] sm:$0xff]
          %v5496 = vld [vmem:[%s1069 + $0x30] sm:$0xff]
          %v5497 = vld [vmem:[%s1069 + $0x38] sm:$0xff]
          %v5498 = vld [vmem:[%s1069 + $0x48] sm:$0xff]
          %v5499 = vld [vmem:[%s1069 + $0x50] sm:$0xff]
          %v5500 = vld [vmem:[%s1069 + $0x60] sm:$0xff]
          %v5501 = vld [vmem:[%s1069 + $0x68] sm:$0xff]
          %v5502 = vld [vmem:[%s1069 + $0x78] sm:$0xff]
          %v5503 = vld [vmem:[%s1069 + $0x80] sm:$0xff]
          %v5504 = vld [vmem:[%s1069 + $0x90] sm:$0xff]
          %v5505 = vld [vmem:[%s1069 + $0x98] sm:$0xff]
          %v5506 = vld [vmem:[%s1069 + $0xa8] sm:$0xff]
          %v5507 = vld [vmem:[%s1069 + $0xb0] sm:$0xff]
          %v5508 = vld [vmem:[%s1069 + $0xc0] sm:$0xff]
          %v5509 = vld [vmem:[%s1069 + $0xc8] sm:$0xff]
          %v5510 = vld [vmem:[%s1069 + $0xd8] sm:$0xff]
          %v5511 = vld [vmem:[%s1069 + $0xe0] sm:$0xff]
          %v5512 = vld [vmem:[%s1069 + $0xf0] sm:$0xff]
          %v5513 = vld [vmem:[%s1069 + $0xf8] sm:$0xff]
          %v5514 = vld [vmem:[%s1069 + $0x108] sm:$0xff]
          %v5515 = vld [vmem:[%s1069 + $0x110] sm:$0xff]
          %v5516 = vld [vmem:[%s1069 + $0x120] sm:$0xff]
          %v5517 = vld [vmem:[%s1069 + $0x128] sm:$0xff]
          %v5518 = vld [vmem:[%s1069 + $0x138] sm:$0xff]
          %v5519 = vld [vmem:[%s1069 + $0x140] sm:$0xff]
          %v5520 = vld [vmem:[%s1069 + $0x150] sm:$0xff]
          %v5521 = vld [vmem:[%s1069 + $0x158] sm:$0xff]
          %v5522 = vld [vmem:[%s1069 + $0x168] sm:$0xff]
          %v5523 = vld [vmem:[%s1069 + $0x170] sm:$0xff]
          %5556 = vrot.lane.b32.xlu0 %v5492, 96
          %v5557 = vpop.permute.xlu0 %5556
          %5558 = vrot.lane.b32.xlu0 %v5493, 96
          %v5559 = vpop.permute.xlu0 %5558
          %5560 = vrot.lane.b32.xlu0 %v5494, 96
          %v5561 = vpop.permute.xlu0 %5560
          %5562 = vrot.lane.b32.xlu0 %v5495, 96
          %v5563 = vpop.permute.xlu0 %5562
          %5564 = vrot.lane.b32.xlu0 %v5496, 96
          %v5565 = vpop.permute.xlu0 %5564
          %5566 = vrot.lane.b32.xlu0 %v5497, 96
          %v5567 = vpop.permute.xlu0 %5566
          %5568 = vrot.lane.b32.xlu0 %v5498, 96
          %v5569 = vpop.permute.xlu0 %5568
          %5570 = vrot.lane.b32.xlu0 %v5499, 96
          %v5571 = vpop.permute.xlu0 %5570
          %5572 = vrot.lane.b32.xlu0 %v5500, 96
          %v5573 = vpop.permute.xlu0 %5572
          %5574 = vrot.lane.b32.xlu0 %v5501, 96
          %v5575 = vpop.permute.xlu0 %5574
          %5576 = vrot.lane.b32.xlu0 %v5502, 96
          %v5577 = vpop.permute.xlu0 %5576
          %5578 = vrot.lane.b32.xlu0 %v5503, 96
          %v5579 = vpop.permute.xlu0 %5578
          %5580 = vrot.lane.b32.xlu0 %v5504, 96
          %v5581 = vpop.permute.xlu0 %5580
          %5582 = vrot.lane.b32.xlu0 %v5505, 96
          %v5583 = vpop.permute.xlu0 %5582
          %5584 = vrot.lane.b32.xlu0 %v5506, 96
          %v5585 = vpop.permute.xlu0 %5584
          %5586 = vrot.lane.b32.xlu0 %v5507, 96
          %v5587 = vpop.permute.xlu0 %5586
          %5588 = vrot.lane.b32.xlu0 %v5508, 96
          %v5589 = vpop.permute.xlu0 %5588
          %5590 = vrot.lane.b32.xlu0 %v5509, 96
          %v5591 = vpop.permute.xlu0 %5590
          %5592 = vrot.lane.b32.xlu0 %v5510, 96
          %v5593 = vpop.permute.xlu0 %5592
          %5594 = vrot.lane.b32.xlu0 %v5511, 96
          %v5595 = vpop.permute.xlu0 %5594
          %5596 = vrot.lane.b32.xlu0 %v5512, 96
          %v5597 = vpop.permute.xlu0 %5596
          %5598 = vrot.lane.b32.xlu0 %v5513, 96
          %v5599 = vpop.permute.xlu0 %5598
          %5600 = vrot.lane.b32.xlu0 %v5514, 96
          %v5601 = vpop.permute.xlu0 %5600
          %5602 = vrot.lane.b32.xlu0 %v5515, 96
          %v5603 = vpop.permute.xlu0 %5602
          %5604 = vrot.lane.b32.xlu0 %v5516, 96
          %v5605 = vpop.permute.xlu0 %5604
          %5606 = vrot.lane.b32.xlu0 %v5517, 96
          %v5607 = vpop.permute.xlu0 %5606
          %5608 = vrot.lane.b32.xlu0 %v5518, 96
          %v5609 = vpop.permute.xlu0 %5608
          %5610 = vrot.lane.b32.xlu0 %v5519, 96
          %v5611 = vpop.permute.xlu0 %5610
          %5612 = vrot.lane.b32.xlu0 %v5520, 96
          %v5613 = vpop.permute.xlu0 %5612
          %5614 = vrot.lane.b32.xlu0 %v5521, 96
          %v5615 = vpop.permute.xlu0 %5614
          %5616 = vrot.lane.b32.xlu0 %v5522, 96
          %v5617 = vpop.permute.xlu0 %5616
          %5618 = vrot.lane.b32.xlu0 %v5523, 96
          %v5619 = vpop.permute.xlu0 %5618
          %5652 = vst.msk [vmem:[#allocation4] sm:$0xff] %vm1230, %v5557
          %5653 = vst.msk [vmem:[#allocation4 + $0x18] sm:$0xff] %vm1230, %v5559
          %5654 = vst.msk [vmem:[#allocation4 + $0x30] sm:$0xff] %vm1230, %v5561
          %5655 = vst.msk [vmem:[#allocation4 + $0x48] sm:$0xff] %vm1230, %v5563
          %5656 = vst.msk [vmem:[#allocation4 + $0x60] sm:$0xff] %vm1230, %v5565
          %5657 = vst.msk [vmem:[#allocation4 + $0x78] sm:$0xff] %vm1230, %v5567
          %5658 = vst.msk [vmem:[#allocation4 + $0x90] sm:$0xff] %vm1230, %v5569
          %5659 = vst.msk [vmem:[#allocation4 + $0xa8] sm:$0xff] %vm1230, %v5571
          %5660 = vst.msk [vmem:[#allocation4 + $0xc0] sm:$0xff] %vm1230, %v5573
          %5661 = vst.msk [vmem:[#allocation4 + $0xd8] sm:$0xff] %vm1230, %v5575
          %5662 = vst.msk [vmem:[#allocation4 + $0xf0] sm:$0xff] %vm1230, %v5577
          %5663 = vst.msk [vmem:[#allocation4 + $0x108] sm:$0xff] %vm1230, %v5579
          %5664 = vst.msk [vmem:[#allocation4 + $0x120] sm:$0xff] %vm1230, %v5581
          %5665 = vst.msk [vmem:[#allocation4 + $0x138] sm:$0xff] %vm1230, %v5583
          %5666 = vst.msk [vmem:[#allocation4 + $0x150] sm:$0xff] %vm1230, %v5585
          %5667 = vst.msk [vmem:[#allocation4 + $0x168] sm:$0xff] %vm1230, %v5587
          %5668 = vst.msk [vmem:[#allocation4 + $0x180] sm:$0xff] %vm1230, %v5589
          %5669 = vst.msk [vmem:[#allocation4 + $0x198] sm:$0xff] %vm1230, %v5591
          %5670 = vst.msk [vmem:[#allocation4 + $0x1b0] sm:$0xff] %vm1230, %v5593
          %5671 = vst.msk [vmem:[#allocation4 + $0x1c8] sm:$0xff] %vm1230, %v5595
          %5672 = vst.msk [vmem:[#allocation4 + $0x1e0] sm:$0xff] %vm1230, %v5597
          %5673 = vst.msk [vmem:[#allocation4 + $0x1f8] sm:$0xff] %vm1230, %v5599
          %5674 = vst.msk [vmem:[#allocation4 + $0x210] sm:$0xff] %vm1230, %v5601
          %5675 = vst.msk [vmem:[#allocation4 + $0x228] sm:$0xff] %vm1230, %v5603
          %5676 = vst.msk [vmem:[#allocation4 + $0x240] sm:$0xff] %vm1230, %v5605
          %5677 = vst.msk [vmem:[#allocation4 + $0x258] sm:$0xff] %vm1230, %v5607
          %5678 = vst.msk [vmem:[#allocation4 + $0x270] sm:$0xff] %vm1230, %v5609
          %5679 = vst.msk [vmem:[#allocation4 + $0x288] sm:$0xff] %vm1230, %v5611
          %5680 = vst.msk [vmem:[#allocation4 + $0x2a0] sm:$0xff] %vm1230, %v5613
          %5681 = vst.msk [vmem:[#allocation4 + $0x2b8] sm:$0xff] %vm1230, %v5615
          %5682 = vst.msk [vmem:[#allocation4 + $0x2d0] sm:$0xff] %vm1230, %v5617
          %5683 = vst.msk [vmem:[#allocation4 + $0x2e8] sm:$0xff] %vm1230, %v5619
          %v5684 = vld [vmem:[%s1069 + $0x1] sm:$0xff]
          %v5685 = vld [vmem:[%s1069 + $0x9] sm:$0xff]
          %v5686 = vld [vmem:[%s1069 + $0x19] sm:$0xff]
          %v5687 = vld [vmem:[%s1069 + $0x21] sm:$0xff]
          %v5688 = vld [vmem:[%s1069 + $0x31] sm:$0xff]
          %v5689 = vld [vmem:[%s1069 + $0x39] sm:$0xff]
          %v5690 = vld [vmem:[%s1069 + $0x49] sm:$0xff]
          %v5691 = vld [vmem:[%s1069 + $0x51] sm:$0xff]
          %v5692 = vld [vmem:[%s1069 + $0x61] sm:$0xff]
          %v5693 = vld [vmem:[%s1069 + $0x69] sm:$0xff]
          %v5694 = vld [vmem:[%s1069 + $0x79] sm:$0xff]
          %v5695 = vld [vmem:[%s1069 + $0x81] sm:$0xff]
          %v5696 = vld [vmem:[%s1069 + $0x91] sm:$0xff]
          %v5697 = vld [vmem:[%s1069 + $0x99] sm:$0xff]
          %v5698 = vld [vmem:[%s1069 + $0xa9] sm:$0xff]
          %v5699 = vld [vmem:[%s1069 + $0xb1] sm:$0xff]
          %v5700 = vld [vmem:[%s1069 + $0xc1] sm:$0xff]
          %v5701 = vld [vmem:[%s1069 + $0xc9] sm:$0xff]
          %v5702 = vld [vmem:[%s1069 + $0xd9] sm:$0xff]
          %v5703 = vld [vmem:[%s1069 + $0xe1] sm:$0xff]
          %v5704 = vld [vmem:[%s1069 + $0xf1] sm:$0xff]
          %v5705 = vld [vmem:[%s1069 + $0xf9] sm:$0xff]
          %v5706 = vld [vmem:[%s1069 + $0x109] sm:$0xff]
          %v5707 = vld [vmem:[%s1069 + $0x111] sm:$0xff]
          %v5708 = vld [vmem:[%s1069 + $0x121] sm:$0xff]
          %v5709 = vld [vmem:[%s1069 + $0x129] sm:$0xff]
          %v5710 = vld [vmem:[%s1069 + $0x139] sm:$0xff]
          %v5711 = vld [vmem:[%s1069 + $0x141] sm:$0xff]
          %v5712 = vld [vmem:[%s1069 + $0x151] sm:$0xff]
          %v5713 = vld [vmem:[%s1069 + $0x159] sm:$0xff]
          %v5714 = vld [vmem:[%s1069 + $0x169] sm:$0xff]
          %v5715 = vld [vmem:[%s1069 + $0x171] sm:$0xff]
          %5716 = vst.msk [vmem:[#allocation4 + $0x8] sm:$0xff] %vm650, %v5684
          %5717 = vst.msk [vmem:[#allocation4 + $0x20] sm:$0xff] %vm650, %v5685
          %5718 = vst.msk [vmem:[#allocation4 + $0x38] sm:$0xff] %vm650, %v5686
          %5719 = vst.msk [vmem:[#allocation4 + $0x50] sm:$0xff] %vm650, %v5687
          %5720 = vst.msk [vmem:[#allocation4 + $0x68] sm:$0xff] %vm650, %v5688
          %5721 = vst.msk [vmem:[#allocation4 + $0x80] sm:$0xff] %vm650, %v5689
          %5722 = vst.msk [vmem:[#allocation4 + $0x98] sm:$0xff] %vm650, %v5690
          %5723 = vst.msk [vmem:[#allocation4 + $0xb0] sm:$0xff] %vm650, %v5691
          %5724 = vst.msk [vmem:[#allocation4 + $0xc8] sm:$0xff] %vm650, %v5692
          %5725 = vst.msk [vmem:[#allocation4 + $0xe0] sm:$0xff] %vm650, %v5693
          %5726 = vst.msk [vmem:[#allocation4 + $0xf8] sm:$0xff] %vm650, %v5694
          %5727 = vst.msk [vmem:[#allocation4 + $0x110] sm:$0xff] %vm650, %v5695
          %5728 = vst.msk [vmem:[#allocation4 + $0x128] sm:$0xff] %vm650, %v5696
          %5729 = vst.msk [vmem:[#allocation4 + $0x140] sm:$0xff] %vm650, %v5697
          %5730 = vst.msk [vmem:[#allocation4 + $0x158] sm:$0xff] %vm650, %v5698
          %5731 = vst.msk [vmem:[#allocation4 + $0x170] sm:$0xff] %vm650, %v5699
          %5732 = vst.msk [vmem:[#allocation4 + $0x188] sm:$0xff] %vm650, %v5700
          %5733 = vst.msk [vmem:[#allocation4 + $0x1a0] sm:$0xff] %vm650, %v5701
          %5734 = vst.msk [vmem:[#allocation4 + $0x1b8] sm:$0xff] %vm650, %v5702
          %5735 = vst.msk [vmem:[#allocation4 + $0x1d0] sm:$0xff] %vm650, %v5703
          %5736 = vst.msk [vmem:[#allocation4 + $0x1e8] sm:$0xff] %vm650, %v5704
          %5737 = vst.msk [vmem:[#allocation4 + $0x200] sm:$0xff] %vm650, %v5705
          %5738 = vst.msk [vmem:[#allocation4 + $0x218] sm:$0xff] %vm650, %v5706
          %5739 = vst.msk [vmem:[#allocation4 + $0x230] sm:$0xff] %vm650, %v5707
          %5740 = vst.msk [vmem:[#allocation4 + $0x248] sm:$0xff] %vm650, %v5708
          %5741 = vst.msk [vmem:[#allocation4 + $0x260] sm:$0xff] %vm650, %v5709
          %5742 = vst.msk [vmem:[#allocation4 + $0x278] sm:$0xff] %vm650, %v5710
          %5743 = vst.msk [vmem:[#allocation4 + $0x290] sm:$0xff] %vm650, %v5711
          %5744 = vst.msk [vmem:[#allocation4 + $0x2a8] sm:$0xff] %vm650, %v5712
          %5745 = vst.msk [vmem:[#allocation4 + $0x2c0] sm:$0xff] %vm650, %v5713
          %5746 = vst.msk [vmem:[#allocation4 + $0x2d8] sm:$0xff] %vm650, %v5714
          %5747 = vst.msk [vmem:[#allocation4 + $0x2f0] sm:$0xff] %vm650, %v5715
          %v5748 = vld [vmem:[%s1069 + $0x2] sm:$0xff]
          %v5749 = vld [vmem:[%s1069 + $0xa] sm:$0xff]
          %v5750 = vld [vmem:[%s1069 + $0x1a] sm:$0xff]
          %v5751 = vld [vmem:[%s1069 + $0x22] sm:$0xff]
          %v5752 = vld [vmem:[%s1069 + $0x32] sm:$0xff]
          %v5753 = vld [vmem:[%s1069 + $0x3a] sm:$0xff]
          %v5754 = vld [vmem:[%s1069 + $0x4a] sm:$0xff]
          %v5755 = vld [vmem:[%s1069 + $0x52] sm:$0xff]
          %v5756 = vld [vmem:[%s1069 + $0x62] sm:$0xff]
          %v5757 = vld [vmem:[%s1069 + $0x6a] sm:$0xff]
          %v5758 = vld [vmem:[%s1069 + $0x7a] sm:$0xff]
          %v5759 = vld [vmem:[%s1069 + $0x82] sm:$0xff]
          %v5760 = vld [vmem:[%s1069 + $0x92] sm:$0xff]
          %v5761 = vld [vmem:[%s1069 + $0x9a] sm:$0xff]
          %v5762 = vld [vmem:[%s1069 + $0xaa] sm:$0xff]
          %v5763 = vld [vmem:[%s1069 + $0xb2] sm:$0xff]
          %v5764 = vld [vmem:[%s1069 + $0xc2] sm:$0xff]
          %v5765 = vld [vmem:[%s1069 + $0xca] sm:$0xff]
          %v5766 = vld [vmem:[%s1069 + $0xda] sm:$0xff]
          %v5767 = vld [vmem:[%s1069 + $0xe2] sm:$0xff]
          %v5768 = vld [vmem:[%s1069 + $0xf2] sm:$0xff]
          %v5769 = vld [vmem:[%s1069 + $0xfa] sm:$0xff]
          %v5770 = vld [vmem:[%s1069 + $0x10a] sm:$0xff]
          %v5771 = vld [vmem:[%s1069 + $0x112] sm:$0xff]
          %v5772 = vld [vmem:[%s1069 + $0x122] sm:$0xff]
          %v5773 = vld [vmem:[%s1069 + $0x12a] sm:$0xff]
          %v5774 = vld [vmem:[%s1069 + $0x13a] sm:$0xff]
          %v5775 = vld [vmem:[%s1069 + $0x142] sm:$0xff]
          %v5776 = vld [vmem:[%s1069 + $0x152] sm:$0xff]
          %v5777 = vld [vmem:[%s1069 + $0x15a] sm:$0xff]
          %v5778 = vld [vmem:[%s1069 + $0x16a] sm:$0xff]
          %v5779 = vld [vmem:[%s1069 + $0x172] sm:$0xff]
          %5812 = vrot.lane.b32.xlu0 %v5748, 32
          %v5813 = vpop.permute.xlu0 %5812
          %5814 = vrot.lane.b32.xlu0 %v5749, 32
          %v5815 = vpop.permute.xlu0 %5814
          %5816 = vrot.lane.b32.xlu0 %v5750, 32
          %v5817 = vpop.permute.xlu0 %5816
          %5818 = vrot.lane.b32.xlu0 %v5751, 32
          %v5819 = vpop.permute.xlu0 %5818
          %5820 = vrot.lane.b32.xlu0 %v5752, 32
          %v5821 = vpop.permute.xlu0 %5820
          %5822 = vrot.lane.b32.xlu0 %v5753, 32
          %v5823 = vpop.permute.xlu0 %5822
          %5824 = vrot.lane.b32.xlu0 %v5754, 32
          %v5825 = vpop.permute.xlu0 %5824
          %5826 = vrot.lane.b32.xlu0 %v5755, 32
          %v5827 = vpop.permute.xlu0 %5826
          %5828 = vrot.lane.b32.xlu0 %v5756, 32
          %v5829 = vpop.permute.xlu0 %5828
          %5830 = vrot.lane.b32.xlu0 %v5757, 32
          %v5831 = vpop.permute.xlu0 %5830
          %5832 = vrot.lane.b32.xlu0 %v5758, 32
          %v5833 = vpop.permute.xlu0 %5832
          %5834 = vrot.lane.b32.xlu0 %v5759, 32
          %v5835 = vpop.permute.xlu0 %5834
          %5836 = vrot.lane.b32.xlu0 %v5760, 32
          %v5837 = vpop.permute.xlu0 %5836
          %5838 = vrot.lane.b32.xlu0 %v5761, 32
          %v5839 = vpop.permute.xlu0 %5838
          %5840 = vrot.lane.b32.xlu0 %v5762, 32
          %v5841 = vpop.permute.xlu0 %5840
          %5842 = vrot.lane.b32.xlu0 %v5763, 32
          %v5843 = vpop.permute.xlu0 %5842
          %5844 = vrot.lane.b32.xlu0 %v5764, 32
          %v5845 = vpop.permute.xlu0 %5844
          %5846 = vrot.lane.b32.xlu0 %v5765, 32
          %v5847 = vpop.permute.xlu0 %5846
          %5848 = vrot.lane.b32.xlu0 %v5766, 32
          %v5849 = vpop.permute.xlu0 %5848
          %5850 = vrot.lane.b32.xlu0 %v5767, 32
          %v5851 = vpop.permute.xlu0 %5850
          %5852 = vrot.lane.b32.xlu0 %v5768, 32
          %v5853 = vpop.permute.xlu0 %5852
          %5854 = vrot.lane.b32.xlu0 %v5769, 32
          %v5855 = vpop.permute.xlu0 %5854
          %5856 = vrot.lane.b32.xlu0 %v5770, 32
          %v5857 = vpop.permute.xlu0 %5856
          %5858 = vrot.lane.b32.xlu0 %v5771, 32
          %v5859 = vpop.permute.xlu0 %5858
          %5860 = vrot.lane.b32.xlu0 %v5772, 32
          %v5861 = vpop.permute.xlu0 %5860
          %5862 = vrot.lane.b32.xlu0 %v5773, 32
          %v5863 = vpop.permute.xlu0 %5862
          %5864 = vrot.lane.b32.xlu0 %v5774, 32
          %v5865 = vpop.permute.xlu0 %5864
          %5866 = vrot.lane.b32.xlu0 %v5775, 32
          %v5867 = vpop.permute.xlu0 %5866
          %5868 = vrot.lane.b32.xlu0 %v5776, 32
          %v5869 = vpop.permute.xlu0 %5868
          %5870 = vrot.lane.b32.xlu0 %v5777, 32
          %v5871 = vpop.permute.xlu0 %5870
          %5872 = vrot.lane.b32.xlu0 %v5778, 32
          %v5873 = vpop.permute.xlu0 %5872
          %5874 = vrot.lane.b32.xlu0 %v5779, 32
          %v5875 = vpop.permute.xlu0 %5874
          %5908 = vst.msk [vmem:[#allocation4 + $0x8] sm:$0xff] %vm843, %v5813
          %5909 = vst.msk [vmem:[#allocation4 + $0x20] sm:$0xff] %vm843, %v5815
          %5910 = vst.msk [vmem:[#allocation4 + $0x38] sm:$0xff] %vm843, %v5817
          %5911 = vst.msk [vmem:[#allocation4 + $0x50] sm:$0xff] %vm843, %v5819
          %5912 = vst.msk [vmem:[#allocation4 + $0x68] sm:$0xff] %vm843, %v5821
          %5913 = vst.msk [vmem:[#allocation4 + $0x80] sm:$0xff] %vm843, %v5823
          %5914 = vst.msk [vmem:[#allocation4 + $0x98] sm:$0xff] %vm843, %v5825
          %5915 = vst.msk [vmem:[#allocation4 + $0xb0] sm:$0xff] %vm843, %v5827
          %5916 = vst.msk [vmem:[#allocation4 + $0xc8] sm:$0xff] %vm843, %v5829
          %5917 = vst.msk [vmem:[#allocation4 + $0xe0] sm:$0xff] %vm843, %v5831
          %5918 = vst.msk [vmem:[#allocation4 + $0xf8] sm:$0xff] %vm843, %v5833
          %5919 = vst.msk [vmem:[#allocation4 + $0x110] sm:$0xff] %vm843, %v5835
          %5920 = vst.msk [vmem:[#allocation4 + $0x128] sm:$0xff] %vm843, %v5837
          %5921 = vst.msk [vmem:[#allocation4 + $0x140] sm:$0xff] %vm843, %v5839
          %5922 = vst.msk [vmem:[#allocation4 + $0x158] sm:$0xff] %vm843, %v5841
          %5923 = vst.msk [vmem:[#allocation4 + $0x170] sm:$0xff] %vm843, %v5843
          %5924 = vst.msk [vmem:[#allocation4 + $0x188] sm:$0xff] %vm843, %v5845
          %5925 = vst.msk [vmem:[#allocation4 + $0x1a0] sm:$0xff] %vm843, %v5847
          %5926 = vst.msk [vmem:[#allocation4 + $0x1b8] sm:$0xff] %vm843, %v5849
          %5927 = vst.msk [vmem:[#allocation4 + $0x1d0] sm:$0xff] %vm843, %v5851
          %5928 = vst.msk [vmem:[#allocation4 + $0x1e8] sm:$0xff] %vm843, %v5853
          %5929 = vst.msk [vmem:[#allocation4 + $0x200] sm:$0xff] %vm843, %v5855
          %5930 = vst.msk [vmem:[#allocation4 + $0x218] sm:$0xff] %vm843, %v5857
          %5931 = vst.msk [vmem:[#allocation4 + $0x230] sm:$0xff] %vm843, %v5859
          %5932 = vst.msk [vmem:[#allocation4 + $0x248] sm:$0xff] %vm843, %v5861
          %5933 = vst.msk [vmem:[#allocation4 + $0x260] sm:$0xff] %vm843, %v5863
          %5934 = vst.msk [vmem:[#allocation4 + $0x278] sm:$0xff] %vm843, %v5865
          %5935 = vst.msk [vmem:[#allocation4 + $0x290] sm:$0xff] %vm843, %v5867
          %5936 = vst.msk [vmem:[#allocation4 + $0x2a8] sm:$0xff] %vm843, %v5869
          %5937 = vst.msk [vmem:[#allocation4 + $0x2c0] sm:$0xff] %vm843, %v5871
          %5938 = vst.msk [vmem:[#allocation4 + $0x2d8] sm:$0xff] %vm843, %v5873
          %5939 = vst.msk [vmem:[#allocation4 + $0x2f0] sm:$0xff] %vm843, %v5875
          %v5940 = vld [vmem:[%s1519] sm:$0xff]
          %v5941 = vld [vmem:[%s1519 + $0x8] sm:$0xff]
          %v5942 = vld [vmem:[%s1519 + $0x18] sm:$0xff]
          %v5943 = vld [vmem:[%s1519 + $0x20] sm:$0xff]
          %v5944 = vld [vmem:[%s1519 + $0x30] sm:$0xff]
          %v5945 = vld [vmem:[%s1519 + $0x38] sm:$0xff]
          %v5946 = vld [vmem:[%s1519 + $0x48] sm:$0xff]
          %v5947 = vld [vmem:[%s1519 + $0x50] sm:$0xff]
          %v5948 = vld [vmem:[%s1519 + $0x60] sm:$0xff]
          %v5949 = vld [vmem:[%s1519 + $0x68] sm:$0xff]
          %v5950 = vld [vmem:[%s1519 + $0x78] sm:$0xff]
          %v5951 = vld [vmem:[%s1519 + $0x80] sm:$0xff]
          %v5952 = vld [vmem:[%s1519 + $0x90] sm:$0xff]
          %v5953 = vld [vmem:[%s1519 + $0x98] sm:$0xff]
          %v5954 = vld [vmem:[%s1519 + $0xa8] sm:$0xff]
          %v5955 = vld [vmem:[%s1519 + $0xb0] sm:$0xff]
          %v5956 = vld [vmem:[%s1519 + $0xc0] sm:$0xff]
          %v5957 = vld [vmem:[%s1519 + $0xc8] sm:$0xff]
          %v5958 = vld [vmem:[%s1519 + $0xd8] sm:$0xff]
          %v5959 = vld [vmem:[%s1519 + $0xe0] sm:$0xff]
          %v5960 = vld [vmem:[%s1519 + $0xf0] sm:$0xff]
          %v5961 = vld [vmem:[%s1519 + $0xf8] sm:$0xff]
          %v5962 = vld [vmem:[%s1519 + $0x108] sm:$0xff]
          %v5963 = vld [vmem:[%s1519 + $0x110] sm:$0xff]
          %v5964 = vld [vmem:[%s1519 + $0x120] sm:$0xff]
          %v5965 = vld [vmem:[%s1519 + $0x128] sm:$0xff]
          %v5966 = vld [vmem:[%s1519 + $0x138] sm:$0xff]
          %v5967 = vld [vmem:[%s1519 + $0x140] sm:$0xff]
          %v5968 = vld [vmem:[%s1519 + $0x150] sm:$0xff]
          %v5969 = vld [vmem:[%s1519 + $0x158] sm:$0xff]
          %v5970 = vld [vmem:[%s1519 + $0x168] sm:$0xff]
          %v5971 = vld [vmem:[%s1519 + $0x170] sm:$0xff]
          %6004 = vrot.lane.b32.xlu0 %v5940, 64
          %v6005 = vpop.permute.xlu0 %6004
          %6006 = vrot.lane.b32.xlu0 %v5941, 64
          %v6007 = vpop.permute.xlu0 %6006
          %6008 = vrot.lane.b32.xlu0 %v5942, 64
          %v6009 = vpop.permute.xlu0 %6008
          %6010 = vrot.lane.b32.xlu0 %v5943, 64
          %v6011 = vpop.permute.xlu0 %6010
          %6012 = vrot.lane.b32.xlu0 %v5944, 64
          %v6013 = vpop.permute.xlu0 %6012
          %6014 = vrot.lane.b32.xlu0 %v5945, 64
          %v6015 = vpop.permute.xlu0 %6014
          %6016 = vrot.lane.b32.xlu0 %v5946, 64
          %v6017 = vpop.permute.xlu0 %6016
          %6018 = vrot.lane.b32.xlu0 %v5947, 64
          %v6019 = vpop.permute.xlu0 %6018
          %6020 = vrot.lane.b32.xlu0 %v5948, 64
          %v6021 = vpop.permute.xlu0 %6020
          %6022 = vrot.lane.b32.xlu0 %v5949, 64
          %v6023 = vpop.permute.xlu0 %6022
          %6024 = vrot.lane.b32.xlu0 %v5950, 64
          %v6025 = vpop.permute.xlu0 %6024
          %6026 = vrot.lane.b32.xlu0 %v5951, 64
          %v6027 = vpop.permute.xlu0 %6026
          %6028 = vrot.lane.b32.xlu0 %v5952, 64
          %v6029 = vpop.permute.xlu0 %6028
          %6030 = vrot.lane.b32.xlu0 %v5953, 64
          %v6031 = vpop.permute.xlu0 %6030
          %6032 = vrot.lane.b32.xlu0 %v5954, 64
          %v6033 = vpop.permute.xlu0 %6032
          %6034 = vrot.lane.b32.xlu0 %v5955, 64
          %v6035 = vpop.permute.xlu0 %6034
          %6036 = vrot.lane.b32.xlu0 %v5956, 64
          %v6037 = vpop.permute.xlu0 %6036
          %6038 = vrot.lane.b32.xlu0 %v5957, 64
          %v6039 = vpop.permute.xlu0 %6038
          %6040 = vrot.lane.b32.xlu0 %v5958, 64
          %v6041 = vpop.permute.xlu0 %6040
          %6042 = vrot.lane.b32.xlu0 %v5959, 64
          %v6043 = vpop.permute.xlu0 %6042
          %6044 = vrot.lane.b32.xlu0 %v5960, 64
          %v6045 = vpop.permute.xlu0 %6044
          %6046 = vrot.lane.b32.xlu0 %v5961, 64
          %v6047 = vpop.permute.xlu0 %6046
          %6048 = vrot.lane.b32.xlu0 %v5962, 64
          %v6049 = vpop.permute.xlu0 %6048
          %6050 = vrot.lane.b32.xlu0 %v5963, 64
          %v6051 = vpop.permute.xlu0 %6050
          %6052 = vrot.lane.b32.xlu0 %v5964, 64
          %v6053 = vpop.permute.xlu0 %6052
          %6054 = vrot.lane.b32.xlu0 %v5965, 64
          %v6055 = vpop.permute.xlu0 %6054
          %6056 = vrot.lane.b32.xlu0 %v5966, 64
          %v6057 = vpop.permute.xlu0 %6056
          %6058 = vrot.lane.b32.xlu0 %v5967, 64
          %v6059 = vpop.permute.xlu0 %6058
          %6060 = vrot.lane.b32.xlu0 %v5968, 64
          %v6061 = vpop.permute.xlu0 %6060
          %6062 = vrot.lane.b32.xlu0 %v5969, 64
          %v6063 = vpop.permute.xlu0 %6062
          %6064 = vrot.lane.b32.xlu0 %v5970, 64
          %v6065 = vpop.permute.xlu0 %6064
          %6066 = vrot.lane.b32.xlu0 %v5971, 64
          %v6067 = vpop.permute.xlu0 %6066
          %6100 = vst.msk [vmem:[#allocation4 + $0x8] sm:$0xff] %vm1036, %v6005
          %6101 = vst.msk [vmem:[#allocation4 + $0x20] sm:$0xff] %vm1036, %v6007
          %6102 = vst.msk [vmem:[#allocation4 + $0x38] sm:$0xff] %vm1036, %v6009
          %6103 = vst.msk [vmem:[#allocation4 + $0x50] sm:$0xff] %vm1036, %v6011
          %6104 = vst.msk [vmem:[#allocation4 + $0x68] sm:$0xff] %vm1036, %v6013
          %6105 = vst.msk [vmem:[#allocation4 + $0x80] sm:$0xff] %vm1036, %v6015
          %6106 = vst.msk [vmem:[#allocation4 + $0x98] sm:$0xff] %vm1036, %v6017
          %6107 = vst.msk [vmem:[#allocation4 + $0xb0] sm:$0xff] %vm1036, %v6019
          %6108 = vst.msk [vmem:[#allocation4 + $0xc8] sm:$0xff] %vm1036, %v6021
          %6109 = vst.msk [vmem:[#allocation4 + $0xe0] sm:$0xff] %vm1036, %v6023
          %6110 = vst.msk [vmem:[#allocation4 + $0xf8] sm:$0xff] %vm1036, %v6025
          %6111 = vst.msk [vmem:[#allocation4 + $0x110] sm:$0xff] %vm1036, %v6027
          %6112 = vst.msk [vmem:[#allocation4 + $0x128] sm:$0xff] %vm1036, %v6029
          %6113 = vst.msk [vmem:[#allocation4 + $0x140] sm:$0xff] %vm1036, %v6031
          %6114 = vst.msk [vmem:[#allocation4 + $0x158] sm:$0xff] %vm1036, %v6033
          %6115 = vst.msk [vmem:[#allocation4 + $0x170] sm:$0xff] %vm1036, %v6035
          %6116 = vst.msk [vmem:[#allocation4 + $0x188] sm:$0xff] %vm1036, %v6037
          %6117 = vst.msk [vmem:[#allocation4 + $0x1a0] sm:$0xff] %vm1036, %v6039
          %6118 = vst.msk [vmem:[#allocation4 + $0x1b8] sm:$0xff] %vm1036, %v6041
          %6119 = vst.msk [vmem:[#allocation4 + $0x1d0] sm:$0xff] %vm1036, %v6043
          %6120 = vst.msk [vmem:[#allocation4 + $0x1e8] sm:$0xff] %vm1036, %v6045
          %6121 = vst.msk [vmem:[#allocation4 + $0x200] sm:$0xff] %vm1036, %v6047
          %6122 = vst.msk [vmem:[#allocation4 + $0x218] sm:$0xff] %vm1036, %v6049
          %6123 = vst.msk [vmem:[#allocation4 + $0x230] sm:$0xff] %vm1036, %v6051
          %6124 = vst.msk [vmem:[#allocation4 + $0x248] sm:$0xff] %vm1036, %v6053
          %6125 = vst.msk [vmem:[#allocation4 + $0x260] sm:$0xff] %vm1036, %v6055
          %6126 = vst.msk [vmem:[#allocation4 + $0x278] sm:$0xff] %vm1036, %v6057
          %6127 = vst.msk [vmem:[#allocation4 + $0x290] sm:$0xff] %vm1036, %v6059
          %6128 = vst.msk [vmem:[#allocation4 + $0x2a8] sm:$0xff] %vm1036, %v6061
          %6129 = vst.msk [vmem:[#allocation4 + $0x2c0] sm:$0xff] %vm1036, %v6063
          %6130 = vst.msk [vmem:[#allocation4 + $0x2d8] sm:$0xff] %vm1036, %v6065
          %6131 = vst.msk [vmem:[#allocation4 + $0x2f0] sm:$0xff] %vm1036, %v6067
          %v6132 = vld [vmem:[%s1519 + $0x1] sm:$0xff]
          %v6133 = vld [vmem:[%s1519 + $0x9] sm:$0xff]
          %v6134 = vld [vmem:[%s1519 + $0x19] sm:$0xff]
          %v6135 = vld [vmem:[%s1519 + $0x21] sm:$0xff]
          %v6136 = vld [vmem:[%s1519 + $0x31] sm:$0xff]
          %v6137 = vld [vmem:[%s1519 + $0x39] sm:$0xff]
          %v6138 = vld [vmem:[%s1519 + $0x49] sm:$0xff]
          %v6139 = vld [vmem:[%s1519 + $0x51] sm:$0xff]
          %v6140 = vld [vmem:[%s1519 + $0x61] sm:$0xff]
          %v6141 = vld [vmem:[%s1519 + $0x69] sm:$0xff]
          %v6142 = vld [vmem:[%s1519 + $0x79] sm:$0xff]
          %v6143 = vld [vmem:[%s1519 + $0x81] sm:$0xff]
          %v6144 = vld [vmem:[%s1519 + $0x91] sm:$0xff]
          %v6145 = vld [vmem:[%s1519 + $0x99] sm:$0xff]
          %v6146 = vld [vmem:[%s1519 + $0xa9] sm:$0xff]
          %v6147 = vld [vmem:[%s1519 + $0xb1] sm:$0xff]
          %v6148 = vld [vmem:[%s1519 + $0xc1] sm:$0xff]
          %v6149 = vld [vmem:[%s1519 + $0xc9] sm:$0xff]
          %v6150 = vld [vmem:[%s1519 + $0xd9] sm:$0xff]
          %v6151 = vld [vmem:[%s1519 + $0xe1] sm:$0xff]
          %v6152 = vld [vmem:[%s1519 + $0xf1] sm:$0xff]
          %v6153 = vld [vmem:[%s1519 + $0xf9] sm:$0xff]
          %v6154 = vld [vmem:[%s1519 + $0x109] sm:$0xff]
          %v6155 = vld [vmem:[%s1519 + $0x111] sm:$0xff]
          %v6156 = vld [vmem:[%s1519 + $0x121] sm:$0xff]
          %v6157 = vld [vmem:[%s1519 + $0x129] sm:$0xff]
          %v6158 = vld [vmem:[%s1519 + $0x139] sm:$0xff]
          %v6159 = vld [vmem:[%s1519 + $0x141] sm:$0xff]
          %v6160 = vld [vmem:[%s1519 + $0x151] sm:$0xff]
          %v6161 = vld [vmem:[%s1519 + $0x159] sm:$0xff]
          %v6162 = vld [vmem:[%s1519 + $0x169] sm:$0xff]
          %v6163 = vld [vmem:[%s1519 + $0x171] sm:$0xff]
          %6196 = vrot.lane.b32.xlu0 %v6132, 96
          %v6197 = vpop.permute.xlu0 %6196
          %6198 = vrot.lane.b32.xlu0 %v6133, 96
          %v6199 = vpop.permute.xlu0 %6198
          %6200 = vrot.lane.b32.xlu0 %v6134, 96
          %v6201 = vpop.permute.xlu0 %6200
          %6202 = vrot.lane.b32.xlu0 %v6135, 96
          %v6203 = vpop.permute.xlu0 %6202
          %6204 = vrot.lane.b32.xlu0 %v6136, 96
          %v6205 = vpop.permute.xlu0 %6204
          %6206 = vrot.lane.b32.xlu0 %v6137, 96
          %v6207 = vpop.permute.xlu0 %6206
          %6208 = vrot.lane.b32.xlu0 %v6138, 96
          %v6209 = vpop.permute.xlu0 %6208
          %6210 = vrot.lane.b32.xlu0 %v6139, 96
          %v6211 = vpop.permute.xlu0 %6210
          %6212 = vrot.lane.b32.xlu0 %v6140, 96
          %v6213 = vpop.permute.xlu0 %6212
          %6214 = vrot.lane.b32.xlu0 %v6141, 96
          %v6215 = vpop.permute.xlu0 %6214
          %6216 = vrot.lane.b32.xlu0 %v6142, 96
          %v6217 = vpop.permute.xlu0 %6216
          %6218 = vrot.lane.b32.xlu0 %v6143, 96
          %v6219 = vpop.permute.xlu0 %6218
          %6220 = vrot.lane.b32.xlu0 %v6144, 96
          %v6221 = vpop.permute.xlu0 %6220
          %6222 = vrot.lane.b32.xlu0 %v6145, 96
          %v6223 = vpop.permute.xlu0 %6222
          %6224 = vrot.lane.b32.xlu0 %v6146, 96
          %v6225 = vpop.permute.xlu0 %6224
          %6226 = vrot.lane.b32.xlu0 %v6147, 96
          %v6227 = vpop.permute.xlu0 %6226
          %6228 = vrot.lane.b32.xlu0 %v6148, 96
          %v6229 = vpop.permute.xlu0 %6228
          %6230 = vrot.lane.b32.xlu0 %v6149, 96
          %v6231 = vpop.permute.xlu0 %6230
          %6232 = vrot.lane.b32.xlu0 %v6150, 96
          %v6233 = vpop.permute.xlu0 %6232
          %6234 = vrot.lane.b32.xlu0 %v6151, 96
          %v6235 = vpop.permute.xlu0 %6234
          %6236 = vrot.lane.b32.xlu0 %v6152, 96
          %v6237 = vpop.permute.xlu0 %6236
          %6238 = vrot.lane.b32.xlu0 %v6153, 96
          %v6239 = vpop.permute.xlu0 %6238
          %6240 = vrot.lane.b32.xlu0 %v6154, 96
          %v6241 = vpop.permute.xlu0 %6240
          %6242 = vrot.lane.b32.xlu0 %v6155, 96
          %v6243 = vpop.permute.xlu0 %6242
          %6244 = vrot.lane.b32.xlu0 %v6156, 96
          %v6245 = vpop.permute.xlu0 %6244
          %6246 = vrot.lane.b32.xlu0 %v6157, 96
          %v6247 = vpop.permute.xlu0 %6246
          %6248 = vrot.lane.b32.xlu0 %v6158, 96
          %v6249 = vpop.permute.xlu0 %6248
          %6250 = vrot.lane.b32.xlu0 %v6159, 96
          %v6251 = vpop.permute.xlu0 %6250
          %6252 = vrot.lane.b32.xlu0 %v6160, 96
          %v6253 = vpop.permute.xlu0 %6252
          %6254 = vrot.lane.b32.xlu0 %v6161, 96
          %v6255 = vpop.permute.xlu0 %6254
          %6256 = vrot.lane.b32.xlu0 %v6162, 96
          %v6257 = vpop.permute.xlu0 %6256
          %6258 = vrot.lane.b32.xlu0 %v6163, 96
          %v6259 = vpop.permute.xlu0 %6258
          %6292 = vst.msk [vmem:[#allocation4 + $0x8] sm:$0xff] %vm1230, %v6197
          %6293 = vst.msk [vmem:[#allocation4 + $0x20] sm:$0xff] %vm1230, %v6199
          %6294 = vst.msk [vmem:[#allocation4 + $0x38] sm:$0xff] %vm1230, %v6201
          %6295 = vst.msk [vmem:[#allocation4 + $0x50] sm:$0xff] %vm1230, %v6203
          %6296 = vst.msk [vmem:[#allocation4 + $0x68] sm:$0xff] %vm1230, %v6205
          %6297 = vst.msk [vmem:[#allocation4 + $0x80] sm:$0xff] %vm1230, %v6207
          %6298 = vst.msk [vmem:[#allocation4 + $0x98] sm:$0xff] %vm1230, %v6209
          %6299 = vst.msk [vmem:[#allocation4 + $0xb0] sm:$0xff] %vm1230, %v6211
          %6300 = vst.msk [vmem:[#allocation4 + $0xc8] sm:$0xff] %vm1230, %v6213
          %6301 = vst.msk [vmem:[#allocation4 + $0xe0] sm:$0xff] %vm1230, %v6215
          %6302 = vst.msk [vmem:[#allocation4 + $0xf8] sm:$0xff] %vm1230, %v6217
          %6303 = vst.msk [vmem:[#allocation4 + $0x110] sm:$0xff] %vm1230, %v6219
          %6304 = vst.msk [vmem:[#allocation4 + $0x128] sm:$0xff] %vm1230, %v6221
          %6305 = vst.msk [vmem:[#allocation4 + $0x140] sm:$0xff] %vm1230, %v6223
          %6306 = vst.msk [vmem:[#allocation4 + $0x158] sm:$0xff] %vm1230, %v6225
          %6307 = vst.msk [vmem:[#allocation4 + $0x170] sm:$0xff] %vm1230, %v6227
          %6308 = vst.msk [vmem:[#allocation4 + $0x188] sm:$0xff] %vm1230, %v6229
          %6309 = vst.msk [vmem:[#allocation4 + $0x1a0] sm:$0xff] %vm1230, %v6231
          %6310 = vst.msk [vmem:[#allocation4 + $0x1b8] sm:$0xff] %vm1230, %v6233
          %6311 = vst.msk [vmem:[#allocation4 + $0x1d0] sm:$0xff] %vm1230, %v6235
          %6312 = vst.msk [vmem:[#allocation4 + $0x1e8] sm:$0xff] %vm1230, %v6237
          %6313 = vst.msk [vmem:[#allocation4 + $0x200] sm:$0xff] %vm1230, %v6239
          %6314 = vst.msk [vmem:[#allocation4 + $0x218] sm:$0xff] %vm1230, %v6241
          %6315 = vst.msk [vmem:[#allocation4 + $0x230] sm:$0xff] %vm1230, %v6243
          %6316 = vst.msk [vmem:[#allocation4 + $0x248] sm:$0xff] %vm1230, %v6245
          %6317 = vst.msk [vmem:[#allocation4 + $0x260] sm:$0xff] %vm1230, %v6247
          %6318 = vst.msk [vmem:[#allocation4 + $0x278] sm:$0xff] %vm1230, %v6249
          %6319 = vst.msk [vmem:[#allocation4 + $0x290] sm:$0xff] %vm1230, %v6251
          %6320 = vst.msk [vmem:[#allocation4 + $0x2a8] sm:$0xff] %vm1230, %v6253
          %6321 = vst.msk [vmem:[#allocation4 + $0x2c0] sm:$0xff] %vm1230, %v6255
          %6322 = vst.msk [vmem:[#allocation4 + $0x2d8] sm:$0xff] %vm1230, %v6257
          %6323 = vst.msk [vmem:[#allocation4 + $0x2f0] sm:$0xff] %vm1230, %v6259
          %v6324 = vld [vmem:[%s1519 + $0x2] sm:$0xff]
          %v6325 = vld [vmem:[%s1519 + $0xa] sm:$0xff]
          %v6326 = vld [vmem:[%s1519 + $0x1a] sm:$0xff]
          %v6327 = vld [vmem:[%s1519 + $0x22] sm:$0xff]
          %v6328 = vld [vmem:[%s1519 + $0x32] sm:$0xff]
          %v6329 = vld [vmem:[%s1519 + $0x3a] sm:$0xff]
          %v6330 = vld [vmem:[%s1519 + $0x4a] sm:$0xff]
          %v6331 = vld [vmem:[%s1519 + $0x52] sm:$0xff]
          %v6332 = vld [vmem:[%s1519 + $0x62] sm:$0xff]
          %v6333 = vld [vmem:[%s1519 + $0x6a] sm:$0xff]
          %v6334 = vld [vmem:[%s1519 + $0x7a] sm:$0xff]
          %v6335 = vld [vmem:[%s1519 + $0x82] sm:$0xff]
          %v6336 = vld [vmem:[%s1519 + $0x92] sm:$0xff]
          %v6337 = vld [vmem:[%s1519 + $0x9a] sm:$0xff]
          %v6338 = vld [vmem:[%s1519 + $0xaa] sm:$0xff]
          %v6339 = vld [vmem:[%s1519 + $0xb2] sm:$0xff]
          %v6340 = vld [vmem:[%s1519 + $0xc2] sm:$0xff]
          %v6341 = vld [vmem:[%s1519 + $0xca] sm:$0xff]
          %v6342 = vld [vmem:[%s1519 + $0xda] sm:$0xff]
          %v6343 = vld [vmem:[%s1519 + $0xe2] sm:$0xff]
          %v6344 = vld [vmem:[%s1519 + $0xf2] sm:$0xff]
          %v6345 = vld [vmem:[%s1519 + $0xfa] sm:$0xff]
          %v6346 = vld [vmem:[%s1519 + $0x10a] sm:$0xff]
          %v6347 = vld [vmem:[%s1519 + $0x112] sm:$0xff]
          %v6348 = vld [vmem:[%s1519 + $0x122] sm:$0xff]
          %v6349 = vld [vmem:[%s1519 + $0x12a] sm:$0xff]
          %v6350 = vld [vmem:[%s1519 + $0x13a] sm:$0xff]
          %v6351 = vld [vmem:[%s1519 + $0x142] sm:$0xff]
          %v6352 = vld [vmem:[%s1519 + $0x152] sm:$0xff]
          %v6353 = vld [vmem:[%s1519 + $0x15a] sm:$0xff]
          %v6354 = vld [vmem:[%s1519 + $0x16a] sm:$0xff]
          %v6355 = vld [vmem:[%s1519 + $0x172] sm:$0xff]
          %6356 = vst.msk [vmem:[#allocation4 + $0x10] sm:$0xff] %vm650, %v6324
          %6357 = vst.msk [vmem:[#allocation4 + $0x28] sm:$0xff] %vm650, %v6325
          %6358 = vst.msk [vmem:[#allocation4 + $0x40] sm:$0xff] %vm650, %v6326
          %6359 = vst.msk [vmem:[#allocation4 + $0x58] sm:$0xff] %vm650, %v6327
          %6360 = vst.msk [vmem:[#allocation4 + $0x70] sm:$0xff] %vm650, %v6328
          %6361 = vst.msk [vmem:[#allocation4 + $0x88] sm:$0xff] %vm650, %v6329
          %6362 = vst.msk [vmem:[#allocation4 + $0xa0] sm:$0xff] %vm650, %v6330
          %6363 = vst.msk [vmem:[#allocation4 + $0xb8] sm:$0xff] %vm650, %v6331
          %6364 = vst.msk [vmem:[#allocation4 + $0xd0] sm:$0xff] %vm650, %v6332
          %6365 = vst.msk [vmem:[#allocation4 + $0xe8] sm:$0xff] %vm650, %v6333
          %6366 = vst.msk [vmem:[#allocation4 + $0x100] sm:$0xff] %vm650, %v6334
          %6367 = vst.msk [vmem:[#allocation4 + $0x118] sm:$0xff] %vm650, %v6335
          %6368 = vst.msk [vmem:[#allocation4 + $0x130] sm:$0xff] %vm650, %v6336
          %6369 = vst.msk [vmem:[#allocation4 + $0x148] sm:$0xff] %vm650, %v6337
          %6370 = vst.msk [vmem:[#allocation4 + $0x160] sm:$0xff] %vm650, %v6338
          %6371 = vst.msk [vmem:[#allocation4 + $0x178] sm:$0xff] %vm650, %v6339
          %6372 = vst.msk [vmem:[#allocation4 + $0x190] sm:$0xff] %vm650, %v6340
          %6373 = vst.msk [vmem:[#allocation4 + $0x1a8] sm:$0xff] %vm650, %v6341
          %6374 = vst.msk [vmem:[#allocation4 + $0x1c0] sm:$0xff] %vm650, %v6342
          %6375 = vst.msk [vmem:[#allocation4 + $0x1d8] sm:$0xff] %vm650, %v6343
          %6376 = vst.msk [vmem:[#allocation4 + $0x1f0] sm:$0xff] %vm650, %v6344
          %6377 = vst.msk [vmem:[#allocation4 + $0x208] sm:$0xff] %vm650, %v6345
          %6378 = vst.msk [vmem:[#allocation4 + $0x220] sm:$0xff] %vm650, %v6346
          %6379 = vst.msk [vmem:[#allocation4 + $0x238] sm:$0xff] %vm650, %v6347
          %6380 = vst.msk [vmem:[#allocation4 + $0x250] sm:$0xff] %vm650, %v6348
          %6381 = vst.msk [vmem:[#allocation4 + $0x268] sm:$0xff] %vm650, %v6349
          %6382 = vst.msk [vmem:[#allocation4 + $0x280] sm:$0xff] %vm650, %v6350
          %6383 = vst.msk [vmem:[#allocation4 + $0x298] sm:$0xff] %vm650, %v6351
          %6384 = vst.msk [vmem:[#allocation4 + $0x2b0] sm:$0xff] %vm650, %v6352
          %6385 = vst.msk [vmem:[#allocation4 + $0x2c8] sm:$0xff] %vm650, %v6353
          %6386 = vst.msk [vmem:[#allocation4 + $0x2e0] sm:$0xff] %vm650, %v6354
          %6387 = vst.msk [vmem:[#allocation4 + $0x2f8] sm:$0xff] %vm650, %v6355
          %v6388 = vld [vmem:[#allocation4] sm:$0xff]
          %v6389 = vld [vmem:[#allocation4 + $0x8] sm:$0xff]
          %v6390 = vld [vmem:[#allocation4 + $0x10] sm:$0xff]
          %v6391 = vld [vmem:[#allocation4 + $0x18] sm:$0xff]
          %v6392 = vld [vmem:[#allocation4 + $0x20] sm:$0xff]
          %v6393 = vld [vmem:[#allocation4 + $0x28] sm:$0xff]
          %v6394 = vld [vmem:[#allocation4 + $0x30] sm:$0xff]
          %v6395 = vld [vmem:[#allocation4 + $0x38] sm:$0xff]
          %v6396 = vld [vmem:[#allocation4 + $0x40] sm:$0xff]
          %v6397 = vld [vmem:[#allocation4 + $0x48] sm:$0xff]
          %v6398 = vld [vmem:[#allocation4 + $0x50] sm:$0xff]
          %v6399 = vld [vmem:[#allocation4 + $0x58] sm:$0xff]
          %v6400 = vld [vmem:[#allocation4 + $0x60] sm:$0xff]
          %v6401 = vld [vmem:[#allocation4 + $0x68] sm:$0xff]
          %v6402 = vld [vmem:[#allocation4 + $0x70] sm:$0xff]
          %v6403 = vld [vmem:[#allocation4 + $0x78] sm:$0xff]
          %v6404 = vld [vmem:[#allocation4 + $0x80] sm:$0xff]
          %v6405 = vld [vmem:[#allocation4 + $0x88] sm:$0xff]
          %v6406 = vld [vmem:[#allocation4 + $0x90] sm:$0xff]
          %v6407 = vld [vmem:[#allocation4 + $0x98] sm:$0xff]
          %v6408 = vld [vmem:[#allocation4 + $0xa0] sm:$0xff]
          %v6409 = vld [vmem:[#allocation4 + $0xa8] sm:$0xff]
          %v6410 = vld [vmem:[#allocation4 + $0xb0] sm:$0xff]
          %v6411 = vld [vmem:[#allocation4 + $0xb8] sm:$0xff]
          %v6412 = vld [vmem:[#allocation4 + $0xc0] sm:$0xff]
          %v6413 = vld [vmem:[#allocation4 + $0xc8] sm:$0xff]
          %v6414 = vld [vmem:[#allocation4 + $0xd0] sm:$0xff]
          %v6415 = vld [vmem:[#allocation4 + $0xd8] sm:$0xff]
          %v6416 = vld [vmem:[#allocation4 + $0xe0] sm:$0xff]
          %v6417 = vld [vmem:[#allocation4 + $0xe8] sm:$0xff]
          %v6418 = vld [vmem:[#allocation4 + $0xf0] sm:$0xff]
          %v6419 = vld [vmem:[#allocation4 + $0xf8] sm:$0xff]
          %v6420 = vld [vmem:[#allocation4 + $0x100] sm:$0xff]
          %v6421 = vld [vmem:[#allocation4 + $0x108] sm:$0xff]
          %v6422 = vld [vmem:[#allocation4 + $0x110] sm:$0xff]
          %v6423 = vld [vmem:[#allocation4 + $0x118] sm:$0xff]
          %v6424 = vld [vmem:[#allocation4 + $0x120] sm:$0xff]
          %v6425 = vld [vmem:[#allocation4 + $0x128] sm:$0xff]
          %v6426 = vld [vmem:[#allocation4 + $0x130] sm:$0xff]
          %v6427 = vld [vmem:[#allocation4 + $0x138] sm:$0xff]
          %v6428 = vld [vmem:[#allocation4 + $0x140] sm:$0xff]
          %v6429 = vld [vmem:[#allocation4 + $0x148] sm:$0xff]
          %v6430 = vld [vmem:[#allocation4 + $0x150] sm:$0xff]
          %v6431 = vld [vmem:[#allocation4 + $0x158] sm:$0xff]
          %v6432 = vld [vmem:[#allocation4 + $0x160] sm:$0xff]
          %v6433 = vld [vmem:[#allocation4 + $0x168] sm:$0xff]
          %v6434 = vld [vmem:[#allocation4 + $0x170] sm:$0xff]
          %v6435 = vld [vmem:[#allocation4 + $0x178] sm:$0xff]
          %v6436 = vld [vmem:[#allocation4 + $0x180] sm:$0xff]
          %v6437 = vld [vmem:[#allocation4 + $0x188] sm:$0xff]
          %v6438 = vld [vmem:[#allocation4 + $0x190] sm:$0xff]
          %v6439 = vld [vmem:[#allocation4 + $0x198] sm:$0xff]
          %v6440 = vld [vmem:[#allocation4 + $0x1a0] sm:$0xff]
          %v6441 = vld [vmem:[#allocation4 + $0x1a8] sm:$0xff]
          %v6442 = vld [vmem:[#allocation4 + $0x1b0] sm:$0xff]
          %v6443 = vld [vmem:[#allocation4 + $0x1b8] sm:$0xff]
          %v6444 = vld [vmem:[#allocation4 + $0x1c0] sm:$0xff]
          %v6445 = vld [vmem:[#allocation4 + $0x1c8] sm:$0xff]
          %v6446 = vld [vmem:[#allocation4 + $0x1d0] sm:$0xff]
          %v6447 = vld [vmem:[#allocation4 + $0x1d8] sm:$0xff]
          %v6448 = vld [vmem:[#allocation4 + $0x1e0] sm:$0xff]
          %v6449 = vld [vmem:[#allocation4 + $0x1e8] sm:$0xff]
          %v6450 = vld [vmem:[#allocation4 + $0x1f0] sm:$0xff]
          %v6451 = vld [vmem:[#allocation4 + $0x1f8] sm:$0xff]
          %v6452 = vld [vmem:[#allocation4 + $0x200] sm:$0xff]
          %v6453 = vld [vmem:[#allocation4 + $0x208] sm:$0xff]
          %v6454 = vld [vmem:[#allocation4 + $0x210] sm:$0xff]
          %v6455 = vld [vmem:[#allocation4 + $0x218] sm:$0xff]
          %v6456 = vld [vmem:[#allocation4 + $0x220] sm:$0xff]
          %v6457 = vld [vmem:[#allocation4 + $0x228] sm:$0xff]
          %v6458 = vld [vmem:[#allocation4 + $0x230] sm:$0xff]
          %v6459 = vld [vmem:[#allocation4 + $0x238] sm:$0xff]
          %v6460 = vld [vmem:[#allocation4 + $0x240] sm:$0xff]
          %v6461 = vld [vmem:[#allocation4 + $0x248] sm:$0xff]
          %v6462 = vld [vmem:[#allocation4 + $0x250] sm:$0xff]
          %v6463 = vld [vmem:[#allocation4 + $0x258] sm:$0xff]
          %v6464 = vld [vmem:[#allocation4 + $0x260] sm:$0xff]
          %v6465 = vld [vmem:[#allocation4 + $0x268] sm:$0xff]
          %v6466 = vld [vmem:[#allocation4 + $0x270] sm:$0xff]
          %v6467 = vld [vmem:[#allocation4 + $0x278] sm:$0xff]
          %v6468 = vld [vmem:[#allocation4 + $0x280] sm:$0xff]
          %v6469 = vld [vmem:[#allocation4 + $0x288] sm:$0xff]
          %v6470 = vld [vmem:[#allocation4 + $0x290] sm:$0xff]
          %v6471 = vld [vmem:[#allocation4 + $0x298] sm:$0xff]
          %v6472 = vld [vmem:[#allocation4 + $0x2a0] sm:$0xff]
          %v6473 = vld [vmem:[#allocation4 + $0x2a8] sm:$0xff]
          %v6474 = vld [vmem:[#allocation4 + $0x2b0] sm:$0xff]
          %v6475 = vld [vmem:[#allocation4 + $0x2b8] sm:$0xff]
          %v6476 = vld [vmem:[#allocation4 + $0x2c0] sm:$0xff]
          %v6477 = vld [vmem:[#allocation4 + $0x2c8] sm:$0xff]
          %v6478 = vld [vmem:[#allocation4 + $0x2d0] sm:$0xff]
          %v6479 = vld [vmem:[#allocation4 + $0x2d8] sm:$0xff]
          %v6480 = vld [vmem:[#allocation4 + $0x2e0] sm:$0xff]
          %v6481 = vld [vmem:[#allocation4 + $0x2e8] sm:$0xff]
          %v6482 = vld [vmem:[#allocation4 + $0x2f0] sm:$0xff]
          %v6483 = vld [vmem:[#allocation4 + $0x2f8] sm:$0xff]
          %v6484 = vpack.c.bf16 %v6391, %v6388
          %v6485 = vpack.c.bf16 %v6392, %v6389
          %v6486 = vpack.c.bf16 %v6393, %v6390
          %v6487 = vpack.c.bf16 %v6397, %v6394
          %v6488 = vpack.c.bf16 %v6398, %v6395
          %v6489 = vpack.c.bf16 %v6399, %v6396
          %v6490 = vpack.c.bf16 %v6403, %v6400
          %v6491 = vpack.c.bf16 %v6404, %v6401
          %v6492 = vpack.c.bf16 %v6405, %v6402
          %v6493 = vpack.c.bf16 %v6409, %v6406
          %v6494 = vpack.c.bf16 %v6410, %v6407
          %v6495 = vpack.c.bf16 %v6411, %v6408
          %v6496 = vpack.c.bf16 %v6415, %v6412
          %v6497 = vpack.c.bf16 %v6416, %v6413
          %v6498 = vpack.c.bf16 %v6417, %v6414
          %v6499 = vpack.c.bf16 %v6421, %v6418
          %v6500 = vpack.c.bf16 %v6422, %v6419
          %v6501 = vpack.c.bf16 %v6423, %v6420
          %v6502 = vpack.c.bf16 %v6427, %v6424
          %v6503 = vpack.c.bf16 %v6428, %v6425
          %v6504 = vpack.c.bf16 %v6429, %v6426
          %v6505 = vpack.c.bf16 %v6433, %v6430
          %v6506 = vpack.c.bf16 %v6434, %v6431
          %v6507 = vpack.c.bf16 %v6435, %v6432
          %v6508 = vpack.c.bf16 %v6439, %v6436
          %v6509 = vpack.c.bf16 %v6440, %v6437
          %v6510 = vpack.c.bf16 %v6441, %v6438
          %v6511 = vpack.c.bf16 %v6445, %v6442
          %v6512 = vpack.c.bf16 %v6446, %v6443
          %v6513 = vpack.c.bf16 %v6447, %v6444
          %v6514 = vpack.c.bf16 %v6451, %v6448
          %v6515 = vpack.c.bf16 %v6452, %v6449
          %v6516 = vpack.c.bf16 %v6453, %v6450
          %v6517 = vpack.c.bf16 %v6457, %v6454
          %v6518 = vpack.c.bf16 %v6458, %v6455
          %v6519 = vpack.c.bf16 %v6459, %v6456
          %v6520 = vpack.c.bf16 %v6463, %v6460
          %v6521 = vpack.c.bf16 %v6464, %v6461
          %v6522 = vpack.c.bf16 %v6465, %v6462
          %v6523 = vpack.c.bf16 %v6469, %v6466
          %v6524 = vpack.c.bf16 %v6470, %v6467
          %v6525 = vpack.c.bf16 %v6471, %v6468
          %v6526 = vpack.c.bf16 %v6475, %v6472
          %v6527 = vpack.c.bf16 %v6476, %v6473
          %v6528 = vpack.c.bf16 %v6477, %v6474
          %v6529 = vpack.c.bf16 %v6481, %v6478
          %v6530 = vpack.c.bf16 %v6482, %v6479
          %v6531 = vpack.c.bf16 %v6483, %v6480
          %v6533 = vlaneseq
          %v6534 = vshrl.u32 %v6533, 7
          %v6535 = vsub.s32 0, %v6534
          %v6536 = vrot.slane %v5043, %v6535
          %v6574 = vunpack.c.l.b16 %v5007
          %v6575 = vunpack.c.l.b16 %v5008
          %v6576 = vunpack.c.l.b16 %v5009
          %v6577 = vunpack.c.l.b16 %v5010
          %v6578 = vunpack.c.l.b16 %v5011
          %v6579 = vunpack.c.l.b16 %v5012
          %v6580 = vunpack.c.l.b16 %v5013
          %v6581 = vunpack.c.l.b16 %v5014
          %v6582 = vunpack.c.l.b16 %v5015
          %v6583 = vunpack.c.l.b16 %v5016
          %v6584 = vunpack.c.l.b16 %v5017
          %v6585 = vunpack.c.l.b16 %v5018
          %v6586 = vunpack.c.l.b16 %v5019
          %v6587 = vunpack.c.l.b16 %v5020
          %v6588 = vunpack.c.l.b16 %v5021
          %v6589 = vunpack.c.l.b16 %v5022
          %v6590 = vunpack.c.l.b16 %v5023
          %v6591 = vunpack.c.l.b16 %v5024
          %v6592 = vunpack.c.l.b16 %v5025
          %v6593 = vunpack.c.l.b16 %v5026
          %v6594 = vunpack.c.l.b16 %v5027
          %v6595 = vunpack.c.l.b16 %v5028
          %v6596 = vunpack.c.l.b16 %v5029
          %v6597 = vunpack.c.l.b16 %v5030
          %v6598 = vunpack.c.l.b16 %v5031
          %v6599 = vunpack.c.l.b16 %v5032
          %v6600 = vunpack.c.l.b16 %v5033
          %v6601 = vunpack.c.l.b16 %v5034
          %v6602 = vunpack.c.l.b16 %v5035
          %v6603 = vunpack.c.l.b16 %v5036
          %v6604 = vunpack.c.l.b16 %v5037
          %v6605 = vunpack.c.l.b16 %v5038
          %v6606 = vunpack.c.l.b16 %v5039
          %v6607 = vunpack.c.l.b16 %v5040
          %v6608 = vunpack.c.l.b16 %v5041
          %v6609 = vunpack.c.l.b16 %v5042
          %v6610 = vpack.c.b16 %v6575, %v6574
          %v6611 = vpack.c.b16 %v6577, %v6576
          %v6612 = vpack.c.b16 %v6579, %v6578
          %v6613 = vpack.c.b16 %v6581, %v6580
          %v6614 = vpack.c.b16 %v6583, %v6582
          %v6615 = vpack.c.b16 %v6585, %v6584
          %v6616 = vpack.c.b16 %v6587, %v6586
          %v6617 = vpack.c.b16 %v6589, %v6588
          %v6618 = vpack.c.b16 %v6591, %v6590
          %v6619 = vpack.c.b16 %v6593, %v6592
          %v6620 = vpack.c.b16 %v6595, %v6594
          %v6621 = vpack.c.b16 %v6597, %v6596
          %v6622 = vpack.c.b16 %v6599, %v6598
          %v6623 = vpack.c.b16 %v6601, %v6600
          %v6624 = vpack.c.b16 %v6603, %v6602
          %v6625 = vpack.c.b16 %v6605, %v6604
          %v6626 = vpack.c.b16 %v6607, %v6606
          %v6627 = vpack.c.b16 %v6609, %v6608
          %v6647 = vsel %vm650, %v6486, 0
          %v6650 = vsel %vm650, %v6489, 0
          %v6653 = vsel %vm650, %v6492, 0
          %v6656 = vsel %vm650, %v6495, 0
          %v6659 = vsel %vm650, %v6498, 0
          %v6662 = vsel %vm650, %v6501, 0
          %v6665 = vsel %vm650, %v6504, 0
          %v6668 = vsel %vm650, %v6507, 0
          %v6671 = vsel %vm650, %v6510, 0
          %v6674 = vsel %vm650, %v6513, 0
          %v6677 = vsel %vm650, %v6516, 0
          %v6680 = vsel %vm650, %v6519, 0
          %v6683 = vsel %vm650, %v6522, 0
          %v6686 = vsel %vm650, %v6525, 0
          %v6689 = vsel %vm650, %v6528, 0
          %v6692 = vsel %vm650, %v6531, 0
          %6694 = vmatprep.subr.bf16.mxu0 0
          %6695 = vmatpush1.bf16.msra.mxu0 %v6617
          %6696 = vmatprep.subr.bf16.mxu0 0
          %6697 = vmatpush1.bf16.msra.mxu0 %v6616
          %6698 = vmatprep.subr.bf16.mxu0 0
          %6699 = vmatpush1.bf16.msra.mxu0 %v6615
          %6700 = vmatprep.subr.bf16.mxu0 0
          %6701 = vmatpush1.bf16.msra.mxu0 %v6614
          %6702 = vmatprep.subr.bf16.mxu0 0
          %6703 = vmatpush1.bf16.msra.mxu0 %v6613
          %6704 = vmatprep.subr.bf16.mxu0 0
          %6705 = vmatpush1.bf16.msra.mxu0 %v6612
          %6706 = vmatprep.subr.bf16.mxu0 0
          %6707 = vmatpush1.bf16.msra.mxu0 %v6611
          %6708 = vmatprep.subr.bf16.mxu0 0
          %6709 = vmatpush1.bf16.msra.mxu0 %v6610
          %6710 = vmatprep.subr.bf16.mxu0 0
          %6711 = vmatpush2.bf16.msra.mxu0 %v6625
          %6712 = vmatprep.subr.bf16.mxu0 0
          %6713 = vmatpush2.bf16.msra.mxu0 %v6624
          %6714 = vmatprep.subr.bf16.mxu0 0
          %6715 = vmatpush2.bf16.msra.mxu0 %v6623
          %6716 = vmatprep.subr.bf16.mxu0 0
          %6717 = vmatpush2.bf16.msra.mxu0 %v6622
          %6718 = vmatprep.subr.bf16.mxu0 0
          %6719 = vmatpush2.bf16.msra.mxu0 %v6621
          %6720 = vmatprep.subr.bf16.mxu0 0
          %6721 = vmatpush2.bf16.msra.mxu0 %v6620
          %6722 = vmatprep.subr.bf16.mxu0 0
          %6723 = vmatpush2.bf16.msra.mxu0 %v6619
          %6724 = vmatprep.subr.bf16.mxu0 0
          %6725 = vmatpush2.bf16.msra.mxu0 %v6618
          %6726 = vmatprep.mubr.bf16.mxu0 %v6485
          %6727 = vmatmul.mubr.bf16.gmra.mxu0 %v6484
          %v6728 = vpop.f32.mrf.mxu0
          %v6729 = vadd.f32 %v6536, %v6728
          %v6730 = vpop.f32.mrf.mxu0
          %v6731 = vpop.f32.mrf.mxu0
          %v6732 = vadd.f32 %v6536, %v6731
          %v6733 = vpop.f32.mrf.mxu0
          %6734 = vmatprep.mubr.bf16.mxu0 %v6488
          %6735 = vmatmul.mubr.bf16.gmra.mxu0 %v6487
          %v6736 = vpop.f32.mrf.mxu0
          %v6737 = vadd.f32 %v6536, %v6736
          %v6738 = vpop.f32.mrf.mxu0
          %v6739 = vpop.f32.mrf.mxu0
          %v6740 = vadd.f32 %v6536, %v6739
          %v6741 = vpop.f32.mrf.mxu0
          %6742 = vmatprep.mubr.bf16.mxu0 %v6491
          %6743 = vmatmul.mubr.bf16.gmra.mxu0 %v6490
          %v6744 = vpop.f32.mrf.mxu0
          %v6745 = vadd.f32 %v6536, %v6744
          %v6746 = vpop.f32.mrf.mxu0
          %v6747 = vpop.f32.mrf.mxu0
          %v6748 = vadd.f32 %v6536, %v6747
          %v6749 = vpop.f32.mrf.mxu0
          %6750 = vmatprep.mubr.bf16.mxu0 %v6494
          %6751 = vmatmul.mubr.bf16.gmra.mxu0 %v6493
          %v6752 = vpop.f32.mrf.mxu0
          %v6753 = vadd.f32 %v6536, %v6752
          %v6754 = vpop.f32.mrf.mxu0
          %v6755 = vpop.f32.mrf.mxu0
          %v6756 = vadd.f32 %v6536, %v6755
          %v6757 = vpop.f32.mrf.mxu0
          %6758 = vmatprep.mubr.bf16.mxu0 %v6497
          %6759 = vmatmul.mubr.bf16.gmra.mxu0 %v6496
          %v6760 = vpop.f32.mrf.mxu0
          %v6761 = vadd.f32 %v6536, %v6760
          %v6762 = vpop.f32.mrf.mxu0
          %v6763 = vpop.f32.mrf.mxu0
          %v6764 = vadd.f32 %v6536, %v6763
          %v6765 = vpop.f32.mrf.mxu0
          %6766 = vmatprep.mubr.bf16.mxu0 %v6500
          %6767 = vmatmul.mubr.bf16.gmra.mxu0 %v6499
          %v6768 = vpop.f32.mrf.mxu0
          %v6769 = vadd.f32 %v6536, %v6768
          %v6770 = vpop.f32.mrf.mxu0
          %v6771 = vpop.f32.mrf.mxu0
          %v6772 = vadd.f32 %v6536, %v6771
          %v6773 = vpop.f32.mrf.mxu0
          %6774 = vmatprep.mubr.bf16.mxu0 %v6503
          %6775 = vmatmul.mubr.bf16.gmra.mxu0 %v6502
          %v6776 = vpop.f32.mrf.mxu0
          %v6777 = vadd.f32 %v6536, %v6776
          %v6778 = vpop.f32.mrf.mxu0
          %v6779 = vpop.f32.mrf.mxu0
          %v6780 = vadd.f32 %v6536, %v6779
          %v6781 = vpop.f32.mrf.mxu0
          %6782 = vmatprep.mubr.bf16.mxu0 %v6506
          %6783 = vmatmul.mubr.bf16.gmra.mxu0 %v6505
          %v6784 = vpop.f32.mrf.mxu0
          %v6785 = vadd.f32 %v6536, %v6784
          %v6786 = vpop.f32.mrf.mxu0
          %v6787 = vpop.f32.mrf.mxu0
          %v6788 = vadd.f32 %v6536, %v6787
          %v6789 = vpop.f32.mrf.mxu0
          %6790 = vmatprep.mubr.bf16.mxu0 %v6509
          %6791 = vmatmul.mubr.bf16.gmra.mxu0 %v6508
          %v6792 = vpop.f32.mrf.mxu0
          %v6793 = vadd.f32 %v6536, %v6792
          %v6794 = vpop.f32.mrf.mxu0
          %v6795 = vpop.f32.mrf.mxu0
          %v6796 = vadd.f32 %v6536, %v6795
          %v6797 = vpop.f32.mrf.mxu0
          %6798 = vmatprep.mubr.bf16.mxu0 %v6512
          %6799 = vmatmul.mubr.bf16.gmra.mxu0 %v6511
          %v6800 = vpop.f32.mrf.mxu0
          %v6801 = vadd.f32 %v6536, %v6800
          %v6802 = vpop.f32.mrf.mxu0
          %v6803 = vpop.f32.mrf.mxu0
          %v6804 = vadd.f32 %v6536, %v6803
          %v6805 = vpop.f32.mrf.mxu0
          %6806 = vmatprep.mubr.bf16.mxu0 %v6515
          %6807 = vmatmul.mubr.bf16.gmra.mxu0 %v6514
          %v6808 = vpop.f32.mrf.mxu0
          %v6809 = vadd.f32 %v6536, %v6808
          %v6810 = vpop.f32.mrf.mxu0
          %v6811 = vpop.f32.mrf.mxu0
          %v6812 = vadd.f32 %v6536, %v6811
          %v6813 = vpop.f32.mrf.mxu0
          %6814 = vmatprep.mubr.bf16.mxu0 %v6518
          %6815 = vmatmul.mubr.bf16.gmra.mxu0 %v6517
          %v6816 = vpop.f32.mrf.mxu0
          %v6817 = vadd.f32 %v6536, %v6816
          %v6818 = vpop.f32.mrf.mxu0
          %v6819 = vpop.f32.mrf.mxu0
          %v6820 = vadd.f32 %v6536, %v6819
          %v6821 = vpop.f32.mrf.mxu0
          %6822 = vmatprep.mubr.bf16.mxu0 %v6521
          %6823 = vmatmul.mubr.bf16.gmra.mxu0 %v6520
          %v6824 = vpop.f32.mrf.mxu0
          %v6825 = vadd.f32 %v6536, %v6824
          %v6826 = vpop.f32.mrf.mxu0
          %v6827 = vpop.f32.mrf.mxu0
          %v6828 = vadd.f32 %v6536, %v6827
          %v6829 = vpop.f32.mrf.mxu0
          %6830 = vmatprep.mubr.bf16.mxu0 %v6524
          %6831 = vmatmul.mubr.bf16.gmra.mxu0 %v6523
          %v6832 = vpop.f32.mrf.mxu0
          %v6833 = vadd.f32 %v6536, %v6832
          %v6834 = vpop.f32.mrf.mxu0
          %v6835 = vpop.f32.mrf.mxu0
          %v6836 = vadd.f32 %v6536, %v6835
          %v6837 = vpop.f32.mrf.mxu0
          %6838 = vmatprep.mubr.bf16.mxu0 %v6527
          %6839 = vmatmul.mubr.bf16.gmra.mxu0 %v6526
          %v6840 = vpop.f32.mrf.mxu0
          %v6841 = vadd.f32 %v6536, %v6840
          %v6842 = vpop.f32.mrf.mxu0
          %v6843 = vpop.f32.mrf.mxu0
          %v6844 = vadd.f32 %v6536, %v6843
          %v6845 = vpop.f32.mrf.mxu0
          %6846 = vmatprep.mubr.bf16.mxu0 %v6530
          %6847 = vmatmul.mubr.bf16.gmra.mxu0 %v6529
          %v6848 = vpop.f32.mrf.mxu0
          %v6849 = vadd.f32 %v6536, %v6848
          %v6850 = vpop.f32.mrf.mxu0
          %v6851 = vpop.f32.mrf.mxu0
          %v6852 = vadd.f32 %v6536, %v6851
          %v6853 = vpop.f32.mrf.mxu0
          %6854 = vdwg.mxu0
          %6855 = vmatprep.subr.bf16.mxu0 0
          %6856 = vmatpush1.bf16.msra.mxu0 0
          %6857 = vmatprep.subr.bf16.mxu0 0
          %6858 = vmatpush1.bf16.msra.mxu0 0
          %6859 = vmatprep.subr.bf16.mxu0 0
          %6860 = vmatpush1.bf16.msra.mxu0 0
          %6861 = vmatprep.subr.bf16.mxu0 0
          %6862 = vmatpush1.bf16.msra.mxu0 0
          %6863 = vmatprep.subr.bf16.mxu0 0
          %6864 = vmatpush1.bf16.msra.mxu0 0
          %6865 = vmatprep.subr.bf16.mxu0 0
          %6866 = vmatpush1.bf16.msra.mxu0 0
          %6867 = vmatprep.subr.bf16.mxu0 0
          %6868 = vmatpush1.bf16.msra.mxu0 %v6627
          %6869 = vmatprep.subr.bf16.mxu0 0
          %6870 = vmatpush1.bf16.msra.mxu0 %v6626
          %6871 = vmatprep.subr.bf16.mxu0 0
          %6872 = vmatpush2.bf16.msra.mxu0 0
          %6873 = vmatprep.subr.bf16.mxu0 0
          %6874 = vmatpush2.bf16.msra.mxu0 0
          %6875 = vmatprep.subr.bf16.mxu0 0
          %6876 = vmatpush2.bf16.msra.mxu0 0
          %6877 = vmatprep.subr.bf16.mxu0 0
          %6878 = vmatpush2.bf16.msra.mxu0 0
          %6879 = vmatprep.subr.bf16.mxu0 0
          %6880 = vmatpush2.bf16.msra.mxu0 0
          %6881 = vmatprep.subr.bf16.mxu0 0
          %6882 = vmatpush2.bf16.msra.mxu0 0
          %6883 = vmatprep.subr.bf16.mxu0 0
          %6884 = vmatpush2.bf16.msra.mxu0 0
          %6885 = vmatprep.subr.bf16.mxu0 0
          %6886 = vmatpush2.bf16.msra.mxu0 0
          %6887 = vmatprep.mubr.bf16.mxu0 0
          %6888 = vmatmul.mubr.bf16.gmra.mxu0 %v6647
          %v6889 = vpop.f32.mrf.mxu0
          %v6890 = vadd.f32 %v6729, %v6889
          %v6891 = vpop.f32.mrf.mxu0
          %v6892 = vpop.f32.mrf.mxu0
          %v6893 = vadd.f32 %v6732, %v6892
          %v6894 = vpop.f32.mrf.mxu0
          %6895 = vmatprep.mubr.bf16.mxu0 0
          %6896 = vmatmul.mubr.bf16.gmra.mxu0 %v6650
          %v6897 = vpop.f32.mrf.mxu0
          %v6898 = vadd.f32 %v6737, %v6897
          %v6899 = vpop.f32.mrf.mxu0
          %v6900 = vpop.f32.mrf.mxu0
          %v6901 = vadd.f32 %v6740, %v6900
          %v6902 = vpop.f32.mrf.mxu0
          %6903 = vmatprep.mubr.bf16.mxu0 0
          %6904 = vmatmul.mubr.bf16.gmra.mxu0 %v6653
          %v6905 = vpop.f32.mrf.mxu0
          %v6906 = vadd.f32 %v6745, %v6905
          %v6907 = vpop.f32.mrf.mxu0
          %v6908 = vpop.f32.mrf.mxu0
          %v6909 = vadd.f32 %v6748, %v6908
          %v6910 = vpop.f32.mrf.mxu0
          %6911 = vmatprep.mubr.bf16.mxu0 0
          %6912 = vmatmul.mubr.bf16.gmra.mxu0 %v6656
          %v6913 = vpop.f32.mrf.mxu0
          %v6914 = vadd.f32 %v6753, %v6913
          %v6915 = vpop.f32.mrf.mxu0
          %v6916 = vpop.f32.mrf.mxu0
          %v6917 = vadd.f32 %v6756, %v6916
          %v6918 = vpop.f32.mrf.mxu0
          %6919 = vmatprep.mubr.bf16.mxu0 0
          %6920 = vmatmul.mubr.bf16.gmra.mxu0 %v6659
          %v6921 = vpop.f32.mrf.mxu0
          %v6922 = vadd.f32 %v6761, %v6921
          %v6923 = vpop.f32.mrf.mxu0
          %v6924 = vpop.f32.mrf.mxu0
          %v6925 = vadd.f32 %v6764, %v6924
          %v6926 = vpop.f32.mrf.mxu0
          %6927 = vmatprep.mubr.bf16.mxu0 0
          %6928 = vmatmul.mubr.bf16.gmra.mxu0 %v6662
          %v6929 = vpop.f32.mrf.mxu0
          %v6930 = vadd.f32 %v6769, %v6929
          %v6931 = vpop.f32.mrf.mxu0
          %v6932 = vpop.f32.mrf.mxu0
          %v6933 = vadd.f32 %v6772, %v6932
          %v6934 = vpop.f32.mrf.mxu0
          %6935 = vmatprep.mubr.bf16.mxu0 0
          %6936 = vmatmul.mubr.bf16.gmra.mxu0 %v6665
          %v6937 = vpop.f32.mrf.mxu0
          %v6938 = vadd.f32 %v6777, %v6937
          %v6939 = vpop.f32.mrf.mxu0
          %v6940 = vpop.f32.mrf.mxu0
          %v6941 = vadd.f32 %v6780, %v6940
          %v6942 = vpop.f32.mrf.mxu0
          %6943 = vmatprep.mubr.bf16.mxu0 0
          %6944 = vmatmul.mubr.bf16.gmra.mxu0 %v6668
          %v6945 = vpop.f32.mrf.mxu0
          %v6946 = vadd.f32 %v6785, %v6945
          %v6947 = vpop.f32.mrf.mxu0
          %v6948 = vpop.f32.mrf.mxu0
          %v6949 = vadd.f32 %v6788, %v6948
          %v6950 = vpop.f32.mrf.mxu0
          %6951 = vmatprep.mubr.bf16.mxu0 0
          %6952 = vmatmul.mubr.bf16.gmra.mxu0 %v6671
          %v6953 = vpop.f32.mrf.mxu0
          %v6954 = vadd.f32 %v6793, %v6953
          %v6955 = vpop.f32.mrf.mxu0
          %v6956 = vpop.f32.mrf.mxu0
          %v6957 = vadd.f32 %v6796, %v6956
          %v6958 = vpop.f32.mrf.mxu0
          %6959 = vmatprep.mubr.bf16.mxu0 0
          %6960 = vmatmul.mubr.bf16.gmra.mxu0 %v6674
          %v6961 = vpop.f32.mrf.mxu0
          %v6962 = vadd.f32 %v6801, %v6961
          %v6963 = vpop.f32.mrf.mxu0
          %v6964 = vpop.f32.mrf.mxu0
          %v6965 = vadd.f32 %v6804, %v6964
          %v6966 = vpop.f32.mrf.mxu0
          %6967 = vmatprep.mubr.bf16.mxu0 0
          %6968 = vmatmul.mubr.bf16.gmra.mxu0 %v6677
          %v6969 = vpop.f32.mrf.mxu0
          %v6970 = vadd.f32 %v6809, %v6969
          %v6971 = vpop.f32.mrf.mxu0
          %v6972 = vpop.f32.mrf.mxu0
          %v6973 = vadd.f32 %v6812, %v6972
          %v6974 = vpop.f32.mrf.mxu0
          %6975 = vmatprep.mubr.bf16.mxu0 0
          %6976 = vmatmul.mubr.bf16.gmra.mxu0 %v6680
          %v6977 = vpop.f32.mrf.mxu0
          %v6978 = vadd.f32 %v6817, %v6977
          %v6979 = vpop.f32.mrf.mxu0
          %v6980 = vpop.f32.mrf.mxu0
          %v6981 = vadd.f32 %v6820, %v6980
          %v6982 = vpop.f32.mrf.mxu0
          %6983 = vmatprep.mubr.bf16.mxu0 0
          %6984 = vmatmul.mubr.bf16.gmra.mxu0 %v6683
          %v6985 = vpop.f32.mrf.mxu0
          %v6986 = vadd.f32 %v6825, %v6985
          %v6987 = vpop.f32.mrf.mxu0
          %v6988 = vpop.f32.mrf.mxu0
          %v6989 = vadd.f32 %v6828, %v6988
          %v6990 = vpop.f32.mrf.mxu0
          %6991 = vmatprep.mubr.bf16.mxu0 0
          %6992 = vmatmul.mubr.bf16.gmra.mxu0 %v6686
          %v6993 = vpop.f32.mrf.mxu0
          %v6994 = vadd.f32 %v6833, %v6993
          %v6995 = vpop.f32.mrf.mxu0
          %v6996 = vpop.f32.mrf.mxu0
          %v6997 = vadd.f32 %v6836, %v6996
          %v6998 = vpop.f32.mrf.mxu0
          %6999 = vmatprep.mubr.bf16.mxu0 0
          %7000 = vmatmul.mubr.bf16.gmra.mxu0 %v6689
          %v7001 = vpop.f32.mrf.mxu0
          %v7002 = vadd.f32 %v6841, %v7001
          %v7003 = vpop.f32.mrf.mxu0
          %v7004 = vpop.f32.mrf.mxu0
          %v7005 = vadd.f32 %v6844, %v7004
          %v7006 = vpop.f32.mrf.mxu0
          %7007 = vmatprep.mubr.bf16.mxu0 0
          %7008 = vmatmul.mubr.bf16.gmra.mxu0 %v6692
          %v7009 = vpop.f32.mrf.mxu0
          %v7010 = vadd.f32 %v6849, %v7009
          %v7011 = vpop.f32.mrf.mxu0
          %v7012 = vpop.f32.mrf.mxu0
          %v7013 = vadd.f32 %v6852, %v7012
          %v7014 = vpop.f32.mrf.mxu0
          %7015 = vdwg.mxu0
          %v7016 = vld [vmem:[%s396] sm:$0xff]
          %v7017 = vld [vmem:[%s396 + $0x8] sm:$0xff]
          %v7018 = vld [vmem:[%s396 + $0x10] sm:$0xff]
          %v7019 = vld [vmem:[%s396 + $0x18] sm:$0xff]
          %v7020 = vld [vmem:[%s396 + $0x20] sm:$0xff]
          %v7021 = vld [vmem:[%s396 + $0x28] sm:$0xff]
          %v7022 = vld [vmem:[%s396 + $0x30] sm:$0xff]
          %v7023 = vld [vmem:[%s396 + $0x38] sm:$0xff]
          %v7024 = vld [vmem:[%s396 + $0x40] sm:$0xff]
          %v7025 = vld [vmem:[%s396 + $0x48] sm:$0xff]
          %v7026 = vld [vmem:[%s396 + $0x50] sm:$0xff]
          %v7027 = vld [vmem:[%s396 + $0x58] sm:$0xff]
          %v7028 = vld [vmem:[%s396 + $0x60] sm:$0xff]
          %v7029 = vld [vmem:[%s396 + $0x68] sm:$0xff]
          %v7030 = vld [vmem:[%s396 + $0x70] sm:$0xff]
          %v7031 = vld [vmem:[%s396 + $0x78] sm:$0xff]
          %v7032 = vld [vmem:[%s396 + $0x80] sm:$0xff]
          %v7033 = vld [vmem:[%s396 + $0x88] sm:$0xff]
          %v7034 = vld [vmem:[%s396 + $0x90] sm:$0xff]
          %v7035 = vld [vmem:[%s396 + $0x98] sm:$0xff]
          %v7036 = vld [vmem:[%s396 + $0xa0] sm:$0xff]
          %v7037 = vld [vmem:[%s396 + $0xa8] sm:$0xff]
          %v7038 = vld [vmem:[%s396 + $0xb0] sm:$0xff]
          %v7039 = vld [vmem:[%s396 + $0xb8] sm:$0xff]
          %v7040 = vld [vmem:[%s396 + $0xc0] sm:$0xff]
          %v7041 = vld [vmem:[%s396 + $0xc8] sm:$0xff]
          %v7042 = vld [vmem:[%s396 + $0xd0] sm:$0xff]
          %v7043 = vld [vmem:[%s396 + $0xd8] sm:$0xff]
          %v7044 = vld [vmem:[%s396 + $0xe0] sm:$0xff]
          %v7045 = vld [vmem:[%s396 + $0xe8] sm:$0xff]
          %v7046 = vld [vmem:[%s396 + $0xf0] sm:$0xff]
          %v7047 = vld [vmem:[%s396 + $0xf8] sm:$0xff]
          %v7048 = vadd.f32 %v6890, %v7016
          %v7049 = vadd.f32 %v6893, %v7017
          %v7050 = vadd.f32 %v6898, %v7018
          %v7051 = vadd.f32 %v6901, %v7019
          %v7052 = vadd.f32 %v6906, %v7020
          %v7053 = vadd.f32 %v6909, %v7021
          %v7054 = vadd.f32 %v6914, %v7022
          %v7055 = vadd.f32 %v6917, %v7023
          %v7056 = vadd.f32 %v6922, %v7024
          %v7057 = vadd.f32 %v6925, %v7025
          %v7058 = vadd.f32 %v6930, %v7026
          %v7059 = vadd.f32 %v6933, %v7027
          %v7060 = vadd.f32 %v6938, %v7028
          %v7061 = vadd.f32 %v6941, %v7029
          %v7062 = vadd.f32 %v6946, %v7030
          %v7063 = vadd.f32 %v6949, %v7031
          %v7064 = vadd.f32 %v6954, %v7032
          %v7065 = vadd.f32 %v6957, %v7033
          %v7066 = vadd.f32 %v6962, %v7034
          %v7067 = vadd.f32 %v6965, %v7035
          %v7068 = vadd.f32 %v6970, %v7036
          %v7069 = vadd.f32 %v6973, %v7037
          %v7070 = vadd.f32 %v6978, %v7038
          %v7071 = vadd.f32 %v6981, %v7039
          %v7072 = vadd.f32 %v6986, %v7040
          %v7073 = vadd.f32 %v6989, %v7041
          %v7074 = vadd.f32 %v6994, %v7042
          %v7075 = vadd.f32 %v6997, %v7043
          %v7076 = vadd.f32 %v7002, %v7044
          %v7077 = vadd.f32 %v7005, %v7045
          %v7078 = vadd.f32 %v7010, %v7046
          %v7079 = vadd.f32 %v7013, %v7047
          %7080 = vst.msk [vmem:[%s391] sm:$0xff] %vm650, %v7048
          %7081 = vst.msk [vmem:[%s391 + $0x8] sm:$0xff] %vm650, %v7049
          %7082 = vst.msk [vmem:[%s391 + $0x10] sm:$0xff] %vm650, %v7050
          %7083 = vst.msk [vmem:[%s391 + $0x18] sm:$0xff] %vm650, %v7051
          %7084 = vst.msk [vmem:[%s391 + $0x20] sm:$0xff] %vm650, %v7052
          %7085 = vst.msk [vmem:[%s391 + $0x28] sm:$0xff] %vm650, %v7053
          %7086 = vst.msk [vmem:[%s391 + $0x30] sm:$0xff] %vm650, %v7054
          %7087 = vst.msk [vmem:[%s391 + $0x38] sm:$0xff] %vm650, %v7055
          %7088 = vst.msk [vmem:[%s391 + $0x40] sm:$0xff] %vm650, %v7056
          %7089 = vst.msk [vmem:[%s391 + $0x48] sm:$0xff] %vm650, %v7057
          %7090 = vst.msk [vmem:[%s391 + $0x50] sm:$0xff] %vm650, %v7058
          %7091 = vst.msk [vmem:[%s391 + $0x58] sm:$0xff] %vm650, %v7059
          %7092 = vst.msk [vmem:[%s391 + $0x60] sm:$0xff] %vm650, %v7060
          %7093 = vst.msk [vmem:[%s391 + $0x68] sm:$0xff] %vm650, %v7061
          %7094 = vst.msk [vmem:[%s391 + $0x70] sm:$0xff] %vm650, %v7062
          %7095 = vst.msk [vmem:[%s391 + $0x78] sm:$0xff] %vm650, %v7063
          %7096 = vst.msk [vmem:[%s391 + $0x80] sm:$0xff] %vm650, %v7064
          %7097 = vst.msk [vmem:[%s391 + $0x88] sm:$0xff] %vm650, %v7065
          %7098 = vst.msk [vmem:[%s391 + $0x90] sm:$0xff] %vm650, %v7066
          %7099 = vst.msk [vmem:[%s391 + $0x98] sm:$0xff] %vm650, %v7067
          %7100 = vst.msk [vmem:[%s391 + $0xa0] sm:$0xff] %vm650, %v7068
          %7101 = vst.msk [vmem:[%s391 + $0xa8] sm:$0xff] %vm650, %v7069
          %7102 = vst.msk [vmem:[%s391 + $0xb0] sm:$0xff] %vm650, %v7070
          %7103 = vst.msk [vmem:[%s391 + $0xb8] sm:$0xff] %vm650, %v7071
          %7104 = vst.msk [vmem:[%s391 + $0xc0] sm:$0xff] %vm650, %v7072
          %7105 = vst.msk [vmem:[%s391 + $0xc8] sm:$0xff] %vm650, %v7073
          %7106 = vst.msk [vmem:[%s391 + $0xd0] sm:$0xff] %vm650, %v7074
          %7107 = vst.msk [vmem:[%s391 + $0xd8] sm:$0xff] %vm650, %v7075
          %7108 = vst.msk [vmem:[%s391 + $0xe0] sm:$0xff] %vm650, %v7076
          %7109 = vst.msk [vmem:[%s391 + $0xe8] sm:$0xff] %vm650, %v7077
          %7110 = vst.msk [vmem:[%s391 + $0xf0] sm:$0xff] %vm650, %v7078
          %7111 = vst.msk [vmem:[%s391 + $0xf8] sm:$0xff] %vm650, %v7079
        $region72: #{fused_residual_group.1} parent=63 // pred_fallthru
          _
        %s7112 = sand.u32 %s281, 1
        %s7113 = scalar_lea.sflag [#allocation6], %s7112
        %s7114 = sand.u32 %s281, 1
        %s7115 = smul.addr %s7114, 256
        %s7116 = scalar_lea.vmem [#allocation5], %s7115
        // Predicated region
        $region73: #{fused_residual_group.1} parent=63 // pred_check
          %p7117 = pneg %p291
        $region74: #{fused_residual_group.1} parent=63 // pred_check_branch
          %7119 = sbr.rel (%p7117) target = $region76
        $region75: #{fused_residual_group.1} parent=63 // pred_region
          %s7121 = ssub.s32 4096, 4096
          %7122 = vsyncadd %s7113, %s7121
          %s7123 = smul.addr %s29, 32
          %s7124 = smul.addr %s7123, 128
          %s7125 = scalar_lea.hbm %s11, %s7124
          %s7126 = sshll.u32 %s7116, 4
          %s7127 = int_to_ptr.vmem [resolvable:$true] %s7126
          %7132 = dma.vmem_to_hbm [thread:$0]  %s7127, 4096, %s7125, %s7113, 128, 128, 8
        $region76: #{fused_residual_group.1} parent=63 // pred_fallthru
          _
      $region64: #{fused_residual_group.1} parent=5 // pred_fallthru
        _
      %p7133 = scmp.le.s32.totalorder 2, %s20
      // Predicated region
      $region77: #{fused_residual_group.1} parent=5 // pred_check
        %p7134 = pneg %p7133
      $region78: #{fused_residual_group.1} parent=5 // pred_check_branch
        %7136 = sbr.rel (%p7134) target = $region80
      $region79: #{fused_residual_group.1} parent=5 // pred_region
        %s7137 = ssub.s32 %s20, 2
        // Predicated region
        $region81: #{fused_residual_group.1} parent=79 // pred_check
          %p7138 = pneg %p297
        $region82: #{fused_residual_group.1} parent=79 // pred_check_branch
          %7140 = sbr.rel (%p7138) target = $region84
        $region83: #{fused_residual_group.1} parent=79 // pred_region
          %s7141 = sand.u32 %s282, 1
          %s7142 = scalar_lea.sflag [#allocation6], %s7141
          %s7143 = sand.u32 %s282, 1
          %s7144 = smul.addr %s7143, 256
          %s7145 = scalar_lea.vmem [#allocation5], %s7144
          %7146 = dma.done %s7142, 4096
        $region84: #{fused_residual_group.1} parent=79 // pred_fallthru
          _
      $region80: #{fused_residual_group.1} parent=5 // pred_fallthru
        _
    $region6: #{fused_residual_group.1} parent=1 // loop_footer
      %s24 = sadd.s32 1, %s20
    $region7: #{fused_residual_group.1} parent=1 // loop_footer_branch
      %19 = sbr.rel target = $region3
    $region8: #{fused_residual_group.1} parent=1 // loop_exit
      _
    %7147 = vsyncpa [#allocation6], 1
    %s7148 = scalar_lea.sflag [#allocation6], 1
    %7149 = vsyncpa %s7148, 1

</llo_original>
